<compile_context>
chip_gen: v5e
topology: v5e:2x2
jax: 0.10.0
libtpu: 0.0.40
codegen_flags: <defaults>
</compile_context>

<pallas_src>
import jax
import jax.numpy as jnp
from jax.experimental import pallas as pl
from jax.experimental.pallas import tpu as pltpu

_EPS = 1e-5
_HALO_W = 8   # sublane-aligned column offset of the halo-scratch interior


# ----------------------------------------------------------------------------
# Fused Inception_C kernel (one image per grid step)
# ----------------------------------------------------------------------------
def _build_inception_kernel(H, W, cin, n1x1, n3x3red, n3x3, n5x5red, n5x5,
                            pool_planes, cmax):
    HW = H * W
    # column ranges of the fused 1x1 result (order: b1, b2_1, b2_2, b3_1, b3_2)
    r1 = (0, n1x1)
    r21 = (r1[1], r1[1] + n3x3red)
    r22 = (r21[1], r21[1] + n3x3red)
    r31 = (r22[1], r22[1] + n5x5red)
    r32 = (r31[1], r31[1] + n5x5red)
    # output channel offsets (torch.cat order: y1..y6)
    o1 = 0
    o2 = o1 + n1x1
    o3 = o2 + n3x3
    o4 = o3 + n3x3
    o5 = o4 + n5x5
    o6 = o5 + n5x5

    def kernel(x_ref, wred_ref, bred_ref,
               w21_ref, b21_ref, w22_ref, b22_ref,
               w31a_ref, b31a_ref, w31b_ref, b31b_ref,
               w32a_ref, b32a_ref, w32b_ref, b32b_ref,
               w4_ref, b4_ref, out_ref, halo_ref):

        x = x_ref[0]                                  # (H, W, cin) f32
        x2 = x.reshape(HW, cin)

        # ---- fused 1x1 convs over the shared input (b1 + four reducers) ----
        red = jnp.dot(x2.astype(jnp.bfloat16), wred_ref[...],
                      preferred_element_type=jnp.float32)
        red = jnp.maximum(red + bred_ref[...], 0.0)   # (HW, c_red) f32

        def spatial_conv(t2d, tcin, w_ref, b_ref, kh, kw):
            """conv(kh,kw), padding (kh//2, kw//2), folded-BN bias + ReLU."""
            cout = w_ref.shape[-1]
            halo_ref[...] = jnp.zeros_like(halo_ref)
            halo_ref[1:H + 1, _HALO_W:_HALO_W + W, 0:tcin] = (
                t2d.reshape(H, W, tcin))
            acc = jnp.zeros((HW, cout), jnp.float32)
            tap = 0
            for ikh in range(kh):
                for ikw in range(kw):
                    dh = ikh - kh // 2
                    dw = ikw - kw // 2
                    win = halo_ref[1 + dh:1 + dh + H,
                                   _HALO_W + dw:_HALO_W + dw + W,
                                   0:tcin]
                    acc = acc + jnp.dot(
                        win.reshape(HW, tcin).astype(jnp.bfloat16),
                        w_ref[tap], preferred_element_type=jnp.float32)
                    tap += 1
            return jnp.maximum(acc + b_ref[...], 0.0)  # (HW, cout) f32

        # ---- branch 1: 1x1 ----
        y1 = red[:, r1[0]:r1[1]]
        out_ref[0, :, :, o1:o1 + n1x1] = y1.reshape(H, W, n1x1)

        # ---- branch 2_1: 1x1 -> (1,3) ----
        y2 = spatial_conv(red[:, r21[0]:r21[1]], n3x3red, w21_ref, b21_ref,
                          1, 3)
        out_ref[0, :, :, o2:o2 + n3x3] = y2.reshape(H, W, n3x3)

        # ---- branch 2_2: 1x1 -> (3,1) ----
        y3 = spatial_conv(red[:, r22[0]:r22[1]], n3x3red, w22_ref, b22_ref,
                          3, 1)
        out_ref[0, :, :, o3:o3 + n3x3] = y3.reshape(H, W, n3x3)

        # ---- branch 3_1: 1x1 -> 3x3 -> (1,3) ----
        u = spatial_conv(red[:, r31[0]:r31[1]], n5x5red, w31a_ref, b31a_ref,
                         3, 3)
        y4 = spatial_conv(u, n5x5, w31b_ref, b31b_ref, 1, 3)
        out_ref[0, :, :, o4:o4 + n5x5] = y4.reshape(H, W, n5x5)

        # ---- branch 3_2: 1x1 -> 3x3 -> (3,1) ----
        u = spatial_conv(red[:, r32[0]:r32[1]], n5x5red, w32a_ref, b32a_ref,
                         3, 3)
        y5 = spatial_conv(u, n5x5, w32b_ref, b32b_ref, 3, 1)
        out_ref[0, :, :, o5:o5 + n5x5] = y5.reshape(H, W, n5x5)

        # ---- branch 4: maxpool 3x3/s1/p1 fused with the 1x1 conv ----
        halo_ref[...] = jnp.full_like(halo_ref, -jnp.inf)
        halo_ref[1:H + 1, _HALO_W:_HALO_W + W, 0:cin] = x
        m = halo_ref[1:H + 1, _HALO_W:_HALO_W + W, 0:cin]   # center tap == x
        for dh in (-1, 0, 1):
            for dw in (-1, 0, 1):
                if dh == 0 and dw == 0:
                    continue
                m = jnp.maximum(
                    m, halo_ref[1 + dh:1 + dh + H,
                                _HALO_W + dw:_HALO_W + dw + W, 0:cin])
        y6 = jnp.dot(m.reshape(HW, cin).astype(jnp.bfloat16), w4_ref[...],
                     preferred_element_type=jnp.float32)
        y6 = jnp.maximum(y6 + b4_ref[...], 0.0)
        out_ref[0, :, :, o6:o6 + pool_planes] = y6.reshape(H, W, pool_planes)

    return kernel


# ----------------------------------------------------------------------------
# BN folding / weight packing (plain JAX, runs once under jit)
# ----------------------------------------------------------------------------
def _fold_bn(p):
    w, cb, gamma, beta, mean, var = p          # w: (kh, kw, Cin, Cout)
    scale = gamma / jnp.sqrt(var + _EPS)       # (Cout,)
    return w * scale, (cb - mean) * scale + beta


def _pack_spatial(p):
    w_f, b_f = _fold_bn(p)
    kh, kw, ci, co = w_f.shape
    return (w_f.reshape(kh * kw, ci, co).astype(jnp.bfloat16),
            b_f.reshape(1, co).astype(jnp.float32))


def _pack_1x1(p):
    w_f, b_f = _fold_bn(p)
    return w_f[0, 0], b_f                      # (Cin, Cout), (Cout,)


# ----------------------------------------------------------------------------
# Inception_C forward (NCHW in / NCHW out, like PyTorch)
# ----------------------------------------------------------------------------
@jax.jit
def inception_c_forward(x_nchw, params):
    x = jnp.transpose(x_nchw, (0, 2, 3, 1)).astype(jnp.float32)  # -> NHWC
    N, H, W, cin = x.shape

    # fused 1x1 group (b1 + the four branch reducers), concat along Cout
    red_keys = ("b1", "b2_1_red", "b2_2_red", "b3_1_red", "b3_2_red")
    ws, bs = zip(*(_pack_1x1(params[k]) for k in red_keys))
    w_red = jnp.concatenate(ws, axis=1).astype(jnp.bfloat16)
    b_red = jnp.concatenate(bs, axis=0).reshape(1, -1).astype(jnp.float32)

    w21, b21 = _pack_spatial(params["b2_1_conv"])
    w22, b22 = _pack_spatial(params["b2_2_conv"])
    w31a, b31a = _pack_spatial(params["b3_1_c33"])
    w31b, b31b = _pack_spatial(params["b3_1_c13"])
    w32a, b32a = _pack_spatial(params["b3_2_c33"])
    w32b, b32b = _pack_spatial(params["b3_2_c31"])
    w4_, b4_ = _pack_1x1(params["b4"])
    w4_ = w4_.astype(jnp.bfloat16)
    b4_ = b4_.reshape(1, -1).astype(jnp.float32)

    n1x1 = params["b1"][0].shape[-1]
    n3x3red = params["b2_1_red"][0].shape[-1]
    n3x3 = params["b2_1_conv"][0].shape[-1]
    n5x5red = params["b3_1_red"][0].shape[-1]
    n5x5 = params["b3_1_c33"][0].shape[-1]
    pool_planes = params["b4"][0].shape[-1]
    c_total = n1x1 + 2 * n3x3 + 2 * n5x5 + pool_planes
    cmax = max(cin, n3x3red, n5x5red, n5x5)

    kernel = _build_inception_kernel(H, W, cin, n1x1, n3x3red, n3x3,
                                     n5x5red, n5x5, pool_planes, cmax)

    operands = (x, w_red, b_red, w21, b21, w22, b22,
                w31a, b31a, w31b, b31b, w32a, b32a, w32b, b32b, w4_, b4_)

    def full_spec(a):
        zeros = (0,) * a.ndim
        return pl.BlockSpec(a.shape, lambda n, _z=zeros: _z)

    in_specs = [pl.BlockSpec((1, H, W, cin), lambda n: (n, 0, 0, 0))]
    in_specs += [full_spec(a) for a in operands[1:]]

    out_nhwc = pl.pallas_call(
        kernel,
        out_shape=jax.ShapeDtypeStruct((N, H, W, c_total), jnp.float32),
        grid=(N,),
        in_specs=in_specs,
        out_specs=pl.BlockSpec((1, H, W, c_total), lambda n: (n, 0, 0, 0)),
        scratch_shapes=[pltpu.VMEM((H + 2, W + 2 * _HALO_W, cmax),
                                   jnp.float32)],
        compiler_params=pltpu.CompilerParams(
            dimension_semantics=("parallel",),
            vmem_limit_bytes=32 * 1024 * 1024),
    )(*operands)

    return jnp.transpose(out_nhwc, (0, 3, 1, 2))  # back to NCHW


# ----------------------------------------------------------------------------
# Parameter init (deterministic, synthetic)
# ----------------------------------------------------------------------------
def init_conv_bn(key, cin, cout, kh, kw):
    k1, k2, k3, k4, k5, k6 = jax.random.split(key, 6)
    w = jax.random.normal(k1, (kh, kw, cin, cout), jnp.float32) * 0.1
    b = jax.random.normal(k2, (cout,), jnp.float32) * 0.1
    gamma = 1.0 + 0.1 * jax.random.normal(k3, (cout,), jnp.float32)
    beta = 0.1 * jax.random.normal(k4, (cout,), jnp.float32)
    mean = 0.1 * jax.random.normal(k5, (cout,), jnp.float32)
    var = 1.0 + 0.1 * jax.random.uniform(k6, (cout,), jnp.float32)
    return (w, b, gamma, beta, mean, var)


def init_inception_c_params(key, in_planes, n1x1, n3x3red, n3x3,
                            n5x5red, n5x5, pool_planes):
    keys = jax.random.split(key, 12)
    return {
        "b1":        init_conv_bn(keys[0], in_planes, n1x1, 1, 1),
        "b2_1_red":  init_conv_bn(keys[1], in_planes, n3x3red, 1, 1),
        "b2_1_conv": init_conv_bn(keys[2], n3x3red, n3x3, 1, 3),
        "b2_2_red":  init_conv_bn(keys[3], in_planes, n3x3red, 1, 1),
        "b2_2_conv": init_conv_bn(keys[4], n3x3red, n3x3, 3, 1),
        "b3_1_red":  init_conv_bn(keys[5], in_planes, n5x5red, 1, 1),
        "b3_1_c33":  init_conv_bn(keys[6], n5x5red, n5x5, 3, 3),
        "b3_1_c13":  init_conv_bn(keys[7], n5x5, n5x5, 1, 3),
        "b3_2_red":  init_conv_bn(keys[8], in_planes, n5x5red, 1, 1),
        "b3_2_c33":  init_conv_bn(keys[9], n5x5red, n5x5, 3, 3),
        "b3_2_c31":  init_conv_bn(keys[10], n5x5, n5x5, 3, 1),
        "b4":        init_conv_bn(keys[11], in_planes, pool_planes, 1, 1),
    }


if __name__ == "__main__":
    # Small shapes consistent with the module.
    N, in_planes, H, W = 2, 4, 16, 16
    n1x1, n3x3red, n3x3, n5x5red, n5x5, pool_planes = 8, 4, 8, 4, 8, 8

    key = jax.random.PRNGKey(0)
    kx, kp = jax.random.split(key)
    x = jax.random.normal(kx, (N, in_planes, H, W), jnp.float32)
    params = init_inception_c_params(
        kp, in_planes, n1x1, n3x3red, n3x3, n5x5red, n5x5, pool_planes)

    out = inception_c_forward(x, params)
    out = jax.block_until_ready(out)

    expected_c = n1x1 + n3x3 + n3x3 + n5x5 + n5x5 + pool_planes
    assert out.shape == (N, expected_c, H, W), out.shape
    assert jnp.all(jnp.isfinite(out))
    print("KERNEL_OK")
</pallas_src>

<mosaic_0001>
module attributes {stable_mosaic.version = 11 : i64} {
  func.func @kernel(%arg0: i32, %arg1: memref<1x16x16x4xf32, #tpu.memory_space<vmem>>, %arg2: memref<4x24xbf16, #tpu.memory_space<vmem>>, %arg3: memref<1x24xf32, #tpu.memory_space<vmem>>, %arg4: memref<3x4x8xbf16, #tpu.memory_space<vmem>>, %arg5: memref<1x8xf32, #tpu.memory_space<vmem>>, %arg6: memref<3x4x8xbf16, #tpu.memory_space<vmem>>, %arg7: memref<1x8xf32, #tpu.memory_space<vmem>>, %arg8: memref<9x4x8xbf16, #tpu.memory_space<vmem>>, %arg9: memref<1x8xf32, #tpu.memory_space<vmem>>, %arg10: memref<3x8x8xbf16, #tpu.memory_space<vmem>>, %arg11: memref<1x8xf32, #tpu.memory_space<vmem>>, %arg12: memref<9x4x8xbf16, #tpu.memory_space<vmem>>, %arg13: memref<1x8xf32, #tpu.memory_space<vmem>>, %arg14: memref<3x8x8xbf16, #tpu.memory_space<vmem>>, %arg15: memref<1x8xf32, #tpu.memory_space<vmem>>, %arg16: memref<4x8xbf16, #tpu.memory_space<vmem>>, %arg17: memref<1x8xf32, #tpu.memory_space<vmem>>, %arg18: memref<1x16x16x48xf32, #tpu.memory_space<vmem>>, %arg19: memref<18x32x8xf32, #tpu.memory_space<vmem>>) attributes {dimension_semantics = [#tpu.dimension_semantics<parallel>], iteration_bounds = array<i64: 2>, scalar_prefetch = 0 : i64, scratch_operands = 1 : i64, tpu.core_type = #tpu.core_type<tc>, window_params = [{transform_indices = @transform_0, window_bounds = array<i64: 1, 16, 16, 4>}, {pipeline_mode = #tpu.pipeline_mode<synchronous>, transform_indices = @transform_1, window_bounds = array<i64: 4, 24>}, {pipeline_mode = #tpu.pipeline_mode<synchronous>, transform_indices = @transform_2, window_bounds = array<i64: 1, 24>}, {pipeline_mode = #tpu.pipeline_mode<synchronous>, transform_indices = @transform_3, window_bounds = array<i64: 3, 4, 8>}, {pipeline_mode = #tpu.pipeline_mode<synchronous>, transform_indices = @transform_4, window_bounds = array<i64: 1, 8>}, {pipeline_mode = #tpu.pipeline_mode<synchronous>, transform_indices = @transform_5, window_bounds = array<i64: 3, 4, 8>}, {pipeline_mode = #tpu.pipeline_mode<synchronous>, transform_indices = @transform_6, window_bounds = array<i64: 1, 8>}, {pipeline_mode = #tpu.pipeline_mode<synchronous>, transform_indices = @transform_7, window_bounds = array<i64: 9, 4, 8>}, {pipeline_mode = #tpu.pipeline_mode<synchronous>, transform_indices = @transform_8, window_bounds = array<i64: 1, 8>}, {pipeline_mode = #tpu.pipeline_mode<synchronous>, transform_indices = @transform_9, window_bounds = array<i64: 3, 8, 8>}, {pipeline_mode = #tpu.pipeline_mode<synchronous>, transform_indices = @transform_10, window_bounds = array<i64: 1, 8>}, {pipeline_mode = #tpu.pipeline_mode<synchronous>, transform_indices = @transform_11, window_bounds = array<i64: 9, 4, 8>}, {pipeline_mode = #tpu.pipeline_mode<synchronous>, transform_indices = @transform_12, window_bounds = array<i64: 1, 8>}, {pipeline_mode = #tpu.pipeline_mode<synchronous>, transform_indices = @transform_13, window_bounds = array<i64: 3, 8, 8>}, {pipeline_mode = #tpu.pipeline_mode<synchronous>, transform_indices = @transform_14, window_bounds = array<i64: 1, 8>}, {pipeline_mode = #tpu.pipeline_mode<synchronous>, transform_indices = @transform_15, window_bounds = array<i64: 4, 8>}, {pipeline_mode = #tpu.pipeline_mode<synchronous>, transform_indices = @transform_16, window_bounds = array<i64: 1, 8>}, {transform_indices = @transform_17, window_bounds = array<i64: 1, 16, 16, 48>}]} {
    %c0 = arith.constant 0 : index
    %c0_0 = arith.constant 0 : index
    %c0_1 = arith.constant 0 : index
    %c0_2 = arith.constant 0 : index
    %0 = vector.load %arg1[%c0, %c0_0, %c0_1, %c0_2] : memref<1x16x16x4xf32, #tpu.memory_space<vmem>>, vector<1x16x16x4xf32>
    %1 = vector.shape_cast %0 : vector<1x16x16x4xf32> to vector<16x16x4xf32>
    %2 = vector.shape_cast %1 : vector<16x16x4xf32> to vector<256x4xf32>
    %3 = arith.truncf %2 : vector<256x4xf32> to vector<256x4xbf16>
    %c0_3 = arith.constant 0 : index
    %c0_4 = arith.constant 0 : index
    %4 = vector.load %arg2[%c0_3, %c0_4] : memref<4x24xbf16, #tpu.memory_space<vmem>>, vector<4x24xbf16>
    %cst = arith.constant dense<0.000000e+00> : vector<256x24xf32>
    %5 = tpu.matmul %3, %4, %cst {dimension_numbers = #tpu.dot_dimension_numbers<[1], [0], [0], [1], [0, 0, 1, 1], [], []>} : vector<256x4xbf16>, vector<4x24xbf16>, vector<256x24xf32> -> vector<256x24xf32>
    %c0_5 = arith.constant 0 : index
    %c0_6 = arith.constant 0 : index
    %6 = vector.load %arg3[%c0_5, %c0_6] : memref<1x24xf32, #tpu.memory_space<vmem>>, vector<1x24xf32>
    %7 = vector.broadcast %6 : vector<1x24xf32> to vector<256x24xf32>
    %8 = arith.addf %5, %7 : vector<256x24xf32>
    %cst_7 = arith.constant 0.000000e+00 : f32
    %9 = vector.broadcast %cst_7 : f32 to vector<256x24xf32>
    %10 = arith.maximumf %8, %9 : vector<256x24xf32>
    %11 = vector.extract_strided_slice %10 {offsets = [0, 0], sizes = [256, 8], strides = [1, 1]} : vector<256x24xf32> to vector<256x8xf32>
    %12 = vector.shape_cast %11 : vector<256x8xf32> to vector<16x16x8xf32>
    %c0_8 = arith.constant 0 : index
    %c0_9 = arith.constant 0 : index
    %c0_10 = arith.constant 0 : index
    %c0_11 = arith.constant 0 : index
    %13 = vector.load %arg18[%c0_8, %c0_9, %c0_10, %c0_11] : memref<1x16x16x48xf32, #tpu.memory_space<vmem>>, vector<1x16x16x8xf32>
    %14 = vector.shape_cast %13 : vector<1x16x16x8xf32> to vector<16x16x8xf32>
    %15 = vector.shape_cast %12 : vector<16x16x8xf32> to vector<1x16x16x8xf32>
    tpu.vector_store %arg18[%c0_8, %c0_9, %c0_10, %c0_11], %15 {strides = array<i32>} : memref<1x16x16x48xf32, #tpu.memory_space<vmem>>, vector<1x16x16x8xf32>,
    %16 = vector.extract_strided_slice %10 {offsets = [0, 8], sizes = [256, 4], strides = [1, 1]} : vector<256x24xf32> to vector<256x4xf32>
    %cst_12 = arith.constant 0.000000e+00 : f32
    %17 = vector.broadcast %cst_12 : f32 to vector<18x32x8xf32>
    %c0_13 = arith.constant 0 : index
    %c0_14 = arith.constant 0 : index
    %c0_15 = arith.constant 0 : index
    %18 = vector.load %arg19[%c0_13, %c0_14, %c0_15] : memref<18x32x8xf32, #tpu.memory_space<vmem>>, vector<18x32x8xf32>
    tpu.vector_store %arg19[%c0_13, %c0_14, %c0_15], %17 {strides = array<i32>} : memref<18x32x8xf32, #tpu.memory_space<vmem>>, vector<18x32x8xf32>,
    %19 = vector.shape_cast %16 : vector<256x4xf32> to vector<16x16x4xf32>
    %c1 = arith.constant 1 : index
    %c8 = arith.constant 8 : index
    %c0_16 = arith.constant 0 : index
    %20 = vector.load %arg19[%c1, %c8, %c0_16] : memref<18x32x8xf32, #tpu.memory_space<vmem>>, vector<16x16x4xf32>
    tpu.vector_store %arg19[%c1, %c8, %c0_16], %19 {strides = array<i32>} : memref<18x32x8xf32, #tpu.memory_space<vmem>>, vector<16x16x4xf32>,
    %cst_17 = arith.constant 0.000000e+00 : f32
    %21 = vector.broadcast %cst_17 : f32 to vector<256x8xf32>
    %c1_18 = arith.constant 1 : index
    %c7 = arith.constant 7 : index
    %c0_19 = arith.constant 0 : index
    %22 = vector.load %arg19[%c1_18, %c7, %c0_19] : memref<18x32x8xf32, #tpu.memory_space<vmem>>, vector<16x16x4xf32>
    %23 = vector.shape_cast %22 : vector<16x16x4xf32> to vector<256x4xf32>
    %24 = arith.truncf %23 : vector<256x4xf32> to vector<256x4xbf16>
    %c0_20 = arith.constant 0 : index
    %c0_21 = arith.constant 0 : index
    %c0_22 = arith.constant 0 : index
    %25 = vector.load %arg4[%c0_20, %c0_21, %c0_22] : memref<3x4x8xbf16, #tpu.memory_space<vmem>>, vector<1x4x8xbf16>
    %26 = vector.shape_cast %25 : vector<1x4x8xbf16> to vector<4x8xbf16>
    %cst_23 = arith.constant dense<0.000000e+00> : vector<256x8xf32>
    %27 = tpu.matmul %24, %26, %cst_23 {dimension_numbers = #tpu.dot_dimension_numbers<[1], [0], [0], [1], [0, 0, 1, 1], [], []>} : vector<256x4xbf16>, vector<4x8xbf16>, vector<256x8xf32> -> vector<256x8xf32>
    %28 = arith.addf %21, %27 : vector<256x8xf32>
    %c1_24 = arith.constant 1 : index
    %c8_25 = arith.constant 8 : index
    %c0_26 = arith.constant 0 : index
    %29 = vector.load %arg19[%c1_24, %c8_25, %c0_26] : memref<18x32x8xf32, #tpu.memory_space<vmem>>, vector<16x16x4xf32>
    %30 = vector.shape_cast %29 : vector<16x16x4xf32> to vector<256x4xf32>
    %31 = arith.truncf %30 : vector<256x4xf32> to vector<256x4xbf16>
    %c1_27 = arith.constant 1 : index
    %c0_28 = arith.constant 0 : index
    %c0_29 = arith.constant 0 : index
    %32 = vector.load %arg4[%c1_27, %c0_28, %c0_29] : memref<3x4x8xbf16, #tpu.memory_space<vmem>>, vector<1x4x8xbf16>
    %33 = vector.shape_cast %32 : vector<1x4x8xbf16> to vector<4x8xbf16>
    %cst_30 = arith.constant dense<0.000000e+00> : vector<256x8xf32>
    %34 = tpu.matmul %31, %33, %cst_30 {dimension_numbers = #tpu.dot_dimension_numbers<[1], [0], [0], [1], [0, 0, 1, 1], [], []>} : vector<256x4xbf16>, vector<4x8xbf16>, vector<256x8xf32> -> vector<256x8xf32>
    %35 = arith.addf %28, %34 : vector<256x8xf32>
    %c1_31 = arith.constant 1 : index
    %c9 = arith.constant 9 : index
    %c0_32 = arith.constant 0 : index
    %36 = vector.load %arg19[%c1_31, %c9, %c0_32] : memref<18x32x8xf32, #tpu.memory_space<vmem>>, vector<16x16x4xf32>
    %37 = vector.shape_cast %36 : vector<16x16x4xf32> to vector<256x4xf32>
    %38 = arith.truncf %37 : vector<256x4xf32> to vector<256x4xbf16>
    %c2 = arith.constant 2 : index
    %c0_33 = arith.constant 0 : index
    %c0_34 = arith.constant 0 : index
    %39 = vector.load %arg4[%c2, %c0_33, %c0_34] : memref<3x4x8xbf16, #tpu.memory_space<vmem>>, vector<1x4x8xbf16>
    %40 = vector.shape_cast %39 : vector<1x4x8xbf16> to vector<4x8xbf16>
    %cst_35 = arith.constant dense<0.000000e+00> : vector<256x8xf32>
    %41 = tpu.matmul %38, %40, %cst_35 {dimension_numbers = #tpu.dot_dimension_numbers<[1], [0], [0], [1], [0, 0, 1, 1], [], []>} : vector<256x4xbf16>, vector<4x8xbf16>, vector<256x8xf32> -> vector<256x8xf32>
    %42 = arith.addf %35, %41 : vector<256x8xf32>
    %c0_36 = arith.constant 0 : index
    %c0_37 = arith.constant 0 : index
    %43 = vector.load %arg5[%c0_36, %c0_37] : memref<1x8xf32, #tpu.memory_space<vmem>>, vector<1x8xf32>
    %44 = vector.broadcast %43 : vector<1x8xf32> to vector<256x8xf32>
    %45 = arith.addf %42, %44 : vector<256x8xf32>
    %cst_38 = arith.constant 0.000000e+00 : f32
    %46 = vector.broadcast %cst_38 : f32 to vector<256x8xf32>
    %47 = arith.maximumf %45, %46 : vector<256x8xf32>
    %48 = vector.shape_cast %47 : vector<256x8xf32> to vector<16x16x8xf32>
    %c0_39 = arith.constant 0 : index
    %c0_40 = arith.constant 0 : index
    %c0_41 = arith.constant 0 : index
    %c8_42 = arith.constant 8 : index
    %49 = vector.load %arg18[%c0_39, %c0_40, %c0_41, %c8_42] : memref<1x16x16x48xf32, #tpu.memory_space<vmem>>, vector<1x16x16x8xf32>
    %50 = vector.shape_cast %49 : vector<1x16x16x8xf32> to vector<16x16x8xf32>
    %51 = vector.shape_cast %48 : vector<16x16x8xf32> to vector<1x16x16x8xf32>
    tpu.vector_store %arg18[%c0_39, %c0_40, %c0_41, %c8_42], %51 {strides = array<i32>} : memref<1x16x16x48xf32, #tpu.memory_space<vmem>>, vector<1x16x16x8xf32>,
    %52 = vector.extract_strided_slice %10 {offsets = [0, 12], sizes = [256, 4], strides = [1, 1]} : vector<256x24xf32> to vector<256x4xf32>
    %cst_43 = arith.constant 0.000000e+00 : f32
    %53 = vector.broadcast %cst_43 : f32 to vector<18x32x8xf32>
    %c0_44 = arith.constant 0 : index
    %c0_45 = arith.constant 0 : index
    %c0_46 = arith.constant 0 : index
    %54 = vector.load %arg19[%c0_44, %c0_45, %c0_46] : memref<18x32x8xf32, #tpu.memory_space<vmem>>, vector<18x32x8xf32>
    tpu.vector_store %arg19[%c0_44, %c0_45, %c0_46], %53 {strides = array<i32>} : memref<18x32x8xf32, #tpu.memory_space<vmem>>, vector<18x32x8xf32>,
    %55 = vector.shape_cast %52 : vector<256x4xf32> to vector<16x16x4xf32>
    %c1_47 = arith.constant 1 : index
    %c8_48 = arith.constant 8 : index
    %c0_49 = arith.constant 0 : index
    %56 = vector.load %arg19[%c1_47, %c8_48, %c0_49] : memref<18x32x8xf32, #tpu.memory_space<vmem>>, vector<16x16x4xf32>
    tpu.vector_store %arg19[%c1_47, %c8_48, %c0_49], %55 {strides = array<i32>} : memref<18x32x8xf32, #tpu.memory_space<vmem>>, vector<16x16x4xf32>,
    %cst_50 = arith.constant 0.000000e+00 : f32
    %57 = vector.broadcast %cst_50 : f32 to vector<256x8xf32>
    %c0_51 = arith.constant 0 : index
    %c8_52 = arith.constant 8 : index
    %c0_53 = arith.constant 0 : index
    %58 = vector.load %arg19[%c0_51, %c8_52, %c0_53] : memref<18x32x8xf32, #tpu.memory_space<vmem>>, vector<16x16x4xf32>
    %59 = vector.shape_cast %58 : vector<16x16x4xf32> to vector<256x4xf32>
    %60 = arith.truncf %59 : vector<256x4xf32> to vector<256x4xbf16>
    %c0_54 = arith.constant 0 : index
    %c0_55 = arith.constant 0 : index
    %c0_56 = arith.constant 0 : index
    %61 = vector.load %arg6[%c0_54, %c0_55, %c0_56] : memref<3x4x8xbf16, #tpu.memory_space<vmem>>, vector<1x4x8xbf16>
    %62 = vector.shape_cast %61 : vector<1x4x8xbf16> to vector<4x8xbf16>
    %cst_57 = arith.constant dense<0.000000e+00> : vector<256x8xf32>
    %63 = tpu.matmul %60, %62, %cst_57 {dimension_numbers = #tpu.dot_dimension_numbers<[1], [0], [0], [1], [0, 0, 1, 1], [], []>} : vector<256x4xbf16>, vector<4x8xbf16>, vector<256x8xf32> -> vector<256x8xf32>
    %64 = arith.addf %57, %63 : vector<256x8xf32>
    %c1_58 = arith.constant 1 : index
    %c8_59 = arith.constant 8 : index
    %c0_60 = arith.constant 0 : index
    %65 = vector.load %arg19[%c1_58, %c8_59, %c0_60] : memref<18x32x8xf32, #tpu.memory_space<vmem>>, vector<16x16x4xf32>
    %66 = vector.shape_cast %65 : vector<16x16x4xf32> to vector<256x4xf32>
    %67 = arith.truncf %66 : vector<256x4xf32> to vector<256x4xbf16>
    %c1_61 = arith.constant 1 : index
    %c0_62 = arith.constant 0 : index
    %c0_63 = arith.constant 0 : index
    %68 = vector.load %arg6[%c1_61, %c0_62, %c0_63] : memref<3x4x8xbf16, #tpu.memory_space<vmem>>, vector<1x4x8xbf16>
    %69 = vector.shape_cast %68 : vector<1x4x8xbf16> to vector<4x8xbf16>
    %cst_64 = arith.constant dense<0.000000e+00> : vector<256x8xf32>
    %70 = tpu.matmul %67, %69, %cst_64 {dimension_numbers = #tpu.dot_dimension_numbers<[1], [0], [0], [1], [0, 0, 1, 1], [], []>} : vector<256x4xbf16>, vector<4x8xbf16>, vector<256x8xf32> -> vector<256x8xf32>
    %71 = arith.addf %64, %70 : vector<256x8xf32>
    %c2_65 = arith.constant 2 : index
    %c8_66 = arith.constant 8 : index
    %c0_67 = arith.constant 0 : index
    %72 = vector.load %arg19[%c2_65, %c8_66, %c0_67] : memref<18x32x8xf32, #tpu.memory_space<vmem>>, vector<16x16x4xf32>
    %73 = vector.shape_cast %72 : vector<16x16x4xf32> to vector<256x4xf32>
    %74 = arith.truncf %73 : vector<256x4xf32> to vector<256x4xbf16>
    %c2_68 = arith.constant 2 : index
    %c0_69 = arith.constant 0 : index
    %c0_70 = arith.constant 0 : index
    %75 = vector.load %arg6[%c2_68, %c0_69, %c0_70] : memref<3x4x8xbf16, #tpu.memory_space<vmem>>, vector<1x4x8xbf16>
    %76 = vector.shape_cast %75 : vector<1x4x8xbf16> to vector<4x8xbf16>
    %cst_71 = arith.constant dense<0.000000e+00> : vector<256x8xf32>
    %77 = tpu.matmul %74, %76, %cst_71 {dimension_numbers = #tpu.dot_dimension_numbers<[1], [0], [0], [1], [0, 0, 1, 1], [], []>} : vector<256x4xbf16>, vector<4x8xbf16>, vector<256x8xf32> -> vector<256x8xf32>
    %78 = arith.addf %71, %77 : vector<256x8xf32>
    %c0_72 = arith.constant 0 : index
    %c0_73 = arith.constant 0 : index
    %79 = vector.load %arg7[%c0_72, %c0_73] : memref<1x8xf32, #tpu.memory_space<vmem>>, vector<1x8xf32>
    %80 = vector.broadcast %79 : vector<1x8xf32> to vector<256x8xf32>
    %81 = arith.addf %78, %80 : vector<256x8xf32>
    %cst_74 = arith.constant 0.000000e+00 : f32
    %82 = vector.broadcast %cst_74 : f32 to vector<256x8xf32>
    %83 = arith.maximumf %81, %82 : vector<256x8xf32>
    %84 = vector.shape_cast %83 : vector<256x8xf32> to vector<16x16x8xf32>
    %c0_75 = arith.constant 0 : index
    %c0_76 = arith.constant 0 : index
    %c0_77 = arith.constant 0 : index
    %c16 = arith.constant 16 : index
    %85 = vector.load %arg18[%c0_75, %c0_76, %c0_77, %c16] : memref<1x16x16x48xf32, #tpu.memory_space<vmem>>, vector<1x16x16x8xf32>
    %86 = vector.shape_cast %85 : vector<1x16x16x8xf32> to vector<16x16x8xf32>
    %87 = vector.shape_cast %84 : vector<16x16x8xf32> to vector<1x16x16x8xf32>
    tpu.vector_store %arg18[%c0_75, %c0_76, %c0_77, %c16], %87 {strides = array<i32>} : memref<1x16x16x48xf32, #tpu.memory_space<vmem>>, vector<1x16x16x8xf32>,
    %88 = vector.extract_strided_slice %10 {offsets = [0, 16], sizes = [256, 4], strides = [1, 1]} : vector<256x24xf32> to vector<256x4xf32>
    %cst_78 = arith.constant 0.000000e+00 : f32
    %89 = vector.broadcast %cst_78 : f32 to vector<18x32x8xf32>
    %c0_79 = arith.constant 0 : index
    %c0_80 = arith.constant 0 : index
    %c0_81 = arith.constant 0 : index
    %90 = vector.load %arg19[%c0_79, %c0_80, %c0_81] : memref<18x32x8xf32, #tpu.memory_space<vmem>>, vector<18x32x8xf32>
    tpu.vector_store %arg19[%c0_79, %c0_80, %c0_81], %89 {strides = array<i32>} : memref<18x32x8xf32, #tpu.memory_space<vmem>>, vector<18x32x8xf32>,
    %91 = vector.shape_cast %88 : vector<256x4xf32> to vector<16x16x4xf32>
    %c1_82 = arith.constant 1 : index
    %c8_83 = arith.constant 8 : index
    %c0_84 = arith.constant 0 : index
    %92 = vector.load %arg19[%c1_82, %c8_83, %c0_84] : memref<18x32x8xf32, #tpu.memory_space<vmem>>, vector<16x16x4xf32>
    tpu.vector_store %arg19[%c1_82, %c8_83, %c0_84], %91 {strides = array<i32>} : memref<18x32x8xf32, #tpu.memory_space<vmem>>, vector<16x16x4xf32>,
    %cst_85 = arith.constant 0.000000e+00 : f32
    %93 = vector.broadcast %cst_85 : f32 to vector<256x8xf32>
    %c0_86 = arith.constant 0 : index
    %c7_87 = arith.constant 7 : index
    %c0_88 = arith.constant 0 : index
    %94 = vector.load %arg19[%c0_86, %c7_87, %c0_88] : memref<18x32x8xf32, #tpu.memory_space<vmem>>, vector<16x16x4xf32>
    %95 = vector.shape_cast %94 : vector<16x16x4xf32> to vector<256x4xf32>
    %96 = arith.truncf %95 : vector<256x4xf32> to vector<256x4xbf16>
    %c0_89 = arith.constant 0 : index
    %c0_90 = arith.constant 0 : index
    %c0_91 = arith.constant 0 : index
    %97 = vector.load %arg8[%c0_89, %c0_90, %c0_91] : memref<9x4x8xbf16, #tpu.memory_space<vmem>>, vector<1x4x8xbf16>
    %98 = vector.shape_cast %97 : vector<1x4x8xbf16> to vector<4x8xbf16>
    %cst_92 = arith.constant dense<0.000000e+00> : vector<256x8xf32>
    %99 = tpu.matmul %96, %98, %cst_92 {dimension_numbers = #tpu.dot_dimension_numbers<[1], [0], [0], [1], [0, 0, 1, 1], [], []>} : vector<256x4xbf16>, vector<4x8xbf16>, vector<256x8xf32> -> vector<256x8xf32>
    %100 = arith.addf %93, %99 : vector<256x8xf32>
    %c0_93 = arith.constant 0 : index
    %c8_94 = arith.constant 8 : index
    %c0_95 = arith.constant 0 : index
    %101 = vector.load %arg19[%c0_93, %c8_94, %c0_95] : memref<18x32x8xf32, #tpu.memory_space<vmem>>, vector<16x16x4xf32>
    %102 = vector.shape_cast %101 : vector<16x16x4xf32> to vector<256x4xf32>
    %103 = arith.truncf %102 : vector<256x4xf32> to vector<256x4xbf16>
    %c1_96 = arith.constant 1 : index
    %c0_97 = arith.constant 0 : index
    %c0_98 = arith.constant 0 : index
    %104 = vector.load %arg8[%c1_96, %c0_97, %c0_98] : memref<9x4x8xbf16, #tpu.memory_space<vmem>>, vector<1x4x8xbf16>
    %105 = vector.shape_cast %104 : vector<1x4x8xbf16> to vector<4x8xbf16>
    %cst_99 = arith.constant dense<0.000000e+00> : vector<256x8xf32>
    %106 = tpu.matmul %103, %105, %cst_99 {dimension_numbers = #tpu.dot_dimension_numbers<[1], [0], [0], [1], [0, 0, 1, 1], [], []>} : vector<256x4xbf16>, vector<4x8xbf16>, vector<256x8xf32> -> vector<256x8xf32>
    %107 = arith.addf %100, %106 : vector<256x8xf32>
    %c0_100 = arith.constant 0 : index
    %c9_101 = arith.constant 9 : index
    %c0_102 = arith.constant 0 : index
    %108 = vector.load %arg19[%c0_100, %c9_101, %c0_102] : memref<18x32x8xf32, #tpu.memory_space<vmem>>, vector<16x16x4xf32>
    %109 = vector.shape_cast %108 : vector<16x16x4xf32> to vector<256x4xf32>
    %110 = arith.truncf %109 : vector<256x4xf32> to vector<256x4xbf16>
    %c2_103 = arith.constant 2 : index
    %c0_104 = arith.constant 0 : index
    %c0_105 = arith.constant 0 : index
    %111 = vector.load %arg8[%c2_103, %c0_104, %c0_105] : memref<9x4x8xbf16, #tpu.memory_space<vmem>>, vector<1x4x8xbf16>
    %112 = vector.shape_cast %111 : vector<1x4x8xbf16> to vector<4x8xbf16>
    %cst_106 = arith.constant dense<0.000000e+00> : vector<256x8xf32>
    %113 = tpu.matmul %110, %112, %cst_106 {dimension_numbers = #tpu.dot_dimension_numbers<[1], [0], [0], [1], [0, 0, 1, 1], [], []>} : vector<256x4xbf16>, vector<4x8xbf16>, vector<256x8xf32> -> vector<256x8xf32>
    %114 = arith.addf %107, %113 : vector<256x8xf32>
    %c1_107 = arith.constant 1 : index
    %c7_108 = arith.constant 7 : index
    %c0_109 = arith.constant 0 : index
    %115 = vector.load %arg19[%c1_107, %c7_108, %c0_109] : memref<18x32x8xf32, #tpu.memory_space<vmem>>, vector<16x16x4xf32>
    %116 = vector.shape_cast %115 : vector<16x16x4xf32> to vector<256x4xf32>
    %117 = arith.truncf %116 : vector<256x4xf32> to vector<256x4xbf16>
    %c3 = arith.constant 3 : index
    %c0_110 = arith.constant 0 : index
    %c0_111 = arith.constant 0 : index
    %118 = vector.load %arg8[%c3, %c0_110, %c0_111] : memref<9x4x8xbf16, #tpu.memory_space<vmem>>, vector<1x4x8xbf16>
    %119 = vector.shape_cast %118 : vector<1x4x8xbf16> to vector<4x8xbf16>
    %cst_112 = arith.constant dense<0.000000e+00> : vector<256x8xf32>
    %120 = tpu.matmul %117, %119, %cst_112 {dimension_numbers = #tpu.dot_dimension_numbers<[1], [0], [0], [1], [0, 0, 1, 1], [], []>} : vector<256x4xbf16>, vector<4x8xbf16>, vector<256x8xf32> -> vector<256x8xf32>
    %121 = arith.addf %114, %120 : vector<256x8xf32>
    %c1_113 = arith.constant 1 : index
    %c8_114 = arith.constant 8 : index
    %c0_115 = arith.constant 0 : index
    %122 = vector.load %arg19[%c1_113, %c8_114, %c0_115] : memref<18x32x8xf32, #tpu.memory_space<vmem>>, vector<16x16x4xf32>
    %123 = vector.shape_cast %122 : vector<16x16x4xf32> to vector<256x4xf32>
    %124 = arith.truncf %123 : vector<256x4xf32> to vector<256x4xbf16>
    %c4 = arith.constant 4 : index
    %c0_116 = arith.constant 0 : index
    %c0_117 = arith.constant 0 : index
    %125 = vector.load %arg8[%c4, %c0_116, %c0_117] : memref<9x4x8xbf16, #tpu.memory_space<vmem>>, vector<1x4x8xbf16>
    %126 = vector.shape_cast %125 : vector<1x4x8xbf16> to vector<4x8xbf16>
    %cst_118 = arith.constant dense<0.000000e+00> : vector<256x8xf32>
    %127 = tpu.matmul %124, %126, %cst_118 {dimension_numbers = #tpu.dot_dimension_numbers<[1], [0], [0], [1], [0, 0, 1, 1], [], []>} : vector<256x4xbf16>, vector<4x8xbf16>, vector<256x8xf32> -> vector<256x8xf32>
    %128 = arith.addf %121, %127 : vector<256x8xf32>
    %c1_119 = arith.constant 1 : index
    %c9_120 = arith.constant 9 : index
    %c0_121 = arith.constant 0 : index
    %129 = vector.load %arg19[%c1_119, %c9_120, %c0_121] : memref<18x32x8xf32, #tpu.memory_space<vmem>>, vector<16x16x4xf32>
    %130 = vector.shape_cast %129 : vector<16x16x4xf32> to vector<256x4xf32>
    %131 = arith.truncf %130 : vector<256x4xf32> to vector<256x4xbf16>
    %c5 = arith.constant 5 : index
    %c0_122 = arith.constant 0 : index
    %c0_123 = arith.constant 0 : index
    %132 = vector.load %arg8[%c5, %c0_122, %c0_123] : memref<9x4x8xbf16, #tpu.memory_space<vmem>>, vector<1x4x8xbf16>
    %133 = vector.shape_cast %132 : vector<1x4x8xbf16> to vector<4x8xbf16>
    %cst_124 = arith.constant dense<0.000000e+00> : vector<256x8xf32>
    %134 = tpu.matmul %131, %133, %cst_124 {dimension_numbers = #tpu.dot_dimension_numbers<[1], [0], [0], [1], [0, 0, 1, 1], [], []>} : vector<256x4xbf16>, vector<4x8xbf16>, vector<256x8xf32> -> vector<256x8xf32>
    %135 = arith.addf %128, %134 : vector<256x8xf32>
    %c2_125 = arith.constant 2 : index
    %c7_126 = arith.constant 7 : index
    %c0_127 = arith.constant 0 : index
    %136 = vector.load %arg19[%c2_125, %c7_126, %c0_127] : memref<18x32x8xf32, #tpu.memory_space<vmem>>, vector<16x16x4xf32>
    %137 = vector.shape_cast %136 : vector<16x16x4xf32> to vector<256x4xf32>
    %138 = arith.truncf %137 : vector<256x4xf32> to vector<256x4xbf16>
    %c6 = arith.constant 6 : index
    %c0_128 = arith.constant 0 : index
    %c0_129 = arith.constant 0 : index
    %139 = vector.load %arg8[%c6, %c0_128, %c0_129] : memref<9x4x8xbf16, #tpu.memory_space<vmem>>, vector<1x4x8xbf16>
    %140 = vector.shape_cast %139 : vector<1x4x8xbf16> to vector<4x8xbf16>
    %cst_130 = arith.constant dense<0.000000e+00> : vector<256x8xf32>
    %141 = tpu.matmul %138, %140, %cst_130 {dimension_numbers = #tpu.dot_dimension_numbers<[1], [0], [0], [1], [0, 0, 1, 1], [], []>} : vector<256x4xbf16>, vector<4x8xbf16>, vector<256x8xf32> -> vector<256x8xf32>
    %142 = arith.addf %135, %141 : vector<256x8xf32>
    %c2_131 = arith.constant 2 : index
    %c8_132 = arith.constant 8 : index
    %c0_133 = arith.constant 0 : index
    %143 = vector.load %arg19[%c2_131, %c8_132, %c0_133] : memref<18x32x8xf32, #tpu.memory_space<vmem>>, vector<16x16x4xf32>
    %144 = vector.shape_cast %143 : vector<16x16x4xf32> to vector<256x4xf32>
    %145 = arith.truncf %144 : vector<256x4xf32> to vector<256x4xbf16>
    %c7_134 = arith.constant 7 : index
    %c0_135 = arith.constant 0 : index
    %c0_136 = arith.constant 0 : index
    %146 = vector.load %arg8[%c7_134, %c0_135, %c0_136] : memref<9x4x8xbf16, #tpu.memory_space<vmem>>, vector<1x4x8xbf16>
    %147 = vector.shape_cast %146 : vector<1x4x8xbf16> to vector<4x8xbf16>
    %cst_137 = arith.constant dense<0.000000e+00> : vector<256x8xf32>
    %148 = tpu.matmul %145, %147, %cst_137 {dimension_numbers = #tpu.dot_dimension_numbers<[1], [0], [0], [1], [0, 0, 1, 1], [], []>} : vector<256x4xbf16>, vector<4x8xbf16>, vector<256x8xf32> -> vector<256x8xf32>
    %149 = arith.addf %142, %148 : vector<256x8xf32>
    %c2_138 = arith.constant 2 : index
    %c9_139 = arith.constant 9 : index
    %c0_140 = arith.constant 0 : index
    %150 = vector.load %arg19[%c2_138, %c9_139, %c0_140] : memref<18x32x8xf32, #tpu.memory_space<vmem>>, vector<16x16x4xf32>
    %151 = vector.shape_cast %150 : vector<16x16x4xf32> to vector<256x4xf32>
    %152 = arith.truncf %151 : vector<256x4xf32> to vector<256x4xbf16>
    %c8_141 = arith.constant 8 : index
    %c0_142 = arith.constant 0 : index
    %c0_143 = arith.constant 0 : index
    %153 = vector.load %arg8[%c8_141, %c0_142, %c0_143] : memref<9x4x8xbf16, #tpu.memory_space<vmem>>, vector<1x4x8xbf16>
    %154 = vector.shape_cast %153 : vector<1x4x8xbf16> to vector<4x8xbf16>
    %cst_144 = arith.constant dense<0.000000e+00> : vector<256x8xf32>
    %155 = tpu.matmul %152, %154, %cst_144 {dimension_numbers = #tpu.dot_dimension_numbers<[1], [0], [0], [1], [0, 0, 1, 1], [], []>} : vector<256x4xbf16>, vector<4x8xbf16>, vector<256x8xf32> -> vector<256x8xf32>
    %156 = arith.addf %149, %155 : vector<256x8xf32>
    %c0_145 = arith.constant 0 : index
    %c0_146 = arith.constant 0 : index
    %157 = vector.load %arg9[%c0_145, %c0_146] : memref<1x8xf32, #tpu.memory_space<vmem>>, vector<1x8xf32>
    %158 = vector.broadcast %157 : vector<1x8xf32> to vector<256x8xf32>
    %159 = arith.addf %156, %158 : vector<256x8xf32>
    %cst_147 = arith.constant 0.000000e+00 : f32
    %160 = vector.broadcast %cst_147 : f32 to vector<256x8xf32>
    %161 = arith.maximumf %159, %160 : vector<256x8xf32>
    %cst_148 = arith.constant 0.000000e+00 : f32
    %162 = vector.broadcast %cst_148 : f32 to vector<18x32x8xf32>
    %c0_149 = arith.constant 0 : index
    %c0_150 = arith.constant 0 : index
    %c0_151 = arith.constant 0 : index
    %163 = vector.load %arg19[%c0_149, %c0_150, %c0_151] : memref<18x32x8xf32, #tpu.memory_space<vmem>>, vector<18x32x8xf32>
    tpu.vector_store %arg19[%c0_149, %c0_150, %c0_151], %162 {strides = array<i32>} : memref<18x32x8xf32, #tpu.memory_space<vmem>>, vector<18x32x8xf32>,
    %164 = vector.shape_cast %161 : vector<256x8xf32> to vector<16x16x8xf32>
    %c1_152 = arith.constant 1 : index
    %c8_153 = arith.constant 8 : index
    %c0_154 = arith.constant 0 : index
    %165 = vector.load %arg19[%c1_152, %c8_153, %c0_154] : memref<18x32x8xf32, #tpu.memory_space<vmem>>, vector<16x16x8xf32>
    tpu.vector_store %arg19[%c1_152, %c8_153, %c0_154], %164 {strides = array<i32>} : memref<18x32x8xf32, #tpu.memory_space<vmem>>, vector<16x16x8xf32>,
    %cst_155 = arith.constant 0.000000e+00 : f32
    %166 = vector.broadcast %cst_155 : f32 to vector<256x8xf32>
    %c1_156 = arith.constant 1 : index
    %c7_157 = arith.constant 7 : index
    %c0_158 = arith.constant 0 : index
    %167 = vector.load %arg19[%c1_156, %c7_157, %c0_158] : memref<18x32x8xf32, #tpu.memory_space<vmem>>, vector<16x16x8xf32>
    %168 = vector.shape_cast %167 : vector<16x16x8xf32> to vector<256x8xf32>
    %169 = arith.truncf %168 : vector<256x8xf32> to vector<256x8xbf16>
    %c0_159 = arith.constant 0 : index
    %c0_160 = arith.constant 0 : index
    %c0_161 = arith.constant 0 : index
    %170 = vector.load %arg10[%c0_159, %c0_160, %c0_161] : memref<3x8x8xbf16, #tpu.memory_space<vmem>>, vector<1x8x8xbf16>
    %171 = vector.shape_cast %170 : vector<1x8x8xbf16> to vector<8x8xbf16>
    %cst_162 = arith.constant dense<0.000000e+00> : vector<256x8xf32>
    %172 = tpu.matmul %169, %171, %cst_162 {dimension_numbers = #tpu.dot_dimension_numbers<[1], [0], [0], [1], [0, 0, 1, 1], [], []>} : vector<256x8xbf16>, vector<8x8xbf16>, vector<256x8xf32> -> vector<256x8xf32>
    %173 = arith.addf %166, %172 : vector<256x8xf32>
    %c1_163 = arith.constant 1 : index
    %c8_164 = arith.constant 8 : index
    %c0_165 = arith.constant 0 : index
    %174 = vector.load %arg19[%c1_163, %c8_164, %c0_165] : memref<18x32x8xf32, #tpu.memory_space<vmem>>, vector<16x16x8xf32>
    %175 = vector.shape_cast %174 : vector<16x16x8xf32> to vector<256x8xf32>
    %176 = arith.truncf %175 : vector<256x8xf32> to vector<256x8xbf16>
    %c1_166 = arith.constant 1 : index
    %c0_167 = arith.constant 0 : index
    %c0_168 = arith.constant 0 : index
    %177 = vector.load %arg10[%c1_166, %c0_167, %c0_168] : memref<3x8x8xbf16, #tpu.memory_space<vmem>>, vector<1x8x8xbf16>
    %178 = vector.shape_cast %177 : vector<1x8x8xbf16> to vector<8x8xbf16>
    %cst_169 = arith.constant dense<0.000000e+00> : vector<256x8xf32>
    %179 = tpu.matmul %176, %178, %cst_169 {dimension_numbers = #tpu.dot_dimension_numbers<[1], [0], [0], [1], [0, 0, 1, 1], [], []>} : vector<256x8xbf16>, vector<8x8xbf16>, vector<256x8xf32> -> vector<256x8xf32>
    %180 = arith.addf %173, %179 : vector<256x8xf32>
    %c1_170 = arith.constant 1 : index
    %c9_171 = arith.constant 9 : index
    %c0_172 = arith.constant 0 : index
    %181 = vector.load %arg19[%c1_170, %c9_171, %c0_172] : memref<18x32x8xf32, #tpu.memory_space<vmem>>, vector<16x16x8xf32>
    %182 = vector.shape_cast %181 : vector<16x16x8xf32> to vector<256x8xf32>
    %183 = arith.truncf %182 : vector<256x8xf32> to vector<256x8xbf16>
    %c2_173 = arith.constant 2 : index
    %c0_174 = arith.constant 0 : index
    %c0_175 = arith.constant 0 : index
    %184 = vector.load %arg10[%c2_173, %c0_174, %c0_175] : memref<3x8x8xbf16, #tpu.memory_space<vmem>>, vector<1x8x8xbf16>
    %185 = vector.shape_cast %184 : vector<1x8x8xbf16> to vector<8x8xbf16>
    %cst_176 = arith.constant dense<0.000000e+00> : vector<256x8xf32>
    %186 = tpu.matmul %183, %185, %cst_176 {dimension_numbers = #tpu.dot_dimension_numbers<[1], [0], [0], [1], [0, 0, 1, 1], [], []>} : vector<256x8xbf16>, vector<8x8xbf16>, vector<256x8xf32> -> vector<256x8xf32>
    %187 = arith.addf %180, %186 : vector<256x8xf32>
    %c0_177 = arith.constant 0 : index
    %c0_178 = arith.constant 0 : index
    %188 = vector.load %arg11[%c0_177, %c0_178] : memref<1x8xf32, #tpu.memory_space<vmem>>, vector<1x8xf32>
    %189 = vector.broadcast %188 : vector<1x8xf32> to vector<256x8xf32>
    %190 = arith.addf %187, %189 : vector<256x8xf32>
    %cst_179 = arith.constant 0.000000e+00 : f32
    %191 = vector.broadcast %cst_179 : f32 to vector<256x8xf32>
    %192 = arith.maximumf %190, %191 : vector<256x8xf32>
    %193 = vector.shape_cast %192 : vector<256x8xf32> to vector<16x16x8xf32>
    %c0_180 = arith.constant 0 : index
    %c0_181 = arith.constant 0 : index
    %c0_182 = arith.constant 0 : index
    %c24 = arith.constant 24 : index
    %194 = vector.load %arg18[%c0_180, %c0_181, %c0_182, %c24] : memref<1x16x16x48xf32, #tpu.memory_space<vmem>>, vector<1x16x16x8xf32>
    %195 = vector.shape_cast %194 : vector<1x16x16x8xf32> to vector<16x16x8xf32>
    %196 = vector.shape_cast %193 : vector<16x16x8xf32> to vector<1x16x16x8xf32>
    tpu.vector_store %arg18[%c0_180, %c0_181, %c0_182, %c24], %196 {strides = array<i32>} : memref<1x16x16x48xf32, #tpu.memory_space<vmem>>, vector<1x16x16x8xf32>,
    %197 = vector.extract_strided_slice %10 {offsets = [0, 20], sizes = [256, 4], strides = [1, 1]} : vector<256x24xf32> to vector<256x4xf32>
    %cst_183 = arith.constant 0.000000e+00 : f32
    %198 = vector.broadcast %cst_183 : f32 to vector<18x32x8xf32>
    %c0_184 = arith.constant 0 : index
    %c0_185 = arith.constant 0 : index
    %c0_186 = arith.constant 0 : index
    %199 = vector.load %arg19[%c0_184, %c0_185, %c0_186] : memref<18x32x8xf32, #tpu.memory_space<vmem>>, vector<18x32x8xf32>
    tpu.vector_store %arg19[%c0_184, %c0_185, %c0_186], %198 {strides = array<i32>} : memref<18x32x8xf32, #tpu.memory_space<vmem>>, vector<18x32x8xf32>,
    %200 = vector.shape_cast %197 : vector<256x4xf32> to vector<16x16x4xf32>
    %c1_187 = arith.constant 1 : index
    %c8_188 = arith.constant 8 : index
    %c0_189 = arith.constant 0 : index
    %201 = vector.load %arg19[%c1_187, %c8_188, %c0_189] : memref<18x32x8xf32, #tpu.memory_space<vmem>>, vector<16x16x4xf32>
    tpu.vector_store %arg19[%c1_187, %c8_188, %c0_189], %200 {strides = array<i32>} : memref<18x32x8xf32, #tpu.memory_space<vmem>>, vector<16x16x4xf32>,
    %cst_190 = arith.constant 0.000000e+00 : f32
    %202 = vector.broadcast %cst_190 : f32 to vector<256x8xf32>
    %c0_191 = arith.constant 0 : index
    %c7_192 = arith.constant 7 : index
    %c0_193 = arith.constant 0 : index
    %203 = vector.load %arg19[%c0_191, %c7_192, %c0_193] : memref<18x32x8xf32, #tpu.memory_space<vmem>>, vector<16x16x4xf32>
    %204 = vector.shape_cast %203 : vector<16x16x4xf32> to vector<256x4xf32>
    %205 = arith.truncf %204 : vector<256x4xf32> to vector<256x4xbf16>
    %c0_194 = arith.constant 0 : index
    %c0_195 = arith.constant 0 : index
    %c0_196 = arith.constant 0 : index
    %206 = vector.load %arg12[%c0_194, %c0_195, %c0_196] : memref<9x4x8xbf16, #tpu.memory_space<vmem>>, vector<1x4x8xbf16>
    %207 = vector.shape_cast %206 : vector<1x4x8xbf16> to vector<4x8xbf16>
    %cst_197 = arith.constant dense<0.000000e+00> : vector<256x8xf32>
    %208 = tpu.matmul %205, %207, %cst_197 {dimension_numbers = #tpu.dot_dimension_numbers<[1], [0], [0], [1], [0, 0, 1, 1], [], []>} : vector<256x4xbf16>, vector<4x8xbf16>, vector<256x8xf32> -> vector<256x8xf32>
    %209 = arith.addf %202, %208 : vector<256x8xf32>
    %c0_198 = arith.constant 0 : index
    %c8_199 = arith.constant 8 : index
    %c0_200 = arith.constant 0 : index
    %210 = vector.load %arg19[%c0_198, %c8_199, %c0_200] : memref<18x32x8xf32, #tpu.memory_space<vmem>>, vector<16x16x4xf32>
    %211 = vector.shape_cast %210 : vector<16x16x4xf32> to vector<256x4xf32>
    %212 = arith.truncf %211 : vector<256x4xf32> to vector<256x4xbf16>
    %c1_201 = arith.constant 1 : index
    %c0_202 = arith.constant 0 : index
    %c0_203 = arith.constant 0 : index
    %213 = vector.load %arg12[%c1_201, %c0_202, %c0_203] : memref<9x4x8xbf16, #tpu.memory_space<vmem>>, vector<1x4x8xbf16>
    %214 = vector.shape_cast %213 : vector<1x4x8xbf16> to vector<4x8xbf16>
    %cst_204 = arith.constant dense<0.000000e+00> : vector<256x8xf32>
    %215 = tpu.matmul %212, %214, %cst_204 {dimension_numbers = #tpu.dot_dimension_numbers<[1], [0], [0], [1], [0, 0, 1, 1], [], []>} : vector<256x4xbf16>, vector<4x8xbf16>, vector<256x8xf32> -> vector<256x8xf32>
    %216 = arith.addf %209, %215 : vector<256x8xf32>
    %c0_205 = arith.constant 0 : index
    %c9_206 = arith.constant 9 : index
    %c0_207 = arith.constant 0 : index
    %217 = vector.load %arg19[%c0_205, %c9_206, %c0_207] : memref<18x32x8xf32, #tpu.memory_space<vmem>>, vector<16x16x4xf32>
    %218 = vector.shape_cast %217 : vector<16x16x4xf32> to vector<256x4xf32>
    %219 = arith.truncf %218 : vector<256x4xf32> to vector<256x4xbf16>
    %c2_208 = arith.constant 2 : index
    %c0_209 = arith.constant 0 : index
    %c0_210 = arith.constant 0 : index
    %220 = vector.load %arg12[%c2_208, %c0_209, %c0_210] : memref<9x4x8xbf16, #tpu.memory_space<vmem>>, vector<1x4x8xbf16>
    %221 = vector.shape_cast %220 : vector<1x4x8xbf16> to vector<4x8xbf16>
    %cst_211 = arith.constant dense<0.000000e+00> : vector<256x8xf32>
    %222 = tpu.matmul %219, %221, %cst_211 {dimension_numbers = #tpu.dot_dimension_numbers<[1], [0], [0], [1], [0, 0, 1, 1], [], []>} : vector<256x4xbf16>, vector<4x8xbf16>, vector<256x8xf32> -> vector<256x8xf32>
    %223 = arith.addf %216, %222 : vector<256x8xf32>
    %c1_212 = arith.constant 1 : index
    %c7_213 = arith.constant 7 : index
    %c0_214 = arith.constant 0 : index
    %224 = vector.load %arg19[%c1_212, %c7_213, %c0_214] : memref<18x32x8xf32, #tpu.memory_space<vmem>>, vector<16x16x4xf32>
    %225 = vector.shape_cast %224 : vector<16x16x4xf32> to vector<256x4xf32>
    %226 = arith.truncf %225 : vector<256x4xf32> to vector<256x4xbf16>
    %c3_215 = arith.constant 3 : index
    %c0_216 = arith.constant 0 : index
    %c0_217 = arith.constant 0 : index
    %227 = vector.load %arg12[%c3_215, %c0_216, %c0_217] : memref<9x4x8xbf16, #tpu.memory_space<vmem>>, vector<1x4x8xbf16>
    %228 = vector.shape_cast %227 : vector<1x4x8xbf16> to vector<4x8xbf16>
    %cst_218 = arith.constant dense<0.000000e+00> : vector<256x8xf32>
    %229 = tpu.matmul %226, %228, %cst_218 {dimension_numbers = #tpu.dot_dimension_numbers<[1], [0], [0], [1], [0, 0, 1, 1], [], []>} : vector<256x4xbf16>, vector<4x8xbf16>, vector<256x8xf32> -> vector<256x8xf32>
    %230 = arith.addf %223, %229 : vector<256x8xf32>
    %c1_219 = arith.constant 1 : index
    %c8_220 = arith.constant 8 : index
    %c0_221 = arith.constant 0 : index
    %231 = vector.load %arg19[%c1_219, %c8_220, %c0_221] : memref<18x32x8xf32, #tpu.memory_space<vmem>>, vector<16x16x4xf32>
    %232 = vector.shape_cast %231 : vector<16x16x4xf32> to vector<256x4xf32>
    %233 = arith.truncf %232 : vector<256x4xf32> to vector<256x4xbf16>
    %c4_222 = arith.constant 4 : index
    %c0_223 = arith.constant 0 : index
    %c0_224 = arith.constant 0 : index
    %234 = vector.load %arg12[%c4_222, %c0_223, %c0_224] : memref<9x4x8xbf16, #tpu.memory_space<vmem>>, vector<1x4x8xbf16>
    %235 = vector.shape_cast %234 : vector<1x4x8xbf16> to vector<4x8xbf16>
    %cst_225 = arith.constant dense<0.000000e+00> : vector<256x8xf32>
    %236 = tpu.matmul %233, %235, %cst_225 {dimension_numbers = #tpu.dot_dimension_numbers<[1], [0], [0], [1], [0, 0, 1, 1], [], []>} : vector<256x4xbf16>, vector<4x8xbf16>, vector<256x8xf32> -> vector<256x8xf32>
    %237 = arith.addf %230, %236 : vector<256x8xf32>
    %c1_226 = arith.constant 1 : index
    %c9_227 = arith.constant 9 : index
    %c0_228 = arith.constant 0 : index
    %238 = vector.load %arg19[%c1_226, %c9_227, %c0_228] : memref<18x32x8xf32, #tpu.memory_space<vmem>>, vector<16x16x4xf32>
    %239 = vector.shape_cast %238 : vector<16x16x4xf32> to vector<256x4xf32>
    %240 = arith.truncf %239 : vector<256x4xf32> to vector<256x4xbf16>
    %c5_229 = arith.constant 5 : index
    %c0_230 = arith.constant 0 : index
    %c0_231 = arith.constant 0 : index
    %241 = vector.load %arg12[%c5_229, %c0_230, %c0_231] : memref<9x4x8xbf16, #tpu.memory_space<vmem>>, vector<1x4x8xbf16>
    %242 = vector.shape_cast %241 : vector<1x4x8xbf16> to vector<4x8xbf16>
    %cst_232 = arith.constant dense<0.000000e+00> : vector<256x8xf32>
    %243 = tpu.matmul %240, %242, %cst_232 {dimension_numbers = #tpu.dot_dimension_numbers<[1], [0], [0], [1], [0, 0, 1, 1], [], []>} : vector<256x4xbf16>, vector<4x8xbf16>, vector<256x8xf32> -> vector<256x8xf32>
    %244 = arith.addf %237, %243 : vector<256x8xf32>
    %c2_233 = arith.constant 2 : index
    %c7_234 = arith.constant 7 : index
    %c0_235 = arith.constant 0 : index
    %245 = vector.load %arg19[%c2_233, %c7_234, %c0_235] : memref<18x32x8xf32, #tpu.memory_space<vmem>>, vector<16x16x4xf32>
    %246 = vector.shape_cast %245 : vector<16x16x4xf32> to vector<256x4xf32>
    %247 = arith.truncf %246 : vector<256x4xf32> to vector<256x4xbf16>
    %c6_236 = arith.constant 6 : index
    %c0_237 = arith.constant 0 : index
    %c0_238 = arith.constant 0 : index
    %248 = vector.load %arg12[%c6_236, %c0_237, %c0_238] : memref<9x4x8xbf16, #tpu.memory_space<vmem>>, vector<1x4x8xbf16>
    %249 = vector.shape_cast %248 : vector<1x4x8xbf16> to vector<4x8xbf16>
    %cst_239 = arith.constant dense<0.000000e+00> : vector<256x8xf32>
    %250 = tpu.matmul %247, %249, %cst_239 {dimension_numbers = #tpu.dot_dimension_numbers<[1], [0], [0], [1], [0, 0, 1, 1], [], []>} : vector<256x4xbf16>, vector<4x8xbf16>, vector<256x8xf32> -> vector<256x8xf32>
    %251 = arith.addf %244, %250 : vector<256x8xf32>
    %c2_240 = arith.constant 2 : index
    %c8_241 = arith.constant 8 : index
    %c0_242 = arith.constant 0 : index
    %252 = vector.load %arg19[%c2_240, %c8_241, %c0_242] : memref<18x32x8xf32, #tpu.memory_space<vmem>>, vector<16x16x4xf32>
    %253 = vector.shape_cast %252 : vector<16x16x4xf32> to vector<256x4xf32>
    %254 = arith.truncf %253 : vector<256x4xf32> to vector<256x4xbf16>
    %c7_243 = arith.constant 7 : index
    %c0_244 = arith.constant 0 : index
    %c0_245 = arith.constant 0 : index
    %255 = vector.load %arg12[%c7_243, %c0_244, %c0_245] : memref<9x4x8xbf16, #tpu.memory_space<vmem>>, vector<1x4x8xbf16>
    %256 = vector.shape_cast %255 : vector<1x4x8xbf16> to vector<4x8xbf16>
    %cst_246 = arith.constant dense<0.000000e+00> : vector<256x8xf32>
    %257 = tpu.matmul %254, %256, %cst_246 {dimension_numbers = #tpu.dot_dimension_numbers<[1], [0], [0], [1], [0, 0, 1, 1], [], []>} : vector<256x4xbf16>, vector<4x8xbf16>, vector<256x8xf32> -> vector<256x8xf32>
    %258 = arith.addf %251, %257 : vector<256x8xf32>
    %c2_247 = arith.constant 2 : index
    %c9_248 = arith.constant 9 : index
    %c0_249 = arith.constant 0 : index
    %259 = vector.load %arg19[%c2_247, %c9_248, %c0_249] : memref<18x32x8xf32, #tpu.memory_space<vmem>>, vector<16x16x4xf32>
    %260 = vector.shape_cast %259 : vector<16x16x4xf32> to vector<256x4xf32>
    %261 = arith.truncf %260 : vector<256x4xf32> to vector<256x4xbf16>
    %c8_250 = arith.constant 8 : index
    %c0_251 = arith.constant 0 : index
    %c0_252 = arith.constant 0 : index
    %262 = vector.load %arg12[%c8_250, %c0_251, %c0_252] : memref<9x4x8xbf16, #tpu.memory_space<vmem>>, vector<1x4x8xbf16>
    %263 = vector.shape_cast %262 : vector<1x4x8xbf16> to vector<4x8xbf16>
    %cst_253 = arith.constant dense<0.000000e+00> : vector<256x8xf32>
    %264 = tpu.matmul %261, %263, %cst_253 {dimension_numbers = #tpu.dot_dimension_numbers<[1], [0], [0], [1], [0, 0, 1, 1], [], []>} : vector<256x4xbf16>, vector<4x8xbf16>, vector<256x8xf32> -> vector<256x8xf32>
    %265 = arith.addf %258, %264 : vector<256x8xf32>
    %c0_254 = arith.constant 0 : index
    %c0_255 = arith.constant 0 : index
    %266 = vector.load %arg13[%c0_254, %c0_255] : memref<1x8xf32, #tpu.memory_space<vmem>>, vector<1x8xf32>
    %267 = vector.broadcast %266 : vector<1x8xf32> to vector<256x8xf32>
    %268 = arith.addf %265, %267 : vector<256x8xf32>
    %cst_256 = arith.constant 0.000000e+00 : f32
    %269 = vector.broadcast %cst_256 : f32 to vector<256x8xf32>
    %270 = arith.maximumf %268, %269 : vector<256x8xf32>
    %cst_257 = arith.constant 0.000000e+00 : f32
    %271 = vector.broadcast %cst_257 : f32 to vector<18x32x8xf32>
    %c0_258 = arith.constant 0 : index
    %c0_259 = arith.constant 0 : index
    %c0_260 = arith.constant 0 : index
    %272 = vector.load %arg19[%c0_258, %c0_259, %c0_260] : memref<18x32x8xf32, #tpu.memory_space<vmem>>, vector<18x32x8xf32>
    tpu.vector_store %arg19[%c0_258, %c0_259, %c0_260], %271 {strides = array<i32>} : memref<18x32x8xf32, #tpu.memory_space<vmem>>, vector<18x32x8xf32>,
    %273 = vector.shape_cast %270 : vector<256x8xf32> to vector<16x16x8xf32>
    %c1_261 = arith.constant 1 : index
    %c8_262 = arith.constant 8 : index
    %c0_263 = arith.constant 0 : index
    %274 = vector.load %arg19[%c1_261, %c8_262, %c0_263] : memref<18x32x8xf32, #tpu.memory_space<vmem>>, vector<16x16x8xf32>
    tpu.vector_store %arg19[%c1_261, %c8_262, %c0_263], %273 {strides = array<i32>} : memref<18x32x8xf32, #tpu.memory_space<vmem>>, vector<16x16x8xf32>,
    %cst_264 = arith.constant 0.000000e+00 : f32
    %275 = vector.broadcast %cst_264 : f32 to vector<256x8xf32>
    %c0_265 = arith.constant 0 : index
    %c8_266 = arith.constant 8 : index
    %c0_267 = arith.constant 0 : index
    %276 = vector.load %arg19[%c0_265, %c8_266, %c0_267] : memref<18x32x8xf32, #tpu.memory_space<vmem>>, vector<16x16x8xf32>
    %277 = vector.shape_cast %276 : vector<16x16x8xf32> to vector<256x8xf32>
    %278 = arith.truncf %277 : vector<256x8xf32> to vector<256x8xbf16>
    %c0_268 = arith.constant 0 : index
    %c0_269 = arith.constant 0 : index
    %c0_270 = arith.constant 0 : index
    %279 = vector.load %arg14[%c0_268, %c0_269, %c0_270] : memref<3x8x8xbf16, #tpu.memory_space<vmem>>, vector<1x8x8xbf16>
    %280 = vector.shape_cast %279 : vector<1x8x8xbf16> to vector<8x8xbf16>
    %cst_271 = arith.constant dense<0.000000e+00> : vector<256x8xf32>
    %281 = tpu.matmul %278, %280, %cst_271 {dimension_numbers = #tpu.dot_dimension_numbers<[1], [0], [0], [1], [0, 0, 1, 1], [], []>} : vector<256x8xbf16>, vector<8x8xbf16>, vector<256x8xf32> -> vector<256x8xf32>
    %282 = arith.addf %275, %281 : vector<256x8xf32>
    %c1_272 = arith.constant 1 : index
    %c8_273 = arith.constant 8 : index
    %c0_274 = arith.constant 0 : index
    %283 = vector.load %arg19[%c1_272, %c8_273, %c0_274] : memref<18x32x8xf32, #tpu.memory_space<vmem>>, vector<16x16x8xf32>
    %284 = vector.shape_cast %283 : vector<16x16x8xf32> to vector<256x8xf32>
    %285 = arith.truncf %284 : vector<256x8xf32> to vector<256x8xbf16>
    %c1_275 = arith.constant 1 : index
    %c0_276 = arith.constant 0 : index
    %c0_277 = arith.constant 0 : index
    %286 = vector.load %arg14[%c1_275, %c0_276, %c0_277] : memref<3x8x8xbf16, #tpu.memory_space<vmem>>, vector<1x8x8xbf16>
    %287 = vector.shape_cast %286 : vector<1x8x8xbf16> to vector<8x8xbf16>
    %cst_278 = arith.constant dense<0.000000e+00> : vector<256x8xf32>
    %288 = tpu.matmul %285, %287, %cst_278 {dimension_numbers = #tpu.dot_dimension_numbers<[1], [0], [0], [1], [0, 0, 1, 1], [], []>} : vector<256x8xbf16>, vector<8x8xbf16>, vector<256x8xf32> -> vector<256x8xf32>
    %289 = arith.addf %282, %288 : vector<256x8xf32>
    %c2_279 = arith.constant 2 : index
    %c8_280 = arith.constant 8 : index
    %c0_281 = arith.constant 0 : index
    %290 = vector.load %arg19[%c2_279, %c8_280, %c0_281] : memref<18x32x8xf32, #tpu.memory_space<vmem>>, vector<16x16x8xf32>
    %291 = vector.shape_cast %290 : vector<16x16x8xf32> to vector<256x8xf32>
    %292 = arith.truncf %291 : vector<256x8xf32> to vector<256x8xbf16>
    %c2_282 = arith.constant 2 : index
    %c0_283 = arith.constant 0 : index
    %c0_284 = arith.constant 0 : index
    %293 = vector.load %arg14[%c2_282, %c0_283, %c0_284] : memref<3x8x8xbf16, #tpu.memory_space<vmem>>, vector<1x8x8xbf16>
    %294 = vector.shape_cast %293 : vector<1x8x8xbf16> to vector<8x8xbf16>
    %cst_285 = arith.constant dense<0.000000e+00> : vector<256x8xf32>
    %295 = tpu.matmul %292, %294, %cst_285 {dimension_numbers = #tpu.dot_dimension_numbers<[1], [0], [0], [1], [0, 0, 1, 1], [], []>} : vector<256x8xbf16>, vector<8x8xbf16>, vector<256x8xf32> -> vector<256x8xf32>
    %296 = arith.addf %289, %295 : vector<256x8xf32>
    %c0_286 = arith.constant 0 : index
    %c0_287 = arith.constant 0 : index
    %297 = vector.load %arg15[%c0_286, %c0_287] : memref<1x8xf32, #tpu.memory_space<vmem>>, vector<1x8xf32>
    %298 = vector.broadcast %297 : vector<1x8xf32> to vector<256x8xf32>
    %299 = arith.addf %296, %298 : vector<256x8xf32>
    %cst_288 = arith.constant 0.000000e+00 : f32
    %300 = vector.broadcast %cst_288 : f32 to vector<256x8xf32>
    %301 = arith.maximumf %299, %300 : vector<256x8xf32>
    %302 = vector.shape_cast %301 : vector<256x8xf32> to vector<16x16x8xf32>
    %c0_289 = arith.constant 0 : index
    %c0_290 = arith.constant 0 : index
    %c0_291 = arith.constant 0 : index
    %c32 = arith.constant 32 : index
    %303 = vector.load %arg18[%c0_289, %c0_290, %c0_291, %c32] : memref<1x16x16x48xf32, #tpu.memory_space<vmem>>, vector<1x16x16x8xf32>
    %304 = vector.shape_cast %303 : vector<1x16x16x8xf32> to vector<16x16x8xf32>
    %305 = vector.shape_cast %302 : vector<16x16x8xf32> to vector<1x16x16x8xf32>
    tpu.vector_store %arg18[%c0_289, %c0_290, %c0_291, %c32], %305 {strides = array<i32>} : memref<1x16x16x48xf32, #tpu.memory_space<vmem>>, vector<1x16x16x8xf32>,
    %cst_292 = arith.constant 0xFF800000 : f32
    %306 = vector.broadcast %cst_292 : f32 to vector<18x32x8xf32>
    %c0_293 = arith.constant 0 : index
    %c0_294 = arith.constant 0 : index
    %c0_295 = arith.constant 0 : index
    %307 = vector.load %arg19[%c0_293, %c0_294, %c0_295] : memref<18x32x8xf32, #tpu.memory_space<vmem>>, vector<18x32x8xf32>
    tpu.vector_store %arg19[%c0_293, %c0_294, %c0_295], %306 {strides = array<i32>} : memref<18x32x8xf32, #tpu.memory_space<vmem>>, vector<18x32x8xf32>,
    %c1_296 = arith.constant 1 : index
    %c8_297 = arith.constant 8 : index
    %c0_298 = arith.constant 0 : index
    %308 = vector.load %arg19[%c1_296, %c8_297, %c0_298] : memref<18x32x8xf32, #tpu.memory_space<vmem>>, vector<16x16x4xf32>
    tpu.vector_store %arg19[%c1_296, %c8_297, %c0_298], %1 {strides = array<i32>} : memref<18x32x8xf32, #tpu.memory_space<vmem>>, vector<16x16x4xf32>,
    %c1_299 = arith.constant 1 : index
    %c8_300 = arith.constant 8 : index
    %c0_301 = arith.constant 0 : index
    %309 = vector.load %arg19[%c1_299, %c8_300, %c0_301] : memref<18x32x8xf32, #tpu.memory_space<vmem>>, vector<16x16x4xf32>
    %c0_302 = arith.constant 0 : index
    %c7_303 = arith.constant 7 : index
    %c0_304 = arith.constant 0 : index
    %310 = vector.load %arg19[%c0_302, %c7_303, %c0_304] : memref<18x32x8xf32, #tpu.memory_space<vmem>>, vector<16x16x4xf32>
    %311 = arith.maximumf %309, %310 : vector<16x16x4xf32>
    %c0_305 = arith.constant 0 : index
    %c8_306 = arith.constant 8 : index
    %c0_307 = arith.constant 0 : index
    %312 = vector.load %arg19[%c0_305, %c8_306, %c0_307] : memref<18x32x8xf32, #tpu.memory_space<vmem>>, vector<16x16x4xf32>
    %313 = arith.maximumf %311, %312 : vector<16x16x4xf32>
    %c0_308 = arith.constant 0 : index
    %c9_309 = arith.constant 9 : index
    %c0_310 = arith.constant 0 : index
    %314 = vector.load %arg19[%c0_308, %c9_309, %c0_310] : memref<18x32x8xf32, #tpu.memory_space<vmem>>, vector<16x16x4xf32>
    %315 = arith.maximumf %313, %314 : vector<16x16x4xf32>
    %c1_311 = arith.constant 1 : index
    %c7_312 = arith.constant 7 : index
    %c0_313 = arith.constant 0 : index
    %316 = vector.load %arg19[%c1_311, %c7_312, %c0_313] : memref<18x32x8xf32, #tpu.memory_space<vmem>>, vector<16x16x4xf32>
    %317 = arith.maximumf %315, %316 : vector<16x16x4xf32>
    %c1_314 = arith.constant 1 : index
    %c9_315 = arith.constant 9 : index
    %c0_316 = arith.constant 0 : index
    %318 = vector.load %arg19[%c1_314, %c9_315, %c0_316] : memref<18x32x8xf32, #tpu.memory_space<vmem>>, vector<16x16x4xf32>
    %319 = arith.maximumf %317, %318 : vector<16x16x4xf32>
    %c2_317 = arith.constant 2 : index
    %c7_318 = arith.constant 7 : index
    %c0_319 = arith.constant 0 : index
    %320 = vector.load %arg19[%c2_317, %c7_318, %c0_319] : memref<18x32x8xf32, #tpu.memory_space<vmem>>, vector<16x16x4xf32>
    %321 = arith.maximumf %319, %320 : vector<16x16x4xf32>
    %c2_320 = arith.constant 2 : index
    %c8_321 = arith.constant 8 : index
    %c0_322 = arith.constant 0 : index
    %322 = vector.load %arg19[%c2_320, %c8_321, %c0_322] : memref<18x32x8xf32, #tpu.memory_space<vmem>>, vector<16x16x4xf32>
    %323 = arith.maximumf %321, %322 : vector<16x16x4xf32>
    %c2_323 = arith.constant 2 : index
    %c9_324 = arith.constant 9 : index
    %c0_325 = arith.constant 0 : index
    %324 = vector.load %arg19[%c2_323, %c9_324, %c0_325] : memref<18x32x8xf32, #tpu.memory_space<vmem>>, vector<16x16x4xf32>
    %325 = arith.maximumf %323, %324 : vector<16x16x4xf32>
    %326 = vector.shape_cast %325 : vector<16x16x4xf32> to vector<256x4xf32>
    %327 = arith.truncf %326 : vector<256x4xf32> to vector<256x4xbf16>
    %c0_326 = arith.constant 0 : index
    %c0_327 = arith.constant 0 : index
    %328 = vector.load %arg16[%c0_326, %c0_327] : memref<4x8xbf16, #tpu.memory_space<vmem>>, vector<4x8xbf16>
    %cst_328 = arith.constant dense<0.000000e+00> : vector<256x8xf32>
    %329 = tpu.matmul %327, %328, %cst_328 {dimension_numbers = #tpu.dot_dimension_numbers<[1], [0], [0], [1], [0, 0, 1, 1], [], []>} : vector<256x4xbf16>, vector<4x8xbf16>, vector<256x8xf32> -> vector<256x8xf32>
    %c0_329 = arith.constant 0 : index
    %c0_330 = arith.constant 0 : index
    %330 = vector.load %arg17[%c0_329, %c0_330] : memref<1x8xf32, #tpu.memory_space<vmem>>, vector<1x8xf32>
    %331 = vector.broadcast %330 : vector<1x8xf32> to vector<256x8xf32>
    %332 = arith.addf %329, %331 : vector<256x8xf32>
    %cst_331 = arith.constant 0.000000e+00 : f32
    %333 = vector.broadcast %cst_331 : f32 to vector<256x8xf32>
    %334 = arith.maximumf %332, %333 : vector<256x8xf32>
    %335 = vector.shape_cast %334 : vector<256x8xf32> to vector<16x16x8xf32>
    %c0_332 = arith.constant 0 : index
    %c0_333 = arith.constant 0 : index
    %c0_334 = arith.constant 0 : index
    %c40 = arith.constant 40 : index
    %336 = vector.load %arg18[%c0_332, %c0_333, %c0_334, %c40] : memref<1x16x16x48xf32, #tpu.memory_space<vmem>>, vector<1x16x16x8xf32>
    %337 = vector.shape_cast %336 : vector<1x16x16x8xf32> to vector<16x16x8xf32>
    %338 = vector.shape_cast %335 : vector<16x16x8xf32> to vector<1x16x16x8xf32>
    tpu.vector_store %arg18[%c0_332, %c0_333, %c0_334, %c40], %338 {strides = array<i32>} : memref<1x16x16x48xf32, #tpu.memory_space<vmem>>, vector<1x16x16x8xf32>,
    return
  }
  func.func @transform_0(%arg0: i32) -> (i32, i32, i32, i32) {
    %c0_i32 = arith.constant 0 : i32
    %c0_i32_0 = arith.constant 0 : i32
    %c0_i32_1 = arith.constant 0 : i32
    %c0_i32_2 = arith.constant 0 : i32
    return %arg0, %c0_i32, %c0_i32_0, %c0_i32_1 : i32, i32, i32, i32
  }
  func.func @transform_1(%arg0: i32) -> (i32, i32) {
    %c0_i32 = arith.constant 0 : i32
    %c0_i32_0 = arith.constant 0 : i32
    %c0_i32_1 = arith.constant 0 : i32
    return %c0_i32, %c0_i32_0 : i32, i32
  }
  func.func @transform_2(%arg0: i32) -> (i32, i32) {
    %c0_i32 = arith.constant 0 : i32
    %c0_i32_0 = arith.constant 0 : i32
    %c0_i32_1 = arith.constant 0 : i32
    return %c0_i32, %c0_i32_0 : i32, i32
  }
  func.func @transform_3(%arg0: i32) -> (i32, i32, i32) {
    %c0_i32 = arith.constant 0 : i32
    %c0_i32_0 = arith.constant 0 : i32
    %c0_i32_1 = arith.constant 0 : i32
    %c0_i32_2 = arith.constant 0 : i32
    return %c0_i32, %c0_i32_0, %c0_i32_1 : i32, i32, i32
  }
  func.func @transform_4(%arg0: i32) -> (i32, i32) {
    %c0_i32 = arith.constant 0 : i32
    %c0_i32_0 = arith.constant 0 : i32
    %c0_i32_1 = arith.constant 0 : i32
    return %c0_i32, %c0_i32_0 : i32, i32
  }
  func.func @transform_5(%arg0: i32) -> (i32, i32, i32) {
    %c0_i32 = arith.constant 0 : i32
    %c0_i32_0 = arith.constant 0 : i32
    %c0_i32_1 = arith.constant 0 : i32
    %c0_i32_2 = arith.constant 0 : i32
    return %c0_i32, %c0_i32_0, %c0_i32_1 : i32, i32, i32
  }
  func.func @transform_6(%arg0: i32) -> (i32, i32) {
    %c0_i32 = arith.constant 0 : i32
    %c0_i32_0 = arith.constant 0 : i32
    %c0_i32_1 = arith.constant 0 : i32
    return %c0_i32, %c0_i32_0 : i32, i32
  }
  func.func @transform_7(%arg0: i32) -> (i32, i32, i32) {
    %c0_i32 = arith.constant 0 : i32
    %c0_i32_0 = arith.constant 0 : i32
    %c0_i32_1 = arith.constant 0 : i32
    %c0_i32_2 = arith.constant 0 : i32
    return %c0_i32, %c0_i32_0, %c0_i32_1 : i32, i32, i32
  }
  func.func @transform_8(%arg0: i32) -> (i32, i32) {
    %c0_i32 = arith.constant 0 : i32
    %c0_i32_0 = arith.constant 0 : i32
    %c0_i32_1 = arith.constant 0 : i32
    return %c0_i32, %c0_i32_0 : i32, i32
  }
  func.func @transform_9(%arg0: i32) -> (i32, i32, i32) {
    %c0_i32 = arith.constant 0 : i32
    %c0_i32_0 = arith.constant 0 : i32
    %c0_i32_1 = arith.constant 0 : i32
    %c0_i32_2 = arith.constant 0 : i32
    return %c0_i32, %c0_i32_0, %c0_i32_1 : i32, i32, i32
  }
  func.func @transform_10(%arg0: i32) -> (i32, i32) {
    %c0_i32 = arith.constant 0 : i32
    %c0_i32_0 = arith.constant 0 : i32
    %c0_i32_1 = arith.constant 0 : i32
    return %c0_i32, %c0_i32_0 : i32, i32
  }
  func.func @transform_11(%arg0: i32) -> (i32, i32, i32) {
    %c0_i32 = arith.constant 0 : i32
    %c0_i32_0 = arith.constant 0 : i32
    %c0_i32_1 = arith.constant 0 : i32
    %c0_i32_2 = arith.constant 0 : i32
    return %c0_i32, %c0_i32_0, %c0_i32_1 : i32, i32, i32
  }
  func.func @transform_12(%arg0: i32) -> (i32, i32) {
    %c0_i32 = arith.constant 0 : i32
    %c0_i32_0 = arith.constant 0 : i32
    %c0_i32_1 = arith.constant 0 : i32
    return %c0_i32, %c0_i32_0 : i32, i32
  }
  func.func @transform_13(%arg0: i32) -> (i32, i32, i32) {
    %c0_i32 = arith.constant 0 : i32
    %c0_i32_0 = arith.constant 0 : i32
    %c0_i32_1 = arith.constant 0 : i32
    %c0_i32_2 = arith.constant 0 : i32
    return %c0_i32, %c0_i32_0, %c0_i32_1 : i32, i32, i32
  }
  func.func @transform_14(%arg0: i32) -> (i32, i32) {
    %c0_i32 = arith.constant 0 : i32
    %c0_i32_0 = arith.constant 0 : i32
    %c0_i32_1 = arith.constant 0 : i32
    return %c0_i32, %c0_i32_0 : i32, i32
  }
  func.func @transform_15(%arg0: i32) -> (i32, i32) {
    %c0_i32 = arith.constant 0 : i32
    %c0_i32_0 = arith.constant 0 : i32
    %c0_i32_1 = arith.constant 0 : i32
    return %c0_i32, %c0_i32_0 : i32, i32
  }
  func.func @transform_16(%arg0: i32) -> (i32, i32) {
    %c0_i32 = arith.constant 0 : i32
    %c0_i32_0 = arith.constant 0 : i32
    %c0_i32_1 = arith.constant 0 : i32
    return %c0_i32, %c0_i32_0 : i32, i32
  }
  func.func @transform_17(%arg0: i32) -> (i32, i32, i32, i32) {
    %c0_i32 = arith.constant 0 : i32
    %c0_i32_0 = arith.constant 0 : i32
    %c0_i32_1 = arith.constant 0 : i32
    %c0_i32_2 = arith.constant 0 : i32
    return %arg0, %c0_i32, %c0_i32_0, %c0_i32_1 : i32, i32, i32, i32
  }
}

</mosaic_0001>

<llo_original>
// kernel: inception_c_forward.1
$region0: #{inception_c_forward.1}
  #allocation0 [shape = 'u32[]', space=smem, size = 0x4, offset = 0x4, fixed_abs, tag = 'smem constant byte address 0x4 - core index']
  #allocation1 [shape = 'u32[72,128]{1,0:T(1,128)}', space=vmem, size = 0x9000, scoped, tag = 'internal scratch']
  #allocation2 [shape = 'f32[18,32,8]{2,1,0:T(8,128)}', space=vmem, size = 0x48000, scoped, tag = 'scratch operand']
  %s0 = inlined_call_operand.vmem [shape: f32[2,16,16,4], index: 0, kind: input, shape index: {}]
  %s1 = inlined_call_operand.vmem [shape: bf16[4,24], index: 1, kind: input, shape index: {}]
  %s2 = inlined_call_operand.vmem [shape: f32[1,24], index: 2, kind: input, shape index: {}]
  %s3 = inlined_call_operand.vmem [shape: bf16[3,4,8], index: 3, kind: input, shape index: {}]
  %s4 = inlined_call_operand.vmem [shape: f32[1,8], index: 4, kind: input, shape index: {}]
  %s5 = inlined_call_operand.vmem [shape: bf16[3,4,8], index: 5, kind: input, shape index: {}]
  %s6 = inlined_call_operand.vmem [shape: f32[1,8], index: 6, kind: input, shape index: {}]
  %s7 = inlined_call_operand.vmem [shape: bf16[9,4,8], index: 7, kind: input, shape index: {}]
  %s8 = inlined_call_operand.vmem [shape: f32[1,8], index: 8, kind: input, shape index: {}]
  %s9 = inlined_call_operand.vmem [shape: bf16[3,8,8], index: 9, kind: input, shape index: {}]
  %s10 = inlined_call_operand.vmem [shape: f32[1,8], index: 10, kind: input, shape index: {}]
  %s11 = inlined_call_operand.vmem [shape: bf16[9,4,8], index: 11, kind: input, shape index: {}]
  %s12 = inlined_call_operand.vmem [shape: f32[1,8], index: 12, kind: input, shape index: {}]
  %s13 = inlined_call_operand.vmem [shape: bf16[3,8,8], index: 13, kind: input, shape index: {}]
  %s14 = inlined_call_operand.vmem [shape: f32[1,8], index: 14, kind: input, shape index: {}]
  %s15 = inlined_call_operand.vmem [shape: bf16[4,8], index: 15, kind: input, shape index: {}]
  %s16 = inlined_call_operand.vmem [shape: f32[1,8], index: 16, kind: input, shape index: {}]
  %s17 = inlined_call_operand.hbm [shape: f32[2,16,16,48], index: 17, kind: output, shape index: {}]
  %s18 = sld [smem:[#allocation0]]
  $region101: #{inception_c_forward.1} parent=0
    _
  %s20 = ssub.s32 1, %s18
  %s21 = scalar_select 0, %s20, %s18
  $region1: #{inception_c_forward.1} parent=0
    #allocation3 [shape = 'u8[262144]{0}', space=vmem, size = 0x40000, scoped, tag = 'output window, operand 0']
    #allocation4 [shape = 's32[2]{0}', space=sflag, size = 0x8, scoped, tag = 'scoped memory for inception_c_forward.1']
    %22 = vsyncpa [#allocation4], 0
    %s23 = scalar_lea.sflag [#allocation4], 1
    %24 = vsyncpa %s23, 0
    loop: start=0, step=1, limit=4
    $region2: #{inception_c_forward.1} parent=1 // loop_pre_header
      _
    $region3: #{inception_c_forward.1} parent=1 // loop_header
      %s26 = sphi 0, %s30
      %p27 = scmp.ge.s32.totalorder %s26, 4
      %s36 = sphi 0, %s38
      %s39 = sphi 0, %s36
      %s40 = sphi 0, %s39
      %s56 = sphi 0, %s40
      %s60 = sphi 0, %s60
      %s62 = sphi 0, %s60
      %s63 = sphi 0, %s62
      %s77 = sphi 0, %s63
      %s81 = sphi 0, %s81
      %s83 = sphi 0, %s81
      %s84 = sphi 0, %s83
      %s98 = sphi 0, %s84
      %s102 = sphi 0, %s102
      %s104 = sphi 0, %s102
      %s105 = sphi 0, %s104
      %s119 = sphi 0, %s105
      %s123 = sphi 0, %s123
      %s125 = sphi 0, %s123
      %s126 = sphi 0, %s125
      %s140 = sphi 0, %s126
      %s144 = sphi 0, %s144
      %s146 = sphi 0, %s144
      %s147 = sphi 0, %s146
      %s161 = sphi 0, %s147
      %s165 = sphi 0, %s165
      %s167 = sphi 0, %s165
      %s168 = sphi 0, %s167
      %s182 = sphi 0, %s168
      %s186 = sphi 0, %s186
      %s188 = sphi 0, %s186
      %s189 = sphi 0, %s188
      %s203 = sphi 0, %s189
      %s207 = sphi 0, %s207
      %s209 = sphi 0, %s207
      %s210 = sphi 0, %s209
      %s224 = sphi 0, %s210
      %s228 = sphi 0, %s228
      %s230 = sphi 0, %s228
      %s231 = sphi 0, %s230
      %s245 = sphi 0, %s231
      %s249 = sphi 0, %s249
      %s251 = sphi 0, %s249
      %s252 = sphi 0, %s251
      %s266 = sphi 0, %s252
      %s270 = sphi 0, %s270
      %s272 = sphi 0, %s270
      %s273 = sphi 0, %s272
      %s287 = sphi 0, %s273
      %s291 = sphi 0, %s291
      %s293 = sphi 0, %s291
      %s294 = sphi 0, %s293
      %s308 = sphi 0, %s294
      %s312 = sphi 0, %s312
      %s314 = sphi 0, %s312
      %s315 = sphi 0, %s314
      %s329 = sphi 0, %s315
      %s333 = sphi 0, %s333
      %s335 = sphi 0, %s333
      %s336 = sphi 0, %s335
      %s350 = sphi 0, %s336
      %s354 = sphi 0, %s354
      %s356 = sphi 0, %s354
      %s357 = sphi 0, %s356
      %s371 = sphi 0, %s357
      %s375 = sphi 0, %s375
      %s377 = sphi 0, %s375
      %s378 = sphi 0, %s377
      %s392 = sphi 0, %s378
      %s398 = sphi 0, %s400
      %s401 = sphi 0, %s398
      %s402 = sphi 0, %s401
      %s418 = sphi 0, %s402
    $region4: #{inception_c_forward.1} parent=1 // loop_header_branch
      %29 = sbr.rel (%p27) target = $region8
    $region5: #{inception_c_forward.1} parent=1 // loop_body
      %s31 = ssub.s32 %s26, 1
      %s32 = ssub.s32 %s26, 2
      %s33 = sadd.s32 %s26, 1
      %s34 = ssub.s32 %s26, %s33
      %p35 = scmp.eq.s32.totalorder %s34, 0
      %s37 = sadd.s32 %s36, 1
      %s38 = scalar_select %p35, %s36, %s37
      %p41 = pneg %p35
      %p42 = scmp.eq.s32.totalorder %s26, 1
      %p43 = por %p41, %p42
      %p44 = scmp.ne.s32.totalorder %s36, %s39
      %p45 = scmp.eq.s32.totalorder %s26, 0
      %p46 = por %p44, %p45
      %p47 = scmp.ne.s32.totalorder %s36, %s39
      %p48 = scmp.eq.s32.totalorder %s31, 1
      %p49 = por %p47, %p48
      %p50 = scmp.ne.s32.totalorder %s39, %s40
      %p51 = scmp.eq.s32.totalorder %s31, 0
      %p52 = por %p50, %p51
      %p53 = scmp.ne.s32.totalorder %s39, %s40
      %p54 = scmp.eq.s32.totalorder %s32, 1
      %p55 = por %p53, %p54
      %p57 = scmp.ne.s32.totalorder %s40, %s56
      %p58 = scmp.eq.s32.totalorder %s32, 0
      %p59 = por %p57, %p58
      %s61 = sadd.s32 %s60, 1
      %p64 = scmp.eq.s32.totalorder %s26, 1
      %p65 = scmp.ne.s32.totalorder %s60, %s62
      %p66 = scmp.eq.s32.totalorder %s26, 0
      %p67 = por %p65, %p66
      %p68 = scmp.ne.s32.totalorder %s60, %s62
      %p69 = scmp.eq.s32.totalorder %s31, 1
      %p70 = por %p68, %p69
      %p71 = scmp.ne.s32.totalorder %s62, %s63
      %p72 = scmp.eq.s32.totalorder %s31, 0
      %p73 = por %p71, %p72
      %p74 = scmp.ne.s32.totalorder %s62, %s63
      %p75 = scmp.eq.s32.totalorder %s32, 1
      %p76 = por %p74, %p75
      %p78 = scmp.ne.s32.totalorder %s63, %s77
      %p79 = scmp.eq.s32.totalorder %s32, 0
      %p80 = por %p78, %p79
      %s82 = sadd.s32 %s81, 1
      %p85 = scmp.eq.s32.totalorder %s26, 1
      %p86 = scmp.ne.s32.totalorder %s81, %s83
      %p87 = scmp.eq.s32.totalorder %s26, 0
      %p88 = por %p86, %p87
      %p89 = scmp.ne.s32.totalorder %s81, %s83
      %p90 = scmp.eq.s32.totalorder %s31, 1
      %p91 = por %p89, %p90
      %p92 = scmp.ne.s32.totalorder %s83, %s84
      %p93 = scmp.eq.s32.totalorder %s31, 0
      %p94 = por %p92, %p93
      %p95 = scmp.ne.s32.totalorder %s83, %s84
      %p96 = scmp.eq.s32.totalorder %s32, 1
      %p97 = por %p95, %p96
      %p99 = scmp.ne.s32.totalorder %s84, %s98
      %p100 = scmp.eq.s32.totalorder %s32, 0
      %p101 = por %p99, %p100
      %s103 = sadd.s32 %s102, 1
      %p106 = scmp.eq.s32.totalorder %s26, 1
      %p107 = scmp.ne.s32.totalorder %s102, %s104
      %p108 = scmp.eq.s32.totalorder %s26, 0
      %p109 = por %p107, %p108
      %p110 = scmp.ne.s32.totalorder %s102, %s104
      %p111 = scmp.eq.s32.totalorder %s31, 1
      %p112 = por %p110, %p111
      %p113 = scmp.ne.s32.totalorder %s104, %s105
      %p114 = scmp.eq.s32.totalorder %s31, 0
      %p115 = por %p113, %p114
      %p116 = scmp.ne.s32.totalorder %s104, %s105
      %p117 = scmp.eq.s32.totalorder %s32, 1
      %p118 = por %p116, %p117
      %p120 = scmp.ne.s32.totalorder %s105, %s119
      %p121 = scmp.eq.s32.totalorder %s32, 0
      %p122 = por %p120, %p121
      %s124 = sadd.s32 %s123, 1
      %p127 = scmp.eq.s32.totalorder %s26, 1
      %p128 = scmp.ne.s32.totalorder %s123, %s125
      %p129 = scmp.eq.s32.totalorder %s26, 0
      %p130 = por %p128, %p129
      %p131 = scmp.ne.s32.totalorder %s123, %s125
      %p132 = scmp.eq.s32.totalorder %s31, 1
      %p133 = por %p131, %p132
      %p134 = scmp.ne.s32.totalorder %s125, %s126
      %p135 = scmp.eq.s32.totalorder %s31, 0
      %p136 = por %p134, %p135
      %p137 = scmp.ne.s32.totalorder %s125, %s126
      %p138 = scmp.eq.s32.totalorder %s32, 1
      %p139 = por %p137, %p138
      %p141 = scmp.ne.s32.totalorder %s126, %s140
      %p142 = scmp.eq.s32.totalorder %s32, 0
      %p143 = por %p141, %p142
      %s145 = sadd.s32 %s144, 1
      %p148 = scmp.eq.s32.totalorder %s26, 1
      %p149 = scmp.ne.s32.totalorder %s144, %s146
      %p150 = scmp.eq.s32.totalorder %s26, 0
      %p151 = por %p149, %p150
      %p152 = scmp.ne.s32.totalorder %s144, %s146
      %p153 = scmp.eq.s32.totalorder %s31, 1
      %p154 = por %p152, %p153
      %p155 = scmp.ne.s32.totalorder %s146, %s147
      %p156 = scmp.eq.s32.totalorder %s31, 0
      %p157 = por %p155, %p156
      %p158 = scmp.ne.s32.totalorder %s146, %s147
      %p159 = scmp.eq.s32.totalorder %s32, 1
      %p160 = por %p158, %p159
      %p162 = scmp.ne.s32.totalorder %s147, %s161
      %p163 = scmp.eq.s32.totalorder %s32, 0
      %p164 = por %p162, %p163
      %s166 = sadd.s32 %s165, 1
      %p169 = scmp.eq.s32.totalorder %s26, 1
      %p170 = scmp.ne.s32.totalorder %s165, %s167
      %p171 = scmp.eq.s32.totalorder %s26, 0
      %p172 = por %p170, %p171
      %p173 = scmp.ne.s32.totalorder %s165, %s167
      %p174 = scmp.eq.s32.totalorder %s31, 1
      %p175 = por %p173, %p174
      %p176 = scmp.ne.s32.totalorder %s167, %s168
      %p177 = scmp.eq.s32.totalorder %s31, 0
      %p178 = por %p176, %p177
      %p179 = scmp.ne.s32.totalorder %s167, %s168
      %p180 = scmp.eq.s32.totalorder %s32, 1
      %p181 = por %p179, %p180
      %p183 = scmp.ne.s32.totalorder %s168, %s182
      %p184 = scmp.eq.s32.totalorder %s32, 0
      %p185 = por %p183, %p184
      %s187 = sadd.s32 %s186, 1
      %p190 = scmp.eq.s32.totalorder %s26, 1
      %p191 = scmp.ne.s32.totalorder %s186, %s188
      %p192 = scmp.eq.s32.totalorder %s26, 0
      %p193 = por %p191, %p192
      %p194 = scmp.ne.s32.totalorder %s186, %s188
      %p195 = scmp.eq.s32.totalorder %s31, 1
      %p196 = por %p194, %p195
      %p197 = scmp.ne.s32.totalorder %s188, %s189
      %p198 = scmp.eq.s32.totalorder %s31, 0
      %p199 = por %p197, %p198
      %p200 = scmp.ne.s32.totalorder %s188, %s189
      %p201 = scmp.eq.s32.totalorder %s32, 1
      %p202 = por %p200, %p201
      %p204 = scmp.ne.s32.totalorder %s189, %s203
      %p205 = scmp.eq.s32.totalorder %s32, 0
      %p206 = por %p204, %p205
      %s208 = sadd.s32 %s207, 1
      %p211 = scmp.eq.s32.totalorder %s26, 1
      %p212 = scmp.ne.s32.totalorder %s207, %s209
      %p213 = scmp.eq.s32.totalorder %s26, 0
      %p214 = por %p212, %p213
      %p215 = scmp.ne.s32.totalorder %s207, %s209
      %p216 = scmp.eq.s32.totalorder %s31, 1
      %p217 = por %p215, %p216
      %p218 = scmp.ne.s32.totalorder %s209, %s210
      %p219 = scmp.eq.s32.totalorder %s31, 0
      %p220 = por %p218, %p219
      %p221 = scmp.ne.s32.totalorder %s209, %s210
      %p222 = scmp.eq.s32.totalorder %s32, 1
      %p223 = por %p221, %p222
      %p225 = scmp.ne.s32.totalorder %s210, %s224
      %p226 = scmp.eq.s32.totalorder %s32, 0
      %p227 = por %p225, %p226
      %s229 = sadd.s32 %s228, 1
      %p232 = scmp.eq.s32.totalorder %s26, 1
      %p233 = scmp.ne.s32.totalorder %s228, %s230
      %p234 = scmp.eq.s32.totalorder %s26, 0
      %p235 = por %p233, %p234
      %p236 = scmp.ne.s32.totalorder %s228, %s230
      %p237 = scmp.eq.s32.totalorder %s31, 1
      %p238 = por %p236, %p237
      %p239 = scmp.ne.s32.totalorder %s230, %s231
      %p240 = scmp.eq.s32.totalorder %s31, 0
      %p241 = por %p239, %p240
      %p242 = scmp.ne.s32.totalorder %s230, %s231
      %p243 = scmp.eq.s32.totalorder %s32, 1
      %p244 = por %p242, %p243
      %p246 = scmp.ne.s32.totalorder %s231, %s245
      %p247 = scmp.eq.s32.totalorder %s32, 0
      %p248 = por %p246, %p247
      %s250 = sadd.s32 %s249, 1
      %p253 = scmp.eq.s32.totalorder %s26, 1
      %p254 = scmp.ne.s32.totalorder %s249, %s251
      %p255 = scmp.eq.s32.totalorder %s26, 0
      %p256 = por %p254, %p255
      %p257 = scmp.ne.s32.totalorder %s249, %s251
      %p258 = scmp.eq.s32.totalorder %s31, 1
      %p259 = por %p257, %p258
      %p260 = scmp.ne.s32.totalorder %s251, %s252
      %p261 = scmp.eq.s32.totalorder %s31, 0
      %p262 = por %p260, %p261
      %p263 = scmp.ne.s32.totalorder %s251, %s252
      %p264 = scmp.eq.s32.totalorder %s32, 1
      %p265 = por %p263, %p264
      %p267 = scmp.ne.s32.totalorder %s252, %s266
      %p268 = scmp.eq.s32.totalorder %s32, 0
      %p269 = por %p267, %p268
      %s271 = sadd.s32 %s270, 1
      %p274 = scmp.eq.s32.totalorder %s26, 1
      %p275 = scmp.ne.s32.totalorder %s270, %s272
      %p276 = scmp.eq.s32.totalorder %s26, 0
      %p277 = por %p275, %p276
      %p278 = scmp.ne.s32.totalorder %s270, %s272
      %p279 = scmp.eq.s32.totalorder %s31, 1
      %p280 = por %p278, %p279
      %p281 = scmp.ne.s32.totalorder %s272, %s273
      %p282 = scmp.eq.s32.totalorder %s31, 0
      %p283 = por %p281, %p282
      %p284 = scmp.ne.s32.totalorder %s272, %s273
      %p285 = scmp.eq.s32.totalorder %s32, 1
      %p286 = por %p284, %p285
      %p288 = scmp.ne.s32.totalorder %s273, %s287
      %p289 = scmp.eq.s32.totalorder %s32, 0
      %p290 = por %p288, %p289
      %s292 = sadd.s32 %s291, 1
      %p295 = scmp.eq.s32.totalorder %s26, 1
      %p296 = scmp.ne.s32.totalorder %s291, %s293
      %p297 = scmp.eq.s32.totalorder %s26, 0
      %p298 = por %p296, %p297
      %p299 = scmp.ne.s32.totalorder %s291, %s293
      %p300 = scmp.eq.s32.totalorder %s31, 1
      %p301 = por %p299, %p300
      %p302 = scmp.ne.s32.totalorder %s293, %s294
      %p303 = scmp.eq.s32.totalorder %s31, 0
      %p304 = por %p302, %p303
      %p305 = scmp.ne.s32.totalorder %s293, %s294
      %p306 = scmp.eq.s32.totalorder %s32, 1
      %p307 = por %p305, %p306
      %p309 = scmp.ne.s32.totalorder %s294, %s308
      %p310 = scmp.eq.s32.totalorder %s32, 0
      %p311 = por %p309, %p310
      %s313 = sadd.s32 %s312, 1
      %p316 = scmp.eq.s32.totalorder %s26, 1
      %p317 = scmp.ne.s32.totalorder %s312, %s314
      %p318 = scmp.eq.s32.totalorder %s26, 0
      %p319 = por %p317, %p318
      %p320 = scmp.ne.s32.totalorder %s312, %s314
      %p321 = scmp.eq.s32.totalorder %s31, 1
      %p322 = por %p320, %p321
      %p323 = scmp.ne.s32.totalorder %s314, %s315
      %p324 = scmp.eq.s32.totalorder %s31, 0
      %p325 = por %p323, %p324
      %p326 = scmp.ne.s32.totalorder %s314, %s315
      %p327 = scmp.eq.s32.totalorder %s32, 1
      %p328 = por %p326, %p327
      %p330 = scmp.ne.s32.totalorder %s315, %s329
      %p331 = scmp.eq.s32.totalorder %s32, 0
      %p332 = por %p330, %p331
      %s334 = sadd.s32 %s333, 1
      %p337 = scmp.eq.s32.totalorder %s26, 1
      %p338 = scmp.ne.s32.totalorder %s333, %s335
      %p339 = scmp.eq.s32.totalorder %s26, 0
      %p340 = por %p338, %p339
      %p341 = scmp.ne.s32.totalorder %s333, %s335
      %p342 = scmp.eq.s32.totalorder %s31, 1
      %p343 = por %p341, %p342
      %p344 = scmp.ne.s32.totalorder %s335, %s336
      %p345 = scmp.eq.s32.totalorder %s31, 0
      %p346 = por %p344, %p345
      %p347 = scmp.ne.s32.totalorder %s335, %s336
      %p348 = scmp.eq.s32.totalorder %s32, 1
      %p349 = por %p347, %p348
      %p351 = scmp.ne.s32.totalorder %s336, %s350
      %p352 = scmp.eq.s32.totalorder %s32, 0
      %p353 = por %p351, %p352
      %s355 = sadd.s32 %s354, 1
      %p358 = scmp.eq.s32.totalorder %s26, 1
      %p359 = scmp.ne.s32.totalorder %s354, %s356
      %p360 = scmp.eq.s32.totalorder %s26, 0
      %p361 = por %p359, %p360
      %p362 = scmp.ne.s32.totalorder %s354, %s356
      %p363 = scmp.eq.s32.totalorder %s31, 1
      %p364 = por %p362, %p363
      %p365 = scmp.ne.s32.totalorder %s356, %s357
      %p366 = scmp.eq.s32.totalorder %s31, 0
      %p367 = por %p365, %p366
      %p368 = scmp.ne.s32.totalorder %s356, %s357
      %p369 = scmp.eq.s32.totalorder %s32, 1
      %p370 = por %p368, %p369
      %p372 = scmp.ne.s32.totalorder %s357, %s371
      %p373 = scmp.eq.s32.totalorder %s32, 0
      %p374 = por %p372, %p373
      %s376 = sadd.s32 %s375, 1
      %p379 = scmp.eq.s32.totalorder %s26, 1
      %p380 = scmp.ne.s32.totalorder %s375, %s377
      %p381 = scmp.eq.s32.totalorder %s26, 0
      %p382 = por %p380, %p381
      %p383 = scmp.ne.s32.totalorder %s375, %s377
      %p384 = scmp.eq.s32.totalorder %s31, 1
      %p385 = por %p383, %p384
      %p386 = scmp.ne.s32.totalorder %s377, %s378
      %p387 = scmp.eq.s32.totalorder %s31, 0
      %p388 = por %p386, %p387
      %p389 = scmp.ne.s32.totalorder %s377, %s378
      %p390 = scmp.eq.s32.totalorder %s32, 1
      %p391 = por %p389, %p390
      %p393 = scmp.ne.s32.totalorder %s378, %s392
      %p394 = scmp.eq.s32.totalorder %s32, 0
      %p395 = por %p393, %p394
      %s396 = ssub.s32 %s26, %s33
      %p397 = scmp.eq.s32.totalorder %s396, 0
      %s399 = sadd.s32 %s398, 1
      %s400 = scalar_select %p397, %s398, %s399
      %p403 = pneg %p397
      %p404 = scmp.eq.s32.totalorder %s26, 1
      %p405 = por %p403, %p404
      %p406 = scmp.ne.s32.totalorder %s398, %s401
      %p407 = scmp.eq.s32.totalorder %s26, 0
      %p408 = por %p406, %p407
      %p409 = scmp.ne.s32.totalorder %s398, %s401
      %p410 = scmp.eq.s32.totalorder %s31, 1
      %p411 = por %p409, %p410
      %p412 = scmp.ne.s32.totalorder %s401, %s402
      %p413 = scmp.eq.s32.totalorder %s31, 0
      %p414 = por %p412, %p413
      %p415 = scmp.ne.s32.totalorder %s401, %s402
      %p416 = scmp.eq.s32.totalorder %s32, 1
      %p417 = por %p415, %p416
      %p419 = scmp.ne.s32.totalorder %s402, %s418
      %p420 = scmp.eq.s32.totalorder %s32, 0
      %p421 = por %p419, %p420
      %p422 = scmp.le.s32.totalorder 1, %s26
      %p423 = scmp.lt.s32.totalorder %s26, 3
      %p424 = pnand %p422, %p423
      %p425 = pneg %p424
      // Predicated region
      $region9: #{inception_c_forward.1} parent=5 // pred_check
        _
      $region10: #{inception_c_forward.1} parent=5 // pred_check_branch
        %427 = sbr.rel (%p424) target = $region12
      $region11: #{inception_c_forward.1} parent=5 // pred_region
        %s428 = ssub.s32 %s26, 1
        // Predicated region
        $region13: #{inception_c_forward.1} parent=11 // pred_check
          %p429 = pneg %p73
        $region14: #{inception_c_forward.1} parent=11 // pred_check_branch
          %431 = sbr.rel (%p429) target = $region16
        $region15: #{inception_c_forward.1} parent=11 // pred_region
          _
        $region16: #{inception_c_forward.1} parent=11 // pred_fallthru
          _
        // Predicated region
        $region17: #{inception_c_forward.1} parent=11 // pred_check
          %p432 = pneg %p94
        $region18: #{inception_c_forward.1} parent=11 // pred_check_branch
          %434 = sbr.rel (%p432) target = $region20
        $region19: #{inception_c_forward.1} parent=11 // pred_region
          _
        $region20: #{inception_c_forward.1} parent=11 // pred_fallthru
          _
        // Predicated region
        $region21: #{inception_c_forward.1} parent=11 // pred_check
          %p435 = pneg %p115
        $region22: #{inception_c_forward.1} parent=11 // pred_check_branch
          %437 = sbr.rel (%p435) target = $region24
        $region23: #{inception_c_forward.1} parent=11 // pred_region
          _
        $region24: #{inception_c_forward.1} parent=11 // pred_fallthru
          _
        // Predicated region
        $region25: #{inception_c_forward.1} parent=11 // pred_check
          %p438 = pneg %p136
        $region26: #{inception_c_forward.1} parent=11 // pred_check_branch
          %440 = sbr.rel (%p438) target = $region28
        $region27: #{inception_c_forward.1} parent=11 // pred_region
          _
        $region28: #{inception_c_forward.1} parent=11 // pred_fallthru
          _
        // Predicated region
        $region29: #{inception_c_forward.1} parent=11 // pred_check
          %p441 = pneg %p157
        $region30: #{inception_c_forward.1} parent=11 // pred_check_branch
          %443 = sbr.rel (%p441) target = $region32
        $region31: #{inception_c_forward.1} parent=11 // pred_region
          _
        $region32: #{inception_c_forward.1} parent=11 // pred_fallthru
          _
        // Predicated region
        $region33: #{inception_c_forward.1} parent=11 // pred_check
          %p444 = pneg %p178
        $region34: #{inception_c_forward.1} parent=11 // pred_check_branch
          %446 = sbr.rel (%p444) target = $region36
        $region35: #{inception_c_forward.1} parent=11 // pred_region
          _
        $region36: #{inception_c_forward.1} parent=11 // pred_fallthru
          _
        // Predicated region
        $region37: #{inception_c_forward.1} parent=11 // pred_check
          %p447 = pneg %p199
        $region38: #{inception_c_forward.1} parent=11 // pred_check_branch
          %449 = sbr.rel (%p447) target = $region40
        $region39: #{inception_c_forward.1} parent=11 // pred_region
          _
        $region40: #{inception_c_forward.1} parent=11 // pred_fallthru
          _
        // Predicated region
        $region41: #{inception_c_forward.1} parent=11 // pred_check
          %p450 = pneg %p220
        $region42: #{inception_c_forward.1} parent=11 // pred_check_branch
          %452 = sbr.rel (%p450) target = $region44
        $region43: #{inception_c_forward.1} parent=11 // pred_region
          _
        $region44: #{inception_c_forward.1} parent=11 // pred_fallthru
          _
        // Predicated region
        $region45: #{inception_c_forward.1} parent=11 // pred_check
          %p453 = pneg %p241
        $region46: #{inception_c_forward.1} parent=11 // pred_check_branch
          %455 = sbr.rel (%p453) target = $region48
        $region47: #{inception_c_forward.1} parent=11 // pred_region
          _
        $region48: #{inception_c_forward.1} parent=11 // pred_fallthru
          _
        // Predicated region
        $region49: #{inception_c_forward.1} parent=11 // pred_check
          %p456 = pneg %p262
        $region50: #{inception_c_forward.1} parent=11 // pred_check_branch
          %458 = sbr.rel (%p456) target = $region52
        $region51: #{inception_c_forward.1} parent=11 // pred_region
          _
        $region52: #{inception_c_forward.1} parent=11 // pred_fallthru
          _
        // Predicated region
        $region53: #{inception_c_forward.1} parent=11 // pred_check
          %p459 = pneg %p283
        $region54: #{inception_c_forward.1} parent=11 // pred_check_branch
          %461 = sbr.rel (%p459) target = $region56
        $region55: #{inception_c_forward.1} parent=11 // pred_region
          _
        $region56: #{inception_c_forward.1} parent=11 // pred_fallthru
          _
        // Predicated region
        $region57: #{inception_c_forward.1} parent=11 // pred_check
          %p462 = pneg %p304
        $region58: #{inception_c_forward.1} parent=11 // pred_check_branch
          %464 = sbr.rel (%p462) target = $region60
        $region59: #{inception_c_forward.1} parent=11 // pred_region
          _
        $region60: #{inception_c_forward.1} parent=11 // pred_fallthru
          _
        // Predicated region
        $region61: #{inception_c_forward.1} parent=11 // pred_check
          %p465 = pneg %p325
        $region62: #{inception_c_forward.1} parent=11 // pred_check_branch
          %467 = sbr.rel (%p465) target = $region64
        $region63: #{inception_c_forward.1} parent=11 // pred_region
          _
        $region64: #{inception_c_forward.1} parent=11 // pred_fallthru
          _
        // Predicated region
        $region65: #{inception_c_forward.1} parent=11 // pred_check
          %p468 = pneg %p346
        $region66: #{inception_c_forward.1} parent=11 // pred_check_branch
          %470 = sbr.rel (%p468) target = $region68
        $region67: #{inception_c_forward.1} parent=11 // pred_region
          _
        $region68: #{inception_c_forward.1} parent=11 // pred_fallthru
          _
        // Predicated region
        $region69: #{inception_c_forward.1} parent=11 // pred_check
          %p471 = pneg %p367
        $region70: #{inception_c_forward.1} parent=11 // pred_check_branch
          %473 = sbr.rel (%p471) target = $region72
        $region71: #{inception_c_forward.1} parent=11 // pred_region
          _
        $region72: #{inception_c_forward.1} parent=11 // pred_fallthru
          _
        // Predicated region
        $region73: #{inception_c_forward.1} parent=11 // pred_check
          %p474 = pneg %p388
        $region74: #{inception_c_forward.1} parent=11 // pred_check_branch
          %476 = sbr.rel (%p474) target = $region76
        $region75: #{inception_c_forward.1} parent=11 // pred_region
          _
        $region76: #{inception_c_forward.1} parent=11 // pred_fallthru
          _
      $region12: #{inception_c_forward.1} parent=5 // pred_fallthru
        _
      %p477 = scmp.lt.s32.totalorder %s26, 2
      // Predicated region
      $region77: #{inception_c_forward.1} parent=5 // pred_check
        %p478 = pneg %p477
      $region78: #{inception_c_forward.1} parent=5 // pred_check_branch
        %480 = sbr.rel (%p478) target = $region80
      $region79: #{inception_c_forward.1} parent=5 // pred_region
        // Predicated region
        $region81: #{inception_c_forward.1} parent=79 // pred_check
          %p481 = pneg %p46
        $region82: #{inception_c_forward.1} parent=79 // pred_check_branch
          %483 = sbr.rel (%p481) target = $region84
        $region83: #{inception_c_forward.1} parent=79 // pred_region
          %p484 = scmp.lt.s32.totalorder %s26, 1
          %s485 = scalar_select %p484, %s26, 1
          %s486 = smul.addr %s485, 32
          %s487 = smul.addr %s486, 8
          %s488 = scalar_lea.vmem %s0, %s487
        $region84: #{inception_c_forward.1} parent=79 // pred_fallthru
          _
      $region80: #{inception_c_forward.1} parent=5 // pred_fallthru
        _
      %p489 = scmp.le.s32.totalorder 1, %s26
      %p490 = scmp.lt.s32.totalorder %s26, 3
      %p491 = pnand %p489, %p490
      %p492 = pneg %p491
      // Predicated region
      $region85: #{inception_c_forward.1} parent=5 // pred_check
        _
      $region86: #{inception_c_forward.1} parent=5 // pred_check_branch
        %494 = sbr.rel (%p491) target = $region88
      $region87: #{inception_c_forward.1} parent=5 // pred_region
        %s495 = ssub.s32 %s26, 1
        %p496 = scmp.lt.s32.totalorder %s31, 1
        %s497 = scalar_select %p496, %s31, 1
        %s498 = smul.addr %s497, 32
        %s499 = smul.addr %s498, 8
        %s500 = scalar_lea.vmem %s0, %s499
        %p501 = pneg %p52
        %p502 = pneg %p49
        %p503 = pneg %p73
        %p504 = pneg %p70
        %p505 = pneg %p94
        %p506 = pneg %p91
        %p507 = pneg %p115
        %p508 = pneg %p112
        %p509 = pneg %p136
        %p510 = pneg %p133
        %p511 = pneg %p157
        %p512 = pneg %p154
        %p513 = pneg %p178
        %p514 = pneg %p175
        %p515 = pneg %p199
        %p516 = pneg %p196
        %p517 = pneg %p220
        %p518 = pneg %p217
        %p519 = pneg %p241
        %p520 = pneg %p238
        %p521 = pneg %p262
        %p522 = pneg %p259
        %p523 = pneg %p283
        %p524 = pneg %p280
        %p525 = pneg %p304
        %p526 = pneg %p301
        %p527 = pneg %p325
        %p528 = pneg %p322
        %p529 = pneg %p346
        %p530 = pneg %p343
        %p531 = pneg %p367
        %p532 = pneg %p364
        %p533 = pneg %p388
        %p534 = pneg %p385
        %p535 = pneg %p414
        %p536 = pneg %p411
        %s537 = sand.u32 %s401, 1
        %s538 = scalar_lea.sflag [#allocation4], %s537
        %s539 = sand.u32 %s401, 1
        %s540 = smul.addr %s539, 256
        %s541 = scalar_lea.vmem [#allocation3], %s540
        %p542 = scmp.lt.s32.totalorder %s31, 1
        %s543 = scalar_select %p542, %s31, 1
        %s544 = smul.addr %s543, 32
        %s545 = smul.addr %s544, 8
        %s546 = scalar_lea.vmem %s0, %s545
        %v548 = vld [vmem:[%s546] sm:$0xff]
        %v549 = vld [vmem:[%s546 + $0x8] sm:$0xff]
        %v550 = vld [vmem:[%s546 + $0x10] sm:$0xff]
        %v551 = vld [vmem:[%s546 + $0x18] sm:$0xff]
        %v552 = vld [vmem:[%s546 + $0x20] sm:$0xff]
        %v553 = vld [vmem:[%s546 + $0x28] sm:$0xff]
        %v554 = vld [vmem:[%s546 + $0x30] sm:$0xff]
        %v555 = vld [vmem:[%s546 + $0x38] sm:$0xff]
        %v556 = vld [vmem:[%s546 + $0x40] sm:$0xff]
        %v557 = vld [vmem:[%s546 + $0x48] sm:$0xff]
        %v558 = vld [vmem:[%s546 + $0x50] sm:$0xff]
        %v559 = vld [vmem:[%s546 + $0x58] sm:$0xff]
        %v560 = vld [vmem:[%s546 + $0x60] sm:$0xff]
        %v561 = vld [vmem:[%s546 + $0x68] sm:$0xff]
        %v562 = vld [vmem:[%s546 + $0x70] sm:$0xff]
        %v563 = vld [vmem:[%s546 + $0x78] sm:$0xff]
        %v564 = vld [vmem:[%s546 + $0x80] sm:$0xff]
        %v565 = vld [vmem:[%s546 + $0x88] sm:$0xff]
        %v566 = vld [vmem:[%s546 + $0x90] sm:$0xff]
        %v567 = vld [vmem:[%s546 + $0x98] sm:$0xff]
        %v568 = vld [vmem:[%s546 + $0xa0] sm:$0xff]
        %v569 = vld [vmem:[%s546 + $0xa8] sm:$0xff]
        %v570 = vld [vmem:[%s546 + $0xb0] sm:$0xff]
        %v571 = vld [vmem:[%s546 + $0xb8] sm:$0xff]
        %v572 = vld [vmem:[%s546 + $0xc0] sm:$0xff]
        %v573 = vld [vmem:[%s546 + $0xc8] sm:$0xff]
        %v574 = vld [vmem:[%s546 + $0xd0] sm:$0xff]
        %v575 = vld [vmem:[%s546 + $0xd8] sm:$0xff]
        %v576 = vld [vmem:[%s546 + $0xe0] sm:$0xff]
        %v577 = vld [vmem:[%s546 + $0xe8] sm:$0xff]
        %v578 = vld [vmem:[%s546 + $0xf0] sm:$0xff]
        %v579 = vld [vmem:[%s546 + $0xf8] sm:$0xff]
        %v580 = vpack.c.bf16 %v549, %v548
        %v581 = vpack.c.bf16 %v551, %v550
        %v582 = vpack.c.bf16 %v553, %v552
        %v583 = vpack.c.bf16 %v555, %v554
        %v584 = vpack.c.bf16 %v557, %v556
        %v585 = vpack.c.bf16 %v559, %v558
        %v586 = vpack.c.bf16 %v561, %v560
        %v587 = vpack.c.bf16 %v563, %v562
        %v588 = vpack.c.bf16 %v565, %v564
        %v589 = vpack.c.bf16 %v567, %v566
        %v590 = vpack.c.bf16 %v569, %v568
        %v591 = vpack.c.bf16 %v571, %v570
        %v592 = vpack.c.bf16 %v573, %v572
        %v593 = vpack.c.bf16 %v575, %v574
        %v594 = vpack.c.bf16 %v577, %v576
        %v595 = vpack.c.bf16 %v579, %v578
        %v596 = vld [vmem:[%s1] sm:$0x3]
        %v597 = vld [vmem:[%s2] sm:$0x1]
        %v599 = vperm.slane %v597, 0
        %vm601 = vcmask 31744
        %v603 = vsel %vm601, %v580, 0
        %v606 = vsel %vm601, %v581, 0
        %v609 = vsel %vm601, %v582, 0
        %v612 = vsel %vm601, %v583, 0
        %v615 = vsel %vm601, %v584, 0
        %v618 = vsel %vm601, %v585, 0
        %v621 = vsel %vm601, %v586, 0
        %v624 = vsel %vm601, %v587, 0
        %v627 = vsel %vm601, %v588, 0
        %v630 = vsel %vm601, %v589, 0
        %v633 = vsel %vm601, %v590, 0
        %v636 = vsel %vm601, %v591, 0
        %v639 = vsel %vm601, %v592, 0
        %v642 = vsel %vm601, %v593, 0
        %v645 = vsel %vm601, %v594, 0
        %v648 = vsel %vm601, %v595, 0
        %vm650 = vcmask 1041408
        %v652 = vsel %vm650, %v596, 0
        %654 = vmatpush.bf16.msra.mxu0 0
        %655 = vmatpush.bf16.msra.mxu0 0
        %656 = vmatpush.bf16.msra.mxu0 0
        %657 = vmatpush.bf16.msra.mxu0 0
        %658 = vmatpush.bf16.msra.mxu0 0
        %659 = vmatpush.bf16.msra.mxu0 0
        %660 = vmatpush.bf16.msra.mxu0 0
        %661 = vmatpush.bf16.msra.mxu0 %v652
        %662 = vmatmul.bf16.gmra.mxu0 %v603
        %v663 = vpop.f32.mrf.mxu0
        %v664 = vadd.f32 %v599, %v663
        %v665 = vpop.f32.mrf.mxu0
        %v666 = vadd.f32 %v599, %v665
        %667 = vmatmul.bf16.gmra.mxu0 %v606
        %v668 = vpop.f32.mrf.mxu0
        %v669 = vadd.f32 %v599, %v668
        %v670 = vpop.f32.mrf.mxu0
        %v671 = vadd.f32 %v599, %v670
        %672 = vmatmul.bf16.gmra.mxu0 %v609
        %v673 = vpop.f32.mrf.mxu0
        %v674 = vadd.f32 %v599, %v673
        %v675 = vpop.f32.mrf.mxu0
        %v676 = vadd.f32 %v599, %v675
        %677 = vmatmul.bf16.gmra.mxu0 %v612
        %v678 = vpop.f32.mrf.mxu0
        %v679 = vadd.f32 %v599, %v678
        %v680 = vpop.f32.mrf.mxu0
        %v681 = vadd.f32 %v599, %v680
        %682 = vmatmul.bf16.gmra.mxu0 %v615
        %v683 = vpop.f32.mrf.mxu0
        %v684 = vadd.f32 %v599, %v683
        %v685 = vpop.f32.mrf.mxu0
        %v686 = vadd.f32 %v599, %v685
        %687 = vmatmul.bf16.gmra.mxu0 %v618
        %v688 = vpop.f32.mrf.mxu0
        %v689 = vadd.f32 %v599, %v688
        %v690 = vpop.f32.mrf.mxu0
        %v691 = vadd.f32 %v599, %v690
        %692 = vmatmul.bf16.gmra.mxu0 %v621
        %v693 = vpop.f32.mrf.mxu0
        %v694 = vadd.f32 %v599, %v693
        %v695 = vpop.f32.mrf.mxu0
        %v696 = vadd.f32 %v599, %v695
        %697 = vmatmul.bf16.gmra.mxu0 %v624
        %v698 = vpop.f32.mrf.mxu0
        %v699 = vadd.f32 %v599, %v698
        %v700 = vpop.f32.mrf.mxu0
        %v701 = vadd.f32 %v599, %v700
        %702 = vmatmul.bf16.gmra.mxu0 %v627
        %v703 = vpop.f32.mrf.mxu0
        %v704 = vadd.f32 %v599, %v703
        %v705 = vpop.f32.mrf.mxu0
        %v706 = vadd.f32 %v599, %v705
        %707 = vmatmul.bf16.gmra.mxu0 %v630
        %v708 = vpop.f32.mrf.mxu0
        %v709 = vadd.f32 %v599, %v708
        %v710 = vpop.f32.mrf.mxu0
        %v711 = vadd.f32 %v599, %v710
        %712 = vmatmul.bf16.gmra.mxu0 %v633
        %v713 = vpop.f32.mrf.mxu0
        %v714 = vadd.f32 %v599, %v713
        %v715 = vpop.f32.mrf.mxu0
        %v716 = vadd.f32 %v599, %v715
        %717 = vmatmul.bf16.gmra.mxu0 %v636
        %v718 = vpop.f32.mrf.mxu0
        %v719 = vadd.f32 %v599, %v718
        %v720 = vpop.f32.mrf.mxu0
        %v721 = vadd.f32 %v599, %v720
        %722 = vmatmul.bf16.gmra.mxu0 %v639
        %v723 = vpop.f32.mrf.mxu0
        %v724 = vadd.f32 %v599, %v723
        %v725 = vpop.f32.mrf.mxu0
        %v726 = vadd.f32 %v599, %v725
        %727 = vmatmul.bf16.gmra.mxu0 %v642
        %v728 = vpop.f32.mrf.mxu0
        %v729 = vadd.f32 %v599, %v728
        %v730 = vpop.f32.mrf.mxu0
        %v731 = vadd.f32 %v599, %v730
        %732 = vmatmul.bf16.gmra.mxu0 %v645
        %v733 = vpop.f32.mrf.mxu0
        %v734 = vadd.f32 %v599, %v733
        %v735 = vpop.f32.mrf.mxu0
        %v736 = vadd.f32 %v599, %v735
        %737 = vmatmul.bf16.gmra.mxu0 %v648
        %v738 = vpop.f32.mrf.mxu0
        %v739 = vadd.f32 %v599, %v738
        %v740 = vpop.f32.mrf.mxu0
        %v741 = vadd.f32 %v599, %v740
        %742 = vdwg.mxu0
        %v743 = vmax.f32 %v664, 0.0
        %v744 = vmax.f32 %v666, 0.0
        %v745 = vmax.f32 %v669, 0.0
        %v746 = vmax.f32 %v671, 0.0
        %v747 = vmax.f32 %v674, 0.0
        %v748 = vmax.f32 %v676, 0.0
        %v749 = vmax.f32 %v679, 0.0
        %v750 = vmax.f32 %v681, 0.0
        %v751 = vmax.f32 %v684, 0.0
        %v752 = vmax.f32 %v686, 0.0
        %v753 = vmax.f32 %v689, 0.0
        %v754 = vmax.f32 %v691, 0.0
        %v755 = vmax.f32 %v694, 0.0
        %v756 = vmax.f32 %v696, 0.0
        %v757 = vmax.f32 %v699, 0.0
        %v758 = vmax.f32 %v701, 0.0
        %v759 = vmax.f32 %v704, 0.0
        %v760 = vmax.f32 %v706, 0.0
        %v761 = vmax.f32 %v709, 0.0
        %v762 = vmax.f32 %v711, 0.0
        %v763 = vmax.f32 %v714, 0.0
        %v764 = vmax.f32 %v716, 0.0
        %v765 = vmax.f32 %v719, 0.0
        %v766 = vmax.f32 %v721, 0.0
        %v767 = vmax.f32 %v724, 0.0
        %v768 = vmax.f32 %v726, 0.0
        %v769 = vmax.f32 %v729, 0.0
        %v770 = vmax.f32 %v731, 0.0
        %v771 = vmax.f32 %v734, 0.0
        %v772 = vmax.f32 %v736, 0.0
        %v773 = vmax.f32 %v739, 0.0
        %v774 = vmax.f32 %v741, 0.0
        %vm775 = vcmask 64512
        %776 = vst.msk [vmem:[%s541] sm:$0xff] %vm775, %v743
        %777 = vst.msk [vmem:[%s541 + $0x8] sm:$0xff] %vm775, %v744
        %778 = vst.msk [vmem:[%s541 + $0x10] sm:$0xff] %vm775, %v745
        %779 = vst.msk [vmem:[%s541 + $0x18] sm:$0xff] %vm775, %v746
        %780 = vst.msk [vmem:[%s541 + $0x20] sm:$0xff] %vm775, %v747
        %781 = vst.msk [vmem:[%s541 + $0x28] sm:$0xff] %vm775, %v748
        %782 = vst.msk [vmem:[%s541 + $0x30] sm:$0xff] %vm775, %v749
        %783 = vst.msk [vmem:[%s541 + $0x38] sm:$0xff] %vm775, %v750
        %784 = vst.msk [vmem:[%s541 + $0x40] sm:$0xff] %vm775, %v751
        %785 = vst.msk [vmem:[%s541 + $0x48] sm:$0xff] %vm775, %v752
        %786 = vst.msk [vmem:[%s541 + $0x50] sm:$0xff] %vm775, %v753
        %787 = vst.msk [vmem:[%s541 + $0x58] sm:$0xff] %vm775, %v754
        %788 = vst.msk [vmem:[%s541 + $0x60] sm:$0xff] %vm775, %v755
        %789 = vst.msk [vmem:[%s541 + $0x68] sm:$0xff] %vm775, %v756
        %790 = vst.msk [vmem:[%s541 + $0x70] sm:$0xff] %vm775, %v757
        %791 = vst.msk [vmem:[%s541 + $0x78] sm:$0xff] %vm775, %v758
        %792 = vst.msk [vmem:[%s541 + $0x80] sm:$0xff] %vm775, %v759
        %793 = vst.msk [vmem:[%s541 + $0x88] sm:$0xff] %vm775, %v760
        %794 = vst.msk [vmem:[%s541 + $0x90] sm:$0xff] %vm775, %v761
        %795 = vst.msk [vmem:[%s541 + $0x98] sm:$0xff] %vm775, %v762
        %796 = vst.msk [vmem:[%s541 + $0xa0] sm:$0xff] %vm775, %v763
        %797 = vst.msk [vmem:[%s541 + $0xa8] sm:$0xff] %vm775, %v764
        %798 = vst.msk [vmem:[%s541 + $0xb0] sm:$0xff] %vm775, %v765
        %799 = vst.msk [vmem:[%s541 + $0xb8] sm:$0xff] %vm775, %v766
        %800 = vst.msk [vmem:[%s541 + $0xc0] sm:$0xff] %vm775, %v767
        %801 = vst.msk [vmem:[%s541 + $0xc8] sm:$0xff] %vm775, %v768
        %802 = vst.msk [vmem:[%s541 + $0xd0] sm:$0xff] %vm775, %v769
        %803 = vst.msk [vmem:[%s541 + $0xd8] sm:$0xff] %vm775, %v770
        %804 = vst.msk [vmem:[%s541 + $0xe0] sm:$0xff] %vm775, %v771
        %805 = vst.msk [vmem:[%s541 + $0xe8] sm:$0xff] %vm775, %v772
        %806 = vst.msk [vmem:[%s541 + $0xf0] sm:$0xff] %vm775, %v773
        %807 = vst.msk [vmem:[%s541 + $0xf8] sm:$0xff] %vm775, %v774
        %808 = vst.msk [vmem:[#allocation2] sm:$0xff] %vm775, 0.0
        %809 = vst.msk [vmem:[#allocation2 + $0x8] sm:$0xff] %vm775, 0.0
        %810 = vst.msk [vmem:[#allocation2 + $0x10] sm:$0xff] %vm775, 0.0
        %811 = vst.msk [vmem:[#allocation2 + $0x18] sm:$0xff] %vm775, 0.0
        %812 = vst.msk [vmem:[#allocation2 + $0x20] sm:$0xff] %vm775, 0.0
        %813 = vst.msk [vmem:[#allocation2 + $0x28] sm:$0xff] %vm775, 0.0
        %814 = vst.msk [vmem:[#allocation2 + $0x30] sm:$0xff] %vm775, 0.0
        %815 = vst.msk [vmem:[#allocation2 + $0x38] sm:$0xff] %vm775, 0.0
        %816 = vst.msk [vmem:[#allocation2 + $0x40] sm:$0xff] %vm775, 0.0
        %817 = vst.msk [vmem:[#allocation2 + $0x48] sm:$0xff] %vm775, 0.0
        %818 = vst.msk [vmem:[#allocation2 + $0x50] sm:$0xff] %vm775, 0.0
        %819 = vst.msk [vmem:[#allocation2 + $0x58] sm:$0xff] %vm775, 0.0
        %820 = vst.msk [vmem:[#allocation2 + $0x60] sm:$0xff] %vm775, 0.0
        %821 = vst.msk [vmem:[#allocation2 + $0x68] sm:$0xff] %vm775, 0.0
        %822 = vst.msk [vmem:[#allocation2 + $0x70] sm:$0xff] %vm775, 0.0
        %823 = vst.msk [vmem:[#allocation2 + $0x78] sm:$0xff] %vm775, 0.0
        %824 = vst.msk [vmem:[#allocation2 + $0x80] sm:$0xff] %vm775, 0.0
        %825 = vst.msk [vmem:[#allocation2 + $0x88] sm:$0xff] %vm775, 0.0
        %826 = vst.msk [vmem:[#allocation2 + $0x90] sm:$0xff] %vm775, 0.0
        %827 = vst.msk [vmem:[#allocation2 + $0x98] sm:$0xff] %vm775, 0.0
        %828 = vst.msk [vmem:[#allocation2 + $0xa0] sm:$0xff] %vm775, 0.0
        %829 = vst.msk [vmem:[#allocation2 + $0xa8] sm:$0xff] %vm775, 0.0
        %830 = vst.msk [vmem:[#allocation2 + $0xb0] sm:$0xff] %vm775, 0.0
        %831 = vst.msk [vmem:[#allocation2 + $0xb8] sm:$0xff] %vm775, 0.0
        %832 = vst.msk [vmem:[#allocation2 + $0xc0] sm:$0xff] %vm775, 0.0
        %833 = vst.msk [vmem:[#allocation2 + $0xc8] sm:$0xff] %vm775, 0.0
        %834 = vst.msk [vmem:[#allocation2 + $0xd0] sm:$0xff] %vm775, 0.0
        %835 = vst.msk [vmem:[#allocation2 + $0xd8] sm:$0xff] %vm775, 0.0
        %836 = vst.msk [vmem:[#allocation2 + $0xe0] sm:$0xff] %vm775, 0.0
        %837 = vst.msk [vmem:[#allocation2 + $0xe8] sm:$0xff] %vm775, 0.0
        %838 = vst.msk [vmem:[#allocation2 + $0xf0] sm:$0xff] %vm775, 0.0
        %839 = vst.msk [vmem:[#allocation2 + $0xf8] sm:$0xff] %vm775, 0.0
        %840 = vst.msk [vmem:[#allocation2 + $0x100] sm:$0xff] %vm775, 0.0
        %841 = vst.msk [vmem:[#allocation2 + $0x108] sm:$0xff] %vm775, 0.0
        %842 = vst.msk [vmem:[#allocation2 + $0x110] sm:$0xff] %vm775, 0.0
        %843 = vst.msk [vmem:[#allocation2 + $0x118] sm:$0xff] %vm775, 0.0
        %844 = vst.msk [vmem:[#allocation2 + $0x120] sm:$0xff] %vm775, 0.0
        %845 = vst.msk [vmem:[#allocation2 + $0x128] sm:$0xff] %vm775, 0.0
        %846 = vst.msk [vmem:[#allocation2 + $0x130] sm:$0xff] %vm775, 0.0
        %847 = vst.msk [vmem:[#allocation2 + $0x138] sm:$0xff] %vm775, 0.0
        %848 = vst.msk [vmem:[#allocation2 + $0x140] sm:$0xff] %vm775, 0.0
        %849 = vst.msk [vmem:[#allocation2 + $0x148] sm:$0xff] %vm775, 0.0
        %850 = vst.msk [vmem:[#allocation2 + $0x150] sm:$0xff] %vm775, 0.0
        %851 = vst.msk [vmem:[#allocation2 + $0x158] sm:$0xff] %vm775, 0.0
        %852 = vst.msk [vmem:[#allocation2 + $0x160] sm:$0xff] %vm775, 0.0
        %853 = vst.msk [vmem:[#allocation2 + $0x168] sm:$0xff] %vm775, 0.0
        %854 = vst.msk [vmem:[#allocation2 + $0x170] sm:$0xff] %vm775, 0.0
        %855 = vst.msk [vmem:[#allocation2 + $0x178] sm:$0xff] %vm775, 0.0
        %856 = vst.msk [vmem:[#allocation2 + $0x180] sm:$0xff] %vm775, 0.0
        %857 = vst.msk [vmem:[#allocation2 + $0x188] sm:$0xff] %vm775, 0.0
        %858 = vst.msk [vmem:[#allocation2 + $0x190] sm:$0xff] %vm775, 0.0
        %859 = vst.msk [vmem:[#allocation2 + $0x198] sm:$0xff] %vm775, 0.0
        %860 = vst.msk [vmem:[#allocation2 + $0x1a0] sm:$0xff] %vm775, 0.0
        %861 = vst.msk [vmem:[#allocation2 + $0x1a8] sm:$0xff] %vm775, 0.0
        %862 = vst.msk [vmem:[#allocation2 + $0x1b0] sm:$0xff] %vm775, 0.0
        %863 = vst.msk [vmem:[#allocation2 + $0x1b8] sm:$0xff] %vm775, 0.0
        %864 = vst.msk [vmem:[#allocation2 + $0x1c0] sm:$0xff] %vm775, 0.0
        %865 = vst.msk [vmem:[#allocation2 + $0x1c8] sm:$0xff] %vm775, 0.0
        %866 = vst.msk [vmem:[#allocation2 + $0x1d0] sm:$0xff] %vm775, 0.0
        %867 = vst.msk [vmem:[#allocation2 + $0x1d8] sm:$0xff] %vm775, 0.0
        %868 = vst.msk [vmem:[#allocation2 + $0x1e0] sm:$0xff] %vm775, 0.0
        %869 = vst.msk [vmem:[#allocation2 + $0x1e8] sm:$0xff] %vm775, 0.0
        %870 = vst.msk [vmem:[#allocation2 + $0x1f0] sm:$0xff] %vm775, 0.0
        %871 = vst.msk [vmem:[#allocation2 + $0x1f8] sm:$0xff] %vm775, 0.0
        %872 = vst.msk [vmem:[#allocation2 + $0x200] sm:$0xff] %vm775, 0.0
        %873 = vst.msk [vmem:[#allocation2 + $0x208] sm:$0xff] %vm775, 0.0
        %874 = vst.msk [vmem:[#allocation2 + $0x210] sm:$0xff] %vm775, 0.0
        %875 = vst.msk [vmem:[#allocation2 + $0x218] sm:$0xff] %vm775, 0.0
        %876 = vst.msk [vmem:[#allocation2 + $0x220] sm:$0xff] %vm775, 0.0
        %877 = vst.msk [vmem:[#allocation2 + $0x228] sm:$0xff] %vm775, 0.0
        %878 = vst.msk [vmem:[#allocation2 + $0x230] sm:$0xff] %vm775, 0.0
        %879 = vst.msk [vmem:[#allocation2 + $0x238] sm:$0xff] %vm775, 0.0
        %912 = vrot.lane.b32.xlu0 %v743, 120
        %v913 = vpop.permute.xlu0 %912
        %914 = vrot.lane.b32.xlu0 %v744, 120
        %v915 = vpop.permute.xlu0 %914
        %916 = vrot.lane.b32.xlu0 %v745, 120
        %v917 = vpop.permute.xlu0 %916
        %918 = vrot.lane.b32.xlu0 %v746, 120
        %v919 = vpop.permute.xlu0 %918
        %920 = vrot.lane.b32.xlu0 %v747, 120
        %v921 = vpop.permute.xlu0 %920
        %922 = vrot.lane.b32.xlu0 %v748, 120
        %v923 = vpop.permute.xlu0 %922
        %924 = vrot.lane.b32.xlu0 %v749, 120
        %v925 = vpop.permute.xlu0 %924
        %926 = vrot.lane.b32.xlu0 %v750, 120
        %v927 = vpop.permute.xlu0 %926
        %928 = vrot.lane.b32.xlu0 %v751, 120
        %v929 = vpop.permute.xlu0 %928
        %930 = vrot.lane.b32.xlu0 %v752, 120
        %v931 = vpop.permute.xlu0 %930
        %932 = vrot.lane.b32.xlu0 %v753, 120
        %v933 = vpop.permute.xlu0 %932
        %934 = vrot.lane.b32.xlu0 %v754, 120
        %v935 = vpop.permute.xlu0 %934
        %936 = vrot.lane.b32.xlu0 %v755, 120
        %v937 = vpop.permute.xlu0 %936
        %938 = vrot.lane.b32.xlu0 %v756, 120
        %v939 = vpop.permute.xlu0 %938
        %940 = vrot.lane.b32.xlu0 %v757, 120
        %v941 = vpop.permute.xlu0 %940
        %942 = vrot.lane.b32.xlu0 %v758, 120
        %v943 = vpop.permute.xlu0 %942
        %944 = vrot.lane.b32.xlu0 %v759, 120
        %v945 = vpop.permute.xlu0 %944
        %946 = vrot.lane.b32.xlu0 %v760, 120
        %v947 = vpop.permute.xlu0 %946
        %948 = vrot.lane.b32.xlu0 %v761, 120
        %v949 = vpop.permute.xlu0 %948
        %950 = vrot.lane.b32.xlu0 %v762, 120
        %v951 = vpop.permute.xlu0 %950
        %952 = vrot.lane.b32.xlu0 %v763, 120
        %v953 = vpop.permute.xlu0 %952
        %954 = vrot.lane.b32.xlu0 %v764, 120
        %v955 = vpop.permute.xlu0 %954
        %956 = vrot.lane.b32.xlu0 %v765, 120
        %v957 = vpop.permute.xlu0 %956
        %958 = vrot.lane.b32.xlu0 %v766, 120
        %v959 = vpop.permute.xlu0 %958
        %960 = vrot.lane.b32.xlu0 %v767, 120
        %v961 = vpop.permute.xlu0 %960
        %962 = vrot.lane.b32.xlu0 %v768, 120
        %v963 = vpop.permute.xlu0 %962
        %964 = vrot.lane.b32.xlu0 %v769, 120
        %v965 = vpop.permute.xlu0 %964
        %966 = vrot.lane.b32.xlu0 %v770, 120
        %v967 = vpop.permute.xlu0 %966
        %968 = vrot.lane.b32.xlu0 %v771, 120
        %v969 = vpop.permute.xlu0 %968
        %970 = vrot.lane.b32.xlu0 %v772, 120
        %v971 = vpop.permute.xlu0 %970
        %972 = vrot.lane.b32.xlu0 %v773, 120
        %v973 = vpop.permute.xlu0 %972
        %974 = vrot.lane.b32.xlu0 %v774, 120
        %v975 = vpop.permute.xlu0 %974
        %s1008 = scalar_lea.vmem [#allocation2], 32
        %1009 = vst.msk [vmem:[%s1008 + $0x8] sm:$0xff] %vm601, %v913
        %1010 = vst.msk [vmem:[%s1008 + $0x10] sm:$0xff] %vm601, %v915
        %1011 = vst.msk [vmem:[%s1008 + $0x28] sm:$0xff] %vm601, %v917
        %1012 = vst.msk [vmem:[%s1008 + $0x30] sm:$0xff] %vm601, %v919
        %1013 = vst.msk [vmem:[%s1008 + $0x48] sm:$0xff] %vm601, %v921
        %1014 = vst.msk [vmem:[%s1008 + $0x50] sm:$0xff] %vm601, %v923
        %1015 = vst.msk [vmem:[%s1008 + $0x68] sm:$0xff] %vm601, %v925
        %1016 = vst.msk [vmem:[%s1008 + $0x70] sm:$0xff] %vm601, %v927
        %1017 = vst.msk [vmem:[%s1008 + $0x88] sm:$0xff] %vm601, %v929
        %1018 = vst.msk [vmem:[%s1008 + $0x90] sm:$0xff] %vm601, %v931
        %1019 = vst.msk [vmem:[%s1008 + $0xa8] sm:$0xff] %vm601, %v933
        %1020 = vst.msk [vmem:[%s1008 + $0xb0] sm:$0xff] %vm601, %v935
        %1021 = vst.msk [vmem:[%s1008 + $0xc8] sm:$0xff] %vm601, %v937
        %1022 = vst.msk [vmem:[%s1008 + $0xd0] sm:$0xff] %vm601, %v939
        %1023 = vst.msk [vmem:[%s1008 + $0xe8] sm:$0xff] %vm601, %v941
        %1024 = vst.msk [vmem:[%s1008 + $0xf0] sm:$0xff] %vm601, %v943
        %1025 = vst.msk [vmem:[%s1008 + $0x108] sm:$0xff] %vm601, %v945
        %1026 = vst.msk [vmem:[%s1008 + $0x110] sm:$0xff] %vm601, %v947
        %1027 = vst.msk [vmem:[%s1008 + $0x128] sm:$0xff] %vm601, %v949
        %1028 = vst.msk [vmem:[%s1008 + $0x130] sm:$0xff] %vm601, %v951
        %1029 = vst.msk [vmem:[%s1008 + $0x148] sm:$0xff] %vm601, %v953
        %1030 = vst.msk [vmem:[%s1008 + $0x150] sm:$0xff] %vm601, %v955
        %1031 = vst.msk [vmem:[%s1008 + $0x168] sm:$0xff] %vm601, %v957
        %1032 = vst.msk [vmem:[%s1008 + $0x170] sm:$0xff] %vm601, %v959
        %1033 = vst.msk [vmem:[%s1008 + $0x188] sm:$0xff] %vm601, %v961
        %1034 = vst.msk [vmem:[%s1008 + $0x190] sm:$0xff] %vm601, %v963
        %1035 = vst.msk [vmem:[%s1008 + $0x1a8] sm:$0xff] %vm601, %v965
        %1036 = vst.msk [vmem:[%s1008 + $0x1b0] sm:$0xff] %vm601, %v967
        %1037 = vst.msk [vmem:[%s1008 + $0x1c8] sm:$0xff] %vm601, %v969
        %1038 = vst.msk [vmem:[%s1008 + $0x1d0] sm:$0xff] %vm601, %v971
        %1039 = vst.msk [vmem:[%s1008 + $0x1e8] sm:$0xff] %vm601, %v973
        %1040 = vst.msk [vmem:[%s1008 + $0x1f0] sm:$0xff] %vm601, %v975
        %v1041 = vld [vmem:[%s1008 + $0x7] sm:$0xff]
        %v1042 = vld [vmem:[%s1008 + $0xf] sm:$0xff]
        %v1043 = vld [vmem:[%s1008 + $0x27] sm:$0xff]
        %v1044 = vld [vmem:[%s1008 + $0x2f] sm:$0xff]
        %v1045 = vld [vmem:[%s1008 + $0x47] sm:$0xff]
        %v1046 = vld [vmem:[%s1008 + $0x4f] sm:$0xff]
        %v1047 = vld [vmem:[%s1008 + $0x67] sm:$0xff]
        %v1048 = vld [vmem:[%s1008 + $0x6f] sm:$0xff]
        %v1049 = vld [vmem:[%s1008 + $0x87] sm:$0xff]
        %v1050 = vld [vmem:[%s1008 + $0x8f] sm:$0xff]
        %v1051 = vld [vmem:[%s1008 + $0xa7] sm:$0xff]
        %v1052 = vld [vmem:[%s1008 + $0xaf] sm:$0xff]
        %v1053 = vld [vmem:[%s1008 + $0xc7] sm:$0xff]
        %v1054 = vld [vmem:[%s1008 + $0xcf] sm:$0xff]
        %v1055 = vld [vmem:[%s1008 + $0xe7] sm:$0xff]
        %v1056 = vld [vmem:[%s1008 + $0xef] sm:$0xff]
        %v1057 = vld [vmem:[%s1008 + $0x107] sm:$0xff]
        %v1058 = vld [vmem:[%s1008 + $0x10f] sm:$0xff]
        %v1059 = vld [vmem:[%s1008 + $0x127] sm:$0xff]
        %v1060 = vld [vmem:[%s1008 + $0x12f] sm:$0xff]
        %v1061 = vld [vmem:[%s1008 + $0x147] sm:$0xff]
        %v1062 = vld [vmem:[%s1008 + $0x14f] sm:$0xff]
        %v1063 = vld [vmem:[%s1008 + $0x167] sm:$0xff]
        %v1064 = vld [vmem:[%s1008 + $0x16f] sm:$0xff]
        %v1065 = vld [vmem:[%s1008 + $0x187] sm:$0xff]
        %v1066 = vld [vmem:[%s1008 + $0x18f] sm:$0xff]
        %v1067 = vld [vmem:[%s1008 + $0x1a7] sm:$0xff]
        %v1068 = vld [vmem:[%s1008 + $0x1af] sm:$0xff]
        %v1069 = vld [vmem:[%s1008 + $0x1c7] sm:$0xff]
        %v1070 = vld [vmem:[%s1008 + $0x1cf] sm:$0xff]
        %v1071 = vld [vmem:[%s1008 + $0x1e7] sm:$0xff]
        %v1072 = vld [vmem:[%s1008 + $0x1ef] sm:$0xff]
        %v1073 = vpack.c.bf16 %v1042, %v1041
        %v1074 = vpack.c.bf16 %v1044, %v1043
        %v1075 = vpack.c.bf16 %v1046, %v1045
        %v1076 = vpack.c.bf16 %v1048, %v1047
        %v1077 = vpack.c.bf16 %v1050, %v1049
        %v1078 = vpack.c.bf16 %v1052, %v1051
        %v1079 = vpack.c.bf16 %v1054, %v1053
        %v1080 = vpack.c.bf16 %v1056, %v1055
        %v1081 = vpack.c.bf16 %v1058, %v1057
        %v1082 = vpack.c.bf16 %v1060, %v1059
        %v1083 = vpack.c.bf16 %v1062, %v1061
        %v1084 = vpack.c.bf16 %v1064, %v1063
        %v1085 = vpack.c.bf16 %v1066, %v1065
        %v1086 = vpack.c.bf16 %v1068, %v1067
        %v1087 = vpack.c.bf16 %v1070, %v1069
        %v1088 = vpack.c.bf16 %v1072, %v1071
        %v1089 = vld [vmem:[%s3] sm:$0x3]
        %v1090 = vld [vmem:[%s1008 + $0x8] sm:$0xff]
        %v1091 = vld [vmem:[%s1008 + $0x10] sm:$0xff]
        %v1092 = vld [vmem:[%s1008 + $0x28] sm:$0xff]
        %v1093 = vld [vmem:[%s1008 + $0x30] sm:$0xff]
        %v1094 = vld [vmem:[%s1008 + $0x48] sm:$0xff]
        %v1095 = vld [vmem:[%s1008 + $0x50] sm:$0xff]
        %v1096 = vld [vmem:[%s1008 + $0x68] sm:$0xff]
        %v1097 = vld [vmem:[%s1008 + $0x70] sm:$0xff]
        %v1098 = vld [vmem:[%s1008 + $0x88] sm:$0xff]
        %v1099 = vld [vmem:[%s1008 + $0x90] sm:$0xff]
        %v1100 = vld [vmem:[%s1008 + $0xa8] sm:$0xff]
        %v1101 = vld [vmem:[%s1008 + $0xb0] sm:$0xff]
        %v1102 = vld [vmem:[%s1008 + $0xc8] sm:$0xff]
        %v1103 = vld [vmem:[%s1008 + $0xd0] sm:$0xff]
        %v1104 = vld [vmem:[%s1008 + $0xe8] sm:$0xff]
        %v1105 = vld [vmem:[%s1008 + $0xf0] sm:$0xff]
        %v1106 = vld [vmem:[%s1008 + $0x108] sm:$0xff]
        %v1107 = vld [vmem:[%s1008 + $0x110] sm:$0xff]
        %v1108 = vld [vmem:[%s1008 + $0x128] sm:$0xff]
        %v1109 = vld [vmem:[%s1008 + $0x130] sm:$0xff]
        %v1110 = vld [vmem:[%s1008 + $0x148] sm:$0xff]
        %v1111 = vld [vmem:[%s1008 + $0x150] sm:$0xff]
        %v1112 = vld [vmem:[%s1008 + $0x168] sm:$0xff]
        %v1113 = vld [vmem:[%s1008 + $0x170] sm:$0xff]
        %v1114 = vld [vmem:[%s1008 + $0x188] sm:$0xff]
        %v1115 = vld [vmem:[%s1008 + $0x190] sm:$0xff]
        %v1116 = vld [vmem:[%s1008 + $0x1a8] sm:$0xff]
        %v1117 = vld [vmem:[%s1008 + $0x1b0] sm:$0xff]
        %v1118 = vld [vmem:[%s1008 + $0x1c8] sm:$0xff]
        %v1119 = vld [vmem:[%s1008 + $0x1d0] sm:$0xff]
        %v1120 = vld [vmem:[%s1008 + $0x1e8] sm:$0xff]
        %v1121 = vld [vmem:[%s1008 + $0x1f0] sm:$0xff]
        %v1122 = vpack.c.bf16 %v1091, %v1090
        %v1123 = vpack.c.bf16 %v1093, %v1092
        %v1124 = vpack.c.bf16 %v1095, %v1094
        %v1125 = vpack.c.bf16 %v1097, %v1096
        %v1126 = vpack.c.bf16 %v1099, %v1098
        %v1127 = vpack.c.bf16 %v1101, %v1100
        %v1128 = vpack.c.bf16 %v1103, %v1102
        %v1129 = vpack.c.bf16 %v1105, %v1104
        %v1130 = vpack.c.bf16 %v1107, %v1106
        %v1131 = vpack.c.bf16 %v1109, %v1108
        %v1132 = vpack.c.bf16 %v1111, %v1110
        %v1133 = vpack.c.bf16 %v1113, %v1112
        %v1134 = vpack.c.bf16 %v1115, %v1114
        %v1135 = vpack.c.bf16 %v1117, %v1116
        %v1136 = vpack.c.bf16 %v1119, %v1118
        %v1137 = vpack.c.bf16 %v1121, %v1120
        %s1138 = scalar_lea.vmem %s3, 2
        %v1139 = vld [vmem:[%s1138] sm:$0x3]
        %v1141 = vsel %vm601, %v1122, 0
        %v1144 = vsel %vm601, %v1123, 0
        %v1147 = vsel %vm601, %v1124, 0
        %v1150 = vsel %vm601, %v1125, 0
        %v1153 = vsel %vm601, %v1126, 0
        %v1156 = vsel %vm601, %v1127, 0
        %v1159 = vsel %vm601, %v1128, 0
        %v1162 = vsel %vm601, %v1129, 0
        %v1165 = vsel %vm601, %v1130, 0
        %v1168 = vsel %vm601, %v1131, 0
        %v1171 = vsel %vm601, %v1132, 0
        %v1174 = vsel %vm601, %v1133, 0
        %v1177 = vsel %vm601, %v1134, 0
        %v1180 = vsel %vm601, %v1135, 0
        %v1183 = vsel %vm601, %v1136, 0
        %v1186 = vsel %vm601, %v1137, 0
        %v1189 = vsel %vm650, %v1139, 0
        %1191 = vmatpush.bf16.msra.mxu0 0
        %1192 = vmatpush.bf16.msra.mxu0 0
        %1193 = vmatpush.bf16.msra.mxu0 0
        %1194 = vmatpush.bf16.msra.mxu0 0
        %1195 = vmatpush.bf16.msra.mxu0 0
        %1196 = vmatpush.bf16.msra.mxu0 0
        %1197 = vmatpush.bf16.msra.mxu0 0
        %1198 = vmatpush.bf16.msra.mxu0 %v1189
        %1199 = vmatmul.bf16.gmra.mxu0 %v1141
        %v1200 = vpop.f32.mrf.mxu0
        %v1201 = vadd.f32 0.0, %v1200
        %v1202 = vpop.f32.mrf.mxu0
        %v1203 = vadd.f32 0.0, %v1202
        %1204 = vmatmul.bf16.gmra.mxu0 %v1144
        %v1205 = vpop.f32.mrf.mxu0
        %v1206 = vadd.f32 0.0, %v1205
        %v1207 = vpop.f32.mrf.mxu0
        %v1208 = vadd.f32 0.0, %v1207
        %1209 = vmatmul.bf16.gmra.mxu0 %v1147
        %v1210 = vpop.f32.mrf.mxu0
        %v1211 = vadd.f32 0.0, %v1210
        %v1212 = vpop.f32.mrf.mxu0
        %v1213 = vadd.f32 0.0, %v1212
        %1214 = vmatmul.bf16.gmra.mxu0 %v1150
        %v1215 = vpop.f32.mrf.mxu0
        %v1216 = vadd.f32 0.0, %v1215
        %v1217 = vpop.f32.mrf.mxu0
        %v1218 = vadd.f32 0.0, %v1217
        %1219 = vmatmul.bf16.gmra.mxu0 %v1153
        %v1220 = vpop.f32.mrf.mxu0
        %v1221 = vadd.f32 0.0, %v1220
        %v1222 = vpop.f32.mrf.mxu0
        %v1223 = vadd.f32 0.0, %v1222
        %1224 = vmatmul.bf16.gmra.mxu0 %v1156
        %v1225 = vpop.f32.mrf.mxu0
        %v1226 = vadd.f32 0.0, %v1225
        %v1227 = vpop.f32.mrf.mxu0
        %v1228 = vadd.f32 0.0, %v1227
        %1229 = vmatmul.bf16.gmra.mxu0 %v1159
        %v1230 = vpop.f32.mrf.mxu0
        %v1231 = vadd.f32 0.0, %v1230
        %v1232 = vpop.f32.mrf.mxu0
        %v1233 = vadd.f32 0.0, %v1232
        %1234 = vmatmul.bf16.gmra.mxu0 %v1162
        %v1235 = vpop.f32.mrf.mxu0
        %v1236 = vadd.f32 0.0, %v1235
        %v1237 = vpop.f32.mrf.mxu0
        %v1238 = vadd.f32 0.0, %v1237
        %1239 = vmatmul.bf16.gmra.mxu0 %v1165
        %v1240 = vpop.f32.mrf.mxu0
        %v1241 = vadd.f32 0.0, %v1240
        %v1242 = vpop.f32.mrf.mxu0
        %v1243 = vadd.f32 0.0, %v1242
        %1244 = vmatmul.bf16.gmra.mxu0 %v1168
        %v1245 = vpop.f32.mrf.mxu0
        %v1246 = vadd.f32 0.0, %v1245
        %v1247 = vpop.f32.mrf.mxu0
        %v1248 = vadd.f32 0.0, %v1247
        %1249 = vmatmul.bf16.gmra.mxu0 %v1171
        %v1250 = vpop.f32.mrf.mxu0
        %v1251 = vadd.f32 0.0, %v1250
        %v1252 = vpop.f32.mrf.mxu0
        %v1253 = vadd.f32 0.0, %v1252
        %1254 = vmatmul.bf16.gmra.mxu0 %v1174
        %v1255 = vpop.f32.mrf.mxu0
        %v1256 = vadd.f32 0.0, %v1255
        %v1257 = vpop.f32.mrf.mxu0
        %v1258 = vadd.f32 0.0, %v1257
        %1259 = vmatmul.bf16.gmra.mxu0 %v1177
        %v1260 = vpop.f32.mrf.mxu0
        %v1261 = vadd.f32 0.0, %v1260
        %v1262 = vpop.f32.mrf.mxu0
        %v1263 = vadd.f32 0.0, %v1262
        %1264 = vmatmul.bf16.gmra.mxu0 %v1180
        %v1265 = vpop.f32.mrf.mxu0
        %v1266 = vadd.f32 0.0, %v1265
        %v1267 = vpop.f32.mrf.mxu0
        %v1268 = vadd.f32 0.0, %v1267
        %1269 = vmatmul.bf16.gmra.mxu0 %v1183
        %v1270 = vpop.f32.mrf.mxu0
        %v1271 = vadd.f32 0.0, %v1270
        %v1272 = vpop.f32.mrf.mxu0
        %v1273 = vadd.f32 0.0, %v1272
        %1274 = vmatmul.bf16.gmra.mxu0 %v1186
        %v1275 = vpop.f32.mrf.mxu0
        %v1276 = vadd.f32 0.0, %v1275
        %v1277 = vpop.f32.mrf.mxu0
        %v1278 = vadd.f32 0.0, %v1277
        %1279 = vdwg.mxu0
        %v1281 = vsel %vm601, %v1073, 0
        %v1284 = vsel %vm601, %v1074, 0
        %v1287 = vsel %vm601, %v1075, 0
        %v1290 = vsel %vm601, %v1076, 0
        %v1293 = vsel %vm601, %v1077, 0
        %v1296 = vsel %vm601, %v1078, 0
        %v1299 = vsel %vm601, %v1079, 0
        %v1302 = vsel %vm601, %v1080, 0
        %v1305 = vsel %vm601, %v1081, 0
        %v1308 = vsel %vm601, %v1082, 0
        %v1311 = vsel %vm601, %v1083, 0
        %v1314 = vsel %vm601, %v1084, 0
        %v1317 = vsel %vm601, %v1085, 0
        %v1320 = vsel %vm601, %v1086, 0
        %v1323 = vsel %vm601, %v1087, 0
        %v1326 = vsel %vm601, %v1088, 0
        %v1329 = vsel %vm650, %v1089, 0
        %1331 = vmatpush.bf16.msra.mxu0 0
        %1332 = vmatpush.bf16.msra.mxu0 0
        %1333 = vmatpush.bf16.msra.mxu0 0
        %1334 = vmatpush.bf16.msra.mxu0 0
        %1335 = vmatpush.bf16.msra.mxu0 0
        %1336 = vmatpush.bf16.msra.mxu0 0
        %1337 = vmatpush.bf16.msra.mxu0 0
        %1338 = vmatpush.bf16.msra.mxu0 %v1329
        %1339 = vmatmul.bf16.gmra.mxu0 %v1281
        %v1340 = vpop.f32.mrf.mxu0
        %v1341 = vadd.f32 %v1201, %v1340
        %v1342 = vpop.f32.mrf.mxu0
        %v1343 = vadd.f32 %v1203, %v1342
        %1344 = vmatmul.bf16.gmra.mxu0 %v1284
        %v1345 = vpop.f32.mrf.mxu0
        %v1346 = vadd.f32 %v1206, %v1345
        %v1347 = vpop.f32.mrf.mxu0
        %v1348 = vadd.f32 %v1208, %v1347
        %1349 = vmatmul.bf16.gmra.mxu0 %v1287
        %v1350 = vpop.f32.mrf.mxu0
        %v1351 = vadd.f32 %v1211, %v1350
        %v1352 = vpop.f32.mrf.mxu0
        %v1353 = vadd.f32 %v1213, %v1352
        %1354 = vmatmul.bf16.gmra.mxu0 %v1290
        %v1355 = vpop.f32.mrf.mxu0
        %v1356 = vadd.f32 %v1216, %v1355
        %v1357 = vpop.f32.mrf.mxu0
        %v1358 = vadd.f32 %v1218, %v1357
        %1359 = vmatmul.bf16.gmra.mxu0 %v1293
        %v1360 = vpop.f32.mrf.mxu0
        %v1361 = vadd.f32 %v1221, %v1360
        %v1362 = vpop.f32.mrf.mxu0
        %v1363 = vadd.f32 %v1223, %v1362
        %1364 = vmatmul.bf16.gmra.mxu0 %v1296
        %v1365 = vpop.f32.mrf.mxu0
        %v1366 = vadd.f32 %v1226, %v1365
        %v1367 = vpop.f32.mrf.mxu0
        %v1368 = vadd.f32 %v1228, %v1367
        %1369 = vmatmul.bf16.gmra.mxu0 %v1299
        %v1370 = vpop.f32.mrf.mxu0
        %v1371 = vadd.f32 %v1231, %v1370
        %v1372 = vpop.f32.mrf.mxu0
        %v1373 = vadd.f32 %v1233, %v1372
        %1374 = vmatmul.bf16.gmra.mxu0 %v1302
        %v1375 = vpop.f32.mrf.mxu0
        %v1376 = vadd.f32 %v1236, %v1375
        %v1377 = vpop.f32.mrf.mxu0
        %v1378 = vadd.f32 %v1238, %v1377
        %1379 = vmatmul.bf16.gmra.mxu0 %v1305
        %v1380 = vpop.f32.mrf.mxu0
        %v1381 = vadd.f32 %v1241, %v1380
        %v1382 = vpop.f32.mrf.mxu0
        %v1383 = vadd.f32 %v1243, %v1382
        %1384 = vmatmul.bf16.gmra.mxu0 %v1308
        %v1385 = vpop.f32.mrf.mxu0
        %v1386 = vadd.f32 %v1246, %v1385
        %v1387 = vpop.f32.mrf.mxu0
        %v1388 = vadd.f32 %v1248, %v1387
        %1389 = vmatmul.bf16.gmra.mxu0 %v1311
        %v1390 = vpop.f32.mrf.mxu0
        %v1391 = vadd.f32 %v1251, %v1390
        %v1392 = vpop.f32.mrf.mxu0
        %v1393 = vadd.f32 %v1253, %v1392
        %1394 = vmatmul.bf16.gmra.mxu0 %v1314
        %v1395 = vpop.f32.mrf.mxu0
        %v1396 = vadd.f32 %v1256, %v1395
        %v1397 = vpop.f32.mrf.mxu0
        %v1398 = vadd.f32 %v1258, %v1397
        %1399 = vmatmul.bf16.gmra.mxu0 %v1317
        %v1400 = vpop.f32.mrf.mxu0
        %v1401 = vadd.f32 %v1261, %v1400
        %v1402 = vpop.f32.mrf.mxu0
        %v1403 = vadd.f32 %v1263, %v1402
        %1404 = vmatmul.bf16.gmra.mxu0 %v1320
        %v1405 = vpop.f32.mrf.mxu0
        %v1406 = vadd.f32 %v1266, %v1405
        %v1407 = vpop.f32.mrf.mxu0
        %v1408 = vadd.f32 %v1268, %v1407
        %1409 = vmatmul.bf16.gmra.mxu0 %v1323
        %v1410 = vpop.f32.mrf.mxu0
        %v1411 = vadd.f32 %v1271, %v1410
        %v1412 = vpop.f32.mrf.mxu0
        %v1413 = vadd.f32 %v1273, %v1412
        %1414 = vmatmul.bf16.gmra.mxu0 %v1326
        %v1415 = vpop.f32.mrf.mxu0
        %v1416 = vadd.f32 %v1276, %v1415
        %v1417 = vpop.f32.mrf.mxu0
        %v1418 = vadd.f32 %v1278, %v1417
        %1419 = vdwg.mxu0
        %v1420 = vld [vmem:[%s1008 + $0x9] sm:$0xff]
        %v1421 = vld [vmem:[%s1008 + $0x11] sm:$0xff]
        %v1422 = vld [vmem:[%s1008 + $0x29] sm:$0xff]
        %v1423 = vld [vmem:[%s1008 + $0x31] sm:$0xff]
        %v1424 = vld [vmem:[%s1008 + $0x49] sm:$0xff]
        %v1425 = vld [vmem:[%s1008 + $0x51] sm:$0xff]
        %v1426 = vld [vmem:[%s1008 + $0x69] sm:$0xff]
        %v1427 = vld [vmem:[%s1008 + $0x71] sm:$0xff]
        %v1428 = vld [vmem:[%s1008 + $0x89] sm:$0xff]
        %v1429 = vld [vmem:[%s1008 + $0x91] sm:$0xff]
        %v1430 = vld [vmem:[%s1008 + $0xa9] sm:$0xff]
        %v1431 = vld [vmem:[%s1008 + $0xb1] sm:$0xff]
        %v1432 = vld [vmem:[%s1008 + $0xc9] sm:$0xff]
        %v1433 = vld [vmem:[%s1008 + $0xd1] sm:$0xff]
        %v1434 = vld [vmem:[%s1008 + $0xe9] sm:$0xff]
        %v1435 = vld [vmem:[%s1008 + $0xf1] sm:$0xff]
        %v1436 = vld [vmem:[%s1008 + $0x109] sm:$0xff]
        %v1437 = vld [vmem:[%s1008 + $0x111] sm:$0xff]
        %v1438 = vld [vmem:[%s1008 + $0x129] sm:$0xff]
        %v1439 = vld [vmem:[%s1008 + $0x131] sm:$0xff]
        %v1440 = vld [vmem:[%s1008 + $0x149] sm:$0xff]
        %v1441 = vld [vmem:[%s1008 + $0x151] sm:$0xff]
        %v1442 = vld [vmem:[%s1008 + $0x169] sm:$0xff]
        %v1443 = vld [vmem:[%s1008 + $0x171] sm:$0xff]
        %v1444 = vld [vmem:[%s1008 + $0x189] sm:$0xff]
        %v1445 = vld [vmem:[%s1008 + $0x191] sm:$0xff]
        %v1446 = vld [vmem:[%s1008 + $0x1a9] sm:$0xff]
        %v1447 = vld [vmem:[%s1008 + $0x1b1] sm:$0xff]
        %v1448 = vld [vmem:[%s1008 + $0x1c9] sm:$0xff]
        %v1449 = vld [vmem:[%s1008 + $0x1d1] sm:$0xff]
        %v1450 = vld [vmem:[%s1008 + $0x1e9] sm:$0xff]
        %v1451 = vld [vmem:[%s1008 + $0x1f1] sm:$0xff]
        %v1452 = vpack.c.bf16 %v1421, %v1420
        %v1453 = vpack.c.bf16 %v1423, %v1422
        %v1454 = vpack.c.bf16 %v1425, %v1424
        %v1455 = vpack.c.bf16 %v1427, %v1426
        %v1456 = vpack.c.bf16 %v1429, %v1428
        %v1457 = vpack.c.bf16 %v1431, %v1430
        %v1458 = vpack.c.bf16 %v1433, %v1432
        %v1459 = vpack.c.bf16 %v1435, %v1434
        %v1460 = vpack.c.bf16 %v1437, %v1436
        %v1461 = vpack.c.bf16 %v1439, %v1438
        %v1462 = vpack.c.bf16 %v1441, %v1440
        %v1463 = vpack.c.bf16 %v1443, %v1442
        %v1464 = vpack.c.bf16 %v1445, %v1444
        %v1465 = vpack.c.bf16 %v1447, %v1446
        %v1466 = vpack.c.bf16 %v1449, %v1448
        %v1467 = vpack.c.bf16 %v1451, %v1450
        %s1468 = scalar_lea.vmem %s3, 4
        %v1469 = vld [vmem:[%s1468] sm:$0x3]
        %v1471 = vsel %vm601, %v1452, 0
        %v1474 = vsel %vm601, %v1453, 0
        %v1477 = vsel %vm601, %v1454, 0
        %v1480 = vsel %vm601, %v1455, 0
        %v1483 = vsel %vm601, %v1456, 0
        %v1486 = vsel %vm601, %v1457, 0
        %v1489 = vsel %vm601, %v1458, 0
        %v1492 = vsel %vm601, %v1459, 0
        %v1495 = vsel %vm601, %v1460, 0
        %v1498 = vsel %vm601, %v1461, 0
        %v1501 = vsel %vm601, %v1462, 0
        %v1504 = vsel %vm601, %v1463, 0
        %v1507 = vsel %vm601, %v1464, 0
        %v1510 = vsel %vm601, %v1465, 0
        %v1513 = vsel %vm601, %v1466, 0
        %v1516 = vsel %vm601, %v1467, 0
        %v1519 = vsel %vm650, %v1469, 0
        %1521 = vmatpush.bf16.msra.mxu0 0
        %1522 = vmatpush.bf16.msra.mxu0 0
        %1523 = vmatpush.bf16.msra.mxu0 0
        %1524 = vmatpush.bf16.msra.mxu0 0
        %1525 = vmatpush.bf16.msra.mxu0 0
        %1526 = vmatpush.bf16.msra.mxu0 0
        %1527 = vmatpush.bf16.msra.mxu0 0
        %1528 = vmatpush.bf16.msra.mxu0 %v1519
        %1529 = vmatmul.bf16.gmra.mxu0 %v1471
        %v1530 = vpop.f32.mrf.mxu0
        %v1531 = vadd.f32 0.0, %v1530
        %v1532 = vpop.f32.mrf.mxu0
        %v1533 = vadd.f32 0.0, %v1532
        %1534 = vmatmul.bf16.gmra.mxu0 %v1474
        %v1535 = vpop.f32.mrf.mxu0
        %v1536 = vadd.f32 0.0, %v1535
        %v1537 = vpop.f32.mrf.mxu0
        %v1538 = vadd.f32 0.0, %v1537
        %1539 = vmatmul.bf16.gmra.mxu0 %v1477
        %v1540 = vpop.f32.mrf.mxu0
        %v1541 = vadd.f32 0.0, %v1540
        %v1542 = vpop.f32.mrf.mxu0
        %v1543 = vadd.f32 0.0, %v1542
        %1544 = vmatmul.bf16.gmra.mxu0 %v1480
        %v1545 = vpop.f32.mrf.mxu0
        %v1546 = vadd.f32 0.0, %v1545
        %v1547 = vpop.f32.mrf.mxu0
        %v1548 = vadd.f32 0.0, %v1547
        %1549 = vmatmul.bf16.gmra.mxu0 %v1483
        %v1550 = vpop.f32.mrf.mxu0
        %v1551 = vadd.f32 0.0, %v1550
        %v1552 = vpop.f32.mrf.mxu0
        %v1553 = vadd.f32 0.0, %v1552
        %1554 = vmatmul.bf16.gmra.mxu0 %v1486
        %v1555 = vpop.f32.mrf.mxu0
        %v1556 = vadd.f32 0.0, %v1555
        %v1557 = vpop.f32.mrf.mxu0
        %v1558 = vadd.f32 0.0, %v1557
        %1559 = vmatmul.bf16.gmra.mxu0 %v1489
        %v1560 = vpop.f32.mrf.mxu0
        %v1561 = vadd.f32 0.0, %v1560
        %v1562 = vpop.f32.mrf.mxu0
        %v1563 = vadd.f32 0.0, %v1562
        %1564 = vmatmul.bf16.gmra.mxu0 %v1492
        %v1565 = vpop.f32.mrf.mxu0
        %v1566 = vadd.f32 0.0, %v1565
        %v1567 = vpop.f32.mrf.mxu0
        %v1568 = vadd.f32 0.0, %v1567
        %1569 = vmatmul.bf16.gmra.mxu0 %v1495
        %v1570 = vpop.f32.mrf.mxu0
        %v1571 = vadd.f32 0.0, %v1570
        %v1572 = vpop.f32.mrf.mxu0
        %v1573 = vadd.f32 0.0, %v1572
        %1574 = vmatmul.bf16.gmra.mxu0 %v1498
        %v1575 = vpop.f32.mrf.mxu0
        %v1576 = vadd.f32 0.0, %v1575
        %v1577 = vpop.f32.mrf.mxu0
        %v1578 = vadd.f32 0.0, %v1577
        %1579 = vmatmul.bf16.gmra.mxu0 %v1501
        %v1580 = vpop.f32.mrf.mxu0
        %v1581 = vadd.f32 0.0, %v1580
        %v1582 = vpop.f32.mrf.mxu0
        %v1583 = vadd.f32 0.0, %v1582
        %1584 = vmatmul.bf16.gmra.mxu0 %v1504
        %v1585 = vpop.f32.mrf.mxu0
        %v1586 = vadd.f32 0.0, %v1585
        %v1587 = vpop.f32.mrf.mxu0
        %v1588 = vadd.f32 0.0, %v1587
        %1589 = vmatmul.bf16.gmra.mxu0 %v1507
        %v1590 = vpop.f32.mrf.mxu0
        %v1591 = vadd.f32 0.0, %v1590
        %v1592 = vpop.f32.mrf.mxu0
        %v1593 = vadd.f32 0.0, %v1592
        %1594 = vmatmul.bf16.gmra.mxu0 %v1510
        %v1595 = vpop.f32.mrf.mxu0
        %v1596 = vadd.f32 0.0, %v1595
        %v1597 = vpop.f32.mrf.mxu0
        %v1598 = vadd.f32 0.0, %v1597
        %1599 = vmatmul.bf16.gmra.mxu0 %v1513
        %v1600 = vpop.f32.mrf.mxu0
        %v1601 = vadd.f32 0.0, %v1600
        %v1602 = vpop.f32.mrf.mxu0
        %v1603 = vadd.f32 0.0, %v1602
        %1604 = vmatmul.bf16.gmra.mxu0 %v1516
        %v1605 = vpop.f32.mrf.mxu0
        %v1606 = vadd.f32 0.0, %v1605
        %v1607 = vpop.f32.mrf.mxu0
        %v1608 = vadd.f32 0.0, %v1607
        %1609 = vdwg.mxu0
        %v1610 = vadd.f32 %v1341, %v1531
        %v1611 = vadd.f32 %v1343, %v1533
        %v1612 = vadd.f32 %v1346, %v1536
        %v1613 = vadd.f32 %v1348, %v1538
        %v1614 = vadd.f32 %v1351, %v1541
        %v1615 = vadd.f32 %v1353, %v1543
        %v1616 = vadd.f32 %v1356, %v1546
        %v1617 = vadd.f32 %v1358, %v1548
        %v1618 = vadd.f32 %v1361, %v1551
        %v1619 = vadd.f32 %v1363, %v1553
        %v1620 = vadd.f32 %v1366, %v1556
        %v1621 = vadd.f32 %v1368, %v1558
        %v1622 = vadd.f32 %v1371, %v1561
        %v1623 = vadd.f32 %v1373, %v1563
        %v1624 = vadd.f32 %v1376, %v1566
        %v1625 = vadd.f32 %v1378, %v1568
        %v1626 = vadd.f32 %v1381, %v1571
        %v1627 = vadd.f32 %v1383, %v1573
        %v1628 = vadd.f32 %v1386, %v1576
        %v1629 = vadd.f32 %v1388, %v1578
        %v1630 = vadd.f32 %v1391, %v1581
        %v1631 = vadd.f32 %v1393, %v1583
        %v1632 = vadd.f32 %v1396, %v1586
        %v1633 = vadd.f32 %v1398, %v1588
        %v1634 = vadd.f32 %v1401, %v1591
        %v1635 = vadd.f32 %v1403, %v1593
        %v1636 = vadd.f32 %v1406, %v1596
        %v1637 = vadd.f32 %v1408, %v1598
        %v1638 = vadd.f32 %v1411, %v1601
        %v1639 = vadd.f32 %v1413, %v1603
        %v1640 = vadd.f32 %v1416, %v1606
        %v1641 = vadd.f32 %v1418, %v1608
        %v1642 = vld [vmem:[%s4] sm:$0x1]
        %v1644 = vperm.slane %v1642, 0
        %v1646 = vadd.f32 %v1610, %v1644
        %v1647 = vadd.f32 %v1611, %v1644
        %v1648 = vadd.f32 %v1612, %v1644
        %v1649 = vadd.f32 %v1613, %v1644
        %v1650 = vadd.f32 %v1614, %v1644
        %v1651 = vadd.f32 %v1615, %v1644
        %v1652 = vadd.f32 %v1616, %v1644
        %v1653 = vadd.f32 %v1617, %v1644
        %v1654 = vadd.f32 %v1618, %v1644
        %v1655 = vadd.f32 %v1619, %v1644
        %v1656 = vadd.f32 %v1620, %v1644
        %v1657 = vadd.f32 %v1621, %v1644
        %v1658 = vadd.f32 %v1622, %v1644
        %v1659 = vadd.f32 %v1623, %v1644
        %v1660 = vadd.f32 %v1624, %v1644
        %v1661 = vadd.f32 %v1625, %v1644
        %v1662 = vadd.f32 %v1626, %v1644
        %v1663 = vadd.f32 %v1627, %v1644
        %v1664 = vadd.f32 %v1628, %v1644
        %v1665 = vadd.f32 %v1629, %v1644
        %v1666 = vadd.f32 %v1630, %v1644
        %v1667 = vadd.f32 %v1631, %v1644
        %v1668 = vadd.f32 %v1632, %v1644
        %v1669 = vadd.f32 %v1633, %v1644
        %v1670 = vadd.f32 %v1634, %v1644
        %v1671 = vadd.f32 %v1635, %v1644
        %v1672 = vadd.f32 %v1636, %v1644
        %v1673 = vadd.f32 %v1637, %v1644
        %v1674 = vadd.f32 %v1638, %v1644
        %v1675 = vadd.f32 %v1639, %v1644
        %v1676 = vadd.f32 %v1640, %v1644
        %v1677 = vadd.f32 %v1641, %v1644
        %v1678 = vmax.f32 %v1646, 0.0
        %v1679 = vmax.f32 %v1647, 0.0
        %v1680 = vmax.f32 %v1648, 0.0
        %v1681 = vmax.f32 %v1649, 0.0
        %v1682 = vmax.f32 %v1650, 0.0
        %v1683 = vmax.f32 %v1651, 0.0
        %v1684 = vmax.f32 %v1652, 0.0
        %v1685 = vmax.f32 %v1653, 0.0
        %v1686 = vmax.f32 %v1654, 0.0
        %v1687 = vmax.f32 %v1655, 0.0
        %v1688 = vmax.f32 %v1656, 0.0
        %v1689 = vmax.f32 %v1657, 0.0
        %v1690 = vmax.f32 %v1658, 0.0
        %v1691 = vmax.f32 %v1659, 0.0
        %v1692 = vmax.f32 %v1660, 0.0
        %v1693 = vmax.f32 %v1661, 0.0
        %v1694 = vmax.f32 %v1662, 0.0
        %v1695 = vmax.f32 %v1663, 0.0
        %v1696 = vmax.f32 %v1664, 0.0
        %v1697 = vmax.f32 %v1665, 0.0
        %v1698 = vmax.f32 %v1666, 0.0
        %v1699 = vmax.f32 %v1667, 0.0
        %v1700 = vmax.f32 %v1668, 0.0
        %v1701 = vmax.f32 %v1669, 0.0
        %v1702 = vmax.f32 %v1670, 0.0
        %v1703 = vmax.f32 %v1671, 0.0
        %v1704 = vmax.f32 %v1672, 0.0
        %v1705 = vmax.f32 %v1673, 0.0
        %v1706 = vmax.f32 %v1674, 0.0
        %v1707 = vmax.f32 %v1675, 0.0
        %v1708 = vmax.f32 %v1676, 0.0
        %v1709 = vmax.f32 %v1677, 0.0
        %1742 = vrot.lane.b32.xlu0 %v1678, 8
        %v1743 = vpop.permute.xlu0 %1742
        %1744 = vrot.lane.b32.xlu0 %v1679, 8
        %v1745 = vpop.permute.xlu0 %1744
        %1746 = vrot.lane.b32.xlu0 %v1680, 8
        %v1747 = vpop.permute.xlu0 %1746
        %1748 = vrot.lane.b32.xlu0 %v1681, 8
        %v1749 = vpop.permute.xlu0 %1748
        %1750 = vrot.lane.b32.xlu0 %v1682, 8
        %v1751 = vpop.permute.xlu0 %1750
        %1752 = vrot.lane.b32.xlu0 %v1683, 8
        %v1753 = vpop.permute.xlu0 %1752
        %1754 = vrot.lane.b32.xlu0 %v1684, 8
        %v1755 = vpop.permute.xlu0 %1754
        %1756 = vrot.lane.b32.xlu0 %v1685, 8
        %v1757 = vpop.permute.xlu0 %1756
        %1758 = vrot.lane.b32.xlu0 %v1686, 8
        %v1759 = vpop.permute.xlu0 %1758
        %1760 = vrot.lane.b32.xlu0 %v1687, 8
        %v1761 = vpop.permute.xlu0 %1760
        %1762 = vrot.lane.b32.xlu0 %v1688, 8
        %v1763 = vpop.permute.xlu0 %1762
        %1764 = vrot.lane.b32.xlu0 %v1689, 8
        %v1765 = vpop.permute.xlu0 %1764
        %1766 = vrot.lane.b32.xlu0 %v1690, 8
        %v1767 = vpop.permute.xlu0 %1766
        %1768 = vrot.lane.b32.xlu0 %v1691, 8
        %v1769 = vpop.permute.xlu0 %1768
        %1770 = vrot.lane.b32.xlu0 %v1692, 8
        %v1771 = vpop.permute.xlu0 %1770
        %1772 = vrot.lane.b32.xlu0 %v1693, 8
        %v1773 = vpop.permute.xlu0 %1772
        %1774 = vrot.lane.b32.xlu0 %v1694, 8
        %v1775 = vpop.permute.xlu0 %1774
        %1776 = vrot.lane.b32.xlu0 %v1695, 8
        %v1777 = vpop.permute.xlu0 %1776
        %1778 = vrot.lane.b32.xlu0 %v1696, 8
        %v1779 = vpop.permute.xlu0 %1778
        %1780 = vrot.lane.b32.xlu0 %v1697, 8
        %v1781 = vpop.permute.xlu0 %1780
        %1782 = vrot.lane.b32.xlu0 %v1698, 8
        %v1783 = vpop.permute.xlu0 %1782
        %1784 = vrot.lane.b32.xlu0 %v1699, 8
        %v1785 = vpop.permute.xlu0 %1784
        %1786 = vrot.lane.b32.xlu0 %v1700, 8
        %v1787 = vpop.permute.xlu0 %1786
        %1788 = vrot.lane.b32.xlu0 %v1701, 8
        %v1789 = vpop.permute.xlu0 %1788
        %1790 = vrot.lane.b32.xlu0 %v1702, 8
        %v1791 = vpop.permute.xlu0 %1790
        %1792 = vrot.lane.b32.xlu0 %v1703, 8
        %v1793 = vpop.permute.xlu0 %1792
        %1794 = vrot.lane.b32.xlu0 %v1704, 8
        %v1795 = vpop.permute.xlu0 %1794
        %1796 = vrot.lane.b32.xlu0 %v1705, 8
        %v1797 = vpop.permute.xlu0 %1796
        %1798 = vrot.lane.b32.xlu0 %v1706, 8
        %v1799 = vpop.permute.xlu0 %1798
        %1800 = vrot.lane.b32.xlu0 %v1707, 8
        %v1801 = vpop.permute.xlu0 %1800
        %1802 = vrot.lane.b32.xlu0 %v1708, 8
        %v1803 = vpop.permute.xlu0 %1802
        %1804 = vrot.lane.b32.xlu0 %v1709, 8
        %v1805 = vpop.permute.xlu0 %1804
        %vm1838 = vcmask 130112
        %1839 = vst.msk [vmem:[%s541] sm:$0xff] %vm1838, %v1743
        %1840 = vst.msk [vmem:[%s541 + $0x8] sm:$0xff] %vm1838, %v1745
        %1841 = vst.msk [vmem:[%s541 + $0x10] sm:$0xff] %vm1838, %v1747
        %1842 = vst.msk [vmem:[%s541 + $0x18] sm:$0xff] %vm1838, %v1749
        %1843 = vst.msk [vmem:[%s541 + $0x20] sm:$0xff] %vm1838, %v1751
        %1844 = vst.msk [vmem:[%s541 + $0x28] sm:$0xff] %vm1838, %v1753
        %1845 = vst.msk [vmem:[%s541 + $0x30] sm:$0xff] %vm1838, %v1755
        %1846 = vst.msk [vmem:[%s541 + $0x38] sm:$0xff] %vm1838, %v1757
        %1847 = vst.msk [vmem:[%s541 + $0x40] sm:$0xff] %vm1838, %v1759
        %1848 = vst.msk [vmem:[%s541 + $0x48] sm:$0xff] %vm1838, %v1761
        %1849 = vst.msk [vmem:[%s541 + $0x50] sm:$0xff] %vm1838, %v1763
        %1850 = vst.msk [vmem:[%s541 + $0x58] sm:$0xff] %vm1838, %v1765
        %1851 = vst.msk [vmem:[%s541 + $0x60] sm:$0xff] %vm1838, %v1767
        %1852 = vst.msk [vmem:[%s541 + $0x68] sm:$0xff] %vm1838, %v1769
        %1853 = vst.msk [vmem:[%s541 + $0x70] sm:$0xff] %vm1838, %v1771
        %1854 = vst.msk [vmem:[%s541 + $0x78] sm:$0xff] %vm1838, %v1773
        %1855 = vst.msk [vmem:[%s541 + $0x80] sm:$0xff] %vm1838, %v1775
        %1856 = vst.msk [vmem:[%s541 + $0x88] sm:$0xff] %vm1838, %v1777
        %1857 = vst.msk [vmem:[%s541 + $0x90] sm:$0xff] %vm1838, %v1779
        %1858 = vst.msk [vmem:[%s541 + $0x98] sm:$0xff] %vm1838, %v1781
        %1859 = vst.msk [vmem:[%s541 + $0xa0] sm:$0xff] %vm1838, %v1783
        %1860 = vst.msk [vmem:[%s541 + $0xa8] sm:$0xff] %vm1838, %v1785
        %1861 = vst.msk [vmem:[%s541 + $0xb0] sm:$0xff] %vm1838, %v1787
        %1862 = vst.msk [vmem:[%s541 + $0xb8] sm:$0xff] %vm1838, %v1789
        %1863 = vst.msk [vmem:[%s541 + $0xc0] sm:$0xff] %vm1838, %v1791
        %1864 = vst.msk [vmem:[%s541 + $0xc8] sm:$0xff] %vm1838, %v1793
        %1865 = vst.msk [vmem:[%s541 + $0xd0] sm:$0xff] %vm1838, %v1795
        %1866 = vst.msk [vmem:[%s541 + $0xd8] sm:$0xff] %vm1838, %v1797
        %1867 = vst.msk [vmem:[%s541 + $0xe0] sm:$0xff] %vm1838, %v1799
        %1868 = vst.msk [vmem:[%s541 + $0xe8] sm:$0xff] %vm1838, %v1801
        %1869 = vst.msk [vmem:[%s541 + $0xf0] sm:$0xff] %vm1838, %v1803
        %1870 = vst.msk [vmem:[%s541 + $0xf8] sm:$0xff] %vm1838, %v1805
        %1871 = vst.msk [vmem:[#allocation2] sm:$0xff] %vm775, 0.0
        %1872 = vst.msk [vmem:[#allocation2 + $0x8] sm:$0xff] %vm775, 0.0
        %1873 = vst.msk [vmem:[#allocation2 + $0x10] sm:$0xff] %vm775, 0.0
        %1874 = vst.msk [vmem:[#allocation2 + $0x18] sm:$0xff] %vm775, 0.0
        %1875 = vst.msk [vmem:[#allocation2 + $0x20] sm:$0xff] %vm775, 0.0
        %1876 = vst.msk [vmem:[#allocation2 + $0x28] sm:$0xff] %vm775, 0.0
        %1877 = vst.msk [vmem:[#allocation2 + $0x30] sm:$0xff] %vm775, 0.0
        %1878 = vst.msk [vmem:[#allocation2 + $0x38] sm:$0xff] %vm775, 0.0
        %1879 = vst.msk [vmem:[#allocation2 + $0x40] sm:$0xff] %vm775, 0.0
        %1880 = vst.msk [vmem:[#allocation2 + $0x48] sm:$0xff] %vm775, 0.0
        %1881 = vst.msk [vmem:[#allocation2 + $0x50] sm:$0xff] %vm775, 0.0
        %1882 = vst.msk [vmem:[#allocation2 + $0x58] sm:$0xff] %vm775, 0.0
        %1883 = vst.msk [vmem:[#allocation2 + $0x60] sm:$0xff] %vm775, 0.0
        %1884 = vst.msk [vmem:[#allocation2 + $0x68] sm:$0xff] %vm775, 0.0
        %1885 = vst.msk [vmem:[#allocation2 + $0x70] sm:$0xff] %vm775, 0.0
        %1886 = vst.msk [vmem:[#allocation2 + $0x78] sm:$0xff] %vm775, 0.0
        %1887 = vst.msk [vmem:[#allocation2 + $0x80] sm:$0xff] %vm775, 0.0
        %1888 = vst.msk [vmem:[#allocation2 + $0x88] sm:$0xff] %vm775, 0.0
        %1889 = vst.msk [vmem:[#allocation2 + $0x90] sm:$0xff] %vm775, 0.0
        %1890 = vst.msk [vmem:[#allocation2 + $0x98] sm:$0xff] %vm775, 0.0
        %1891 = vst.msk [vmem:[#allocation2 + $0xa0] sm:$0xff] %vm775, 0.0
        %1892 = vst.msk [vmem:[#allocation2 + $0xa8] sm:$0xff] %vm775, 0.0
        %1893 = vst.msk [vmem:[#allocation2 + $0xb0] sm:$0xff] %vm775, 0.0
        %1894 = vst.msk [vmem:[#allocation2 + $0xb8] sm:$0xff] %vm775, 0.0
        %1895 = vst.msk [vmem:[#allocation2 + $0xc0] sm:$0xff] %vm775, 0.0
        %1896 = vst.msk [vmem:[#allocation2 + $0xc8] sm:$0xff] %vm775, 0.0
        %1897 = vst.msk [vmem:[#allocation2 + $0xd0] sm:$0xff] %vm775, 0.0
        %1898 = vst.msk [vmem:[#allocation2 + $0xd8] sm:$0xff] %vm775, 0.0
        %1899 = vst.msk [vmem:[#allocation2 + $0xe0] sm:$0xff] %vm775, 0.0
        %1900 = vst.msk [vmem:[#allocation2 + $0xe8] sm:$0xff] %vm775, 0.0
        %1901 = vst.msk [vmem:[#allocation2 + $0xf0] sm:$0xff] %vm775, 0.0
        %1902 = vst.msk [vmem:[#allocation2 + $0xf8] sm:$0xff] %vm775, 0.0
        %1903 = vst.msk [vmem:[#allocation2 + $0x100] sm:$0xff] %vm775, 0.0
        %1904 = vst.msk [vmem:[#allocation2 + $0x108] sm:$0xff] %vm775, 0.0
        %1905 = vst.msk [vmem:[#allocation2 + $0x110] sm:$0xff] %vm775, 0.0
        %1906 = vst.msk [vmem:[#allocation2 + $0x118] sm:$0xff] %vm775, 0.0
        %1907 = vst.msk [vmem:[#allocation2 + $0x120] sm:$0xff] %vm775, 0.0
        %1908 = vst.msk [vmem:[#allocation2 + $0x128] sm:$0xff] %vm775, 0.0
        %1909 = vst.msk [vmem:[#allocation2 + $0x130] sm:$0xff] %vm775, 0.0
        %1910 = vst.msk [vmem:[#allocation2 + $0x138] sm:$0xff] %vm775, 0.0
        %1911 = vst.msk [vmem:[#allocation2 + $0x140] sm:$0xff] %vm775, 0.0
        %1912 = vst.msk [vmem:[#allocation2 + $0x148] sm:$0xff] %vm775, 0.0
        %1913 = vst.msk [vmem:[#allocation2 + $0x150] sm:$0xff] %vm775, 0.0
        %1914 = vst.msk [vmem:[#allocation2 + $0x158] sm:$0xff] %vm775, 0.0
        %1915 = vst.msk [vmem:[#allocation2 + $0x160] sm:$0xff] %vm775, 0.0
        %1916 = vst.msk [vmem:[#allocation2 + $0x168] sm:$0xff] %vm775, 0.0
        %1917 = vst.msk [vmem:[#allocation2 + $0x170] sm:$0xff] %vm775, 0.0
        %1918 = vst.msk [vmem:[#allocation2 + $0x178] sm:$0xff] %vm775, 0.0
        %1919 = vst.msk [vmem:[#allocation2 + $0x180] sm:$0xff] %vm775, 0.0
        %1920 = vst.msk [vmem:[#allocation2 + $0x188] sm:$0xff] %vm775, 0.0
        %1921 = vst.msk [vmem:[#allocation2 + $0x190] sm:$0xff] %vm775, 0.0
        %1922 = vst.msk [vmem:[#allocation2 + $0x198] sm:$0xff] %vm775, 0.0
        %1923 = vst.msk [vmem:[#allocation2 + $0x1a0] sm:$0xff] %vm775, 0.0
        %1924 = vst.msk [vmem:[#allocation2 + $0x1a8] sm:$0xff] %vm775, 0.0
        %1925 = vst.msk [vmem:[#allocation2 + $0x1b0] sm:$0xff] %vm775, 0.0
        %1926 = vst.msk [vmem:[#allocation2 + $0x1b8] sm:$0xff] %vm775, 0.0
        %1927 = vst.msk [vmem:[#allocation2 + $0x1c0] sm:$0xff] %vm775, 0.0
        %1928 = vst.msk [vmem:[#allocation2 + $0x1c8] sm:$0xff] %vm775, 0.0
        %1929 = vst.msk [vmem:[#allocation2 + $0x1d0] sm:$0xff] %vm775, 0.0
        %1930 = vst.msk [vmem:[#allocation2 + $0x1d8] sm:$0xff] %vm775, 0.0
        %1931 = vst.msk [vmem:[#allocation2 + $0x1e0] sm:$0xff] %vm775, 0.0
        %1932 = vst.msk [vmem:[#allocation2 + $0x1e8] sm:$0xff] %vm775, 0.0
        %1933 = vst.msk [vmem:[#allocation2 + $0x1f0] sm:$0xff] %vm775, 0.0
        %1934 = vst.msk [vmem:[#allocation2 + $0x1f8] sm:$0xff] %vm775, 0.0
        %1935 = vst.msk [vmem:[#allocation2 + $0x200] sm:$0xff] %vm775, 0.0
        %1936 = vst.msk [vmem:[#allocation2 + $0x208] sm:$0xff] %vm775, 0.0
        %1937 = vst.msk [vmem:[#allocation2 + $0x210] sm:$0xff] %vm775, 0.0
        %1938 = vst.msk [vmem:[#allocation2 + $0x218] sm:$0xff] %vm775, 0.0
        %1939 = vst.msk [vmem:[#allocation2 + $0x220] sm:$0xff] %vm775, 0.0
        %1940 = vst.msk [vmem:[#allocation2 + $0x228] sm:$0xff] %vm775, 0.0
        %1941 = vst.msk [vmem:[#allocation2 + $0x230] sm:$0xff] %vm775, 0.0
        %1942 = vst.msk [vmem:[#allocation2 + $0x238] sm:$0xff] %vm775, 0.0
        %1943 = vrot.lane.b32.xlu0 %v743, 116
        %v1944 = vpop.permute.xlu0 %1943
        %1945 = vrot.lane.b32.xlu0 %v744, 116
        %v1946 = vpop.permute.xlu0 %1945
        %1947 = vrot.lane.b32.xlu0 %v745, 116
        %v1948 = vpop.permute.xlu0 %1947
        %1949 = vrot.lane.b32.xlu0 %v746, 116
        %v1950 = vpop.permute.xlu0 %1949
        %1951 = vrot.lane.b32.xlu0 %v747, 116
        %v1952 = vpop.permute.xlu0 %1951
        %1953 = vrot.lane.b32.xlu0 %v748, 116
        %v1954 = vpop.permute.xlu0 %1953
        %1955 = vrot.lane.b32.xlu0 %v749, 116
        %v1956 = vpop.permute.xlu0 %1955
        %1957 = vrot.lane.b32.xlu0 %v750, 116
        %v1958 = vpop.permute.xlu0 %1957
        %1959 = vrot.lane.b32.xlu0 %v751, 116
        %v1960 = vpop.permute.xlu0 %1959
        %1961 = vrot.lane.b32.xlu0 %v752, 116
        %v1962 = vpop.permute.xlu0 %1961
        %1963 = vrot.lane.b32.xlu0 %v753, 116
        %v1964 = vpop.permute.xlu0 %1963
        %1965 = vrot.lane.b32.xlu0 %v754, 116
        %v1966 = vpop.permute.xlu0 %1965
        %1967 = vrot.lane.b32.xlu0 %v755, 116
        %v1968 = vpop.permute.xlu0 %1967
        %1969 = vrot.lane.b32.xlu0 %v756, 116
        %v1970 = vpop.permute.xlu0 %1969
        %1971 = vrot.lane.b32.xlu0 %v757, 116
        %v1972 = vpop.permute.xlu0 %1971
        %1973 = vrot.lane.b32.xlu0 %v758, 116
        %v1974 = vpop.permute.xlu0 %1973
        %1975 = vrot.lane.b32.xlu0 %v759, 116
        %v1976 = vpop.permute.xlu0 %1975
        %1977 = vrot.lane.b32.xlu0 %v760, 116
        %v1978 = vpop.permute.xlu0 %1977
        %1979 = vrot.lane.b32.xlu0 %v761, 116
        %v1980 = vpop.permute.xlu0 %1979
        %1981 = vrot.lane.b32.xlu0 %v762, 116
        %v1982 = vpop.permute.xlu0 %1981
        %1983 = vrot.lane.b32.xlu0 %v763, 116
        %v1984 = vpop.permute.xlu0 %1983
        %1985 = vrot.lane.b32.xlu0 %v764, 116
        %v1986 = vpop.permute.xlu0 %1985
        %1987 = vrot.lane.b32.xlu0 %v765, 116
        %v1988 = vpop.permute.xlu0 %1987
        %1989 = vrot.lane.b32.xlu0 %v766, 116
        %v1990 = vpop.permute.xlu0 %1989
        %1991 = vrot.lane.b32.xlu0 %v767, 116
        %v1992 = vpop.permute.xlu0 %1991
        %1993 = vrot.lane.b32.xlu0 %v768, 116
        %v1994 = vpop.permute.xlu0 %1993
        %1995 = vrot.lane.b32.xlu0 %v769, 116
        %v1996 = vpop.permute.xlu0 %1995
        %1997 = vrot.lane.b32.xlu0 %v770, 116
        %v1998 = vpop.permute.xlu0 %1997
        %1999 = vrot.lane.b32.xlu0 %v771, 116
        %v2000 = vpop.permute.xlu0 %1999
        %2001 = vrot.lane.b32.xlu0 %v772, 116
        %v2002 = vpop.permute.xlu0 %2001
        %2003 = vrot.lane.b32.xlu0 %v773, 116
        %v2004 = vpop.permute.xlu0 %2003
        %2005 = vrot.lane.b32.xlu0 %v774, 116
        %v2006 = vpop.permute.xlu0 %2005
        %2039 = vst.msk [vmem:[%s1008 + $0x8] sm:$0xff] %vm601, %v1944
        %2040 = vst.msk [vmem:[%s1008 + $0x10] sm:$0xff] %vm601, %v1946
        %2041 = vst.msk [vmem:[%s1008 + $0x28] sm:$0xff] %vm601, %v1948
        %2042 = vst.msk [vmem:[%s1008 + $0x30] sm:$0xff] %vm601, %v1950
        %2043 = vst.msk [vmem:[%s1008 + $0x48] sm:$0xff] %vm601, %v1952
        %2044 = vst.msk [vmem:[%s1008 + $0x50] sm:$0xff] %vm601, %v1954
        %2045 = vst.msk [vmem:[%s1008 + $0x68] sm:$0xff] %vm601, %v1956
        %2046 = vst.msk [vmem:[%s1008 + $0x70] sm:$0xff] %vm601, %v1958
        %2047 = vst.msk [vmem:[%s1008 + $0x88] sm:$0xff] %vm601, %v1960
        %2048 = vst.msk [vmem:[%s1008 + $0x90] sm:$0xff] %vm601, %v1962
        %2049 = vst.msk [vmem:[%s1008 + $0xa8] sm:$0xff] %vm601, %v1964
        %2050 = vst.msk [vmem:[%s1008 + $0xb0] sm:$0xff] %vm601, %v1966
        %2051 = vst.msk [vmem:[%s1008 + $0xc8] sm:$0xff] %vm601, %v1968
        %2052 = vst.msk [vmem:[%s1008 + $0xd0] sm:$0xff] %vm601, %v1970
        %2053 = vst.msk [vmem:[%s1008 + $0xe8] sm:$0xff] %vm601, %v1972
        %2054 = vst.msk [vmem:[%s1008 + $0xf0] sm:$0xff] %vm601, %v1974
        %2055 = vst.msk [vmem:[%s1008 + $0x108] sm:$0xff] %vm601, %v1976
        %2056 = vst.msk [vmem:[%s1008 + $0x110] sm:$0xff] %vm601, %v1978
        %2057 = vst.msk [vmem:[%s1008 + $0x128] sm:$0xff] %vm601, %v1980
        %2058 = vst.msk [vmem:[%s1008 + $0x130] sm:$0xff] %vm601, %v1982
        %2059 = vst.msk [vmem:[%s1008 + $0x148] sm:$0xff] %vm601, %v1984
        %2060 = vst.msk [vmem:[%s1008 + $0x150] sm:$0xff] %vm601, %v1986
        %2061 = vst.msk [vmem:[%s1008 + $0x168] sm:$0xff] %vm601, %v1988
        %2062 = vst.msk [vmem:[%s1008 + $0x170] sm:$0xff] %vm601, %v1990
        %2063 = vst.msk [vmem:[%s1008 + $0x188] sm:$0xff] %vm601, %v1992
        %2064 = vst.msk [vmem:[%s1008 + $0x190] sm:$0xff] %vm601, %v1994
        %2065 = vst.msk [vmem:[%s1008 + $0x1a8] sm:$0xff] %vm601, %v1996
        %2066 = vst.msk [vmem:[%s1008 + $0x1b0] sm:$0xff] %vm601, %v1998
        %2067 = vst.msk [vmem:[%s1008 + $0x1c8] sm:$0xff] %vm601, %v2000
        %2068 = vst.msk [vmem:[%s1008 + $0x1d0] sm:$0xff] %vm601, %v2002
        %2069 = vst.msk [vmem:[%s1008 + $0x1e8] sm:$0xff] %vm601, %v2004
        %2070 = vst.msk [vmem:[%s1008 + $0x1f0] sm:$0xff] %vm601, %v2006
        %v2071 = vld [vmem:[#allocation2 + $0x8] sm:$0xff]
        %v2072 = vld [vmem:[#allocation2 + $0x10] sm:$0xff]
        %v2073 = vld [vmem:[#allocation2 + $0x28] sm:$0xff]
        %v2074 = vld [vmem:[#allocation2 + $0x30] sm:$0xff]
        %v2075 = vld [vmem:[#allocation2 + $0x48] sm:$0xff]
        %v2076 = vld [vmem:[#allocation2 + $0x50] sm:$0xff]
        %v2077 = vld [vmem:[#allocation2 + $0x68] sm:$0xff]
        %v2078 = vld [vmem:[#allocation2 + $0x70] sm:$0xff]
        %v2079 = vld [vmem:[#allocation2 + $0x88] sm:$0xff]
        %v2080 = vld [vmem:[#allocation2 + $0x90] sm:$0xff]
        %v2081 = vld [vmem:[#allocation2 + $0xa8] sm:$0xff]
        %v2082 = vld [vmem:[#allocation2 + $0xb0] sm:$0xff]
        %v2083 = vld [vmem:[#allocation2 + $0xc8] sm:$0xff]
        %v2084 = vld [vmem:[#allocation2 + $0xd0] sm:$0xff]
        %v2085 = vld [vmem:[#allocation2 + $0xe8] sm:$0xff]
        %v2086 = vld [vmem:[#allocation2 + $0xf0] sm:$0xff]
        %v2087 = vld [vmem:[#allocation2 + $0x108] sm:$0xff]
        %v2088 = vld [vmem:[#allocation2 + $0x110] sm:$0xff]
        %v2089 = vld [vmem:[#allocation2 + $0x128] sm:$0xff]
        %v2090 = vld [vmem:[#allocation2 + $0x130] sm:$0xff]
        %v2091 = vld [vmem:[#allocation2 + $0x148] sm:$0xff]
        %v2092 = vld [vmem:[#allocation2 + $0x150] sm:$0xff]
        %v2093 = vld [vmem:[#allocation2 + $0x168] sm:$0xff]
        %v2094 = vld [vmem:[#allocation2 + $0x170] sm:$0xff]
        %v2095 = vld [vmem:[#allocation2 + $0x188] sm:$0xff]
        %v2096 = vld [vmem:[#allocation2 + $0x190] sm:$0xff]
        %v2097 = vld [vmem:[#allocation2 + $0x1a8] sm:$0xff]
        %v2098 = vld [vmem:[#allocation2 + $0x1b0] sm:$0xff]
        %v2099 = vld [vmem:[#allocation2 + $0x1c8] sm:$0xff]
        %v2100 = vld [vmem:[#allocation2 + $0x1d0] sm:$0xff]
        %v2101 = vld [vmem:[#allocation2 + $0x1e8] sm:$0xff]
        %v2102 = vld [vmem:[#allocation2 + $0x1f0] sm:$0xff]
        %v2103 = vpack.c.bf16 %v2072, %v2071
        %v2104 = vpack.c.bf16 %v2074, %v2073
        %v2105 = vpack.c.bf16 %v2076, %v2075
        %v2106 = vpack.c.bf16 %v2078, %v2077
        %v2107 = vpack.c.bf16 %v2080, %v2079
        %v2108 = vpack.c.bf16 %v2082, %v2081
        %v2109 = vpack.c.bf16 %v2084, %v2083
        %v2110 = vpack.c.bf16 %v2086, %v2085
        %v2111 = vpack.c.bf16 %v2088, %v2087
        %v2112 = vpack.c.bf16 %v2090, %v2089
        %v2113 = vpack.c.bf16 %v2092, %v2091
        %v2114 = vpack.c.bf16 %v2094, %v2093
        %v2115 = vpack.c.bf16 %v2096, %v2095
        %v2116 = vpack.c.bf16 %v2098, %v2097
        %v2117 = vpack.c.bf16 %v2100, %v2099
        %v2118 = vpack.c.bf16 %v2102, %v2101
        %v2119 = vld [vmem:[%s5] sm:$0x3]
        %v2120 = vld [vmem:[%s1008 + $0x8] sm:$0xff]
        %v2121 = vld [vmem:[%s1008 + $0x10] sm:$0xff]
        %v2122 = vld [vmem:[%s1008 + $0x28] sm:$0xff]
        %v2123 = vld [vmem:[%s1008 + $0x30] sm:$0xff]
        %v2124 = vld [vmem:[%s1008 + $0x48] sm:$0xff]
        %v2125 = vld [vmem:[%s1008 + $0x50] sm:$0xff]
        %v2126 = vld [vmem:[%s1008 + $0x68] sm:$0xff]
        %v2127 = vld [vmem:[%s1008 + $0x70] sm:$0xff]
        %v2128 = vld [vmem:[%s1008 + $0x88] sm:$0xff]
        %v2129 = vld [vmem:[%s1008 + $0x90] sm:$0xff]
        %v2130 = vld [vmem:[%s1008 + $0xa8] sm:$0xff]
        %v2131 = vld [vmem:[%s1008 + $0xb0] sm:$0xff]
        %v2132 = vld [vmem:[%s1008 + $0xc8] sm:$0xff]
        %v2133 = vld [vmem:[%s1008 + $0xd0] sm:$0xff]
        %v2134 = vld [vmem:[%s1008 + $0xe8] sm:$0xff]
        %v2135 = vld [vmem:[%s1008 + $0xf0] sm:$0xff]
        %v2136 = vld [vmem:[%s1008 + $0x108] sm:$0xff]
        %v2137 = vld [vmem:[%s1008 + $0x110] sm:$0xff]
        %v2138 = vld [vmem:[%s1008 + $0x128] sm:$0xff]
        %v2139 = vld [vmem:[%s1008 + $0x130] sm:$0xff]
        %v2140 = vld [vmem:[%s1008 + $0x148] sm:$0xff]
        %v2141 = vld [vmem:[%s1008 + $0x150] sm:$0xff]
        %v2142 = vld [vmem:[%s1008 + $0x168] sm:$0xff]
        %v2143 = vld [vmem:[%s1008 + $0x170] sm:$0xff]
        %v2144 = vld [vmem:[%s1008 + $0x188] sm:$0xff]
        %v2145 = vld [vmem:[%s1008 + $0x190] sm:$0xff]
        %v2146 = vld [vmem:[%s1008 + $0x1a8] sm:$0xff]
        %v2147 = vld [vmem:[%s1008 + $0x1b0] sm:$0xff]
        %v2148 = vld [vmem:[%s1008 + $0x1c8] sm:$0xff]
        %v2149 = vld [vmem:[%s1008 + $0x1d0] sm:$0xff]
        %v2150 = vld [vmem:[%s1008 + $0x1e8] sm:$0xff]
        %v2151 = vld [vmem:[%s1008 + $0x1f0] sm:$0xff]
        %v2152 = vpack.c.bf16 %v2121, %v2120
        %v2153 = vpack.c.bf16 %v2123, %v2122
        %v2154 = vpack.c.bf16 %v2125, %v2124
        %v2155 = vpack.c.bf16 %v2127, %v2126
        %v2156 = vpack.c.bf16 %v2129, %v2128
        %v2157 = vpack.c.bf16 %v2131, %v2130
        %v2158 = vpack.c.bf16 %v2133, %v2132
        %v2159 = vpack.c.bf16 %v2135, %v2134
        %v2160 = vpack.c.bf16 %v2137, %v2136
        %v2161 = vpack.c.bf16 %v2139, %v2138
        %v2162 = vpack.c.bf16 %v2141, %v2140
        %v2163 = vpack.c.bf16 %v2143, %v2142
        %v2164 = vpack.c.bf16 %v2145, %v2144
        %v2165 = vpack.c.bf16 %v2147, %v2146
        %v2166 = vpack.c.bf16 %v2149, %v2148
        %v2167 = vpack.c.bf16 %v2151, %v2150
        %s2168 = scalar_lea.vmem %s5, 2
        %v2169 = vld [vmem:[%s2168] sm:$0x3]
        %v2171 = vsel %vm601, %v2152, 0
        %v2174 = vsel %vm601, %v2153, 0
        %v2177 = vsel %vm601, %v2154, 0
        %v2180 = vsel %vm601, %v2155, 0
        %v2183 = vsel %vm601, %v2156, 0
        %v2186 = vsel %vm601, %v2157, 0
        %v2189 = vsel %vm601, %v2158, 0
        %v2192 = vsel %vm601, %v2159, 0
        %v2195 = vsel %vm601, %v2160, 0
        %v2198 = vsel %vm601, %v2161, 0
        %v2201 = vsel %vm601, %v2162, 0
        %v2204 = vsel %vm601, %v2163, 0
        %v2207 = vsel %vm601, %v2164, 0
        %v2210 = vsel %vm601, %v2165, 0
        %v2213 = vsel %vm601, %v2166, 0
        %v2216 = vsel %vm601, %v2167, 0
        %v2219 = vsel %vm650, %v2169, 0
        %2221 = vmatpush.bf16.msra.mxu0 0
        %2222 = vmatpush.bf16.msra.mxu0 0
        %2223 = vmatpush.bf16.msra.mxu0 0
        %2224 = vmatpush.bf16.msra.mxu0 0
        %2225 = vmatpush.bf16.msra.mxu0 0
        %2226 = vmatpush.bf16.msra.mxu0 0
        %2227 = vmatpush.bf16.msra.mxu0 0
        %2228 = vmatpush.bf16.msra.mxu0 %v2219
        %2229 = vmatmul.bf16.gmra.mxu0 %v2171
        %v2230 = vpop.f32.mrf.mxu0
        %v2231 = vadd.f32 0.0, %v2230
        %v2232 = vpop.f32.mrf.mxu0
        %v2233 = vadd.f32 0.0, %v2232
        %2234 = vmatmul.bf16.gmra.mxu0 %v2174
        %v2235 = vpop.f32.mrf.mxu0
        %v2236 = vadd.f32 0.0, %v2235
        %v2237 = vpop.f32.mrf.mxu0
        %v2238 = vadd.f32 0.0, %v2237
        %2239 = vmatmul.bf16.gmra.mxu0 %v2177
        %v2240 = vpop.f32.mrf.mxu0
        %v2241 = vadd.f32 0.0, %v2240
        %v2242 = vpop.f32.mrf.mxu0
        %v2243 = vadd.f32 0.0, %v2242
        %2244 = vmatmul.bf16.gmra.mxu0 %v2180
        %v2245 = vpop.f32.mrf.mxu0
        %v2246 = vadd.f32 0.0, %v2245
        %v2247 = vpop.f32.mrf.mxu0
        %v2248 = vadd.f32 0.0, %v2247
        %2249 = vmatmul.bf16.gmra.mxu0 %v2183
        %v2250 = vpop.f32.mrf.mxu0
        %v2251 = vadd.f32 0.0, %v2250
        %v2252 = vpop.f32.mrf.mxu0
        %v2253 = vadd.f32 0.0, %v2252
        %2254 = vmatmul.bf16.gmra.mxu0 %v2186
        %v2255 = vpop.f32.mrf.mxu0
        %v2256 = vadd.f32 0.0, %v2255
        %v2257 = vpop.f32.mrf.mxu0
        %v2258 = vadd.f32 0.0, %v2257
        %2259 = vmatmul.bf16.gmra.mxu0 %v2189
        %v2260 = vpop.f32.mrf.mxu0
        %v2261 = vadd.f32 0.0, %v2260
        %v2262 = vpop.f32.mrf.mxu0
        %v2263 = vadd.f32 0.0, %v2262
        %2264 = vmatmul.bf16.gmra.mxu0 %v2192
        %v2265 = vpop.f32.mrf.mxu0
        %v2266 = vadd.f32 0.0, %v2265
        %v2267 = vpop.f32.mrf.mxu0
        %v2268 = vadd.f32 0.0, %v2267
        %2269 = vmatmul.bf16.gmra.mxu0 %v2195
        %v2270 = vpop.f32.mrf.mxu0
        %v2271 = vadd.f32 0.0, %v2270
        %v2272 = vpop.f32.mrf.mxu0
        %v2273 = vadd.f32 0.0, %v2272
        %2274 = vmatmul.bf16.gmra.mxu0 %v2198
        %v2275 = vpop.f32.mrf.mxu0
        %v2276 = vadd.f32 0.0, %v2275
        %v2277 = vpop.f32.mrf.mxu0
        %v2278 = vadd.f32 0.0, %v2277
        %2279 = vmatmul.bf16.gmra.mxu0 %v2201
        %v2280 = vpop.f32.mrf.mxu0
        %v2281 = vadd.f32 0.0, %v2280
        %v2282 = vpop.f32.mrf.mxu0
        %v2283 = vadd.f32 0.0, %v2282
        %2284 = vmatmul.bf16.gmra.mxu0 %v2204
        %v2285 = vpop.f32.mrf.mxu0
        %v2286 = vadd.f32 0.0, %v2285
        %v2287 = vpop.f32.mrf.mxu0
        %v2288 = vadd.f32 0.0, %v2287
        %2289 = vmatmul.bf16.gmra.mxu0 %v2207
        %v2290 = vpop.f32.mrf.mxu0
        %v2291 = vadd.f32 0.0, %v2290
        %v2292 = vpop.f32.mrf.mxu0
        %v2293 = vadd.f32 0.0, %v2292
        %2294 = vmatmul.bf16.gmra.mxu0 %v2210
        %v2295 = vpop.f32.mrf.mxu0
        %v2296 = vadd.f32 0.0, %v2295
        %v2297 = vpop.f32.mrf.mxu0
        %v2298 = vadd.f32 0.0, %v2297
        %2299 = vmatmul.bf16.gmra.mxu0 %v2213
        %v2300 = vpop.f32.mrf.mxu0
        %v2301 = vadd.f32 0.0, %v2300
        %v2302 = vpop.f32.mrf.mxu0
        %v2303 = vadd.f32 0.0, %v2302
        %2304 = vmatmul.bf16.gmra.mxu0 %v2216
        %v2305 = vpop.f32.mrf.mxu0
        %v2306 = vadd.f32 0.0, %v2305
        %v2307 = vpop.f32.mrf.mxu0
        %v2308 = vadd.f32 0.0, %v2307
        %2309 = vdwg.mxu0
        %v2311 = vsel %vm601, %v2103, 0
        %v2314 = vsel %vm601, %v2104, 0
        %v2317 = vsel %vm601, %v2105, 0
        %v2320 = vsel %vm601, %v2106, 0
        %v2323 = vsel %vm601, %v2107, 0
        %v2326 = vsel %vm601, %v2108, 0
        %v2329 = vsel %vm601, %v2109, 0
        %v2332 = vsel %vm601, %v2110, 0
        %v2335 = vsel %vm601, %v2111, 0
        %v2338 = vsel %vm601, %v2112, 0
        %v2341 = vsel %vm601, %v2113, 0
        %v2344 = vsel %vm601, %v2114, 0
        %v2347 = vsel %vm601, %v2115, 0
        %v2350 = vsel %vm601, %v2116, 0
        %v2353 = vsel %vm601, %v2117, 0
        %v2356 = vsel %vm601, %v2118, 0
        %v2359 = vsel %vm650, %v2119, 0
        %2361 = vmatpush.bf16.msra.mxu0 0
        %2362 = vmatpush.bf16.msra.mxu0 0
        %2363 = vmatpush.bf16.msra.mxu0 0
        %2364 = vmatpush.bf16.msra.mxu0 0
        %2365 = vmatpush.bf16.msra.mxu0 0
        %2366 = vmatpush.bf16.msra.mxu0 0
        %2367 = vmatpush.bf16.msra.mxu0 0
        %2368 = vmatpush.bf16.msra.mxu0 %v2359
        %2369 = vmatmul.bf16.gmra.mxu0 %v2311
        %v2370 = vpop.f32.mrf.mxu0
        %v2371 = vadd.f32 %v2231, %v2370
        %v2372 = vpop.f32.mrf.mxu0
        %v2373 = vadd.f32 %v2233, %v2372
        %2374 = vmatmul.bf16.gmra.mxu0 %v2314
        %v2375 = vpop.f32.mrf.mxu0
        %v2376 = vadd.f32 %v2236, %v2375
        %v2377 = vpop.f32.mrf.mxu0
        %v2378 = vadd.f32 %v2238, %v2377
        %2379 = vmatmul.bf16.gmra.mxu0 %v2317
        %v2380 = vpop.f32.mrf.mxu0
        %v2381 = vadd.f32 %v2241, %v2380
        %v2382 = vpop.f32.mrf.mxu0
        %v2383 = vadd.f32 %v2243, %v2382
        %2384 = vmatmul.bf16.gmra.mxu0 %v2320
        %v2385 = vpop.f32.mrf.mxu0
        %v2386 = vadd.f32 %v2246, %v2385
        %v2387 = vpop.f32.mrf.mxu0
        %v2388 = vadd.f32 %v2248, %v2387
        %2389 = vmatmul.bf16.gmra.mxu0 %v2323
        %v2390 = vpop.f32.mrf.mxu0
        %v2391 = vadd.f32 %v2251, %v2390
        %v2392 = vpop.f32.mrf.mxu0
        %v2393 = vadd.f32 %v2253, %v2392
        %2394 = vmatmul.bf16.gmra.mxu0 %v2326
        %v2395 = vpop.f32.mrf.mxu0
        %v2396 = vadd.f32 %v2256, %v2395
        %v2397 = vpop.f32.mrf.mxu0
        %v2398 = vadd.f32 %v2258, %v2397
        %2399 = vmatmul.bf16.gmra.mxu0 %v2329
        %v2400 = vpop.f32.mrf.mxu0
        %v2401 = vadd.f32 %v2261, %v2400
        %v2402 = vpop.f32.mrf.mxu0
        %v2403 = vadd.f32 %v2263, %v2402
        %2404 = vmatmul.bf16.gmra.mxu0 %v2332
        %v2405 = vpop.f32.mrf.mxu0
        %v2406 = vadd.f32 %v2266, %v2405
        %v2407 = vpop.f32.mrf.mxu0
        %v2408 = vadd.f32 %v2268, %v2407
        %2409 = vmatmul.bf16.gmra.mxu0 %v2335
        %v2410 = vpop.f32.mrf.mxu0
        %v2411 = vadd.f32 %v2271, %v2410
        %v2412 = vpop.f32.mrf.mxu0
        %v2413 = vadd.f32 %v2273, %v2412
        %2414 = vmatmul.bf16.gmra.mxu0 %v2338
        %v2415 = vpop.f32.mrf.mxu0
        %v2416 = vadd.f32 %v2276, %v2415
        %v2417 = vpop.f32.mrf.mxu0
        %v2418 = vadd.f32 %v2278, %v2417
        %2419 = vmatmul.bf16.gmra.mxu0 %v2341
        %v2420 = vpop.f32.mrf.mxu0
        %v2421 = vadd.f32 %v2281, %v2420
        %v2422 = vpop.f32.mrf.mxu0
        %v2423 = vadd.f32 %v2283, %v2422
        %2424 = vmatmul.bf16.gmra.mxu0 %v2344
        %v2425 = vpop.f32.mrf.mxu0
        %v2426 = vadd.f32 %v2286, %v2425
        %v2427 = vpop.f32.mrf.mxu0
        %v2428 = vadd.f32 %v2288, %v2427
        %2429 = vmatmul.bf16.gmra.mxu0 %v2347
        %v2430 = vpop.f32.mrf.mxu0
        %v2431 = vadd.f32 %v2291, %v2430
        %v2432 = vpop.f32.mrf.mxu0
        %v2433 = vadd.f32 %v2293, %v2432
        %2434 = vmatmul.bf16.gmra.mxu0 %v2350
        %v2435 = vpop.f32.mrf.mxu0
        %v2436 = vadd.f32 %v2296, %v2435
        %v2437 = vpop.f32.mrf.mxu0
        %v2438 = vadd.f32 %v2298, %v2437
        %2439 = vmatmul.bf16.gmra.mxu0 %v2353
        %v2440 = vpop.f32.mrf.mxu0
        %v2441 = vadd.f32 %v2301, %v2440
        %v2442 = vpop.f32.mrf.mxu0
        %v2443 = vadd.f32 %v2303, %v2442
        %2444 = vmatmul.bf16.gmra.mxu0 %v2356
        %v2445 = vpop.f32.mrf.mxu0
        %v2446 = vadd.f32 %v2306, %v2445
        %v2447 = vpop.f32.mrf.mxu0
        %v2448 = vadd.f32 %v2308, %v2447
        %2449 = vdwg.mxu0
        %s2450 = scalar_lea.vmem [#allocation2], 64
        %v2451 = vld [vmem:[%s2450 + $0x8] sm:$0xff]
        %v2452 = vld [vmem:[%s2450 + $0x10] sm:$0xff]
        %v2453 = vld [vmem:[%s2450 + $0x28] sm:$0xff]
        %v2454 = vld [vmem:[%s2450 + $0x30] sm:$0xff]
        %v2455 = vld [vmem:[%s2450 + $0x48] sm:$0xff]
        %v2456 = vld [vmem:[%s2450 + $0x50] sm:$0xff]
        %v2457 = vld [vmem:[%s2450 + $0x68] sm:$0xff]
        %v2458 = vld [vmem:[%s2450 + $0x70] sm:$0xff]
        %v2459 = vld [vmem:[%s2450 + $0x88] sm:$0xff]
        %v2460 = vld [vmem:[%s2450 + $0x90] sm:$0xff]
        %v2461 = vld [vmem:[%s2450 + $0xa8] sm:$0xff]
        %v2462 = vld [vmem:[%s2450 + $0xb0] sm:$0xff]
        %v2463 = vld [vmem:[%s2450 + $0xc8] sm:$0xff]
        %v2464 = vld [vmem:[%s2450 + $0xd0] sm:$0xff]
        %v2465 = vld [vmem:[%s2450 + $0xe8] sm:$0xff]
        %v2466 = vld [vmem:[%s2450 + $0xf0] sm:$0xff]
        %v2467 = vld [vmem:[%s2450 + $0x108] sm:$0xff]
        %v2468 = vld [vmem:[%s2450 + $0x110] sm:$0xff]
        %v2469 = vld [vmem:[%s2450 + $0x128] sm:$0xff]
        %v2470 = vld [vmem:[%s2450 + $0x130] sm:$0xff]
        %v2471 = vld [vmem:[%s2450 + $0x148] sm:$0xff]
        %v2472 = vld [vmem:[%s2450 + $0x150] sm:$0xff]
        %v2473 = vld [vmem:[%s2450 + $0x168] sm:$0xff]
        %v2474 = vld [vmem:[%s2450 + $0x170] sm:$0xff]
        %v2475 = vld [vmem:[%s2450 + $0x188] sm:$0xff]
        %v2476 = vld [vmem:[%s2450 + $0x190] sm:$0xff]
        %v2477 = vld [vmem:[%s2450 + $0x1a8] sm:$0xff]
        %v2478 = vld [vmem:[%s2450 + $0x1b0] sm:$0xff]
        %v2479 = vld [vmem:[%s2450 + $0x1c8] sm:$0xff]
        %v2480 = vld [vmem:[%s2450 + $0x1d0] sm:$0xff]
        %v2481 = vld [vmem:[%s2450 + $0x1e8] sm:$0xff]
        %v2482 = vld [vmem:[%s2450 + $0x1f0] sm:$0xff]
        %v2483 = vpack.c.bf16 %v2452, %v2451
        %v2484 = vpack.c.bf16 %v2454, %v2453
        %v2485 = vpack.c.bf16 %v2456, %v2455
        %v2486 = vpack.c.bf16 %v2458, %v2457
        %v2487 = vpack.c.bf16 %v2460, %v2459
        %v2488 = vpack.c.bf16 %v2462, %v2461
        %v2489 = vpack.c.bf16 %v2464, %v2463
        %v2490 = vpack.c.bf16 %v2466, %v2465
        %v2491 = vpack.c.bf16 %v2468, %v2467
        %v2492 = vpack.c.bf16 %v2470, %v2469
        %v2493 = vpack.c.bf16 %v2472, %v2471
        %v2494 = vpack.c.bf16 %v2474, %v2473
        %v2495 = vpack.c.bf16 %v2476, %v2475
        %v2496 = vpack.c.bf16 %v2478, %v2477
        %v2497 = vpack.c.bf16 %v2480, %v2479
        %v2498 = vpack.c.bf16 %v2482, %v2481
        %s2499 = scalar_lea.vmem %s5, 4
        %v2500 = vld [vmem:[%s2499] sm:$0x3]
        %v2502 = vsel %vm601, %v2483, 0
        %v2505 = vsel %vm601, %v2484, 0
        %v2508 = vsel %vm601, %v2485, 0
        %v2511 = vsel %vm601, %v2486, 0
        %v2514 = vsel %vm601, %v2487, 0
        %v2517 = vsel %vm601, %v2488, 0
        %v2520 = vsel %vm601, %v2489, 0
        %v2523 = vsel %vm601, %v2490, 0
        %v2526 = vsel %vm601, %v2491, 0
        %v2529 = vsel %vm601, %v2492, 0
        %v2532 = vsel %vm601, %v2493, 0
        %v2535 = vsel %vm601, %v2494, 0
        %v2538 = vsel %vm601, %v2495, 0
        %v2541 = vsel %vm601, %v2496, 0
        %v2544 = vsel %vm601, %v2497, 0
        %v2547 = vsel %vm601, %v2498, 0
        %v2550 = vsel %vm650, %v2500, 0
        %2552 = vmatpush.bf16.msra.mxu0 0
        %2553 = vmatpush.bf16.msra.mxu0 0
        %2554 = vmatpush.bf16.msra.mxu0 0
        %2555 = vmatpush.bf16.msra.mxu0 0
        %2556 = vmatpush.bf16.msra.mxu0 0
        %2557 = vmatpush.bf16.msra.mxu0 0
        %2558 = vmatpush.bf16.msra.mxu0 0
        %2559 = vmatpush.bf16.msra.mxu0 %v2550
        %2560 = vmatmul.bf16.gmra.mxu0 %v2502
        %v2561 = vpop.f32.mrf.mxu0
        %v2562 = vadd.f32 0.0, %v2561
        %v2563 = vpop.f32.mrf.mxu0
        %v2564 = vadd.f32 0.0, %v2563
        %2565 = vmatmul.bf16.gmra.mxu0 %v2505
        %v2566 = vpop.f32.mrf.mxu0
        %v2567 = vadd.f32 0.0, %v2566
        %v2568 = vpop.f32.mrf.mxu0
        %v2569 = vadd.f32 0.0, %v2568
        %2570 = vmatmul.bf16.gmra.mxu0 %v2508
        %v2571 = vpop.f32.mrf.mxu0
        %v2572 = vadd.f32 0.0, %v2571
        %v2573 = vpop.f32.mrf.mxu0
        %v2574 = vadd.f32 0.0, %v2573
        %2575 = vmatmul.bf16.gmra.mxu0 %v2511
        %v2576 = vpop.f32.mrf.mxu0
        %v2577 = vadd.f32 0.0, %v2576
        %v2578 = vpop.f32.mrf.mxu0
        %v2579 = vadd.f32 0.0, %v2578
        %2580 = vmatmul.bf16.gmra.mxu0 %v2514
        %v2581 = vpop.f32.mrf.mxu0
        %v2582 = vadd.f32 0.0, %v2581
        %v2583 = vpop.f32.mrf.mxu0
        %v2584 = vadd.f32 0.0, %v2583
        %2585 = vmatmul.bf16.gmra.mxu0 %v2517
        %v2586 = vpop.f32.mrf.mxu0
        %v2587 = vadd.f32 0.0, %v2586
        %v2588 = vpop.f32.mrf.mxu0
        %v2589 = vadd.f32 0.0, %v2588
        %2590 = vmatmul.bf16.gmra.mxu0 %v2520
        %v2591 = vpop.f32.mrf.mxu0
        %v2592 = vadd.f32 0.0, %v2591
        %v2593 = vpop.f32.mrf.mxu0
        %v2594 = vadd.f32 0.0, %v2593
        %2595 = vmatmul.bf16.gmra.mxu0 %v2523
        %v2596 = vpop.f32.mrf.mxu0
        %v2597 = vadd.f32 0.0, %v2596
        %v2598 = vpop.f32.mrf.mxu0
        %v2599 = vadd.f32 0.0, %v2598
        %2600 = vmatmul.bf16.gmra.mxu0 %v2526
        %v2601 = vpop.f32.mrf.mxu0
        %v2602 = vadd.f32 0.0, %v2601
        %v2603 = vpop.f32.mrf.mxu0
        %v2604 = vadd.f32 0.0, %v2603
        %2605 = vmatmul.bf16.gmra.mxu0 %v2529
        %v2606 = vpop.f32.mrf.mxu0
        %v2607 = vadd.f32 0.0, %v2606
        %v2608 = vpop.f32.mrf.mxu0
        %v2609 = vadd.f32 0.0, %v2608
        %2610 = vmatmul.bf16.gmra.mxu0 %v2532
        %v2611 = vpop.f32.mrf.mxu0
        %v2612 = vadd.f32 0.0, %v2611
        %v2613 = vpop.f32.mrf.mxu0
        %v2614 = vadd.f32 0.0, %v2613
        %2615 = vmatmul.bf16.gmra.mxu0 %v2535
        %v2616 = vpop.f32.mrf.mxu0
        %v2617 = vadd.f32 0.0, %v2616
        %v2618 = vpop.f32.mrf.mxu0
        %v2619 = vadd.f32 0.0, %v2618
        %2620 = vmatmul.bf16.gmra.mxu0 %v2538
        %v2621 = vpop.f32.mrf.mxu0
        %v2622 = vadd.f32 0.0, %v2621
        %v2623 = vpop.f32.mrf.mxu0
        %v2624 = vadd.f32 0.0, %v2623
        %2625 = vmatmul.bf16.gmra.mxu0 %v2541
        %v2626 = vpop.f32.mrf.mxu0
        %v2627 = vadd.f32 0.0, %v2626
        %v2628 = vpop.f32.mrf.mxu0
        %v2629 = vadd.f32 0.0, %v2628
        %2630 = vmatmul.bf16.gmra.mxu0 %v2544
        %v2631 = vpop.f32.mrf.mxu0
        %v2632 = vadd.f32 0.0, %v2631
        %v2633 = vpop.f32.mrf.mxu0
        %v2634 = vadd.f32 0.0, %v2633
        %2635 = vmatmul.bf16.gmra.mxu0 %v2547
        %v2636 = vpop.f32.mrf.mxu0
        %v2637 = vadd.f32 0.0, %v2636
        %v2638 = vpop.f32.mrf.mxu0
        %v2639 = vadd.f32 0.0, %v2638
        %2640 = vdwg.mxu0
        %v2641 = vadd.f32 %v2371, %v2562
        %v2642 = vadd.f32 %v2373, %v2564
        %v2643 = vadd.f32 %v2376, %v2567
        %v2644 = vadd.f32 %v2378, %v2569
        %v2645 = vadd.f32 %v2381, %v2572
        %v2646 = vadd.f32 %v2383, %v2574
        %v2647 = vadd.f32 %v2386, %v2577
        %v2648 = vadd.f32 %v2388, %v2579
        %v2649 = vadd.f32 %v2391, %v2582
        %v2650 = vadd.f32 %v2393, %v2584
        %v2651 = vadd.f32 %v2396, %v2587
        %v2652 = vadd.f32 %v2398, %v2589
        %v2653 = vadd.f32 %v2401, %v2592
        %v2654 = vadd.f32 %v2403, %v2594
        %v2655 = vadd.f32 %v2406, %v2597
        %v2656 = vadd.f32 %v2408, %v2599
        %v2657 = vadd.f32 %v2411, %v2602
        %v2658 = vadd.f32 %v2413, %v2604
        %v2659 = vadd.f32 %v2416, %v2607
        %v2660 = vadd.f32 %v2418, %v2609
        %v2661 = vadd.f32 %v2421, %v2612
        %v2662 = vadd.f32 %v2423, %v2614
        %v2663 = vadd.f32 %v2426, %v2617
        %v2664 = vadd.f32 %v2428, %v2619
        %v2665 = vadd.f32 %v2431, %v2622
        %v2666 = vadd.f32 %v2433, %v2624
        %v2667 = vadd.f32 %v2436, %v2627
        %v2668 = vadd.f32 %v2438, %v2629
        %v2669 = vadd.f32 %v2441, %v2632
        %v2670 = vadd.f32 %v2443, %v2634
        %v2671 = vadd.f32 %v2446, %v2637
        %v2672 = vadd.f32 %v2448, %v2639
        %v2673 = vld [vmem:[%s6] sm:$0x1]
        %v2675 = vperm.slane %v2673, 0
        %v2677 = vadd.f32 %v2641, %v2675
        %v2678 = vadd.f32 %v2642, %v2675
        %v2679 = vadd.f32 %v2643, %v2675
        %v2680 = vadd.f32 %v2644, %v2675
        %v2681 = vadd.f32 %v2645, %v2675
        %v2682 = vadd.f32 %v2646, %v2675
        %v2683 = vadd.f32 %v2647, %v2675
        %v2684 = vadd.f32 %v2648, %v2675
        %v2685 = vadd.f32 %v2649, %v2675
        %v2686 = vadd.f32 %v2650, %v2675
        %v2687 = vadd.f32 %v2651, %v2675
        %v2688 = vadd.f32 %v2652, %v2675
        %v2689 = vadd.f32 %v2653, %v2675
        %v2690 = vadd.f32 %v2654, %v2675
        %v2691 = vadd.f32 %v2655, %v2675
        %v2692 = vadd.f32 %v2656, %v2675
        %v2693 = vadd.f32 %v2657, %v2675
        %v2694 = vadd.f32 %v2658, %v2675
        %v2695 = vadd.f32 %v2659, %v2675
        %v2696 = vadd.f32 %v2660, %v2675
        %v2697 = vadd.f32 %v2661, %v2675
        %v2698 = vadd.f32 %v2662, %v2675
        %v2699 = vadd.f32 %v2663, %v2675
        %v2700 = vadd.f32 %v2664, %v2675
        %v2701 = vadd.f32 %v2665, %v2675
        %v2702 = vadd.f32 %v2666, %v2675
        %v2703 = vadd.f32 %v2667, %v2675
        %v2704 = vadd.f32 %v2668, %v2675
        %v2705 = vadd.f32 %v2669, %v2675
        %v2706 = vadd.f32 %v2670, %v2675
        %v2707 = vadd.f32 %v2671, %v2675
        %v2708 = vadd.f32 %v2672, %v2675
        %v2709 = vmax.f32 %v2677, 0.0
        %v2710 = vmax.f32 %v2678, 0.0
        %v2711 = vmax.f32 %v2679, 0.0
        %v2712 = vmax.f32 %v2680, 0.0
        %v2713 = vmax.f32 %v2681, 0.0
        %v2714 = vmax.f32 %v2682, 0.0
        %v2715 = vmax.f32 %v2683, 0.0
        %v2716 = vmax.f32 %v2684, 0.0
        %v2717 = vmax.f32 %v2685, 0.0
        %v2718 = vmax.f32 %v2686, 0.0
        %v2719 = vmax.f32 %v2687, 0.0
        %v2720 = vmax.f32 %v2688, 0.0
        %v2721 = vmax.f32 %v2689, 0.0
        %v2722 = vmax.f32 %v2690, 0.0
        %v2723 = vmax.f32 %v2691, 0.0
        %v2724 = vmax.f32 %v2692, 0.0
        %v2725 = vmax.f32 %v2693, 0.0
        %v2726 = vmax.f32 %v2694, 0.0
        %v2727 = vmax.f32 %v2695, 0.0
        %v2728 = vmax.f32 %v2696, 0.0
        %v2729 = vmax.f32 %v2697, 0.0
        %v2730 = vmax.f32 %v2698, 0.0
        %v2731 = vmax.f32 %v2699, 0.0
        %v2732 = vmax.f32 %v2700, 0.0
        %v2733 = vmax.f32 %v2701, 0.0
        %v2734 = vmax.f32 %v2702, 0.0
        %v2735 = vmax.f32 %v2703, 0.0
        %v2736 = vmax.f32 %v2704, 0.0
        %v2737 = vmax.f32 %v2705, 0.0
        %v2738 = vmax.f32 %v2706, 0.0
        %v2739 = vmax.f32 %v2707, 0.0
        %v2740 = vmax.f32 %v2708, 0.0
        %2773 = vrot.lane.b32.xlu0 %v2709, 16
        %v2774 = vpop.permute.xlu0 %2773
        %2775 = vrot.lane.b32.xlu0 %v2710, 16
        %v2776 = vpop.permute.xlu0 %2775
        %2777 = vrot.lane.b32.xlu0 %v2711, 16
        %v2778 = vpop.permute.xlu0 %2777
        %2779 = vrot.lane.b32.xlu0 %v2712, 16
        %v2780 = vpop.permute.xlu0 %2779
        %2781 = vrot.lane.b32.xlu0 %v2713, 16
        %v2782 = vpop.permute.xlu0 %2781
        %2783 = vrot.lane.b32.xlu0 %v2714, 16
        %v2784 = vpop.permute.xlu0 %2783
        %2785 = vrot.lane.b32.xlu0 %v2715, 16
        %v2786 = vpop.permute.xlu0 %2785
        %2787 = vrot.lane.b32.xlu0 %v2716, 16
        %v2788 = vpop.permute.xlu0 %2787
        %2789 = vrot.lane.b32.xlu0 %v2717, 16
        %v2790 = vpop.permute.xlu0 %2789
        %2791 = vrot.lane.b32.xlu0 %v2718, 16
        %v2792 = vpop.permute.xlu0 %2791
        %2793 = vrot.lane.b32.xlu0 %v2719, 16
        %v2794 = vpop.permute.xlu0 %2793
        %2795 = vrot.lane.b32.xlu0 %v2720, 16
        %v2796 = vpop.permute.xlu0 %2795
        %2797 = vrot.lane.b32.xlu0 %v2721, 16
        %v2798 = vpop.permute.xlu0 %2797
        %2799 = vrot.lane.b32.xlu0 %v2722, 16
        %v2800 = vpop.permute.xlu0 %2799
        %2801 = vrot.lane.b32.xlu0 %v2723, 16
        %v2802 = vpop.permute.xlu0 %2801
        %2803 = vrot.lane.b32.xlu0 %v2724, 16
        %v2804 = vpop.permute.xlu0 %2803
        %2805 = vrot.lane.b32.xlu0 %v2725, 16
        %v2806 = vpop.permute.xlu0 %2805
        %2807 = vrot.lane.b32.xlu0 %v2726, 16
        %v2808 = vpop.permute.xlu0 %2807
        %2809 = vrot.lane.b32.xlu0 %v2727, 16
        %v2810 = vpop.permute.xlu0 %2809
        %2811 = vrot.lane.b32.xlu0 %v2728, 16
        %v2812 = vpop.permute.xlu0 %2811
        %2813 = vrot.lane.b32.xlu0 %v2729, 16
        %v2814 = vpop.permute.xlu0 %2813
        %2815 = vrot.lane.b32.xlu0 %v2730, 16
        %v2816 = vpop.permute.xlu0 %2815
        %2817 = vrot.lane.b32.xlu0 %v2731, 16
        %v2818 = vpop.permute.xlu0 %2817
        %2819 = vrot.lane.b32.xlu0 %v2732, 16
        %v2820 = vpop.permute.xlu0 %2819
        %2821 = vrot.lane.b32.xlu0 %v2733, 16
        %v2822 = vpop.permute.xlu0 %2821
        %2823 = vrot.lane.b32.xlu0 %v2734, 16
        %v2824 = vpop.permute.xlu0 %2823
        %2825 = vrot.lane.b32.xlu0 %v2735, 16
        %v2826 = vpop.permute.xlu0 %2825
        %2827 = vrot.lane.b32.xlu0 %v2736, 16
        %v2828 = vpop.permute.xlu0 %2827
        %2829 = vrot.lane.b32.xlu0 %v2737, 16
        %v2830 = vpop.permute.xlu0 %2829
        %2831 = vrot.lane.b32.xlu0 %v2738, 16
        %v2832 = vpop.permute.xlu0 %2831
        %2833 = vrot.lane.b32.xlu0 %v2739, 16
        %v2834 = vpop.permute.xlu0 %2833
        %2835 = vrot.lane.b32.xlu0 %v2740, 16
        %v2836 = vpop.permute.xlu0 %2835
        %vm2869 = vcmask 195712
        %2870 = vst.msk [vmem:[%s541] sm:$0xff] %vm2869, %v2774
        %2871 = vst.msk [vmem:[%s541 + $0x8] sm:$0xff] %vm2869, %v2776
        %2872 = vst.msk [vmem:[%s541 + $0x10] sm:$0xff] %vm2869, %v2778
        %2873 = vst.msk [vmem:[%s541 + $0x18] sm:$0xff] %vm2869, %v2780
        %2874 = vst.msk [vmem:[%s541 + $0x20] sm:$0xff] %vm2869, %v2782
        %2875 = vst.msk [vmem:[%s541 + $0x28] sm:$0xff] %vm2869, %v2784
        %2876 = vst.msk [vmem:[%s541 + $0x30] sm:$0xff] %vm2869, %v2786
        %2877 = vst.msk [vmem:[%s541 + $0x38] sm:$0xff] %vm2869, %v2788
        %2878 = vst.msk [vmem:[%s541 + $0x40] sm:$0xff] %vm2869, %v2790
        %2879 = vst.msk [vmem:[%s541 + $0x48] sm:$0xff] %vm2869, %v2792
        %2880 = vst.msk [vmem:[%s541 + $0x50] sm:$0xff] %vm2869, %v2794
        %2881 = vst.msk [vmem:[%s541 + $0x58] sm:$0xff] %vm2869, %v2796
        %2882 = vst.msk [vmem:[%s541 + $0x60] sm:$0xff] %vm2869, %v2798
        %2883 = vst.msk [vmem:[%s541 + $0x68] sm:$0xff] %vm2869, %v2800
        %2884 = vst.msk [vmem:[%s541 + $0x70] sm:$0xff] %vm2869, %v2802
        %2885 = vst.msk [vmem:[%s541 + $0x78] sm:$0xff] %vm2869, %v2804
        %2886 = vst.msk [vmem:[%s541 + $0x80] sm:$0xff] %vm2869, %v2806
        %2887 = vst.msk [vmem:[%s541 + $0x88] sm:$0xff] %vm2869, %v2808
        %2888 = vst.msk [vmem:[%s541 + $0x90] sm:$0xff] %vm2869, %v2810
        %2889 = vst.msk [vmem:[%s541 + $0x98] sm:$0xff] %vm2869, %v2812
        %2890 = vst.msk [vmem:[%s541 + $0xa0] sm:$0xff] %vm2869, %v2814
        %2891 = vst.msk [vmem:[%s541 + $0xa8] sm:$0xff] %vm2869, %v2816
        %2892 = vst.msk [vmem:[%s541 + $0xb0] sm:$0xff] %vm2869, %v2818
        %2893 = vst.msk [vmem:[%s541 + $0xb8] sm:$0xff] %vm2869, %v2820
        %2894 = vst.msk [vmem:[%s541 + $0xc0] sm:$0xff] %vm2869, %v2822
        %2895 = vst.msk [vmem:[%s541 + $0xc8] sm:$0xff] %vm2869, %v2824
        %2896 = vst.msk [vmem:[%s541 + $0xd0] sm:$0xff] %vm2869, %v2826
        %2897 = vst.msk [vmem:[%s541 + $0xd8] sm:$0xff] %vm2869, %v2828
        %2898 = vst.msk [vmem:[%s541 + $0xe0] sm:$0xff] %vm2869, %v2830
        %2899 = vst.msk [vmem:[%s541 + $0xe8] sm:$0xff] %vm2869, %v2832
        %2900 = vst.msk [vmem:[%s541 + $0xf0] sm:$0xff] %vm2869, %v2834
        %2901 = vst.msk [vmem:[%s541 + $0xf8] sm:$0xff] %vm2869, %v2836
        %2902 = vst.msk [vmem:[#allocation2] sm:$0xff] %vm775, 0.0
        %2903 = vst.msk [vmem:[#allocation2 + $0x8] sm:$0xff] %vm775, 0.0
        %2904 = vst.msk [vmem:[#allocation2 + $0x10] sm:$0xff] %vm775, 0.0
        %2905 = vst.msk [vmem:[#allocation2 + $0x18] sm:$0xff] %vm775, 0.0
        %2906 = vst.msk [vmem:[#allocation2 + $0x20] sm:$0xff] %vm775, 0.0
        %2907 = vst.msk [vmem:[#allocation2 + $0x28] sm:$0xff] %vm775, 0.0
        %2908 = vst.msk [vmem:[#allocation2 + $0x30] sm:$0xff] %vm775, 0.0
        %2909 = vst.msk [vmem:[#allocation2 + $0x38] sm:$0xff] %vm775, 0.0
        %2910 = vst.msk [vmem:[#allocation2 + $0x40] sm:$0xff] %vm775, 0.0
        %2911 = vst.msk [vmem:[#allocation2 + $0x48] sm:$0xff] %vm775, 0.0
        %2912 = vst.msk [vmem:[#allocation2 + $0x50] sm:$0xff] %vm775, 0.0
        %2913 = vst.msk [vmem:[#allocation2 + $0x58] sm:$0xff] %vm775, 0.0
        %2914 = vst.msk [vmem:[#allocation2 + $0x60] sm:$0xff] %vm775, 0.0
        %2915 = vst.msk [vmem:[#allocation2 + $0x68] sm:$0xff] %vm775, 0.0
        %2916 = vst.msk [vmem:[#allocation2 + $0x70] sm:$0xff] %vm775, 0.0
        %2917 = vst.msk [vmem:[#allocation2 + $0x78] sm:$0xff] %vm775, 0.0
        %2918 = vst.msk [vmem:[#allocation2 + $0x80] sm:$0xff] %vm775, 0.0
        %2919 = vst.msk [vmem:[#allocation2 + $0x88] sm:$0xff] %vm775, 0.0
        %2920 = vst.msk [vmem:[#allocation2 + $0x90] sm:$0xff] %vm775, 0.0
        %2921 = vst.msk [vmem:[#allocation2 + $0x98] sm:$0xff] %vm775, 0.0
        %2922 = vst.msk [vmem:[#allocation2 + $0xa0] sm:$0xff] %vm775, 0.0
        %2923 = vst.msk [vmem:[#allocation2 + $0xa8] sm:$0xff] %vm775, 0.0
        %2924 = vst.msk [vmem:[#allocation2 + $0xb0] sm:$0xff] %vm775, 0.0
        %2925 = vst.msk [vmem:[#allocation2 + $0xb8] sm:$0xff] %vm775, 0.0
        %2926 = vst.msk [vmem:[#allocation2 + $0xc0] sm:$0xff] %vm775, 0.0
        %2927 = vst.msk [vmem:[#allocation2 + $0xc8] sm:$0xff] %vm775, 0.0
        %2928 = vst.msk [vmem:[#allocation2 + $0xd0] sm:$0xff] %vm775, 0.0
        %2929 = vst.msk [vmem:[#allocation2 + $0xd8] sm:$0xff] %vm775, 0.0
        %2930 = vst.msk [vmem:[#allocation2 + $0xe0] sm:$0xff] %vm775, 0.0
        %2931 = vst.msk [vmem:[#allocation2 + $0xe8] sm:$0xff] %vm775, 0.0
        %2932 = vst.msk [vmem:[#allocation2 + $0xf0] sm:$0xff] %vm775, 0.0
        %2933 = vst.msk [vmem:[#allocation2 + $0xf8] sm:$0xff] %vm775, 0.0
        %2934 = vst.msk [vmem:[#allocation2 + $0x100] sm:$0xff] %vm775, 0.0
        %2935 = vst.msk [vmem:[#allocation2 + $0x108] sm:$0xff] %vm775, 0.0
        %2936 = vst.msk [vmem:[#allocation2 + $0x110] sm:$0xff] %vm775, 0.0
        %2937 = vst.msk [vmem:[#allocation2 + $0x118] sm:$0xff] %vm775, 0.0
        %2938 = vst.msk [vmem:[#allocation2 + $0x120] sm:$0xff] %vm775, 0.0
        %2939 = vst.msk [vmem:[#allocation2 + $0x128] sm:$0xff] %vm775, 0.0
        %2940 = vst.msk [vmem:[#allocation2 + $0x130] sm:$0xff] %vm775, 0.0
        %2941 = vst.msk [vmem:[#allocation2 + $0x138] sm:$0xff] %vm775, 0.0
        %2942 = vst.msk [vmem:[#allocation2 + $0x140] sm:$0xff] %vm775, 0.0
        %2943 = vst.msk [vmem:[#allocation2 + $0x148] sm:$0xff] %vm775, 0.0
        %2944 = vst.msk [vmem:[#allocation2 + $0x150] sm:$0xff] %vm775, 0.0
        %2945 = vst.msk [vmem:[#allocation2 + $0x158] sm:$0xff] %vm775, 0.0
        %2946 = vst.msk [vmem:[#allocation2 + $0x160] sm:$0xff] %vm775, 0.0
        %2947 = vst.msk [vmem:[#allocation2 + $0x168] sm:$0xff] %vm775, 0.0
        %2948 = vst.msk [vmem:[#allocation2 + $0x170] sm:$0xff] %vm775, 0.0
        %2949 = vst.msk [vmem:[#allocation2 + $0x178] sm:$0xff] %vm775, 0.0
        %2950 = vst.msk [vmem:[#allocation2 + $0x180] sm:$0xff] %vm775, 0.0
        %2951 = vst.msk [vmem:[#allocation2 + $0x188] sm:$0xff] %vm775, 0.0
        %2952 = vst.msk [vmem:[#allocation2 + $0x190] sm:$0xff] %vm775, 0.0
        %2953 = vst.msk [vmem:[#allocation2 + $0x198] sm:$0xff] %vm775, 0.0
        %2954 = vst.msk [vmem:[#allocation2 + $0x1a0] sm:$0xff] %vm775, 0.0
        %2955 = vst.msk [vmem:[#allocation2 + $0x1a8] sm:$0xff] %vm775, 0.0
        %2956 = vst.msk [vmem:[#allocation2 + $0x1b0] sm:$0xff] %vm775, 0.0
        %2957 = vst.msk [vmem:[#allocation2 + $0x1b8] sm:$0xff] %vm775, 0.0
        %2958 = vst.msk [vmem:[#allocation2 + $0x1c0] sm:$0xff] %vm775, 0.0
        %2959 = vst.msk [vmem:[#allocation2 + $0x1c8] sm:$0xff] %vm775, 0.0
        %2960 = vst.msk [vmem:[#allocation2 + $0x1d0] sm:$0xff] %vm775, 0.0
        %2961 = vst.msk [vmem:[#allocation2 + $0x1d8] sm:$0xff] %vm775, 0.0
        %2962 = vst.msk [vmem:[#allocation2 + $0x1e0] sm:$0xff] %vm775, 0.0
        %2963 = vst.msk [vmem:[#allocation2 + $0x1e8] sm:$0xff] %vm775, 0.0
        %2964 = vst.msk [vmem:[#allocation2 + $0x1f0] sm:$0xff] %vm775, 0.0
        %2965 = vst.msk [vmem:[#allocation2 + $0x1f8] sm:$0xff] %vm775, 0.0
        %2966 = vst.msk [vmem:[#allocation2 + $0x200] sm:$0xff] %vm775, 0.0
        %2967 = vst.msk [vmem:[#allocation2 + $0x208] sm:$0xff] %vm775, 0.0
        %2968 = vst.msk [vmem:[#allocation2 + $0x210] sm:$0xff] %vm775, 0.0
        %2969 = vst.msk [vmem:[#allocation2 + $0x218] sm:$0xff] %vm775, 0.0
        %2970 = vst.msk [vmem:[#allocation2 + $0x220] sm:$0xff] %vm775, 0.0
        %2971 = vst.msk [vmem:[#allocation2 + $0x228] sm:$0xff] %vm775, 0.0
        %2972 = vst.msk [vmem:[#allocation2 + $0x230] sm:$0xff] %vm775, 0.0
        %2973 = vst.msk [vmem:[#allocation2 + $0x238] sm:$0xff] %vm775, 0.0
        %2974 = vrot.lane.b32.xlu0 %v743, 112
        %v2975 = vpop.permute.xlu0 %2974
        %2976 = vrot.lane.b32.xlu0 %v744, 112
        %v2977 = vpop.permute.xlu0 %2976
        %2978 = vrot.lane.b32.xlu0 %v745, 112
        %v2979 = vpop.permute.xlu0 %2978
        %2980 = vrot.lane.b32.xlu0 %v746, 112
        %v2981 = vpop.permute.xlu0 %2980
        %2982 = vrot.lane.b32.xlu0 %v747, 112
        %v2983 = vpop.permute.xlu0 %2982
        %2984 = vrot.lane.b32.xlu0 %v748, 112
        %v2985 = vpop.permute.xlu0 %2984
        %2986 = vrot.lane.b32.xlu0 %v749, 112
        %v2987 = vpop.permute.xlu0 %2986
        %2988 = vrot.lane.b32.xlu0 %v750, 112
        %v2989 = vpop.permute.xlu0 %2988
        %2990 = vrot.lane.b32.xlu0 %v751, 112
        %v2991 = vpop.permute.xlu0 %2990
        %2992 = vrot.lane.b32.xlu0 %v752, 112
        %v2993 = vpop.permute.xlu0 %2992
        %2994 = vrot.lane.b32.xlu0 %v753, 112
        %v2995 = vpop.permute.xlu0 %2994
        %2996 = vrot.lane.b32.xlu0 %v754, 112
        %v2997 = vpop.permute.xlu0 %2996
        %2998 = vrot.lane.b32.xlu0 %v755, 112
        %v2999 = vpop.permute.xlu0 %2998
        %3000 = vrot.lane.b32.xlu0 %v756, 112
        %v3001 = vpop.permute.xlu0 %3000
        %3002 = vrot.lane.b32.xlu0 %v757, 112
        %v3003 = vpop.permute.xlu0 %3002
        %3004 = vrot.lane.b32.xlu0 %v758, 112
        %v3005 = vpop.permute.xlu0 %3004
        %3006 = vrot.lane.b32.xlu0 %v759, 112
        %v3007 = vpop.permute.xlu0 %3006
        %3008 = vrot.lane.b32.xlu0 %v760, 112
        %v3009 = vpop.permute.xlu0 %3008
        %3010 = vrot.lane.b32.xlu0 %v761, 112
        %v3011 = vpop.permute.xlu0 %3010
        %3012 = vrot.lane.b32.xlu0 %v762, 112
        %v3013 = vpop.permute.xlu0 %3012
        %3014 = vrot.lane.b32.xlu0 %v763, 112
        %v3015 = vpop.permute.xlu0 %3014
        %3016 = vrot.lane.b32.xlu0 %v764, 112
        %v3017 = vpop.permute.xlu0 %3016
        %3018 = vrot.lane.b32.xlu0 %v765, 112
        %v3019 = vpop.permute.xlu0 %3018
        %3020 = vrot.lane.b32.xlu0 %v766, 112
        %v3021 = vpop.permute.xlu0 %3020
        %3022 = vrot.lane.b32.xlu0 %v767, 112
        %v3023 = vpop.permute.xlu0 %3022
        %3024 = vrot.lane.b32.xlu0 %v768, 112
        %v3025 = vpop.permute.xlu0 %3024
        %3026 = vrot.lane.b32.xlu0 %v769, 112
        %v3027 = vpop.permute.xlu0 %3026
        %3028 = vrot.lane.b32.xlu0 %v770, 112
        %v3029 = vpop.permute.xlu0 %3028
        %3030 = vrot.lane.b32.xlu0 %v771, 112
        %v3031 = vpop.permute.xlu0 %3030
        %3032 = vrot.lane.b32.xlu0 %v772, 112
        %v3033 = vpop.permute.xlu0 %3032
        %3034 = vrot.lane.b32.xlu0 %v773, 112
        %v3035 = vpop.permute.xlu0 %3034
        %3036 = vrot.lane.b32.xlu0 %v774, 112
        %v3037 = vpop.permute.xlu0 %3036
        %3070 = vst.msk [vmem:[%s1008 + $0x8] sm:$0xff] %vm601, %v2975
        %3071 = vst.msk [vmem:[%s1008 + $0x10] sm:$0xff] %vm601, %v2977
        %3072 = vst.msk [vmem:[%s1008 + $0x28] sm:$0xff] %vm601, %v2979
        %3073 = vst.msk [vmem:[%s1008 + $0x30] sm:$0xff] %vm601, %v2981
        %3074 = vst.msk [vmem:[%s1008 + $0x48] sm:$0xff] %vm601, %v2983
        %3075 = vst.msk [vmem:[%s1008 + $0x50] sm:$0xff] %vm601, %v2985
        %3076 = vst.msk [vmem:[%s1008 + $0x68] sm:$0xff] %vm601, %v2987
        %3077 = vst.msk [vmem:[%s1008 + $0x70] sm:$0xff] %vm601, %v2989
        %3078 = vst.msk [vmem:[%s1008 + $0x88] sm:$0xff] %vm601, %v2991
        %3079 = vst.msk [vmem:[%s1008 + $0x90] sm:$0xff] %vm601, %v2993
        %3080 = vst.msk [vmem:[%s1008 + $0xa8] sm:$0xff] %vm601, %v2995
        %3081 = vst.msk [vmem:[%s1008 + $0xb0] sm:$0xff] %vm601, %v2997
        %3082 = vst.msk [vmem:[%s1008 + $0xc8] sm:$0xff] %vm601, %v2999
        %3083 = vst.msk [vmem:[%s1008 + $0xd0] sm:$0xff] %vm601, %v3001
        %3084 = vst.msk [vmem:[%s1008 + $0xe8] sm:$0xff] %vm601, %v3003
        %3085 = vst.msk [vmem:[%s1008 + $0xf0] sm:$0xff] %vm601, %v3005
        %3086 = vst.msk [vmem:[%s1008 + $0x108] sm:$0xff] %vm601, %v3007
        %3087 = vst.msk [vmem:[%s1008 + $0x110] sm:$0xff] %vm601, %v3009
        %3088 = vst.msk [vmem:[%s1008 + $0x128] sm:$0xff] %vm601, %v3011
        %3089 = vst.msk [vmem:[%s1008 + $0x130] sm:$0xff] %vm601, %v3013
        %3090 = vst.msk [vmem:[%s1008 + $0x148] sm:$0xff] %vm601, %v3015
        %3091 = vst.msk [vmem:[%s1008 + $0x150] sm:$0xff] %vm601, %v3017
        %3092 = vst.msk [vmem:[%s1008 + $0x168] sm:$0xff] %vm601, %v3019
        %3093 = vst.msk [vmem:[%s1008 + $0x170] sm:$0xff] %vm601, %v3021
        %3094 = vst.msk [vmem:[%s1008 + $0x188] sm:$0xff] %vm601, %v3023
        %3095 = vst.msk [vmem:[%s1008 + $0x190] sm:$0xff] %vm601, %v3025
        %3096 = vst.msk [vmem:[%s1008 + $0x1a8] sm:$0xff] %vm601, %v3027
        %3097 = vst.msk [vmem:[%s1008 + $0x1b0] sm:$0xff] %vm601, %v3029
        %3098 = vst.msk [vmem:[%s1008 + $0x1c8] sm:$0xff] %vm601, %v3031
        %3099 = vst.msk [vmem:[%s1008 + $0x1d0] sm:$0xff] %vm601, %v3033
        %3100 = vst.msk [vmem:[%s1008 + $0x1e8] sm:$0xff] %vm601, %v3035
        %3101 = vst.msk [vmem:[%s1008 + $0x1f0] sm:$0xff] %vm601, %v3037
        %v3102 = vld [vmem:[#allocation2 + $0x7] sm:$0xff]
        %v3103 = vld [vmem:[#allocation2 + $0xf] sm:$0xff]
        %v3104 = vld [vmem:[#allocation2 + $0x27] sm:$0xff]
        %v3105 = vld [vmem:[#allocation2 + $0x2f] sm:$0xff]
        %v3106 = vld [vmem:[#allocation2 + $0x47] sm:$0xff]
        %v3107 = vld [vmem:[#allocation2 + $0x4f] sm:$0xff]
        %v3108 = vld [vmem:[#allocation2 + $0x67] sm:$0xff]
        %v3109 = vld [vmem:[#allocation2 + $0x6f] sm:$0xff]
        %v3110 = vld [vmem:[#allocation2 + $0x87] sm:$0xff]
        %v3111 = vld [vmem:[#allocation2 + $0x8f] sm:$0xff]
        %v3112 = vld [vmem:[#allocation2 + $0xa7] sm:$0xff]
        %v3113 = vld [vmem:[#allocation2 + $0xaf] sm:$0xff]
        %v3114 = vld [vmem:[#allocation2 + $0xc7] sm:$0xff]
        %v3115 = vld [vmem:[#allocation2 + $0xcf] sm:$0xff]
        %v3116 = vld [vmem:[#allocation2 + $0xe7] sm:$0xff]
        %v3117 = vld [vmem:[#allocation2 + $0xef] sm:$0xff]
        %v3118 = vld [vmem:[#allocation2 + $0x107] sm:$0xff]
        %v3119 = vld [vmem:[#allocation2 + $0x10f] sm:$0xff]
        %v3120 = vld [vmem:[#allocation2 + $0x127] sm:$0xff]
        %v3121 = vld [vmem:[#allocation2 + $0x12f] sm:$0xff]
        %v3122 = vld [vmem:[#allocation2 + $0x147] sm:$0xff]
        %v3123 = vld [vmem:[#allocation2 + $0x14f] sm:$0xff]
        %v3124 = vld [vmem:[#allocation2 + $0x167] sm:$0xff]
        %v3125 = vld [vmem:[#allocation2 + $0x16f] sm:$0xff]
        %v3126 = vld [vmem:[#allocation2 + $0x187] sm:$0xff]
        %v3127 = vld [vmem:[#allocation2 + $0x18f] sm:$0xff]
        %v3128 = vld [vmem:[#allocation2 + $0x1a7] sm:$0xff]
        %v3129 = vld [vmem:[#allocation2 + $0x1af] sm:$0xff]
        %v3130 = vld [vmem:[#allocation2 + $0x1c7] sm:$0xff]
        %v3131 = vld [vmem:[#allocation2 + $0x1cf] sm:$0xff]
        %v3132 = vld [vmem:[#allocation2 + $0x1e7] sm:$0xff]
        %v3133 = vld [vmem:[#allocation2 + $0x1ef] sm:$0xff]
        %v3134 = vpack.c.bf16 %v3103, %v3102
        %v3135 = vpack.c.bf16 %v3105, %v3104
        %v3136 = vpack.c.bf16 %v3107, %v3106
        %v3137 = vpack.c.bf16 %v3109, %v3108
        %v3138 = vpack.c.bf16 %v3111, %v3110
        %v3139 = vpack.c.bf16 %v3113, %v3112
        %v3140 = vpack.c.bf16 %v3115, %v3114
        %v3141 = vpack.c.bf16 %v3117, %v3116
        %v3142 = vpack.c.bf16 %v3119, %v3118
        %v3143 = vpack.c.bf16 %v3121, %v3120
        %v3144 = vpack.c.bf16 %v3123, %v3122
        %v3145 = vpack.c.bf16 %v3125, %v3124
        %v3146 = vpack.c.bf16 %v3127, %v3126
        %v3147 = vpack.c.bf16 %v3129, %v3128
        %v3148 = vpack.c.bf16 %v3131, %v3130
        %v3149 = vpack.c.bf16 %v3133, %v3132
        %v3150 = vld [vmem:[%s7] sm:$0x3]
        %v3151 = vld [vmem:[#allocation2 + $0x8] sm:$0xff]
        %v3152 = vld [vmem:[#allocation2 + $0x10] sm:$0xff]
        %v3153 = vld [vmem:[#allocation2 + $0x28] sm:$0xff]
        %v3154 = vld [vmem:[#allocation2 + $0x30] sm:$0xff]
        %v3155 = vld [vmem:[#allocation2 + $0x48] sm:$0xff]
        %v3156 = vld [vmem:[#allocation2 + $0x50] sm:$0xff]
        %v3157 = vld [vmem:[#allocation2 + $0x68] sm:$0xff]
        %v3158 = vld [vmem:[#allocation2 + $0x70] sm:$0xff]
        %v3159 = vld [vmem:[#allocation2 + $0x88] sm:$0xff]
        %v3160 = vld [vmem:[#allocation2 + $0x90] sm:$0xff]
        %v3161 = vld [vmem:[#allocation2 + $0xa8] sm:$0xff]
        %v3162 = vld [vmem:[#allocation2 + $0xb0] sm:$0xff]
        %v3163 = vld [vmem:[#allocation2 + $0xc8] sm:$0xff]
        %v3164 = vld [vmem:[#allocation2 + $0xd0] sm:$0xff]
        %v3165 = vld [vmem:[#allocation2 + $0xe8] sm:$0xff]
        %v3166 = vld [vmem:[#allocation2 + $0xf0] sm:$0xff]
        %v3167 = vld [vmem:[#allocation2 + $0x108] sm:$0xff]
        %v3168 = vld [vmem:[#allocation2 + $0x110] sm:$0xff]
        %v3169 = vld [vmem:[#allocation2 + $0x128] sm:$0xff]
        %v3170 = vld [vmem:[#allocation2 + $0x130] sm:$0xff]
        %v3171 = vld [vmem:[#allocation2 + $0x148] sm:$0xff]
        %v3172 = vld [vmem:[#allocation2 + $0x150] sm:$0xff]
        %v3173 = vld [vmem:[#allocation2 + $0x168] sm:$0xff]
        %v3174 = vld [vmem:[#allocation2 + $0x170] sm:$0xff]
        %v3175 = vld [vmem:[#allocation2 + $0x188] sm:$0xff]
        %v3176 = vld [vmem:[#allocation2 + $0x190] sm:$0xff]
        %v3177 = vld [vmem:[#allocation2 + $0x1a8] sm:$0xff]
        %v3178 = vld [vmem:[#allocation2 + $0x1b0] sm:$0xff]
        %v3179 = vld [vmem:[#allocation2 + $0x1c8] sm:$0xff]
        %v3180 = vld [vmem:[#allocation2 + $0x1d0] sm:$0xff]
        %v3181 = vld [vmem:[#allocation2 + $0x1e8] sm:$0xff]
        %v3182 = vld [vmem:[#allocation2 + $0x1f0] sm:$0xff]
        %v3183 = vpack.c.bf16 %v3152, %v3151
        %v3184 = vpack.c.bf16 %v3154, %v3153
        %v3185 = vpack.c.bf16 %v3156, %v3155
        %v3186 = vpack.c.bf16 %v3158, %v3157
        %v3187 = vpack.c.bf16 %v3160, %v3159
        %v3188 = vpack.c.bf16 %v3162, %v3161
        %v3189 = vpack.c.bf16 %v3164, %v3163
        %v3190 = vpack.c.bf16 %v3166, %v3165
        %v3191 = vpack.c.bf16 %v3168, %v3167
        %v3192 = vpack.c.bf16 %v3170, %v3169
        %v3193 = vpack.c.bf16 %v3172, %v3171
        %v3194 = vpack.c.bf16 %v3174, %v3173
        %v3195 = vpack.c.bf16 %v3176, %v3175
        %v3196 = vpack.c.bf16 %v3178, %v3177
        %v3197 = vpack.c.bf16 %v3180, %v3179
        %v3198 = vpack.c.bf16 %v3182, %v3181
        %s3199 = scalar_lea.vmem %s7, 2
        %v3200 = vld [vmem:[%s3199] sm:$0x3]
        %v3202 = vsel %vm601, %v3183, 0
        %v3205 = vsel %vm601, %v3184, 0
        %v3208 = vsel %vm601, %v3185, 0
        %v3211 = vsel %vm601, %v3186, 0
        %v3214 = vsel %vm601, %v3187, 0
        %v3217 = vsel %vm601, %v3188, 0
        %v3220 = vsel %vm601, %v3189, 0
        %v3223 = vsel %vm601, %v3190, 0
        %v3226 = vsel %vm601, %v3191, 0
        %v3229 = vsel %vm601, %v3192, 0
        %v3232 = vsel %vm601, %v3193, 0
        %v3235 = vsel %vm601, %v3194, 0
        %v3238 = vsel %vm601, %v3195, 0
        %v3241 = vsel %vm601, %v3196, 0
        %v3244 = vsel %vm601, %v3197, 0
        %v3247 = vsel %vm601, %v3198, 0
        %v3250 = vsel %vm650, %v3200, 0
        %3252 = vmatpush.bf16.msra.mxu0 0
        %3253 = vmatpush.bf16.msra.mxu0 0
        %3254 = vmatpush.bf16.msra.mxu0 0
        %3255 = vmatpush.bf16.msra.mxu0 0
        %3256 = vmatpush.bf16.msra.mxu0 0
        %3257 = vmatpush.bf16.msra.mxu0 0
        %3258 = vmatpush.bf16.msra.mxu0 0
        %3259 = vmatpush.bf16.msra.mxu0 %v3250
        %3260 = vmatmul.bf16.gmra.mxu0 %v3202
        %v3261 = vpop.f32.mrf.mxu0
        %v3262 = vadd.f32 0.0, %v3261
        %v3263 = vpop.f32.mrf.mxu0
        %v3264 = vadd.f32 0.0, %v3263
        %3265 = vmatmul.bf16.gmra.mxu0 %v3205
        %v3266 = vpop.f32.mrf.mxu0
        %v3267 = vadd.f32 0.0, %v3266
        %v3268 = vpop.f32.mrf.mxu0
        %v3269 = vadd.f32 0.0, %v3268
        %3270 = vmatmul.bf16.gmra.mxu0 %v3208
        %v3271 = vpop.f32.mrf.mxu0
        %v3272 = vadd.f32 0.0, %v3271
        %v3273 = vpop.f32.mrf.mxu0
        %v3274 = vadd.f32 0.0, %v3273
        %3275 = vmatmul.bf16.gmra.mxu0 %v3211
        %v3276 = vpop.f32.mrf.mxu0
        %v3277 = vadd.f32 0.0, %v3276
        %v3278 = vpop.f32.mrf.mxu0
        %v3279 = vadd.f32 0.0, %v3278
        %3280 = vmatmul.bf16.gmra.mxu0 %v3214
        %v3281 = vpop.f32.mrf.mxu0
        %v3282 = vadd.f32 0.0, %v3281
        %v3283 = vpop.f32.mrf.mxu0
        %v3284 = vadd.f32 0.0, %v3283
        %3285 = vmatmul.bf16.gmra.mxu0 %v3217
        %v3286 = vpop.f32.mrf.mxu0
        %v3287 = vadd.f32 0.0, %v3286
        %v3288 = vpop.f32.mrf.mxu0
        %v3289 = vadd.f32 0.0, %v3288
        %3290 = vmatmul.bf16.gmra.mxu0 %v3220
        %v3291 = vpop.f32.mrf.mxu0
        %v3292 = vadd.f32 0.0, %v3291
        %v3293 = vpop.f32.mrf.mxu0
        %v3294 = vadd.f32 0.0, %v3293
        %3295 = vmatmul.bf16.gmra.mxu0 %v3223
        %v3296 = vpop.f32.mrf.mxu0
        %v3297 = vadd.f32 0.0, %v3296
        %v3298 = vpop.f32.mrf.mxu0
        %v3299 = vadd.f32 0.0, %v3298
        %3300 = vmatmul.bf16.gmra.mxu0 %v3226
        %v3301 = vpop.f32.mrf.mxu0
        %v3302 = vadd.f32 0.0, %v3301
        %v3303 = vpop.f32.mrf.mxu0
        %v3304 = vadd.f32 0.0, %v3303
        %3305 = vmatmul.bf16.gmra.mxu0 %v3229
        %v3306 = vpop.f32.mrf.mxu0
        %v3307 = vadd.f32 0.0, %v3306
        %v3308 = vpop.f32.mrf.mxu0
        %v3309 = vadd.f32 0.0, %v3308
        %3310 = vmatmul.bf16.gmra.mxu0 %v3232
        %v3311 = vpop.f32.mrf.mxu0
        %v3312 = vadd.f32 0.0, %v3311
        %v3313 = vpop.f32.mrf.mxu0
        %v3314 = vadd.f32 0.0, %v3313
        %3315 = vmatmul.bf16.gmra.mxu0 %v3235
        %v3316 = vpop.f32.mrf.mxu0
        %v3317 = vadd.f32 0.0, %v3316
        %v3318 = vpop.f32.mrf.mxu0
        %v3319 = vadd.f32 0.0, %v3318
        %3320 = vmatmul.bf16.gmra.mxu0 %v3238
        %v3321 = vpop.f32.mrf.mxu0
        %v3322 = vadd.f32 0.0, %v3321
        %v3323 = vpop.f32.mrf.mxu0
        %v3324 = vadd.f32 0.0, %v3323
        %3325 = vmatmul.bf16.gmra.mxu0 %v3241
        %v3326 = vpop.f32.mrf.mxu0
        %v3327 = vadd.f32 0.0, %v3326
        %v3328 = vpop.f32.mrf.mxu0
        %v3329 = vadd.f32 0.0, %v3328
        %3330 = vmatmul.bf16.gmra.mxu0 %v3244
        %v3331 = vpop.f32.mrf.mxu0
        %v3332 = vadd.f32 0.0, %v3331
        %v3333 = vpop.f32.mrf.mxu0
        %v3334 = vadd.f32 0.0, %v3333
        %3335 = vmatmul.bf16.gmra.mxu0 %v3247
        %v3336 = vpop.f32.mrf.mxu0
        %v3337 = vadd.f32 0.0, %v3336
        %v3338 = vpop.f32.mrf.mxu0
        %v3339 = vadd.f32 0.0, %v3338
        %3340 = vdwg.mxu0
        %v3342 = vsel %vm601, %v3134, 0
        %v3345 = vsel %vm601, %v3135, 0
        %v3348 = vsel %vm601, %v3136, 0
        %v3351 = vsel %vm601, %v3137, 0
        %v3354 = vsel %vm601, %v3138, 0
        %v3357 = vsel %vm601, %v3139, 0
        %v3360 = vsel %vm601, %v3140, 0
        %v3363 = vsel %vm601, %v3141, 0
        %v3366 = vsel %vm601, %v3142, 0
        %v3369 = vsel %vm601, %v3143, 0
        %v3372 = vsel %vm601, %v3144, 0
        %v3375 = vsel %vm601, %v3145, 0
        %v3378 = vsel %vm601, %v3146, 0
        %v3381 = vsel %vm601, %v3147, 0
        %v3384 = vsel %vm601, %v3148, 0
        %v3387 = vsel %vm601, %v3149, 0
        %v3390 = vsel %vm650, %v3150, 0
        %3392 = vmatpush.bf16.msra.mxu0 0
        %3393 = vmatpush.bf16.msra.mxu0 0
        %3394 = vmatpush.bf16.msra.mxu0 0
        %3395 = vmatpush.bf16.msra.mxu0 0
        %3396 = vmatpush.bf16.msra.mxu0 0
        %3397 = vmatpush.bf16.msra.mxu0 0
        %3398 = vmatpush.bf16.msra.mxu0 0
        %3399 = vmatpush.bf16.msra.mxu0 %v3390
        %3400 = vmatmul.bf16.gmra.mxu0 %v3342
        %v3401 = vpop.f32.mrf.mxu0
        %v3402 = vadd.f32 %v3262, %v3401
        %v3403 = vpop.f32.mrf.mxu0
        %v3404 = vadd.f32 %v3264, %v3403
        %3405 = vmatmul.bf16.gmra.mxu0 %v3345
        %v3406 = vpop.f32.mrf.mxu0
        %v3407 = vadd.f32 %v3267, %v3406
        %v3408 = vpop.f32.mrf.mxu0
        %v3409 = vadd.f32 %v3269, %v3408
        %3410 = vmatmul.bf16.gmra.mxu0 %v3348
        %v3411 = vpop.f32.mrf.mxu0
        %v3412 = vadd.f32 %v3272, %v3411
        %v3413 = vpop.f32.mrf.mxu0
        %v3414 = vadd.f32 %v3274, %v3413
        %3415 = vmatmul.bf16.gmra.mxu0 %v3351
        %v3416 = vpop.f32.mrf.mxu0
        %v3417 = vadd.f32 %v3277, %v3416
        %v3418 = vpop.f32.mrf.mxu0
        %v3419 = vadd.f32 %v3279, %v3418
        %3420 = vmatmul.bf16.gmra.mxu0 %v3354
        %v3421 = vpop.f32.mrf.mxu0
        %v3422 = vadd.f32 %v3282, %v3421
        %v3423 = vpop.f32.mrf.mxu0
        %v3424 = vadd.f32 %v3284, %v3423
        %3425 = vmatmul.bf16.gmra.mxu0 %v3357
        %v3426 = vpop.f32.mrf.mxu0
        %v3427 = vadd.f32 %v3287, %v3426
        %v3428 = vpop.f32.mrf.mxu0
        %v3429 = vadd.f32 %v3289, %v3428
        %3430 = vmatmul.bf16.gmra.mxu0 %v3360
        %v3431 = vpop.f32.mrf.mxu0
        %v3432 = vadd.f32 %v3292, %v3431
        %v3433 = vpop.f32.mrf.mxu0
        %v3434 = vadd.f32 %v3294, %v3433
        %3435 = vmatmul.bf16.gmra.mxu0 %v3363
        %v3436 = vpop.f32.mrf.mxu0
        %v3437 = vadd.f32 %v3297, %v3436
        %v3438 = vpop.f32.mrf.mxu0
        %v3439 = vadd.f32 %v3299, %v3438
        %3440 = vmatmul.bf16.gmra.mxu0 %v3366
        %v3441 = vpop.f32.mrf.mxu0
        %v3442 = vadd.f32 %v3302, %v3441
        %v3443 = vpop.f32.mrf.mxu0
        %v3444 = vadd.f32 %v3304, %v3443
        %3445 = vmatmul.bf16.gmra.mxu0 %v3369
        %v3446 = vpop.f32.mrf.mxu0
        %v3447 = vadd.f32 %v3307, %v3446
        %v3448 = vpop.f32.mrf.mxu0
        %v3449 = vadd.f32 %v3309, %v3448
        %3450 = vmatmul.bf16.gmra.mxu0 %v3372
        %v3451 = vpop.f32.mrf.mxu0
        %v3452 = vadd.f32 %v3312, %v3451
        %v3453 = vpop.f32.mrf.mxu0
        %v3454 = vadd.f32 %v3314, %v3453
        %3455 = vmatmul.bf16.gmra.mxu0 %v3375
        %v3456 = vpop.f32.mrf.mxu0
        %v3457 = vadd.f32 %v3317, %v3456
        %v3458 = vpop.f32.mrf.mxu0
        %v3459 = vadd.f32 %v3319, %v3458
        %3460 = vmatmul.bf16.gmra.mxu0 %v3378
        %v3461 = vpop.f32.mrf.mxu0
        %v3462 = vadd.f32 %v3322, %v3461
        %v3463 = vpop.f32.mrf.mxu0
        %v3464 = vadd.f32 %v3324, %v3463
        %3465 = vmatmul.bf16.gmra.mxu0 %v3381
        %v3466 = vpop.f32.mrf.mxu0
        %v3467 = vadd.f32 %v3327, %v3466
        %v3468 = vpop.f32.mrf.mxu0
        %v3469 = vadd.f32 %v3329, %v3468
        %3470 = vmatmul.bf16.gmra.mxu0 %v3384
        %v3471 = vpop.f32.mrf.mxu0
        %v3472 = vadd.f32 %v3332, %v3471
        %v3473 = vpop.f32.mrf.mxu0
        %v3474 = vadd.f32 %v3334, %v3473
        %3475 = vmatmul.bf16.gmra.mxu0 %v3387
        %v3476 = vpop.f32.mrf.mxu0
        %v3477 = vadd.f32 %v3337, %v3476
        %v3478 = vpop.f32.mrf.mxu0
        %v3479 = vadd.f32 %v3339, %v3478
        %3480 = vdwg.mxu0
        %v3481 = vld [vmem:[#allocation2 + $0x9] sm:$0xff]
        %v3482 = vld [vmem:[#allocation2 + $0x11] sm:$0xff]
        %v3483 = vld [vmem:[#allocation2 + $0x29] sm:$0xff]
        %v3484 = vld [vmem:[#allocation2 + $0x31] sm:$0xff]
        %v3485 = vld [vmem:[#allocation2 + $0x49] sm:$0xff]
        %v3486 = vld [vmem:[#allocation2 + $0x51] sm:$0xff]
        %v3487 = vld [vmem:[#allocation2 + $0x69] sm:$0xff]
        %v3488 = vld [vmem:[#allocation2 + $0x71] sm:$0xff]
        %v3489 = vld [vmem:[#allocation2 + $0x89] sm:$0xff]
        %v3490 = vld [vmem:[#allocation2 + $0x91] sm:$0xff]
        %v3491 = vld [vmem:[#allocation2 + $0xa9] sm:$0xff]
        %v3492 = vld [vmem:[#allocation2 + $0xb1] sm:$0xff]
        %v3493 = vld [vmem:[#allocation2 + $0xc9] sm:$0xff]
        %v3494 = vld [vmem:[#allocation2 + $0xd1] sm:$0xff]
        %v3495 = vld [vmem:[#allocation2 + $0xe9] sm:$0xff]
        %v3496 = vld [vmem:[#allocation2 + $0xf1] sm:$0xff]
        %v3497 = vld [vmem:[#allocation2 + $0x109] sm:$0xff]
        %v3498 = vld [vmem:[#allocation2 + $0x111] sm:$0xff]
        %v3499 = vld [vmem:[#allocation2 + $0x129] sm:$0xff]
        %v3500 = vld [vmem:[#allocation2 + $0x131] sm:$0xff]
        %v3501 = vld [vmem:[#allocation2 + $0x149] sm:$0xff]
        %v3502 = vld [vmem:[#allocation2 + $0x151] sm:$0xff]
        %v3503 = vld [vmem:[#allocation2 + $0x169] sm:$0xff]
        %v3504 = vld [vmem:[#allocation2 + $0x171] sm:$0xff]
        %v3505 = vld [vmem:[#allocation2 + $0x189] sm:$0xff]
        %v3506 = vld [vmem:[#allocation2 + $0x191] sm:$0xff]
        %v3507 = vld [vmem:[#allocation2 + $0x1a9] sm:$0xff]
        %v3508 = vld [vmem:[#allocation2 + $0x1b1] sm:$0xff]
        %v3509 = vld [vmem:[#allocation2 + $0x1c9] sm:$0xff]
        %v3510 = vld [vmem:[#allocation2 + $0x1d1] sm:$0xff]
        %v3511 = vld [vmem:[#allocation2 + $0x1e9] sm:$0xff]
        %v3512 = vld [vmem:[#allocation2 + $0x1f1] sm:$0xff]
        %v3513 = vpack.c.bf16 %v3482, %v3481
        %v3514 = vpack.c.bf16 %v3484, %v3483
        %v3515 = vpack.c.bf16 %v3486, %v3485
        %v3516 = vpack.c.bf16 %v3488, %v3487
        %v3517 = vpack.c.bf16 %v3490, %v3489
        %v3518 = vpack.c.bf16 %v3492, %v3491
        %v3519 = vpack.c.bf16 %v3494, %v3493
        %v3520 = vpack.c.bf16 %v3496, %v3495
        %v3521 = vpack.c.bf16 %v3498, %v3497
        %v3522 = vpack.c.bf16 %v3500, %v3499
        %v3523 = vpack.c.bf16 %v3502, %v3501
        %v3524 = vpack.c.bf16 %v3504, %v3503
        %v3525 = vpack.c.bf16 %v3506, %v3505
        %v3526 = vpack.c.bf16 %v3508, %v3507
        %v3527 = vpack.c.bf16 %v3510, %v3509
        %v3528 = vpack.c.bf16 %v3512, %v3511
        %s3529 = scalar_lea.vmem %s7, 4
        %v3530 = vld [vmem:[%s3529] sm:$0x3]
        %v3532 = vsel %vm601, %v3513, 0
        %v3535 = vsel %vm601, %v3514, 0
        %v3538 = vsel %vm601, %v3515, 0
        %v3541 = vsel %vm601, %v3516, 0
        %v3544 = vsel %vm601, %v3517, 0
        %v3547 = vsel %vm601, %v3518, 0
        %v3550 = vsel %vm601, %v3519, 0
        %v3553 = vsel %vm601, %v3520, 0
        %v3556 = vsel %vm601, %v3521, 0
        %v3559 = vsel %vm601, %v3522, 0
        %v3562 = vsel %vm601, %v3523, 0
        %v3565 = vsel %vm601, %v3524, 0
        %v3568 = vsel %vm601, %v3525, 0
        %v3571 = vsel %vm601, %v3526, 0
        %v3574 = vsel %vm601, %v3527, 0
        %v3577 = vsel %vm601, %v3528, 0
        %v3580 = vsel %vm650, %v3530, 0
        %3582 = vmatpush.bf16.msra.mxu0 0
        %3583 = vmatpush.bf16.msra.mxu0 0
        %3584 = vmatpush.bf16.msra.mxu0 0
        %3585 = vmatpush.bf16.msra.mxu0 0
        %3586 = vmatpush.bf16.msra.mxu0 0
        %3587 = vmatpush.bf16.msra.mxu0 0
        %3588 = vmatpush.bf16.msra.mxu0 0
        %3589 = vmatpush.bf16.msra.mxu0 %v3580
        %3590 = vmatmul.bf16.gmra.mxu0 %v3532
        %v3591 = vpop.f32.mrf.mxu0
        %v3592 = vadd.f32 0.0, %v3591
        %v3593 = vpop.f32.mrf.mxu0
        %v3594 = vadd.f32 0.0, %v3593
        %3595 = vmatmul.bf16.gmra.mxu0 %v3535
        %v3596 = vpop.f32.mrf.mxu0
        %v3597 = vadd.f32 0.0, %v3596
        %v3598 = vpop.f32.mrf.mxu0
        %v3599 = vadd.f32 0.0, %v3598
        %3600 = vmatmul.bf16.gmra.mxu0 %v3538
        %v3601 = vpop.f32.mrf.mxu0
        %v3602 = vadd.f32 0.0, %v3601
        %v3603 = vpop.f32.mrf.mxu0
        %v3604 = vadd.f32 0.0, %v3603
        %3605 = vmatmul.bf16.gmra.mxu0 %v3541
        %v3606 = vpop.f32.mrf.mxu0
        %v3607 = vadd.f32 0.0, %v3606
        %v3608 = vpop.f32.mrf.mxu0
        %v3609 = vadd.f32 0.0, %v3608
        %3610 = vmatmul.bf16.gmra.mxu0 %v3544
        %v3611 = vpop.f32.mrf.mxu0
        %v3612 = vadd.f32 0.0, %v3611
        %v3613 = vpop.f32.mrf.mxu0
        %v3614 = vadd.f32 0.0, %v3613
        %3615 = vmatmul.bf16.gmra.mxu0 %v3547
        %v3616 = vpop.f32.mrf.mxu0
        %v3617 = vadd.f32 0.0, %v3616
        %v3618 = vpop.f32.mrf.mxu0
        %v3619 = vadd.f32 0.0, %v3618
        %3620 = vmatmul.bf16.gmra.mxu0 %v3550
        %v3621 = vpop.f32.mrf.mxu0
        %v3622 = vadd.f32 0.0, %v3621
        %v3623 = vpop.f32.mrf.mxu0
        %v3624 = vadd.f32 0.0, %v3623
        %3625 = vmatmul.bf16.gmra.mxu0 %v3553
        %v3626 = vpop.f32.mrf.mxu0
        %v3627 = vadd.f32 0.0, %v3626
        %v3628 = vpop.f32.mrf.mxu0
        %v3629 = vadd.f32 0.0, %v3628
        %3630 = vmatmul.bf16.gmra.mxu0 %v3556
        %v3631 = vpop.f32.mrf.mxu0
        %v3632 = vadd.f32 0.0, %v3631
        %v3633 = vpop.f32.mrf.mxu0
        %v3634 = vadd.f32 0.0, %v3633
        %3635 = vmatmul.bf16.gmra.mxu0 %v3559
        %v3636 = vpop.f32.mrf.mxu0
        %v3637 = vadd.f32 0.0, %v3636
        %v3638 = vpop.f32.mrf.mxu0
        %v3639 = vadd.f32 0.0, %v3638
        %3640 = vmatmul.bf16.gmra.mxu0 %v3562
        %v3641 = vpop.f32.mrf.mxu0
        %v3642 = vadd.f32 0.0, %v3641
        %v3643 = vpop.f32.mrf.mxu0
        %v3644 = vadd.f32 0.0, %v3643
        %3645 = vmatmul.bf16.gmra.mxu0 %v3565
        %v3646 = vpop.f32.mrf.mxu0
        %v3647 = vadd.f32 0.0, %v3646
        %v3648 = vpop.f32.mrf.mxu0
        %v3649 = vadd.f32 0.0, %v3648
        %3650 = vmatmul.bf16.gmra.mxu0 %v3568
        %v3651 = vpop.f32.mrf.mxu0
        %v3652 = vadd.f32 0.0, %v3651
        %v3653 = vpop.f32.mrf.mxu0
        %v3654 = vadd.f32 0.0, %v3653
        %3655 = vmatmul.bf16.gmra.mxu0 %v3571
        %v3656 = vpop.f32.mrf.mxu0
        %v3657 = vadd.f32 0.0, %v3656
        %v3658 = vpop.f32.mrf.mxu0
        %v3659 = vadd.f32 0.0, %v3658
        %3660 = vmatmul.bf16.gmra.mxu0 %v3574
        %v3661 = vpop.f32.mrf.mxu0
        %v3662 = vadd.f32 0.0, %v3661
        %v3663 = vpop.f32.mrf.mxu0
        %v3664 = vadd.f32 0.0, %v3663
        %3665 = vmatmul.bf16.gmra.mxu0 %v3577
        %v3666 = vpop.f32.mrf.mxu0
        %v3667 = vadd.f32 0.0, %v3666
        %v3668 = vpop.f32.mrf.mxu0
        %v3669 = vadd.f32 0.0, %v3668
        %3670 = vdwg.mxu0
        %v3671 = vadd.f32 %v3402, %v3592
        %v3672 = vadd.f32 %v3404, %v3594
        %v3673 = vadd.f32 %v3407, %v3597
        %v3674 = vadd.f32 %v3409, %v3599
        %v3675 = vadd.f32 %v3412, %v3602
        %v3676 = vadd.f32 %v3414, %v3604
        %v3677 = vadd.f32 %v3417, %v3607
        %v3678 = vadd.f32 %v3419, %v3609
        %v3679 = vadd.f32 %v3422, %v3612
        %v3680 = vadd.f32 %v3424, %v3614
        %v3681 = vadd.f32 %v3427, %v3617
        %v3682 = vadd.f32 %v3429, %v3619
        %v3683 = vadd.f32 %v3432, %v3622
        %v3684 = vadd.f32 %v3434, %v3624
        %v3685 = vadd.f32 %v3437, %v3627
        %v3686 = vadd.f32 %v3439, %v3629
        %v3687 = vadd.f32 %v3442, %v3632
        %v3688 = vadd.f32 %v3444, %v3634
        %v3689 = vadd.f32 %v3447, %v3637
        %v3690 = vadd.f32 %v3449, %v3639
        %v3691 = vadd.f32 %v3452, %v3642
        %v3692 = vadd.f32 %v3454, %v3644
        %v3693 = vadd.f32 %v3457, %v3647
        %v3694 = vadd.f32 %v3459, %v3649
        %v3695 = vadd.f32 %v3462, %v3652
        %v3696 = vadd.f32 %v3464, %v3654
        %v3697 = vadd.f32 %v3467, %v3657
        %v3698 = vadd.f32 %v3469, %v3659
        %v3699 = vadd.f32 %v3472, %v3662
        %v3700 = vadd.f32 %v3474, %v3664
        %v3701 = vadd.f32 %v3477, %v3667
        %v3702 = vadd.f32 %v3479, %v3669
        %v3703 = vld [vmem:[%s1008 + $0x7] sm:$0xff]
        %v3704 = vld [vmem:[%s1008 + $0xf] sm:$0xff]
        %v3705 = vld [vmem:[%s1008 + $0x27] sm:$0xff]
        %v3706 = vld [vmem:[%s1008 + $0x2f] sm:$0xff]
        %v3707 = vld [vmem:[%s1008 + $0x47] sm:$0xff]
        %v3708 = vld [vmem:[%s1008 + $0x4f] sm:$0xff]
        %v3709 = vld [vmem:[%s1008 + $0x67] sm:$0xff]
        %v3710 = vld [vmem:[%s1008 + $0x6f] sm:$0xff]
        %v3711 = vld [vmem:[%s1008 + $0x87] sm:$0xff]
        %v3712 = vld [vmem:[%s1008 + $0x8f] sm:$0xff]
        %v3713 = vld [vmem:[%s1008 + $0xa7] sm:$0xff]
        %v3714 = vld [vmem:[%s1008 + $0xaf] sm:$0xff]
        %v3715 = vld [vmem:[%s1008 + $0xc7] sm:$0xff]
        %v3716 = vld [vmem:[%s1008 + $0xcf] sm:$0xff]
        %v3717 = vld [vmem:[%s1008 + $0xe7] sm:$0xff]
        %v3718 = vld [vmem:[%s1008 + $0xef] sm:$0xff]
        %v3719 = vld [vmem:[%s1008 + $0x107] sm:$0xff]
        %v3720 = vld [vmem:[%s1008 + $0x10f] sm:$0xff]
        %v3721 = vld [vmem:[%s1008 + $0x127] sm:$0xff]
        %v3722 = vld [vmem:[%s1008 + $0x12f] sm:$0xff]
        %v3723 = vld [vmem:[%s1008 + $0x147] sm:$0xff]
        %v3724 = vld [vmem:[%s1008 + $0x14f] sm:$0xff]
        %v3725 = vld [vmem:[%s1008 + $0x167] sm:$0xff]
        %v3726 = vld [vmem:[%s1008 + $0x16f] sm:$0xff]
        %v3727 = vld [vmem:[%s1008 + $0x187] sm:$0xff]
        %v3728 = vld [vmem:[%s1008 + $0x18f] sm:$0xff]
        %v3729 = vld [vmem:[%s1008 + $0x1a7] sm:$0xff]
        %v3730 = vld [vmem:[%s1008 + $0x1af] sm:$0xff]
        %v3731 = vld [vmem:[%s1008 + $0x1c7] sm:$0xff]
        %v3732 = vld [vmem:[%s1008 + $0x1cf] sm:$0xff]
        %v3733 = vld [vmem:[%s1008 + $0x1e7] sm:$0xff]
        %v3734 = vld [vmem:[%s1008 + $0x1ef] sm:$0xff]
        %v3735 = vpack.c.bf16 %v3704, %v3703
        %v3736 = vpack.c.bf16 %v3706, %v3705
        %v3737 = vpack.c.bf16 %v3708, %v3707
        %v3738 = vpack.c.bf16 %v3710, %v3709
        %v3739 = vpack.c.bf16 %v3712, %v3711
        %v3740 = vpack.c.bf16 %v3714, %v3713
        %v3741 = vpack.c.bf16 %v3716, %v3715
        %v3742 = vpack.c.bf16 %v3718, %v3717
        %v3743 = vpack.c.bf16 %v3720, %v3719
        %v3744 = vpack.c.bf16 %v3722, %v3721
        %v3745 = vpack.c.bf16 %v3724, %v3723
        %v3746 = vpack.c.bf16 %v3726, %v3725
        %v3747 = vpack.c.bf16 %v3728, %v3727
        %v3748 = vpack.c.bf16 %v3730, %v3729
        %v3749 = vpack.c.bf16 %v3732, %v3731
        %v3750 = vpack.c.bf16 %v3734, %v3733
        %s3751 = scalar_lea.vmem %s7, 6
        %v3752 = vld [vmem:[%s3751] sm:$0x3]
        %v3754 = vsel %vm601, %v3735, 0
        %v3757 = vsel %vm601, %v3736, 0
        %v3760 = vsel %vm601, %v3737, 0
        %v3763 = vsel %vm601, %v3738, 0
        %v3766 = vsel %vm601, %v3739, 0
        %v3769 = vsel %vm601, %v3740, 0
        %v3772 = vsel %vm601, %v3741, 0
        %v3775 = vsel %vm601, %v3742, 0
        %v3778 = vsel %vm601, %v3743, 0
        %v3781 = vsel %vm601, %v3744, 0
        %v3784 = vsel %vm601, %v3745, 0
        %v3787 = vsel %vm601, %v3746, 0
        %v3790 = vsel %vm601, %v3747, 0
        %v3793 = vsel %vm601, %v3748, 0
        %v3796 = vsel %vm601, %v3749, 0
        %v3799 = vsel %vm601, %v3750, 0
        %v3802 = vsel %vm650, %v3752, 0
        %3804 = vmatpush.bf16.msra.mxu0 0
        %3805 = vmatpush.bf16.msra.mxu0 0
        %3806 = vmatpush.bf16.msra.mxu0 0
        %3807 = vmatpush.bf16.msra.mxu0 0
        %3808 = vmatpush.bf16.msra.mxu0 0
        %3809 = vmatpush.bf16.msra.mxu0 0
        %3810 = vmatpush.bf16.msra.mxu0 0
        %3811 = vmatpush.bf16.msra.mxu0 %v3802
        %3812 = vmatmul.bf16.gmra.mxu0 %v3754
        %v3813 = vpop.f32.mrf.mxu0
        %v3814 = vadd.f32 0.0, %v3813
        %v3815 = vpop.f32.mrf.mxu0
        %v3816 = vadd.f32 0.0, %v3815
        %3817 = vmatmul.bf16.gmra.mxu0 %v3757
        %v3818 = vpop.f32.mrf.mxu0
        %v3819 = vadd.f32 0.0, %v3818
        %v3820 = vpop.f32.mrf.mxu0
        %v3821 = vadd.f32 0.0, %v3820
        %3822 = vmatmul.bf16.gmra.mxu0 %v3760
        %v3823 = vpop.f32.mrf.mxu0
        %v3824 = vadd.f32 0.0, %v3823
        %v3825 = vpop.f32.mrf.mxu0
        %v3826 = vadd.f32 0.0, %v3825
        %3827 = vmatmul.bf16.gmra.mxu0 %v3763
        %v3828 = vpop.f32.mrf.mxu0
        %v3829 = vadd.f32 0.0, %v3828
        %v3830 = vpop.f32.mrf.mxu0
        %v3831 = vadd.f32 0.0, %v3830
        %3832 = vmatmul.bf16.gmra.mxu0 %v3766
        %v3833 = vpop.f32.mrf.mxu0
        %v3834 = vadd.f32 0.0, %v3833
        %v3835 = vpop.f32.mrf.mxu0
        %v3836 = vadd.f32 0.0, %v3835
        %3837 = vmatmul.bf16.gmra.mxu0 %v3769
        %v3838 = vpop.f32.mrf.mxu0
        %v3839 = vadd.f32 0.0, %v3838
        %v3840 = vpop.f32.mrf.mxu0
        %v3841 = vadd.f32 0.0, %v3840
        %3842 = vmatmul.bf16.gmra.mxu0 %v3772
        %v3843 = vpop.f32.mrf.mxu0
        %v3844 = vadd.f32 0.0, %v3843
        %v3845 = vpop.f32.mrf.mxu0
        %v3846 = vadd.f32 0.0, %v3845
        %3847 = vmatmul.bf16.gmra.mxu0 %v3775
        %v3848 = vpop.f32.mrf.mxu0
        %v3849 = vadd.f32 0.0, %v3848
        %v3850 = vpop.f32.mrf.mxu0
        %v3851 = vadd.f32 0.0, %v3850
        %3852 = vmatmul.bf16.gmra.mxu0 %v3778
        %v3853 = vpop.f32.mrf.mxu0
        %v3854 = vadd.f32 0.0, %v3853
        %v3855 = vpop.f32.mrf.mxu0
        %v3856 = vadd.f32 0.0, %v3855
        %3857 = vmatmul.bf16.gmra.mxu0 %v3781
        %v3858 = vpop.f32.mrf.mxu0
        %v3859 = vadd.f32 0.0, %v3858
        %v3860 = vpop.f32.mrf.mxu0
        %v3861 = vadd.f32 0.0, %v3860
        %3862 = vmatmul.bf16.gmra.mxu0 %v3784
        %v3863 = vpop.f32.mrf.mxu0
        %v3864 = vadd.f32 0.0, %v3863
        %v3865 = vpop.f32.mrf.mxu0
        %v3866 = vadd.f32 0.0, %v3865
        %3867 = vmatmul.bf16.gmra.mxu0 %v3787
        %v3868 = vpop.f32.mrf.mxu0
        %v3869 = vadd.f32 0.0, %v3868
        %v3870 = vpop.f32.mrf.mxu0
        %v3871 = vadd.f32 0.0, %v3870
        %3872 = vmatmul.bf16.gmra.mxu0 %v3790
        %v3873 = vpop.f32.mrf.mxu0
        %v3874 = vadd.f32 0.0, %v3873
        %v3875 = vpop.f32.mrf.mxu0
        %v3876 = vadd.f32 0.0, %v3875
        %3877 = vmatmul.bf16.gmra.mxu0 %v3793
        %v3878 = vpop.f32.mrf.mxu0
        %v3879 = vadd.f32 0.0, %v3878
        %v3880 = vpop.f32.mrf.mxu0
        %v3881 = vadd.f32 0.0, %v3880
        %3882 = vmatmul.bf16.gmra.mxu0 %v3796
        %v3883 = vpop.f32.mrf.mxu0
        %v3884 = vadd.f32 0.0, %v3883
        %v3885 = vpop.f32.mrf.mxu0
        %v3886 = vadd.f32 0.0, %v3885
        %3887 = vmatmul.bf16.gmra.mxu0 %v3799
        %v3888 = vpop.f32.mrf.mxu0
        %v3889 = vadd.f32 0.0, %v3888
        %v3890 = vpop.f32.mrf.mxu0
        %v3891 = vadd.f32 0.0, %v3890
        %3892 = vdwg.mxu0
        %v3893 = vadd.f32 %v3671, %v3814
        %v3894 = vadd.f32 %v3672, %v3816
        %v3895 = vadd.f32 %v3673, %v3819
        %v3896 = vadd.f32 %v3674, %v3821
        %v3897 = vadd.f32 %v3675, %v3824
        %v3898 = vadd.f32 %v3676, %v3826
        %v3899 = vadd.f32 %v3677, %v3829
        %v3900 = vadd.f32 %v3678, %v3831
        %v3901 = vadd.f32 %v3679, %v3834
        %v3902 = vadd.f32 %v3680, %v3836
        %v3903 = vadd.f32 %v3681, %v3839
        %v3904 = vadd.f32 %v3682, %v3841
        %v3905 = vadd.f32 %v3683, %v3844
        %v3906 = vadd.f32 %v3684, %v3846
        %v3907 = vadd.f32 %v3685, %v3849
        %v3908 = vadd.f32 %v3686, %v3851
        %v3909 = vadd.f32 %v3687, %v3854
        %v3910 = vadd.f32 %v3688, %v3856
        %v3911 = vadd.f32 %v3689, %v3859
        %v3912 = vadd.f32 %v3690, %v3861
        %v3913 = vadd.f32 %v3691, %v3864
        %v3914 = vadd.f32 %v3692, %v3866
        %v3915 = vadd.f32 %v3693, %v3869
        %v3916 = vadd.f32 %v3694, %v3871
        %v3917 = vadd.f32 %v3695, %v3874
        %v3918 = vadd.f32 %v3696, %v3876
        %v3919 = vadd.f32 %v3697, %v3879
        %v3920 = vadd.f32 %v3698, %v3881
        %v3921 = vadd.f32 %v3699, %v3884
        %v3922 = vadd.f32 %v3700, %v3886
        %v3923 = vadd.f32 %v3701, %v3889
        %v3924 = vadd.f32 %v3702, %v3891
        %v3925 = vld [vmem:[%s1008 + $0x8] sm:$0xff]
        %v3926 = vld [vmem:[%s1008 + $0x10] sm:$0xff]
        %v3927 = vld [vmem:[%s1008 + $0x28] sm:$0xff]
        %v3928 = vld [vmem:[%s1008 + $0x30] sm:$0xff]
        %v3929 = vld [vmem:[%s1008 + $0x48] sm:$0xff]
        %v3930 = vld [vmem:[%s1008 + $0x50] sm:$0xff]
        %v3931 = vld [vmem:[%s1008 + $0x68] sm:$0xff]
        %v3932 = vld [vmem:[%s1008 + $0x70] sm:$0xff]
        %v3933 = vld [vmem:[%s1008 + $0x88] sm:$0xff]
        %v3934 = vld [vmem:[%s1008 + $0x90] sm:$0xff]
        %v3935 = vld [vmem:[%s1008 + $0xa8] sm:$0xff]
        %v3936 = vld [vmem:[%s1008 + $0xb0] sm:$0xff]
        %v3937 = vld [vmem:[%s1008 + $0xc8] sm:$0xff]
        %v3938 = vld [vmem:[%s1008 + $0xd0] sm:$0xff]
        %v3939 = vld [vmem:[%s1008 + $0xe8] sm:$0xff]
        %v3940 = vld [vmem:[%s1008 + $0xf0] sm:$0xff]
        %v3941 = vld [vmem:[%s1008 + $0x108] sm:$0xff]
        %v3942 = vld [vmem:[%s1008 + $0x110] sm:$0xff]
        %v3943 = vld [vmem:[%s1008 + $0x128] sm:$0xff]
        %v3944 = vld [vmem:[%s1008 + $0x130] sm:$0xff]
        %v3945 = vld [vmem:[%s1008 + $0x148] sm:$0xff]
        %v3946 = vld [vmem:[%s1008 + $0x150] sm:$0xff]
        %v3947 = vld [vmem:[%s1008 + $0x168] sm:$0xff]
        %v3948 = vld [vmem:[%s1008 + $0x170] sm:$0xff]
        %v3949 = vld [vmem:[%s1008 + $0x188] sm:$0xff]
        %v3950 = vld [vmem:[%s1008 + $0x190] sm:$0xff]
        %v3951 = vld [vmem:[%s1008 + $0x1a8] sm:$0xff]
        %v3952 = vld [vmem:[%s1008 + $0x1b0] sm:$0xff]
        %v3953 = vld [vmem:[%s1008 + $0x1c8] sm:$0xff]
        %v3954 = vld [vmem:[%s1008 + $0x1d0] sm:$0xff]
        %v3955 = vld [vmem:[%s1008 + $0x1e8] sm:$0xff]
        %v3956 = vld [vmem:[%s1008 + $0x1f0] sm:$0xff]
        %v3957 = vpack.c.bf16 %v3926, %v3925
        %v3958 = vpack.c.bf16 %v3928, %v3927
        %v3959 = vpack.c.bf16 %v3930, %v3929
        %v3960 = vpack.c.bf16 %v3932, %v3931
        %v3961 = vpack.c.bf16 %v3934, %v3933
        %v3962 = vpack.c.bf16 %v3936, %v3935
        %v3963 = vpack.c.bf16 %v3938, %v3937
        %v3964 = vpack.c.bf16 %v3940, %v3939
        %v3965 = vpack.c.bf16 %v3942, %v3941
        %v3966 = vpack.c.bf16 %v3944, %v3943
        %v3967 = vpack.c.bf16 %v3946, %v3945
        %v3968 = vpack.c.bf16 %v3948, %v3947
        %v3969 = vpack.c.bf16 %v3950, %v3949
        %v3970 = vpack.c.bf16 %v3952, %v3951
        %v3971 = vpack.c.bf16 %v3954, %v3953
        %v3972 = vpack.c.bf16 %v3956, %v3955
        %s3973 = scalar_lea.vmem %s7, 8
        %v3974 = vld [vmem:[%s3973] sm:$0x3]
        %v3976 = vsel %vm601, %v3957, 0
        %v3979 = vsel %vm601, %v3958, 0
        %v3982 = vsel %vm601, %v3959, 0
        %v3985 = vsel %vm601, %v3960, 0
        %v3988 = vsel %vm601, %v3961, 0
        %v3991 = vsel %vm601, %v3962, 0
        %v3994 = vsel %vm601, %v3963, 0
        %v3997 = vsel %vm601, %v3964, 0
        %v4000 = vsel %vm601, %v3965, 0
        %v4003 = vsel %vm601, %v3966, 0
        %v4006 = vsel %vm601, %v3967, 0
        %v4009 = vsel %vm601, %v3968, 0
        %v4012 = vsel %vm601, %v3969, 0
        %v4015 = vsel %vm601, %v3970, 0
        %v4018 = vsel %vm601, %v3971, 0
        %v4021 = vsel %vm601, %v3972, 0
        %v4024 = vsel %vm650, %v3974, 0
        %4026 = vmatpush.bf16.msra.mxu0 0
        %4027 = vmatpush.bf16.msra.mxu0 0
        %4028 = vmatpush.bf16.msra.mxu0 0
        %4029 = vmatpush.bf16.msra.mxu0 0
        %4030 = vmatpush.bf16.msra.mxu0 0
        %4031 = vmatpush.bf16.msra.mxu0 0
        %4032 = vmatpush.bf16.msra.mxu0 0
        %4033 = vmatpush.bf16.msra.mxu0 %v4024
        %4034 = vmatmul.bf16.gmra.mxu0 %v3976
        %v4035 = vpop.f32.mrf.mxu0
        %v4036 = vadd.f32 0.0, %v4035
        %v4037 = vpop.f32.mrf.mxu0
        %v4038 = vadd.f32 0.0, %v4037
        %4039 = vmatmul.bf16.gmra.mxu0 %v3979
        %v4040 = vpop.f32.mrf.mxu0
        %v4041 = vadd.f32 0.0, %v4040
        %v4042 = vpop.f32.mrf.mxu0
        %v4043 = vadd.f32 0.0, %v4042
        %4044 = vmatmul.bf16.gmra.mxu0 %v3982
        %v4045 = vpop.f32.mrf.mxu0
        %v4046 = vadd.f32 0.0, %v4045
        %v4047 = vpop.f32.mrf.mxu0
        %v4048 = vadd.f32 0.0, %v4047
        %4049 = vmatmul.bf16.gmra.mxu0 %v3985
        %v4050 = vpop.f32.mrf.mxu0
        %v4051 = vadd.f32 0.0, %v4050
        %v4052 = vpop.f32.mrf.mxu0
        %v4053 = vadd.f32 0.0, %v4052
        %4054 = vmatmul.bf16.gmra.mxu0 %v3988
        %v4055 = vpop.f32.mrf.mxu0
        %v4056 = vadd.f32 0.0, %v4055
        %v4057 = vpop.f32.mrf.mxu0
        %v4058 = vadd.f32 0.0, %v4057
        %4059 = vmatmul.bf16.gmra.mxu0 %v3991
        %v4060 = vpop.f32.mrf.mxu0
        %v4061 = vadd.f32 0.0, %v4060
        %v4062 = vpop.f32.mrf.mxu0
        %v4063 = vadd.f32 0.0, %v4062
        %4064 = vmatmul.bf16.gmra.mxu0 %v3994
        %v4065 = vpop.f32.mrf.mxu0
        %v4066 = vadd.f32 0.0, %v4065
        %v4067 = vpop.f32.mrf.mxu0
        %v4068 = vadd.f32 0.0, %v4067
        %4069 = vmatmul.bf16.gmra.mxu0 %v3997
        %v4070 = vpop.f32.mrf.mxu0
        %v4071 = vadd.f32 0.0, %v4070
        %v4072 = vpop.f32.mrf.mxu0
        %v4073 = vadd.f32 0.0, %v4072
        %4074 = vmatmul.bf16.gmra.mxu0 %v4000
        %v4075 = vpop.f32.mrf.mxu0
        %v4076 = vadd.f32 0.0, %v4075
        %v4077 = vpop.f32.mrf.mxu0
        %v4078 = vadd.f32 0.0, %v4077
        %4079 = vmatmul.bf16.gmra.mxu0 %v4003
        %v4080 = vpop.f32.mrf.mxu0
        %v4081 = vadd.f32 0.0, %v4080
        %v4082 = vpop.f32.mrf.mxu0
        %v4083 = vadd.f32 0.0, %v4082
        %4084 = vmatmul.bf16.gmra.mxu0 %v4006
        %v4085 = vpop.f32.mrf.mxu0
        %v4086 = vadd.f32 0.0, %v4085
        %v4087 = vpop.f32.mrf.mxu0
        %v4088 = vadd.f32 0.0, %v4087
        %4089 = vmatmul.bf16.gmra.mxu0 %v4009
        %v4090 = vpop.f32.mrf.mxu0
        %v4091 = vadd.f32 0.0, %v4090
        %v4092 = vpop.f32.mrf.mxu0
        %v4093 = vadd.f32 0.0, %v4092
        %4094 = vmatmul.bf16.gmra.mxu0 %v4012
        %v4095 = vpop.f32.mrf.mxu0
        %v4096 = vadd.f32 0.0, %v4095
        %v4097 = vpop.f32.mrf.mxu0
        %v4098 = vadd.f32 0.0, %v4097
        %4099 = vmatmul.bf16.gmra.mxu0 %v4015
        %v4100 = vpop.f32.mrf.mxu0
        %v4101 = vadd.f32 0.0, %v4100
        %v4102 = vpop.f32.mrf.mxu0
        %v4103 = vadd.f32 0.0, %v4102
        %4104 = vmatmul.bf16.gmra.mxu0 %v4018
        %v4105 = vpop.f32.mrf.mxu0
        %v4106 = vadd.f32 0.0, %v4105
        %v4107 = vpop.f32.mrf.mxu0
        %v4108 = vadd.f32 0.0, %v4107
        %4109 = vmatmul.bf16.gmra.mxu0 %v4021
        %v4110 = vpop.f32.mrf.mxu0
        %v4111 = vadd.f32 0.0, %v4110
        %v4112 = vpop.f32.mrf.mxu0
        %v4113 = vadd.f32 0.0, %v4112
        %4114 = vdwg.mxu0
        %v4115 = vadd.f32 %v3893, %v4036
        %v4116 = vadd.f32 %v3894, %v4038
        %v4117 = vadd.f32 %v3895, %v4041
        %v4118 = vadd.f32 %v3896, %v4043
        %v4119 = vadd.f32 %v3897, %v4046
        %v4120 = vadd.f32 %v3898, %v4048
        %v4121 = vadd.f32 %v3899, %v4051
        %v4122 = vadd.f32 %v3900, %v4053
        %v4123 = vadd.f32 %v3901, %v4056
        %v4124 = vadd.f32 %v3902, %v4058
        %v4125 = vadd.f32 %v3903, %v4061
        %v4126 = vadd.f32 %v3904, %v4063
        %v4127 = vadd.f32 %v3905, %v4066
        %v4128 = vadd.f32 %v3906, %v4068
        %v4129 = vadd.f32 %v3907, %v4071
        %v4130 = vadd.f32 %v3908, %v4073
        %v4131 = vadd.f32 %v3909, %v4076
        %v4132 = vadd.f32 %v3910, %v4078
        %v4133 = vadd.f32 %v3911, %v4081
        %v4134 = vadd.f32 %v3912, %v4083
        %v4135 = vadd.f32 %v3913, %v4086
        %v4136 = vadd.f32 %v3914, %v4088
        %v4137 = vadd.f32 %v3915, %v4091
        %v4138 = vadd.f32 %v3916, %v4093
        %v4139 = vadd.f32 %v3917, %v4096
        %v4140 = vadd.f32 %v3918, %v4098
        %v4141 = vadd.f32 %v3919, %v4101
        %v4142 = vadd.f32 %v3920, %v4103
        %v4143 = vadd.f32 %v3921, %v4106
        %v4144 = vadd.f32 %v3922, %v4108
        %v4145 = vadd.f32 %v3923, %v4111
        %v4146 = vadd.f32 %v3924, %v4113
        %v4147 = vld [vmem:[%s1008 + $0x9] sm:$0xff]
        %v4148 = vld [vmem:[%s1008 + $0x11] sm:$0xff]
        %v4149 = vld [vmem:[%s1008 + $0x29] sm:$0xff]
        %v4150 = vld [vmem:[%s1008 + $0x31] sm:$0xff]
        %v4151 = vld [vmem:[%s1008 + $0x49] sm:$0xff]
        %v4152 = vld [vmem:[%s1008 + $0x51] sm:$0xff]
        %v4153 = vld [vmem:[%s1008 + $0x69] sm:$0xff]
        %v4154 = vld [vmem:[%s1008 + $0x71] sm:$0xff]
        %v4155 = vld [vmem:[%s1008 + $0x89] sm:$0xff]
        %v4156 = vld [vmem:[%s1008 + $0x91] sm:$0xff]
        %v4157 = vld [vmem:[%s1008 + $0xa9] sm:$0xff]
        %v4158 = vld [vmem:[%s1008 + $0xb1] sm:$0xff]
        %v4159 = vld [vmem:[%s1008 + $0xc9] sm:$0xff]
        %v4160 = vld [vmem:[%s1008 + $0xd1] sm:$0xff]
        %v4161 = vld [vmem:[%s1008 + $0xe9] sm:$0xff]
        %v4162 = vld [vmem:[%s1008 + $0xf1] sm:$0xff]
        %v4163 = vld [vmem:[%s1008 + $0x109] sm:$0xff]
        %v4164 = vld [vmem:[%s1008 + $0x111] sm:$0xff]
        %v4165 = vld [vmem:[%s1008 + $0x129] sm:$0xff]
        %v4166 = vld [vmem:[%s1008 + $0x131] sm:$0xff]
        %v4167 = vld [vmem:[%s1008 + $0x149] sm:$0xff]
        %v4168 = vld [vmem:[%s1008 + $0x151] sm:$0xff]
        %v4169 = vld [vmem:[%s1008 + $0x169] sm:$0xff]
        %v4170 = vld [vmem:[%s1008 + $0x171] sm:$0xff]
        %v4171 = vld [vmem:[%s1008 + $0x189] sm:$0xff]
        %v4172 = vld [vmem:[%s1008 + $0x191] sm:$0xff]
        %v4173 = vld [vmem:[%s1008 + $0x1a9] sm:$0xff]
        %v4174 = vld [vmem:[%s1008 + $0x1b1] sm:$0xff]
        %v4175 = vld [vmem:[%s1008 + $0x1c9] sm:$0xff]
        %v4176 = vld [vmem:[%s1008 + $0x1d1] sm:$0xff]
        %v4177 = vld [vmem:[%s1008 + $0x1e9] sm:$0xff]
        %v4178 = vld [vmem:[%s1008 + $0x1f1] sm:$0xff]
        %v4179 = vpack.c.bf16 %v4148, %v4147
        %v4180 = vpack.c.bf16 %v4150, %v4149
        %v4181 = vpack.c.bf16 %v4152, %v4151
        %v4182 = vpack.c.bf16 %v4154, %v4153
        %v4183 = vpack.c.bf16 %v4156, %v4155
        %v4184 = vpack.c.bf16 %v4158, %v4157
        %v4185 = vpack.c.bf16 %v4160, %v4159
        %v4186 = vpack.c.bf16 %v4162, %v4161
        %v4187 = vpack.c.bf16 %v4164, %v4163
        %v4188 = vpack.c.bf16 %v4166, %v4165
        %v4189 = vpack.c.bf16 %v4168, %v4167
        %v4190 = vpack.c.bf16 %v4170, %v4169
        %v4191 = vpack.c.bf16 %v4172, %v4171
        %v4192 = vpack.c.bf16 %v4174, %v4173
        %v4193 = vpack.c.bf16 %v4176, %v4175
        %v4194 = vpack.c.bf16 %v4178, %v4177
        %s4195 = scalar_lea.vmem %s7, 10
        %v4196 = vld [vmem:[%s4195] sm:$0x3]
        %v4198 = vsel %vm601, %v4179, 0
        %v4201 = vsel %vm601, %v4180, 0
        %v4204 = vsel %vm601, %v4181, 0
        %v4207 = vsel %vm601, %v4182, 0
        %v4210 = vsel %vm601, %v4183, 0
        %v4213 = vsel %vm601, %v4184, 0
        %v4216 = vsel %vm601, %v4185, 0
        %v4219 = vsel %vm601, %v4186, 0
        %v4222 = vsel %vm601, %v4187, 0
        %v4225 = vsel %vm601, %v4188, 0
        %v4228 = vsel %vm601, %v4189, 0
        %v4231 = vsel %vm601, %v4190, 0
        %v4234 = vsel %vm601, %v4191, 0
        %v4237 = vsel %vm601, %v4192, 0
        %v4240 = vsel %vm601, %v4193, 0
        %v4243 = vsel %vm601, %v4194, 0
        %v4246 = vsel %vm650, %v4196, 0
        %4248 = vmatpush.bf16.msra.mxu0 0
        %4249 = vmatpush.bf16.msra.mxu0 0
        %4250 = vmatpush.bf16.msra.mxu0 0
        %4251 = vmatpush.bf16.msra.mxu0 0
        %4252 = vmatpush.bf16.msra.mxu0 0
        %4253 = vmatpush.bf16.msra.mxu0 0
        %4254 = vmatpush.bf16.msra.mxu0 0
        %4255 = vmatpush.bf16.msra.mxu0 %v4246
        %4256 = vmatmul.bf16.gmra.mxu0 %v4198
        %v4257 = vpop.f32.mrf.mxu0
        %v4258 = vadd.f32 0.0, %v4257
        %v4259 = vpop.f32.mrf.mxu0
        %v4260 = vadd.f32 0.0, %v4259
        %4261 = vmatmul.bf16.gmra.mxu0 %v4201
        %v4262 = vpop.f32.mrf.mxu0
        %v4263 = vadd.f32 0.0, %v4262
        %v4264 = vpop.f32.mrf.mxu0
        %v4265 = vadd.f32 0.0, %v4264
        %4266 = vmatmul.bf16.gmra.mxu0 %v4204
        %v4267 = vpop.f32.mrf.mxu0
        %v4268 = vadd.f32 0.0, %v4267
        %v4269 = vpop.f32.mrf.mxu0
        %v4270 = vadd.f32 0.0, %v4269
        %4271 = vmatmul.bf16.gmra.mxu0 %v4207
        %v4272 = vpop.f32.mrf.mxu0
        %v4273 = vadd.f32 0.0, %v4272
        %v4274 = vpop.f32.mrf.mxu0
        %v4275 = vadd.f32 0.0, %v4274
        %4276 = vmatmul.bf16.gmra.mxu0 %v4210
        %v4277 = vpop.f32.mrf.mxu0
        %v4278 = vadd.f32 0.0, %v4277
        %v4279 = vpop.f32.mrf.mxu0
        %v4280 = vadd.f32 0.0, %v4279
        %4281 = vmatmul.bf16.gmra.mxu0 %v4213
        %v4282 = vpop.f32.mrf.mxu0
        %v4283 = vadd.f32 0.0, %v4282
        %v4284 = vpop.f32.mrf.mxu0
        %v4285 = vadd.f32 0.0, %v4284
        %4286 = vmatmul.bf16.gmra.mxu0 %v4216
        %v4287 = vpop.f32.mrf.mxu0
        %v4288 = vadd.f32 0.0, %v4287
        %v4289 = vpop.f32.mrf.mxu0
        %v4290 = vadd.f32 0.0, %v4289
        %4291 = vmatmul.bf16.gmra.mxu0 %v4219
        %v4292 = vpop.f32.mrf.mxu0
        %v4293 = vadd.f32 0.0, %v4292
        %v4294 = vpop.f32.mrf.mxu0
        %v4295 = vadd.f32 0.0, %v4294
        %4296 = vmatmul.bf16.gmra.mxu0 %v4222
        %v4297 = vpop.f32.mrf.mxu0
        %v4298 = vadd.f32 0.0, %v4297
        %v4299 = vpop.f32.mrf.mxu0
        %v4300 = vadd.f32 0.0, %v4299
        %4301 = vmatmul.bf16.gmra.mxu0 %v4225
        %v4302 = vpop.f32.mrf.mxu0
        %v4303 = vadd.f32 0.0, %v4302
        %v4304 = vpop.f32.mrf.mxu0
        %v4305 = vadd.f32 0.0, %v4304
        %4306 = vmatmul.bf16.gmra.mxu0 %v4228
        %v4307 = vpop.f32.mrf.mxu0
        %v4308 = vadd.f32 0.0, %v4307
        %v4309 = vpop.f32.mrf.mxu0
        %v4310 = vadd.f32 0.0, %v4309
        %4311 = vmatmul.bf16.gmra.mxu0 %v4231
        %v4312 = vpop.f32.mrf.mxu0
        %v4313 = vadd.f32 0.0, %v4312
        %v4314 = vpop.f32.mrf.mxu0
        %v4315 = vadd.f32 0.0, %v4314
        %4316 = vmatmul.bf16.gmra.mxu0 %v4234
        %v4317 = vpop.f32.mrf.mxu0
        %v4318 = vadd.f32 0.0, %v4317
        %v4319 = vpop.f32.mrf.mxu0
        %v4320 = vadd.f32 0.0, %v4319
        %4321 = vmatmul.bf16.gmra.mxu0 %v4237
        %v4322 = vpop.f32.mrf.mxu0
        %v4323 = vadd.f32 0.0, %v4322
        %v4324 = vpop.f32.mrf.mxu0
        %v4325 = vadd.f32 0.0, %v4324
        %4326 = vmatmul.bf16.gmra.mxu0 %v4240
        %v4327 = vpop.f32.mrf.mxu0
        %v4328 = vadd.f32 0.0, %v4327
        %v4329 = vpop.f32.mrf.mxu0
        %v4330 = vadd.f32 0.0, %v4329
        %4331 = vmatmul.bf16.gmra.mxu0 %v4243
        %v4332 = vpop.f32.mrf.mxu0
        %v4333 = vadd.f32 0.0, %v4332
        %v4334 = vpop.f32.mrf.mxu0
        %v4335 = vadd.f32 0.0, %v4334
        %4336 = vdwg.mxu0
        %v4337 = vadd.f32 %v4115, %v4258
        %v4338 = vadd.f32 %v4116, %v4260
        %v4339 = vadd.f32 %v4117, %v4263
        %v4340 = vadd.f32 %v4118, %v4265
        %v4341 = vadd.f32 %v4119, %v4268
        %v4342 = vadd.f32 %v4120, %v4270
        %v4343 = vadd.f32 %v4121, %v4273
        %v4344 = vadd.f32 %v4122, %v4275
        %v4345 = vadd.f32 %v4123, %v4278
        %v4346 = vadd.f32 %v4124, %v4280
        %v4347 = vadd.f32 %v4125, %v4283
        %v4348 = vadd.f32 %v4126, %v4285
        %v4349 = vadd.f32 %v4127, %v4288
        %v4350 = vadd.f32 %v4128, %v4290
        %v4351 = vadd.f32 %v4129, %v4293
        %v4352 = vadd.f32 %v4130, %v4295
        %v4353 = vadd.f32 %v4131, %v4298
        %v4354 = vadd.f32 %v4132, %v4300
        %v4355 = vadd.f32 %v4133, %v4303
        %v4356 = vadd.f32 %v4134, %v4305
        %v4357 = vadd.f32 %v4135, %v4308
        %v4358 = vadd.f32 %v4136, %v4310
        %v4359 = vadd.f32 %v4137, %v4313
        %v4360 = vadd.f32 %v4138, %v4315
        %v4361 = vadd.f32 %v4139, %v4318
        %v4362 = vadd.f32 %v4140, %v4320
        %v4363 = vadd.f32 %v4141, %v4323
        %v4364 = vadd.f32 %v4142, %v4325
        %v4365 = vadd.f32 %v4143, %v4328
        %v4366 = vadd.f32 %v4144, %v4330
        %v4367 = vadd.f32 %v4145, %v4333
        %v4368 = vadd.f32 %v4146, %v4335
        %v4369 = vld [vmem:[%s2450 + $0x7] sm:$0xff]
        %v4370 = vld [vmem:[%s2450 + $0xf] sm:$0xff]
        %v4371 = vld [vmem:[%s2450 + $0x27] sm:$0xff]
        %v4372 = vld [vmem:[%s2450 + $0x2f] sm:$0xff]
        %v4373 = vld [vmem:[%s2450 + $0x47] sm:$0xff]
        %v4374 = vld [vmem:[%s2450 + $0x4f] sm:$0xff]
        %v4375 = vld [vmem:[%s2450 + $0x67] sm:$0xff]
        %v4376 = vld [vmem:[%s2450 + $0x6f] sm:$0xff]
        %v4377 = vld [vmem:[%s2450 + $0x87] sm:$0xff]
        %v4378 = vld [vmem:[%s2450 + $0x8f] sm:$0xff]
        %v4379 = vld [vmem:[%s2450 + $0xa7] sm:$0xff]
        %v4380 = vld [vmem:[%s2450 + $0xaf] sm:$0xff]
        %v4381 = vld [vmem:[%s2450 + $0xc7] sm:$0xff]
        %v4382 = vld [vmem:[%s2450 + $0xcf] sm:$0xff]
        %v4383 = vld [vmem:[%s2450 + $0xe7] sm:$0xff]
        %v4384 = vld [vmem:[%s2450 + $0xef] sm:$0xff]
        %v4385 = vld [vmem:[%s2450 + $0x107] sm:$0xff]
        %v4386 = vld [vmem:[%s2450 + $0x10f] sm:$0xff]
        %v4387 = vld [vmem:[%s2450 + $0x127] sm:$0xff]
        %v4388 = vld [vmem:[%s2450 + $0x12f] sm:$0xff]
        %v4389 = vld [vmem:[%s2450 + $0x147] sm:$0xff]
        %v4390 = vld [vmem:[%s2450 + $0x14f] sm:$0xff]
        %v4391 = vld [vmem:[%s2450 + $0x167] sm:$0xff]
        %v4392 = vld [vmem:[%s2450 + $0x16f] sm:$0xff]
        %v4393 = vld [vmem:[%s2450 + $0x187] sm:$0xff]
        %v4394 = vld [vmem:[%s2450 + $0x18f] sm:$0xff]
        %v4395 = vld [vmem:[%s2450 + $0x1a7] sm:$0xff]
        %v4396 = vld [vmem:[%s2450 + $0x1af] sm:$0xff]
        %v4397 = vld [vmem:[%s2450 + $0x1c7] sm:$0xff]
        %v4398 = vld [vmem:[%s2450 + $0x1cf] sm:$0xff]
        %v4399 = vld [vmem:[%s2450 + $0x1e7] sm:$0xff]
        %v4400 = vld [vmem:[%s2450 + $0x1ef] sm:$0xff]
        %v4401 = vpack.c.bf16 %v4370, %v4369
        %v4402 = vpack.c.bf16 %v4372, %v4371
        %v4403 = vpack.c.bf16 %v4374, %v4373
        %v4404 = vpack.c.bf16 %v4376, %v4375
        %v4405 = vpack.c.bf16 %v4378, %v4377
        %v4406 = vpack.c.bf16 %v4380, %v4379
        %v4407 = vpack.c.bf16 %v4382, %v4381
        %v4408 = vpack.c.bf16 %v4384, %v4383
        %v4409 = vpack.c.bf16 %v4386, %v4385
        %v4410 = vpack.c.bf16 %v4388, %v4387
        %v4411 = vpack.c.bf16 %v4390, %v4389
        %v4412 = vpack.c.bf16 %v4392, %v4391
        %v4413 = vpack.c.bf16 %v4394, %v4393
        %v4414 = vpack.c.bf16 %v4396, %v4395
        %v4415 = vpack.c.bf16 %v4398, %v4397
        %v4416 = vpack.c.bf16 %v4400, %v4399
        %s4417 = scalar_lea.vmem %s7, 12
        %v4418 = vld [vmem:[%s4417] sm:$0x3]
        %v4420 = vsel %vm601, %v4401, 0
        %v4423 = vsel %vm601, %v4402, 0
        %v4426 = vsel %vm601, %v4403, 0
        %v4429 = vsel %vm601, %v4404, 0
        %v4432 = vsel %vm601, %v4405, 0
        %v4435 = vsel %vm601, %v4406, 0
        %v4438 = vsel %vm601, %v4407, 0
        %v4441 = vsel %vm601, %v4408, 0
        %v4444 = vsel %vm601, %v4409, 0
        %v4447 = vsel %vm601, %v4410, 0
        %v4450 = vsel %vm601, %v4411, 0
        %v4453 = vsel %vm601, %v4412, 0
        %v4456 = vsel %vm601, %v4413, 0
        %v4459 = vsel %vm601, %v4414, 0
        %v4462 = vsel %vm601, %v4415, 0
        %v4465 = vsel %vm601, %v4416, 0
        %v4468 = vsel %vm650, %v4418, 0
        %4470 = vmatpush.bf16.msra.mxu0 0
        %4471 = vmatpush.bf16.msra.mxu0 0
        %4472 = vmatpush.bf16.msra.mxu0 0
        %4473 = vmatpush.bf16.msra.mxu0 0
        %4474 = vmatpush.bf16.msra.mxu0 0
        %4475 = vmatpush.bf16.msra.mxu0 0
        %4476 = vmatpush.bf16.msra.mxu0 0
        %4477 = vmatpush.bf16.msra.mxu0 %v4468
        %4478 = vmatmul.bf16.gmra.mxu0 %v4420
        %v4479 = vpop.f32.mrf.mxu0
        %v4480 = vadd.f32 0.0, %v4479
        %v4481 = vpop.f32.mrf.mxu0
        %v4482 = vadd.f32 0.0, %v4481
        %4483 = vmatmul.bf16.gmra.mxu0 %v4423
        %v4484 = vpop.f32.mrf.mxu0
        %v4485 = vadd.f32 0.0, %v4484
        %v4486 = vpop.f32.mrf.mxu0
        %v4487 = vadd.f32 0.0, %v4486
        %4488 = vmatmul.bf16.gmra.mxu0 %v4426
        %v4489 = vpop.f32.mrf.mxu0
        %v4490 = vadd.f32 0.0, %v4489
        %v4491 = vpop.f32.mrf.mxu0
        %v4492 = vadd.f32 0.0, %v4491
        %4493 = vmatmul.bf16.gmra.mxu0 %v4429
        %v4494 = vpop.f32.mrf.mxu0
        %v4495 = vadd.f32 0.0, %v4494
        %v4496 = vpop.f32.mrf.mxu0
        %v4497 = vadd.f32 0.0, %v4496
        %4498 = vmatmul.bf16.gmra.mxu0 %v4432
        %v4499 = vpop.f32.mrf.mxu0
        %v4500 = vadd.f32 0.0, %v4499
        %v4501 = vpop.f32.mrf.mxu0
        %v4502 = vadd.f32 0.0, %v4501
        %4503 = vmatmul.bf16.gmra.mxu0 %v4435
        %v4504 = vpop.f32.mrf.mxu0
        %v4505 = vadd.f32 0.0, %v4504
        %v4506 = vpop.f32.mrf.mxu0
        %v4507 = vadd.f32 0.0, %v4506
        %4508 = vmatmul.bf16.gmra.mxu0 %v4438
        %v4509 = vpop.f32.mrf.mxu0
        %v4510 = vadd.f32 0.0, %v4509
        %v4511 = vpop.f32.mrf.mxu0
        %v4512 = vadd.f32 0.0, %v4511
        %4513 = vmatmul.bf16.gmra.mxu0 %v4441
        %v4514 = vpop.f32.mrf.mxu0
        %v4515 = vadd.f32 0.0, %v4514
        %v4516 = vpop.f32.mrf.mxu0
        %v4517 = vadd.f32 0.0, %v4516
        %4518 = vmatmul.bf16.gmra.mxu0 %v4444
        %v4519 = vpop.f32.mrf.mxu0
        %v4520 = vadd.f32 0.0, %v4519
        %v4521 = vpop.f32.mrf.mxu0
        %v4522 = vadd.f32 0.0, %v4521
        %4523 = vmatmul.bf16.gmra.mxu0 %v4447
        %v4524 = vpop.f32.mrf.mxu0
        %v4525 = vadd.f32 0.0, %v4524
        %v4526 = vpop.f32.mrf.mxu0
        %v4527 = vadd.f32 0.0, %v4526
        %4528 = vmatmul.bf16.gmra.mxu0 %v4450
        %v4529 = vpop.f32.mrf.mxu0
        %v4530 = vadd.f32 0.0, %v4529
        %v4531 = vpop.f32.mrf.mxu0
        %v4532 = vadd.f32 0.0, %v4531
        %4533 = vmatmul.bf16.gmra.mxu0 %v4453
        %v4534 = vpop.f32.mrf.mxu0
        %v4535 = vadd.f32 0.0, %v4534
        %v4536 = vpop.f32.mrf.mxu0
        %v4537 = vadd.f32 0.0, %v4536
        %4538 = vmatmul.bf16.gmra.mxu0 %v4456
        %v4539 = vpop.f32.mrf.mxu0
        %v4540 = vadd.f32 0.0, %v4539
        %v4541 = vpop.f32.mrf.mxu0
        %v4542 = vadd.f32 0.0, %v4541
        %4543 = vmatmul.bf16.gmra.mxu0 %v4459
        %v4544 = vpop.f32.mrf.mxu0
        %v4545 = vadd.f32 0.0, %v4544
        %v4546 = vpop.f32.mrf.mxu0
        %v4547 = vadd.f32 0.0, %v4546
        %4548 = vmatmul.bf16.gmra.mxu0 %v4462
        %v4549 = vpop.f32.mrf.mxu0
        %v4550 = vadd.f32 0.0, %v4549
        %v4551 = vpop.f32.mrf.mxu0
        %v4552 = vadd.f32 0.0, %v4551
        %4553 = vmatmul.bf16.gmra.mxu0 %v4465
        %v4554 = vpop.f32.mrf.mxu0
        %v4555 = vadd.f32 0.0, %v4554
        %v4556 = vpop.f32.mrf.mxu0
        %v4557 = vadd.f32 0.0, %v4556
        %4558 = vdwg.mxu0
        %v4559 = vadd.f32 %v4337, %v4480
        %v4560 = vadd.f32 %v4338, %v4482
        %v4561 = vadd.f32 %v4339, %v4485
        %v4562 = vadd.f32 %v4340, %v4487
        %v4563 = vadd.f32 %v4341, %v4490
        %v4564 = vadd.f32 %v4342, %v4492
        %v4565 = vadd.f32 %v4343, %v4495
        %v4566 = vadd.f32 %v4344, %v4497
        %v4567 = vadd.f32 %v4345, %v4500
        %v4568 = vadd.f32 %v4346, %v4502
        %v4569 = vadd.f32 %v4347, %v4505
        %v4570 = vadd.f32 %v4348, %v4507
        %v4571 = vadd.f32 %v4349, %v4510
        %v4572 = vadd.f32 %v4350, %v4512
        %v4573 = vadd.f32 %v4351, %v4515
        %v4574 = vadd.f32 %v4352, %v4517
        %v4575 = vadd.f32 %v4353, %v4520
        %v4576 = vadd.f32 %v4354, %v4522
        %v4577 = vadd.f32 %v4355, %v4525
        %v4578 = vadd.f32 %v4356, %v4527
        %v4579 = vadd.f32 %v4357, %v4530
        %v4580 = vadd.f32 %v4358, %v4532
        %v4581 = vadd.f32 %v4359, %v4535
        %v4582 = vadd.f32 %v4360, %v4537
        %v4583 = vadd.f32 %v4361, %v4540
        %v4584 = vadd.f32 %v4362, %v4542
        %v4585 = vadd.f32 %v4363, %v4545
        %v4586 = vadd.f32 %v4364, %v4547
        %v4587 = vadd.f32 %v4365, %v4550
        %v4588 = vadd.f32 %v4366, %v4552
        %v4589 = vadd.f32 %v4367, %v4555
        %v4590 = vadd.f32 %v4368, %v4557
        %v4591 = vld [vmem:[%s2450 + $0x8] sm:$0xff]
        %v4592 = vld [vmem:[%s2450 + $0x10] sm:$0xff]
        %v4593 = vld [vmem:[%s2450 + $0x28] sm:$0xff]
        %v4594 = vld [vmem:[%s2450 + $0x30] sm:$0xff]
        %v4595 = vld [vmem:[%s2450 + $0x48] sm:$0xff]
        %v4596 = vld [vmem:[%s2450 + $0x50] sm:$0xff]
        %v4597 = vld [vmem:[%s2450 + $0x68] sm:$0xff]
        %v4598 = vld [vmem:[%s2450 + $0x70] sm:$0xff]
        %v4599 = vld [vmem:[%s2450 + $0x88] sm:$0xff]
        %v4600 = vld [vmem:[%s2450 + $0x90] sm:$0xff]
        %v4601 = vld [vmem:[%s2450 + $0xa8] sm:$0xff]
        %v4602 = vld [vmem:[%s2450 + $0xb0] sm:$0xff]
        %v4603 = vld [vmem:[%s2450 + $0xc8] sm:$0xff]
        %v4604 = vld [vmem:[%s2450 + $0xd0] sm:$0xff]
        %v4605 = vld [vmem:[%s2450 + $0xe8] sm:$0xff]
        %v4606 = vld [vmem:[%s2450 + $0xf0] sm:$0xff]
        %v4607 = vld [vmem:[%s2450 + $0x108] sm:$0xff]
        %v4608 = vld [vmem:[%s2450 + $0x110] sm:$0xff]
        %v4609 = vld [vmem:[%s2450 + $0x128] sm:$0xff]
        %v4610 = vld [vmem:[%s2450 + $0x130] sm:$0xff]
        %v4611 = vld [vmem:[%s2450 + $0x148] sm:$0xff]
        %v4612 = vld [vmem:[%s2450 + $0x150] sm:$0xff]
        %v4613 = vld [vmem:[%s2450 + $0x168] sm:$0xff]
        %v4614 = vld [vmem:[%s2450 + $0x170] sm:$0xff]
        %v4615 = vld [vmem:[%s2450 + $0x188] sm:$0xff]
        %v4616 = vld [vmem:[%s2450 + $0x190] sm:$0xff]
        %v4617 = vld [vmem:[%s2450 + $0x1a8] sm:$0xff]
        %v4618 = vld [vmem:[%s2450 + $0x1b0] sm:$0xff]
        %v4619 = vld [vmem:[%s2450 + $0x1c8] sm:$0xff]
        %v4620 = vld [vmem:[%s2450 + $0x1d0] sm:$0xff]
        %v4621 = vld [vmem:[%s2450 + $0x1e8] sm:$0xff]
        %v4622 = vld [vmem:[%s2450 + $0x1f0] sm:$0xff]
        %v4623 = vpack.c.bf16 %v4592, %v4591
        %v4624 = vpack.c.bf16 %v4594, %v4593
        %v4625 = vpack.c.bf16 %v4596, %v4595
        %v4626 = vpack.c.bf16 %v4598, %v4597
        %v4627 = vpack.c.bf16 %v4600, %v4599
        %v4628 = vpack.c.bf16 %v4602, %v4601
        %v4629 = vpack.c.bf16 %v4604, %v4603
        %v4630 = vpack.c.bf16 %v4606, %v4605
        %v4631 = vpack.c.bf16 %v4608, %v4607
        %v4632 = vpack.c.bf16 %v4610, %v4609
        %v4633 = vpack.c.bf16 %v4612, %v4611
        %v4634 = vpack.c.bf16 %v4614, %v4613
        %v4635 = vpack.c.bf16 %v4616, %v4615
        %v4636 = vpack.c.bf16 %v4618, %v4617
        %v4637 = vpack.c.bf16 %v4620, %v4619
        %v4638 = vpack.c.bf16 %v4622, %v4621
        %s4639 = scalar_lea.vmem %s7, 14
        %v4640 = vld [vmem:[%s4639] sm:$0x3]
        %v4642 = vsel %vm601, %v4623, 0
        %v4645 = vsel %vm601, %v4624, 0
        %v4648 = vsel %vm601, %v4625, 0
        %v4651 = vsel %vm601, %v4626, 0
        %v4654 = vsel %vm601, %v4627, 0
        %v4657 = vsel %vm601, %v4628, 0
        %v4660 = vsel %vm601, %v4629, 0
        %v4663 = vsel %vm601, %v4630, 0
        %v4666 = vsel %vm601, %v4631, 0
        %v4669 = vsel %vm601, %v4632, 0
        %v4672 = vsel %vm601, %v4633, 0
        %v4675 = vsel %vm601, %v4634, 0
        %v4678 = vsel %vm601, %v4635, 0
        %v4681 = vsel %vm601, %v4636, 0
        %v4684 = vsel %vm601, %v4637, 0
        %v4687 = vsel %vm601, %v4638, 0
        %v4690 = vsel %vm650, %v4640, 0
        %4692 = vmatpush.bf16.msra.mxu0 0
        %4693 = vmatpush.bf16.msra.mxu0 0
        %4694 = vmatpush.bf16.msra.mxu0 0
        %4695 = vmatpush.bf16.msra.mxu0 0
        %4696 = vmatpush.bf16.msra.mxu0 0
        %4697 = vmatpush.bf16.msra.mxu0 0
        %4698 = vmatpush.bf16.msra.mxu0 0
        %4699 = vmatpush.bf16.msra.mxu0 %v4690
        %4700 = vmatmul.bf16.gmra.mxu0 %v4642
        %v4701 = vpop.f32.mrf.mxu0
        %v4702 = vadd.f32 0.0, %v4701
        %v4703 = vpop.f32.mrf.mxu0
        %v4704 = vadd.f32 0.0, %v4703
        %4705 = vmatmul.bf16.gmra.mxu0 %v4645
        %v4706 = vpop.f32.mrf.mxu0
        %v4707 = vadd.f32 0.0, %v4706
        %v4708 = vpop.f32.mrf.mxu0
        %v4709 = vadd.f32 0.0, %v4708
        %4710 = vmatmul.bf16.gmra.mxu0 %v4648
        %v4711 = vpop.f32.mrf.mxu0
        %v4712 = vadd.f32 0.0, %v4711
        %v4713 = vpop.f32.mrf.mxu0
        %v4714 = vadd.f32 0.0, %v4713
        %4715 = vmatmul.bf16.gmra.mxu0 %v4651
        %v4716 = vpop.f32.mrf.mxu0
        %v4717 = vadd.f32 0.0, %v4716
        %v4718 = vpop.f32.mrf.mxu0
        %v4719 = vadd.f32 0.0, %v4718
        %4720 = vmatmul.bf16.gmra.mxu0 %v4654
        %v4721 = vpop.f32.mrf.mxu0
        %v4722 = vadd.f32 0.0, %v4721
        %v4723 = vpop.f32.mrf.mxu0
        %v4724 = vadd.f32 0.0, %v4723
        %4725 = vmatmul.bf16.gmra.mxu0 %v4657
        %v4726 = vpop.f32.mrf.mxu0
        %v4727 = vadd.f32 0.0, %v4726
        %v4728 = vpop.f32.mrf.mxu0
        %v4729 = vadd.f32 0.0, %v4728
        %4730 = vmatmul.bf16.gmra.mxu0 %v4660
        %v4731 = vpop.f32.mrf.mxu0
        %v4732 = vadd.f32 0.0, %v4731
        %v4733 = vpop.f32.mrf.mxu0
        %v4734 = vadd.f32 0.0, %v4733
        %4735 = vmatmul.bf16.gmra.mxu0 %v4663
        %v4736 = vpop.f32.mrf.mxu0
        %v4737 = vadd.f32 0.0, %v4736
        %v4738 = vpop.f32.mrf.mxu0
        %v4739 = vadd.f32 0.0, %v4738
        %4740 = vmatmul.bf16.gmra.mxu0 %v4666
        %v4741 = vpop.f32.mrf.mxu0
        %v4742 = vadd.f32 0.0, %v4741
        %v4743 = vpop.f32.mrf.mxu0
        %v4744 = vadd.f32 0.0, %v4743
        %4745 = vmatmul.bf16.gmra.mxu0 %v4669
        %v4746 = vpop.f32.mrf.mxu0
        %v4747 = vadd.f32 0.0, %v4746
        %v4748 = vpop.f32.mrf.mxu0
        %v4749 = vadd.f32 0.0, %v4748
        %4750 = vmatmul.bf16.gmra.mxu0 %v4672
        %v4751 = vpop.f32.mrf.mxu0
        %v4752 = vadd.f32 0.0, %v4751
        %v4753 = vpop.f32.mrf.mxu0
        %v4754 = vadd.f32 0.0, %v4753
        %4755 = vmatmul.bf16.gmra.mxu0 %v4675
        %v4756 = vpop.f32.mrf.mxu0
        %v4757 = vadd.f32 0.0, %v4756
        %v4758 = vpop.f32.mrf.mxu0
        %v4759 = vadd.f32 0.0, %v4758
        %4760 = vmatmul.bf16.gmra.mxu0 %v4678
        %v4761 = vpop.f32.mrf.mxu0
        %v4762 = vadd.f32 0.0, %v4761
        %v4763 = vpop.f32.mrf.mxu0
        %v4764 = vadd.f32 0.0, %v4763
        %4765 = vmatmul.bf16.gmra.mxu0 %v4681
        %v4766 = vpop.f32.mrf.mxu0
        %v4767 = vadd.f32 0.0, %v4766
        %v4768 = vpop.f32.mrf.mxu0
        %v4769 = vadd.f32 0.0, %v4768
        %4770 = vmatmul.bf16.gmra.mxu0 %v4684
        %v4771 = vpop.f32.mrf.mxu0
        %v4772 = vadd.f32 0.0, %v4771
        %v4773 = vpop.f32.mrf.mxu0
        %v4774 = vadd.f32 0.0, %v4773
        %4775 = vmatmul.bf16.gmra.mxu0 %v4687
        %v4776 = vpop.f32.mrf.mxu0
        %v4777 = vadd.f32 0.0, %v4776
        %v4778 = vpop.f32.mrf.mxu0
        %v4779 = vadd.f32 0.0, %v4778
        %4780 = vdwg.mxu0
        %v4781 = vadd.f32 %v4559, %v4702
        %v4782 = vadd.f32 %v4560, %v4704
        %v4783 = vadd.f32 %v4561, %v4707
        %v4784 = vadd.f32 %v4562, %v4709
        %v4785 = vadd.f32 %v4563, %v4712
        %v4786 = vadd.f32 %v4564, %v4714
        %v4787 = vadd.f32 %v4565, %v4717
        %v4788 = vadd.f32 %v4566, %v4719
        %v4789 = vadd.f32 %v4567, %v4722
        %v4790 = vadd.f32 %v4568, %v4724
        %v4791 = vadd.f32 %v4569, %v4727
        %v4792 = vadd.f32 %v4570, %v4729
        %v4793 = vadd.f32 %v4571, %v4732
        %v4794 = vadd.f32 %v4572, %v4734
        %v4795 = vadd.f32 %v4573, %v4737
        %v4796 = vadd.f32 %v4574, %v4739
        %v4797 = vadd.f32 %v4575, %v4742
        %v4798 = vadd.f32 %v4576, %v4744
        %v4799 = vadd.f32 %v4577, %v4747
        %v4800 = vadd.f32 %v4578, %v4749
        %v4801 = vadd.f32 %v4579, %v4752
        %v4802 = vadd.f32 %v4580, %v4754
        %v4803 = vadd.f32 %v4581, %v4757
        %v4804 = vadd.f32 %v4582, %v4759
        %v4805 = vadd.f32 %v4583, %v4762
        %v4806 = vadd.f32 %v4584, %v4764
        %v4807 = vadd.f32 %v4585, %v4767
        %v4808 = vadd.f32 %v4586, %v4769
        %v4809 = vadd.f32 %v4587, %v4772
        %v4810 = vadd.f32 %v4588, %v4774
        %v4811 = vadd.f32 %v4589, %v4777
        %v4812 = vadd.f32 %v4590, %v4779
        %v4813 = vld [vmem:[%s2450 + $0x9] sm:$0xff]
        %v4814 = vld [vmem:[%s2450 + $0x11] sm:$0xff]
        %v4815 = vld [vmem:[%s2450 + $0x29] sm:$0xff]
        %v4816 = vld [vmem:[%s2450 + $0x31] sm:$0xff]
        %v4817 = vld [vmem:[%s2450 + $0x49] sm:$0xff]
        %v4818 = vld [vmem:[%s2450 + $0x51] sm:$0xff]
        %v4819 = vld [vmem:[%s2450 + $0x69] sm:$0xff]
        %v4820 = vld [vmem:[%s2450 + $0x71] sm:$0xff]
        %v4821 = vld [vmem:[%s2450 + $0x89] sm:$0xff]
        %v4822 = vld [vmem:[%s2450 + $0x91] sm:$0xff]
        %v4823 = vld [vmem:[%s2450 + $0xa9] sm:$0xff]
        %v4824 = vld [vmem:[%s2450 + $0xb1] sm:$0xff]
        %v4825 = vld [vmem:[%s2450 + $0xc9] sm:$0xff]
        %v4826 = vld [vmem:[%s2450 + $0xd1] sm:$0xff]
        %v4827 = vld [vmem:[%s2450 + $0xe9] sm:$0xff]
        %v4828 = vld [vmem:[%s2450 + $0xf1] sm:$0xff]
        %v4829 = vld [vmem:[%s2450 + $0x109] sm:$0xff]
        %v4830 = vld [vmem:[%s2450 + $0x111] sm:$0xff]
        %v4831 = vld [vmem:[%s2450 + $0x129] sm:$0xff]
        %v4832 = vld [vmem:[%s2450 + $0x131] sm:$0xff]
        %v4833 = vld [vmem:[%s2450 + $0x149] sm:$0xff]
        %v4834 = vld [vmem:[%s2450 + $0x151] sm:$0xff]
        %v4835 = vld [vmem:[%s2450 + $0x169] sm:$0xff]
        %v4836 = vld [vmem:[%s2450 + $0x171] sm:$0xff]
        %v4837 = vld [vmem:[%s2450 + $0x189] sm:$0xff]
        %v4838 = vld [vmem:[%s2450 + $0x191] sm:$0xff]
        %v4839 = vld [vmem:[%s2450 + $0x1a9] sm:$0xff]
        %v4840 = vld [vmem:[%s2450 + $0x1b1] sm:$0xff]
        %v4841 = vld [vmem:[%s2450 + $0x1c9] sm:$0xff]
        %v4842 = vld [vmem:[%s2450 + $0x1d1] sm:$0xff]
        %v4843 = vld [vmem:[%s2450 + $0x1e9] sm:$0xff]
        %v4844 = vld [vmem:[%s2450 + $0x1f1] sm:$0xff]
        %v4845 = vpack.c.bf16 %v4814, %v4813
        %v4846 = vpack.c.bf16 %v4816, %v4815
        %v4847 = vpack.c.bf16 %v4818, %v4817
        %v4848 = vpack.c.bf16 %v4820, %v4819
        %v4849 = vpack.c.bf16 %v4822, %v4821
        %v4850 = vpack.c.bf16 %v4824, %v4823
        %v4851 = vpack.c.bf16 %v4826, %v4825
        %v4852 = vpack.c.bf16 %v4828, %v4827
        %v4853 = vpack.c.bf16 %v4830, %v4829
        %v4854 = vpack.c.bf16 %v4832, %v4831
        %v4855 = vpack.c.bf16 %v4834, %v4833
        %v4856 = vpack.c.bf16 %v4836, %v4835
        %v4857 = vpack.c.bf16 %v4838, %v4837
        %v4858 = vpack.c.bf16 %v4840, %v4839
        %v4859 = vpack.c.bf16 %v4842, %v4841
        %v4860 = vpack.c.bf16 %v4844, %v4843
        %s4861 = scalar_lea.vmem %s7, 16
        %v4862 = vld [vmem:[%s4861] sm:$0x3]
        %v4864 = vsel %vm601, %v4845, 0
        %v4867 = vsel %vm601, %v4846, 0
        %v4870 = vsel %vm601, %v4847, 0
        %v4873 = vsel %vm601, %v4848, 0
        %v4876 = vsel %vm601, %v4849, 0
        %v4879 = vsel %vm601, %v4850, 0
        %v4882 = vsel %vm601, %v4851, 0
        %v4885 = vsel %vm601, %v4852, 0
        %v4888 = vsel %vm601, %v4853, 0
        %v4891 = vsel %vm601, %v4854, 0
        %v4894 = vsel %vm601, %v4855, 0
        %v4897 = vsel %vm601, %v4856, 0
        %v4900 = vsel %vm601, %v4857, 0
        %v4903 = vsel %vm601, %v4858, 0
        %v4906 = vsel %vm601, %v4859, 0
        %v4909 = vsel %vm601, %v4860, 0
        %v4912 = vsel %vm650, %v4862, 0
        %4914 = vmatpush.bf16.msra.mxu0 0
        %4915 = vmatpush.bf16.msra.mxu0 0
        %4916 = vmatpush.bf16.msra.mxu0 0
        %4917 = vmatpush.bf16.msra.mxu0 0
        %4918 = vmatpush.bf16.msra.mxu0 0
        %4919 = vmatpush.bf16.msra.mxu0 0
        %4920 = vmatpush.bf16.msra.mxu0 0
        %4921 = vmatpush.bf16.msra.mxu0 %v4912
        %4922 = vmatmul.bf16.gmra.mxu0 %v4864
        %v4923 = vpop.f32.mrf.mxu0
        %v4924 = vadd.f32 0.0, %v4923
        %v4925 = vpop.f32.mrf.mxu0
        %v4926 = vadd.f32 0.0, %v4925
        %4927 = vmatmul.bf16.gmra.mxu0 %v4867
        %v4928 = vpop.f32.mrf.mxu0
        %v4929 = vadd.f32 0.0, %v4928
        %v4930 = vpop.f32.mrf.mxu0
        %v4931 = vadd.f32 0.0, %v4930
        %4932 = vmatmul.bf16.gmra.mxu0 %v4870
        %v4933 = vpop.f32.mrf.mxu0
        %v4934 = vadd.f32 0.0, %v4933
        %v4935 = vpop.f32.mrf.mxu0
        %v4936 = vadd.f32 0.0, %v4935
        %4937 = vmatmul.bf16.gmra.mxu0 %v4873
        %v4938 = vpop.f32.mrf.mxu0
        %v4939 = vadd.f32 0.0, %v4938
        %v4940 = vpop.f32.mrf.mxu0
        %v4941 = vadd.f32 0.0, %v4940
        %4942 = vmatmul.bf16.gmra.mxu0 %v4876
        %v4943 = vpop.f32.mrf.mxu0
        %v4944 = vadd.f32 0.0, %v4943
        %v4945 = vpop.f32.mrf.mxu0
        %v4946 = vadd.f32 0.0, %v4945
        %4947 = vmatmul.bf16.gmra.mxu0 %v4879
        %v4948 = vpop.f32.mrf.mxu0
        %v4949 = vadd.f32 0.0, %v4948
        %v4950 = vpop.f32.mrf.mxu0
        %v4951 = vadd.f32 0.0, %v4950
        %4952 = vmatmul.bf16.gmra.mxu0 %v4882
        %v4953 = vpop.f32.mrf.mxu0
        %v4954 = vadd.f32 0.0, %v4953
        %v4955 = vpop.f32.mrf.mxu0
        %v4956 = vadd.f32 0.0, %v4955
        %4957 = vmatmul.bf16.gmra.mxu0 %v4885
        %v4958 = vpop.f32.mrf.mxu0
        %v4959 = vadd.f32 0.0, %v4958
        %v4960 = vpop.f32.mrf.mxu0
        %v4961 = vadd.f32 0.0, %v4960
        %4962 = vmatmul.bf16.gmra.mxu0 %v4888
        %v4963 = vpop.f32.mrf.mxu0
        %v4964 = vadd.f32 0.0, %v4963
        %v4965 = vpop.f32.mrf.mxu0
        %v4966 = vadd.f32 0.0, %v4965
        %4967 = vmatmul.bf16.gmra.mxu0 %v4891
        %v4968 = vpop.f32.mrf.mxu0
        %v4969 = vadd.f32 0.0, %v4968
        %v4970 = vpop.f32.mrf.mxu0
        %v4971 = vadd.f32 0.0, %v4970
        %4972 = vmatmul.bf16.gmra.mxu0 %v4894
        %v4973 = vpop.f32.mrf.mxu0
        %v4974 = vadd.f32 0.0, %v4973
        %v4975 = vpop.f32.mrf.mxu0
        %v4976 = vadd.f32 0.0, %v4975
        %4977 = vmatmul.bf16.gmra.mxu0 %v4897
        %v4978 = vpop.f32.mrf.mxu0
        %v4979 = vadd.f32 0.0, %v4978
        %v4980 = vpop.f32.mrf.mxu0
        %v4981 = vadd.f32 0.0, %v4980
        %4982 = vmatmul.bf16.gmra.mxu0 %v4900
        %v4983 = vpop.f32.mrf.mxu0
        %v4984 = vadd.f32 0.0, %v4983
        %v4985 = vpop.f32.mrf.mxu0
        %v4986 = vadd.f32 0.0, %v4985
        %4987 = vmatmul.bf16.gmra.mxu0 %v4903
        %v4988 = vpop.f32.mrf.mxu0
        %v4989 = vadd.f32 0.0, %v4988
        %v4990 = vpop.f32.mrf.mxu0
        %v4991 = vadd.f32 0.0, %v4990
        %4992 = vmatmul.bf16.gmra.mxu0 %v4906
        %v4993 = vpop.f32.mrf.mxu0
        %v4994 = vadd.f32 0.0, %v4993
        %v4995 = vpop.f32.mrf.mxu0
        %v4996 = vadd.f32 0.0, %v4995
        %4997 = vmatmul.bf16.gmra.mxu0 %v4909
        %v4998 = vpop.f32.mrf.mxu0
        %v4999 = vadd.f32 0.0, %v4998
        %v5000 = vpop.f32.mrf.mxu0
        %v5001 = vadd.f32 0.0, %v5000
        %5002 = vdwg.mxu0
        %v5003 = vadd.f32 %v4781, %v4924
        %v5004 = vadd.f32 %v4782, %v4926
        %v5005 = vadd.f32 %v4783, %v4929
        %v5006 = vadd.f32 %v4784, %v4931
        %v5007 = vadd.f32 %v4785, %v4934
        %v5008 = vadd.f32 %v4786, %v4936
        %v5009 = vadd.f32 %v4787, %v4939
        %v5010 = vadd.f32 %v4788, %v4941
        %v5011 = vadd.f32 %v4789, %v4944
        %v5012 = vadd.f32 %v4790, %v4946
        %v5013 = vadd.f32 %v4791, %v4949
        %v5014 = vadd.f32 %v4792, %v4951
        %v5015 = vadd.f32 %v4793, %v4954
        %v5016 = vadd.f32 %v4794, %v4956
        %v5017 = vadd.f32 %v4795, %v4959
        %v5018 = vadd.f32 %v4796, %v4961
        %v5019 = vadd.f32 %v4797, %v4964
        %v5020 = vadd.f32 %v4798, %v4966
        %v5021 = vadd.f32 %v4799, %v4969
        %v5022 = vadd.f32 %v4800, %v4971
        %v5023 = vadd.f32 %v4801, %v4974
        %v5024 = vadd.f32 %v4802, %v4976
        %v5025 = vadd.f32 %v4803, %v4979
        %v5026 = vadd.f32 %v4804, %v4981
        %v5027 = vadd.f32 %v4805, %v4984
        %v5028 = vadd.f32 %v4806, %v4986
        %v5029 = vadd.f32 %v4807, %v4989
        %v5030 = vadd.f32 %v4808, %v4991
        %v5031 = vadd.f32 %v4809, %v4994
        %v5032 = vadd.f32 %v4810, %v4996
        %v5033 = vadd.f32 %v4811, %v4999
        %v5034 = vadd.f32 %v4812, %v5001
        %v5035 = vld [vmem:[%s8] sm:$0x1]
        %v5037 = vperm.slane %v5035, 0
        %v5039 = vadd.f32 %v5003, %v5037
        %v5040 = vadd.f32 %v5004, %v5037
        %v5041 = vadd.f32 %v5005, %v5037
        %v5042 = vadd.f32 %v5006, %v5037
        %v5043 = vadd.f32 %v5007, %v5037
        %v5044 = vadd.f32 %v5008, %v5037
        %v5045 = vadd.f32 %v5009, %v5037
        %v5046 = vadd.f32 %v5010, %v5037
        %v5047 = vadd.f32 %v5011, %v5037
        %v5048 = vadd.f32 %v5012, %v5037
        %v5049 = vadd.f32 %v5013, %v5037
        %v5050 = vadd.f32 %v5014, %v5037
        %v5051 = vadd.f32 %v5015, %v5037
        %v5052 = vadd.f32 %v5016, %v5037
        %v5053 = vadd.f32 %v5017, %v5037
        %v5054 = vadd.f32 %v5018, %v5037
        %v5055 = vadd.f32 %v5019, %v5037
        %v5056 = vadd.f32 %v5020, %v5037
        %v5057 = vadd.f32 %v5021, %v5037
        %v5058 = vadd.f32 %v5022, %v5037
        %v5059 = vadd.f32 %v5023, %v5037
        %v5060 = vadd.f32 %v5024, %v5037
        %v5061 = vadd.f32 %v5025, %v5037
        %v5062 = vadd.f32 %v5026, %v5037
        %v5063 = vadd.f32 %v5027, %v5037
        %v5064 = vadd.f32 %v5028, %v5037
        %v5065 = vadd.f32 %v5029, %v5037
        %v5066 = vadd.f32 %v5030, %v5037
        %v5067 = vadd.f32 %v5031, %v5037
        %v5068 = vadd.f32 %v5032, %v5037
        %v5069 = vadd.f32 %v5033, %v5037
        %v5070 = vadd.f32 %v5034, %v5037
        %v5071 = vmax.f32 %v5039, 0.0
        %v5072 = vmax.f32 %v5040, 0.0
        %v5073 = vmax.f32 %v5041, 0.0
        %v5074 = vmax.f32 %v5042, 0.0
        %v5075 = vmax.f32 %v5043, 0.0
        %v5076 = vmax.f32 %v5044, 0.0
        %v5077 = vmax.f32 %v5045, 0.0
        %v5078 = vmax.f32 %v5046, 0.0
        %v5079 = vmax.f32 %v5047, 0.0
        %v5080 = vmax.f32 %v5048, 0.0
        %v5081 = vmax.f32 %v5049, 0.0
        %v5082 = vmax.f32 %v5050, 0.0
        %v5083 = vmax.f32 %v5051, 0.0
        %v5084 = vmax.f32 %v5052, 0.0
        %v5085 = vmax.f32 %v5053, 0.0
        %v5086 = vmax.f32 %v5054, 0.0
        %v5087 = vmax.f32 %v5055, 0.0
        %v5088 = vmax.f32 %v5056, 0.0
        %v5089 = vmax.f32 %v5057, 0.0
        %v5090 = vmax.f32 %v5058, 0.0
        %v5091 = vmax.f32 %v5059, 0.0
        %v5092 = vmax.f32 %v5060, 0.0
        %v5093 = vmax.f32 %v5061, 0.0
        %v5094 = vmax.f32 %v5062, 0.0
        %v5095 = vmax.f32 %v5063, 0.0
        %v5096 = vmax.f32 %v5064, 0.0
        %v5097 = vmax.f32 %v5065, 0.0
        %v5098 = vmax.f32 %v5066, 0.0
        %v5099 = vmax.f32 %v5067, 0.0
        %v5100 = vmax.f32 %v5068, 0.0
        %v5101 = vmax.f32 %v5069, 0.0
        %v5102 = vmax.f32 %v5070, 0.0
        %5103 = vst.msk [vmem:[#allocation2] sm:$0xff] %vm775, 0.0
        %5104 = vst.msk [vmem:[#allocation2 + $0x8] sm:$0xff] %vm775, 0.0
        %5105 = vst.msk [vmem:[#allocation2 + $0x10] sm:$0xff] %vm775, 0.0
        %5106 = vst.msk [vmem:[#allocation2 + $0x18] sm:$0xff] %vm775, 0.0
        %5107 = vst.msk [vmem:[#allocation2 + $0x20] sm:$0xff] %vm775, 0.0
        %5108 = vst.msk [vmem:[#allocation2 + $0x28] sm:$0xff] %vm775, 0.0
        %5109 = vst.msk [vmem:[#allocation2 + $0x30] sm:$0xff] %vm775, 0.0
        %5110 = vst.msk [vmem:[#allocation2 + $0x38] sm:$0xff] %vm775, 0.0
        %5111 = vst.msk [vmem:[#allocation2 + $0x40] sm:$0xff] %vm775, 0.0
        %5112 = vst.msk [vmem:[#allocation2 + $0x48] sm:$0xff] %vm775, 0.0
        %5113 = vst.msk [vmem:[#allocation2 + $0x50] sm:$0xff] %vm775, 0.0
        %5114 = vst.msk [vmem:[#allocation2 + $0x58] sm:$0xff] %vm775, 0.0
        %5115 = vst.msk [vmem:[#allocation2 + $0x60] sm:$0xff] %vm775, 0.0
        %5116 = vst.msk [vmem:[#allocation2 + $0x68] sm:$0xff] %vm775, 0.0
        %5117 = vst.msk [vmem:[#allocation2 + $0x70] sm:$0xff] %vm775, 0.0
        %5118 = vst.msk [vmem:[#allocation2 + $0x78] sm:$0xff] %vm775, 0.0
        %5119 = vst.msk [vmem:[#allocation2 + $0x80] sm:$0xff] %vm775, 0.0
        %5120 = vst.msk [vmem:[#allocation2 + $0x88] sm:$0xff] %vm775, 0.0
        %5121 = vst.msk [vmem:[#allocation2 + $0x90] sm:$0xff] %vm775, 0.0
        %5122 = vst.msk [vmem:[#allocation2 + $0x98] sm:$0xff] %vm775, 0.0
        %5123 = vst.msk [vmem:[#allocation2 + $0xa0] sm:$0xff] %vm775, 0.0
        %5124 = vst.msk [vmem:[#allocation2 + $0xa8] sm:$0xff] %vm775, 0.0
        %5125 = vst.msk [vmem:[#allocation2 + $0xb0] sm:$0xff] %vm775, 0.0
        %5126 = vst.msk [vmem:[#allocation2 + $0xb8] sm:$0xff] %vm775, 0.0
        %5127 = vst.msk [vmem:[#allocation2 + $0xc0] sm:$0xff] %vm775, 0.0
        %5128 = vst.msk [vmem:[#allocation2 + $0xc8] sm:$0xff] %vm775, 0.0
        %5129 = vst.msk [vmem:[#allocation2 + $0xd0] sm:$0xff] %vm775, 0.0
        %5130 = vst.msk [vmem:[#allocation2 + $0xd8] sm:$0xff] %vm775, 0.0
        %5131 = vst.msk [vmem:[#allocation2 + $0xe0] sm:$0xff] %vm775, 0.0
        %5132 = vst.msk [vmem:[#allocation2 + $0xe8] sm:$0xff] %vm775, 0.0
        %5133 = vst.msk [vmem:[#allocation2 + $0xf0] sm:$0xff] %vm775, 0.0
        %5134 = vst.msk [vmem:[#allocation2 + $0xf8] sm:$0xff] %vm775, 0.0
        %5135 = vst.msk [vmem:[#allocation2 + $0x100] sm:$0xff] %vm775, 0.0
        %5136 = vst.msk [vmem:[#allocation2 + $0x108] sm:$0xff] %vm775, 0.0
        %5137 = vst.msk [vmem:[#allocation2 + $0x110] sm:$0xff] %vm775, 0.0
        %5138 = vst.msk [vmem:[#allocation2 + $0x118] sm:$0xff] %vm775, 0.0
        %5139 = vst.msk [vmem:[#allocation2 + $0x120] sm:$0xff] %vm775, 0.0
        %5140 = vst.msk [vmem:[#allocation2 + $0x128] sm:$0xff] %vm775, 0.0
        %5141 = vst.msk [vmem:[#allocation2 + $0x130] sm:$0xff] %vm775, 0.0
        %5142 = vst.msk [vmem:[#allocation2 + $0x138] sm:$0xff] %vm775, 0.0
        %5143 = vst.msk [vmem:[#allocation2 + $0x140] sm:$0xff] %vm775, 0.0
        %5144 = vst.msk [vmem:[#allocation2 + $0x148] sm:$0xff] %vm775, 0.0
        %5145 = vst.msk [vmem:[#allocation2 + $0x150] sm:$0xff] %vm775, 0.0
        %5146 = vst.msk [vmem:[#allocation2 + $0x158] sm:$0xff] %vm775, 0.0
        %5147 = vst.msk [vmem:[#allocation2 + $0x160] sm:$0xff] %vm775, 0.0
        %5148 = vst.msk [vmem:[#allocation2 + $0x168] sm:$0xff] %vm775, 0.0
        %5149 = vst.msk [vmem:[#allocation2 + $0x170] sm:$0xff] %vm775, 0.0
        %5150 = vst.msk [vmem:[#allocation2 + $0x178] sm:$0xff] %vm775, 0.0
        %5151 = vst.msk [vmem:[#allocation2 + $0x180] sm:$0xff] %vm775, 0.0
        %5152 = vst.msk [vmem:[#allocation2 + $0x188] sm:$0xff] %vm775, 0.0
        %5153 = vst.msk [vmem:[#allocation2 + $0x190] sm:$0xff] %vm775, 0.0
        %5154 = vst.msk [vmem:[#allocation2 + $0x198] sm:$0xff] %vm775, 0.0
        %5155 = vst.msk [vmem:[#allocation2 + $0x1a0] sm:$0xff] %vm775, 0.0
        %5156 = vst.msk [vmem:[#allocation2 + $0x1a8] sm:$0xff] %vm775, 0.0
        %5157 = vst.msk [vmem:[#allocation2 + $0x1b0] sm:$0xff] %vm775, 0.0
        %5158 = vst.msk [vmem:[#allocation2 + $0x1b8] sm:$0xff] %vm775, 0.0
        %5159 = vst.msk [vmem:[#allocation2 + $0x1c0] sm:$0xff] %vm775, 0.0
        %5160 = vst.msk [vmem:[#allocation2 + $0x1c8] sm:$0xff] %vm775, 0.0
        %5161 = vst.msk [vmem:[#allocation2 + $0x1d0] sm:$0xff] %vm775, 0.0
        %5162 = vst.msk [vmem:[#allocation2 + $0x1d8] sm:$0xff] %vm775, 0.0
        %5163 = vst.msk [vmem:[#allocation2 + $0x1e0] sm:$0xff] %vm775, 0.0
        %5164 = vst.msk [vmem:[#allocation2 + $0x1e8] sm:$0xff] %vm775, 0.0
        %5165 = vst.msk [vmem:[#allocation2 + $0x1f0] sm:$0xff] %vm775, 0.0
        %5166 = vst.msk [vmem:[#allocation2 + $0x1f8] sm:$0xff] %vm775, 0.0
        %5167 = vst.msk [vmem:[#allocation2 + $0x200] sm:$0xff] %vm775, 0.0
        %5168 = vst.msk [vmem:[#allocation2 + $0x208] sm:$0xff] %vm775, 0.0
        %5169 = vst.msk [vmem:[#allocation2 + $0x210] sm:$0xff] %vm775, 0.0
        %5170 = vst.msk [vmem:[#allocation2 + $0x218] sm:$0xff] %vm775, 0.0
        %5171 = vst.msk [vmem:[#allocation2 + $0x220] sm:$0xff] %vm775, 0.0
        %5172 = vst.msk [vmem:[#allocation2 + $0x228] sm:$0xff] %vm775, 0.0
        %5173 = vst.msk [vmem:[#allocation2 + $0x230] sm:$0xff] %vm775, 0.0
        %5174 = vst.msk [vmem:[#allocation2 + $0x238] sm:$0xff] %vm775, 0.0
        %5175 = vst.msk [vmem:[%s1008 + $0x8] sm:$0xff] %vm775, %v5071
        %5176 = vst.msk [vmem:[%s1008 + $0x10] sm:$0xff] %vm775, %v5072
        %5177 = vst.msk [vmem:[%s1008 + $0x28] sm:$0xff] %vm775, %v5073
        %5178 = vst.msk [vmem:[%s1008 + $0x30] sm:$0xff] %vm775, %v5074
        %5179 = vst.msk [vmem:[%s1008 + $0x48] sm:$0xff] %vm775, %v5075
        %5180 = vst.msk [vmem:[%s1008 + $0x50] sm:$0xff] %vm775, %v5076
        %5181 = vst.msk [vmem:[%s1008 + $0x68] sm:$0xff] %vm775, %v5077
        %5182 = vst.msk [vmem:[%s1008 + $0x70] sm:$0xff] %vm775, %v5078
        %5183 = vst.msk [vmem:[%s1008 + $0x88] sm:$0xff] %vm775, %v5079
        %5184 = vst.msk [vmem:[%s1008 + $0x90] sm:$0xff] %vm775, %v5080
        %5185 = vst.msk [vmem:[%s1008 + $0xa8] sm:$0xff] %vm775, %v5081
        %5186 = vst.msk [vmem:[%s1008 + $0xb0] sm:$0xff] %vm775, %v5082
        %5187 = vst.msk [vmem:[%s1008 + $0xc8] sm:$0xff] %vm775, %v5083
        %5188 = vst.msk [vmem:[%s1008 + $0xd0] sm:$0xff] %vm775, %v5084
        %5189 = vst.msk [vmem:[%s1008 + $0xe8] sm:$0xff] %vm775, %v5085
        %5190 = vst.msk [vmem:[%s1008 + $0xf0] sm:$0xff] %vm775, %v5086
        %5191 = vst.msk [vmem:[%s1008 + $0x108] sm:$0xff] %vm775, %v5087
        %5192 = vst.msk [vmem:[%s1008 + $0x110] sm:$0xff] %vm775, %v5088
        %5193 = vst.msk [vmem:[%s1008 + $0x128] sm:$0xff] %vm775, %v5089
        %5194 = vst.msk [vmem:[%s1008 + $0x130] sm:$0xff] %vm775, %v5090
        %5195 = vst.msk [vmem:[%s1008 + $0x148] sm:$0xff] %vm775, %v5091
        %5196 = vst.msk [vmem:[%s1008 + $0x150] sm:$0xff] %vm775, %v5092
        %5197 = vst.msk [vmem:[%s1008 + $0x168] sm:$0xff] %vm775, %v5093
        %5198 = vst.msk [vmem:[%s1008 + $0x170] sm:$0xff] %vm775, %v5094
        %5199 = vst.msk [vmem:[%s1008 + $0x188] sm:$0xff] %vm775, %v5095
        %5200 = vst.msk [vmem:[%s1008 + $0x190] sm:$0xff] %vm775, %v5096
        %5201 = vst.msk [vmem:[%s1008 + $0x1a8] sm:$0xff] %vm775, %v5097
        %5202 = vst.msk [vmem:[%s1008 + $0x1b0] sm:$0xff] %vm775, %v5098
        %5203 = vst.msk [vmem:[%s1008 + $0x1c8] sm:$0xff] %vm775, %v5099
        %5204 = vst.msk [vmem:[%s1008 + $0x1d0] sm:$0xff] %vm775, %v5100
        %5205 = vst.msk [vmem:[%s1008 + $0x1e8] sm:$0xff] %vm775, %v5101
        %5206 = vst.msk [vmem:[%s1008 + $0x1f0] sm:$0xff] %vm775, %v5102
        %v5207 = vld [vmem:[%s1008 + $0x7] sm:$0xff]
        %v5208 = vld [vmem:[%s1008 + $0xf] sm:$0xff]
        %v5209 = vld [vmem:[%s1008 + $0x27] sm:$0xff]
        %v5210 = vld [vmem:[%s1008 + $0x2f] sm:$0xff]
        %v5211 = vld [vmem:[%s1008 + $0x47] sm:$0xff]
        %v5212 = vld [vmem:[%s1008 + $0x4f] sm:$0xff]
        %v5213 = vld [vmem:[%s1008 + $0x67] sm:$0xff]
        %v5214 = vld [vmem:[%s1008 + $0x6f] sm:$0xff]
        %v5215 = vld [vmem:[%s1008 + $0x87] sm:$0xff]
        %v5216 = vld [vmem:[%s1008 + $0x8f] sm:$0xff]
        %v5217 = vld [vmem:[%s1008 + $0xa7] sm:$0xff]
        %v5218 = vld [vmem:[%s1008 + $0xaf] sm:$0xff]
        %v5219 = vld [vmem:[%s1008 + $0xc7] sm:$0xff]
        %v5220 = vld [vmem:[%s1008 + $0xcf] sm:$0xff]
        %v5221 = vld [vmem:[%s1008 + $0xe7] sm:$0xff]
        %v5222 = vld [vmem:[%s1008 + $0xef] sm:$0xff]
        %v5223 = vld [vmem:[%s1008 + $0x107] sm:$0xff]
        %v5224 = vld [vmem:[%s1008 + $0x10f] sm:$0xff]
        %v5225 = vld [vmem:[%s1008 + $0x127] sm:$0xff]
        %v5226 = vld [vmem:[%s1008 + $0x12f] sm:$0xff]
        %v5227 = vld [vmem:[%s1008 + $0x147] sm:$0xff]
        %v5228 = vld [vmem:[%s1008 + $0x14f] sm:$0xff]
        %v5229 = vld [vmem:[%s1008 + $0x167] sm:$0xff]
        %v5230 = vld [vmem:[%s1008 + $0x16f] sm:$0xff]
        %v5231 = vld [vmem:[%s1008 + $0x187] sm:$0xff]
        %v5232 = vld [vmem:[%s1008 + $0x18f] sm:$0xff]
        %v5233 = vld [vmem:[%s1008 + $0x1a7] sm:$0xff]
        %v5234 = vld [vmem:[%s1008 + $0x1af] sm:$0xff]
        %v5235 = vld [vmem:[%s1008 + $0x1c7] sm:$0xff]
        %v5236 = vld [vmem:[%s1008 + $0x1cf] sm:$0xff]
        %v5237 = vld [vmem:[%s1008 + $0x1e7] sm:$0xff]
        %v5238 = vld [vmem:[%s1008 + $0x1ef] sm:$0xff]
        %v5239 = vpack.c.bf16 %v5208, %v5207
        %v5240 = vpack.c.bf16 %v5210, %v5209
        %v5241 = vpack.c.bf16 %v5212, %v5211
        %v5242 = vpack.c.bf16 %v5214, %v5213
        %v5243 = vpack.c.bf16 %v5216, %v5215
        %v5244 = vpack.c.bf16 %v5218, %v5217
        %v5245 = vpack.c.bf16 %v5220, %v5219
        %v5246 = vpack.c.bf16 %v5222, %v5221
        %v5247 = vpack.c.bf16 %v5224, %v5223
        %v5248 = vpack.c.bf16 %v5226, %v5225
        %v5249 = vpack.c.bf16 %v5228, %v5227
        %v5250 = vpack.c.bf16 %v5230, %v5229
        %v5251 = vpack.c.bf16 %v5232, %v5231
        %v5252 = vpack.c.bf16 %v5234, %v5233
        %v5253 = vpack.c.bf16 %v5236, %v5235
        %v5254 = vpack.c.bf16 %v5238, %v5237
        %v5255 = vld [vmem:[%s9] sm:$0xf]
        %v5256 = vld [vmem:[%s1008 + $0x8] sm:$0xff]
        %v5257 = vld [vmem:[%s1008 + $0x10] sm:$0xff]
        %v5258 = vld [vmem:[%s1008 + $0x28] sm:$0xff]
        %v5259 = vld [vmem:[%s1008 + $0x30] sm:$0xff]
        %v5260 = vld [vmem:[%s1008 + $0x48] sm:$0xff]
        %v5261 = vld [vmem:[%s1008 + $0x50] sm:$0xff]
        %v5262 = vld [vmem:[%s1008 + $0x68] sm:$0xff]
        %v5263 = vld [vmem:[%s1008 + $0x70] sm:$0xff]
        %v5264 = vld [vmem:[%s1008 + $0x88] sm:$0xff]
        %v5265 = vld [vmem:[%s1008 + $0x90] sm:$0xff]
        %v5266 = vld [vmem:[%s1008 + $0xa8] sm:$0xff]
        %v5267 = vld [vmem:[%s1008 + $0xb0] sm:$0xff]
        %v5268 = vld [vmem:[%s1008 + $0xc8] sm:$0xff]
        %v5269 = vld [vmem:[%s1008 + $0xd0] sm:$0xff]
        %v5270 = vld [vmem:[%s1008 + $0xe8] sm:$0xff]
        %v5271 = vld [vmem:[%s1008 + $0xf0] sm:$0xff]
        %v5272 = vld [vmem:[%s1008 + $0x108] sm:$0xff]
        %v5273 = vld [vmem:[%s1008 + $0x110] sm:$0xff]
        %v5274 = vld [vmem:[%s1008 + $0x128] sm:$0xff]
        %v5275 = vld [vmem:[%s1008 + $0x130] sm:$0xff]
        %v5276 = vld [vmem:[%s1008 + $0x148] sm:$0xff]
        %v5277 = vld [vmem:[%s1008 + $0x150] sm:$0xff]
        %v5278 = vld [vmem:[%s1008 + $0x168] sm:$0xff]
        %v5279 = vld [vmem:[%s1008 + $0x170] sm:$0xff]
        %v5280 = vld [vmem:[%s1008 + $0x188] sm:$0xff]
        %v5281 = vld [vmem:[%s1008 + $0x190] sm:$0xff]
        %v5282 = vld [vmem:[%s1008 + $0x1a8] sm:$0xff]
        %v5283 = vld [vmem:[%s1008 + $0x1b0] sm:$0xff]
        %v5284 = vld [vmem:[%s1008 + $0x1c8] sm:$0xff]
        %v5285 = vld [vmem:[%s1008 + $0x1d0] sm:$0xff]
        %v5286 = vld [vmem:[%s1008 + $0x1e8] sm:$0xff]
        %v5287 = vld [vmem:[%s1008 + $0x1f0] sm:$0xff]
        %v5288 = vpack.c.bf16 %v5257, %v5256
        %v5289 = vpack.c.bf16 %v5259, %v5258
        %v5290 = vpack.c.bf16 %v5261, %v5260
        %v5291 = vpack.c.bf16 %v5263, %v5262
        %v5292 = vpack.c.bf16 %v5265, %v5264
        %v5293 = vpack.c.bf16 %v5267, %v5266
        %v5294 = vpack.c.bf16 %v5269, %v5268
        %v5295 = vpack.c.bf16 %v5271, %v5270
        %v5296 = vpack.c.bf16 %v5273, %v5272
        %v5297 = vpack.c.bf16 %v5275, %v5274
        %v5298 = vpack.c.bf16 %v5277, %v5276
        %v5299 = vpack.c.bf16 %v5279, %v5278
        %v5300 = vpack.c.bf16 %v5281, %v5280
        %v5301 = vpack.c.bf16 %v5283, %v5282
        %v5302 = vpack.c.bf16 %v5285, %v5284
        %v5303 = vpack.c.bf16 %v5287, %v5286
        %s5304 = scalar_lea.vmem %s9, 4
        %v5305 = vld [vmem:[%s5304] sm:$0xf]
        %v5307 = vsel %vm775, %v5288, 0
        %v5310 = vsel %vm775, %v5289, 0
        %v5313 = vsel %vm775, %v5290, 0
        %v5316 = vsel %vm775, %v5291, 0
        %v5319 = vsel %vm775, %v5292, 0
        %v5322 = vsel %vm775, %v5293, 0
        %v5325 = vsel %vm775, %v5294, 0
        %v5328 = vsel %vm775, %v5295, 0
        %v5331 = vsel %vm775, %v5296, 0
        %v5334 = vsel %vm775, %v5297, 0
        %v5337 = vsel %vm775, %v5298, 0
        %v5340 = vsel %vm775, %v5299, 0
        %v5343 = vsel %vm775, %v5300, 0
        %v5346 = vsel %vm775, %v5301, 0
        %v5349 = vsel %vm775, %v5302, 0
        %v5352 = vsel %vm775, %v5303, 0
        %vm5354 = vcmask 1043456
        %v5356 = vsel %vm5354, %v5305, 0
        %5358 = vmatpush.bf16.msra.mxu0 0
        %5359 = vmatpush.bf16.msra.mxu0 0
        %5360 = vmatpush.bf16.msra.mxu0 0
        %5361 = vmatpush.bf16.msra.mxu0 0
        %5362 = vmatpush.bf16.msra.mxu0 0
        %5363 = vmatpush.bf16.msra.mxu0 0
        %5364 = vmatpush.bf16.msra.mxu0 0
        %5365 = vmatpush.bf16.msra.mxu0 %v5356
        %5366 = vmatmul.bf16.gmra.mxu0 %v5307
        %v5367 = vpop.f32.mrf.mxu0
        %v5368 = vadd.f32 0.0, %v5367
        %v5369 = vpop.f32.mrf.mxu0
        %v5370 = vadd.f32 0.0, %v5369
        %5371 = vmatmul.bf16.gmra.mxu0 %v5310
        %v5372 = vpop.f32.mrf.mxu0
        %v5373 = vadd.f32 0.0, %v5372
        %v5374 = vpop.f32.mrf.mxu0
        %v5375 = vadd.f32 0.0, %v5374
        %5376 = vmatmul.bf16.gmra.mxu0 %v5313
        %v5377 = vpop.f32.mrf.mxu0
        %v5378 = vadd.f32 0.0, %v5377
        %v5379 = vpop.f32.mrf.mxu0
        %v5380 = vadd.f32 0.0, %v5379
        %5381 = vmatmul.bf16.gmra.mxu0 %v5316
        %v5382 = vpop.f32.mrf.mxu0
        %v5383 = vadd.f32 0.0, %v5382
        %v5384 = vpop.f32.mrf.mxu0
        %v5385 = vadd.f32 0.0, %v5384
        %5386 = vmatmul.bf16.gmra.mxu0 %v5319
        %v5387 = vpop.f32.mrf.mxu0
        %v5388 = vadd.f32 0.0, %v5387
        %v5389 = vpop.f32.mrf.mxu0
        %v5390 = vadd.f32 0.0, %v5389
        %5391 = vmatmul.bf16.gmra.mxu0 %v5322
        %v5392 = vpop.f32.mrf.mxu0
        %v5393 = vadd.f32 0.0, %v5392
        %v5394 = vpop.f32.mrf.mxu0
        %v5395 = vadd.f32 0.0, %v5394
        %5396 = vmatmul.bf16.gmra.mxu0 %v5325
        %v5397 = vpop.f32.mrf.mxu0
        %v5398 = vadd.f32 0.0, %v5397
        %v5399 = vpop.f32.mrf.mxu0
        %v5400 = vadd.f32 0.0, %v5399
        %5401 = vmatmul.bf16.gmra.mxu0 %v5328
        %v5402 = vpop.f32.mrf.mxu0
        %v5403 = vadd.f32 0.0, %v5402
        %v5404 = vpop.f32.mrf.mxu0
        %v5405 = vadd.f32 0.0, %v5404
        %5406 = vmatmul.bf16.gmra.mxu0 %v5331
        %v5407 = vpop.f32.mrf.mxu0
        %v5408 = vadd.f32 0.0, %v5407
        %v5409 = vpop.f32.mrf.mxu0
        %v5410 = vadd.f32 0.0, %v5409
        %5411 = vmatmul.bf16.gmra.mxu0 %v5334
        %v5412 = vpop.f32.mrf.mxu0
        %v5413 = vadd.f32 0.0, %v5412
        %v5414 = vpop.f32.mrf.mxu0
        %v5415 = vadd.f32 0.0, %v5414
        %5416 = vmatmul.bf16.gmra.mxu0 %v5337
        %v5417 = vpop.f32.mrf.mxu0
        %v5418 = vadd.f32 0.0, %v5417
        %v5419 = vpop.f32.mrf.mxu0
        %v5420 = vadd.f32 0.0, %v5419
        %5421 = vmatmul.bf16.gmra.mxu0 %v5340
        %v5422 = vpop.f32.mrf.mxu0
        %v5423 = vadd.f32 0.0, %v5422
        %v5424 = vpop.f32.mrf.mxu0
        %v5425 = vadd.f32 0.0, %v5424
        %5426 = vmatmul.bf16.gmra.mxu0 %v5343
        %v5427 = vpop.f32.mrf.mxu0
        %v5428 = vadd.f32 0.0, %v5427
        %v5429 = vpop.f32.mrf.mxu0
        %v5430 = vadd.f32 0.0, %v5429
        %5431 = vmatmul.bf16.gmra.mxu0 %v5346
        %v5432 = vpop.f32.mrf.mxu0
        %v5433 = vadd.f32 0.0, %v5432
        %v5434 = vpop.f32.mrf.mxu0
        %v5435 = vadd.f32 0.0, %v5434
        %5436 = vmatmul.bf16.gmra.mxu0 %v5349
        %v5437 = vpop.f32.mrf.mxu0
        %v5438 = vadd.f32 0.0, %v5437
        %v5439 = vpop.f32.mrf.mxu0
        %v5440 = vadd.f32 0.0, %v5439
        %5441 = vmatmul.bf16.gmra.mxu0 %v5352
        %v5442 = vpop.f32.mrf.mxu0
        %v5443 = vadd.f32 0.0, %v5442
        %v5444 = vpop.f32.mrf.mxu0
        %v5445 = vadd.f32 0.0, %v5444
        %5446 = vdwg.mxu0
        %v5448 = vsel %vm775, %v5239, 0
        %v5451 = vsel %vm775, %v5240, 0
        %v5454 = vsel %vm775, %v5241, 0
        %v5457 = vsel %vm775, %v5242, 0
        %v5460 = vsel %vm775, %v5243, 0
        %v5463 = vsel %vm775, %v5244, 0
        %v5466 = vsel %vm775, %v5245, 0
        %v5469 = vsel %vm775, %v5246, 0
        %v5472 = vsel %vm775, %v5247, 0
        %v5475 = vsel %vm775, %v5248, 0
        %v5478 = vsel %vm775, %v5249, 0
        %v5481 = vsel %vm775, %v5250, 0
        %v5484 = vsel %vm775, %v5251, 0
        %v5487 = vsel %vm775, %v5252, 0
        %v5490 = vsel %vm775, %v5253, 0
        %v5493 = vsel %vm775, %v5254, 0
        %v5496 = vsel %vm5354, %v5255, 0
        %5498 = vmatpush.bf16.msra.mxu0 0
        %5499 = vmatpush.bf16.msra.mxu0 0
        %5500 = vmatpush.bf16.msra.mxu0 0
        %5501 = vmatpush.bf16.msra.mxu0 0
        %5502 = vmatpush.bf16.msra.mxu0 0
        %5503 = vmatpush.bf16.msra.mxu0 0
        %5504 = vmatpush.bf16.msra.mxu0 0
        %5505 = vmatpush.bf16.msra.mxu0 %v5496
        %5506 = vmatmul.bf16.gmra.mxu0 %v5448
        %v5507 = vpop.f32.mrf.mxu0
        %v5508 = vadd.f32 %v5368, %v5507
        %v5509 = vpop.f32.mrf.mxu0
        %v5510 = vadd.f32 %v5370, %v5509
        %5511 = vmatmul.bf16.gmra.mxu0 %v5451
        %v5512 = vpop.f32.mrf.mxu0
        %v5513 = vadd.f32 %v5373, %v5512
        %v5514 = vpop.f32.mrf.mxu0
        %v5515 = vadd.f32 %v5375, %v5514
        %5516 = vmatmul.bf16.gmra.mxu0 %v5454
        %v5517 = vpop.f32.mrf.mxu0
        %v5518 = vadd.f32 %v5378, %v5517
        %v5519 = vpop.f32.mrf.mxu0
        %v5520 = vadd.f32 %v5380, %v5519
        %5521 = vmatmul.bf16.gmra.mxu0 %v5457
        %v5522 = vpop.f32.mrf.mxu0
        %v5523 = vadd.f32 %v5383, %v5522
        %v5524 = vpop.f32.mrf.mxu0
        %v5525 = vadd.f32 %v5385, %v5524
        %5526 = vmatmul.bf16.gmra.mxu0 %v5460
        %v5527 = vpop.f32.mrf.mxu0
        %v5528 = vadd.f32 %v5388, %v5527
        %v5529 = vpop.f32.mrf.mxu0
        %v5530 = vadd.f32 %v5390, %v5529
        %5531 = vmatmul.bf16.gmra.mxu0 %v5463
        %v5532 = vpop.f32.mrf.mxu0
        %v5533 = vadd.f32 %v5393, %v5532
        %v5534 = vpop.f32.mrf.mxu0
        %v5535 = vadd.f32 %v5395, %v5534
        %5536 = vmatmul.bf16.gmra.mxu0 %v5466
        %v5537 = vpop.f32.mrf.mxu0
        %v5538 = vadd.f32 %v5398, %v5537
        %v5539 = vpop.f32.mrf.mxu0
        %v5540 = vadd.f32 %v5400, %v5539
        %5541 = vmatmul.bf16.gmra.mxu0 %v5469
        %v5542 = vpop.f32.mrf.mxu0
        %v5543 = vadd.f32 %v5403, %v5542
        %v5544 = vpop.f32.mrf.mxu0
        %v5545 = vadd.f32 %v5405, %v5544
        %5546 = vmatmul.bf16.gmra.mxu0 %v5472
        %v5547 = vpop.f32.mrf.mxu0
        %v5548 = vadd.f32 %v5408, %v5547
        %v5549 = vpop.f32.mrf.mxu0
        %v5550 = vadd.f32 %v5410, %v5549
        %5551 = vmatmul.bf16.gmra.mxu0 %v5475
        %v5552 = vpop.f32.mrf.mxu0
        %v5553 = vadd.f32 %v5413, %v5552
        %v5554 = vpop.f32.mrf.mxu0
        %v5555 = vadd.f32 %v5415, %v5554
        %5556 = vmatmul.bf16.gmra.mxu0 %v5478
        %v5557 = vpop.f32.mrf.mxu0
        %v5558 = vadd.f32 %v5418, %v5557
        %v5559 = vpop.f32.mrf.mxu0
        %v5560 = vadd.f32 %v5420, %v5559
        %5561 = vmatmul.bf16.gmra.mxu0 %v5481
        %v5562 = vpop.f32.mrf.mxu0
        %v5563 = vadd.f32 %v5423, %v5562
        %v5564 = vpop.f32.mrf.mxu0
        %v5565 = vadd.f32 %v5425, %v5564
        %5566 = vmatmul.bf16.gmra.mxu0 %v5484
        %v5567 = vpop.f32.mrf.mxu0
        %v5568 = vadd.f32 %v5428, %v5567
        %v5569 = vpop.f32.mrf.mxu0
        %v5570 = vadd.f32 %v5430, %v5569
        %5571 = vmatmul.bf16.gmra.mxu0 %v5487
        %v5572 = vpop.f32.mrf.mxu0
        %v5573 = vadd.f32 %v5433, %v5572
        %v5574 = vpop.f32.mrf.mxu0
        %v5575 = vadd.f32 %v5435, %v5574
        %5576 = vmatmul.bf16.gmra.mxu0 %v5490
        %v5577 = vpop.f32.mrf.mxu0
        %v5578 = vadd.f32 %v5438, %v5577
        %v5579 = vpop.f32.mrf.mxu0
        %v5580 = vadd.f32 %v5440, %v5579
        %5581 = vmatmul.bf16.gmra.mxu0 %v5493
        %v5582 = vpop.f32.mrf.mxu0
        %v5583 = vadd.f32 %v5443, %v5582
        %v5584 = vpop.f32.mrf.mxu0
        %v5585 = vadd.f32 %v5445, %v5584
        %5586 = vdwg.mxu0
        %v5587 = vld [vmem:[%s1008 + $0x9] sm:$0xff]
        %v5588 = vld [vmem:[%s1008 + $0x11] sm:$0xff]
        %v5589 = vld [vmem:[%s1008 + $0x29] sm:$0xff]
        %v5590 = vld [vmem:[%s1008 + $0x31] sm:$0xff]
        %v5591 = vld [vmem:[%s1008 + $0x49] sm:$0xff]
        %v5592 = vld [vmem:[%s1008 + $0x51] sm:$0xff]
        %v5593 = vld [vmem:[%s1008 + $0x69] sm:$0xff]
        %v5594 = vld [vmem:[%s1008 + $0x71] sm:$0xff]
        %v5595 = vld [vmem:[%s1008 + $0x89] sm:$0xff]
        %v5596 = vld [vmem:[%s1008 + $0x91] sm:$0xff]
        %v5597 = vld [vmem:[%s1008 + $0xa9] sm:$0xff]
        %v5598 = vld [vmem:[%s1008 + $0xb1] sm:$0xff]
        %v5599 = vld [vmem:[%s1008 + $0xc9] sm:$0xff]
        %v5600 = vld [vmem:[%s1008 + $0xd1] sm:$0xff]
        %v5601 = vld [vmem:[%s1008 + $0xe9] sm:$0xff]
        %v5602 = vld [vmem:[%s1008 + $0xf1] sm:$0xff]
        %v5603 = vld [vmem:[%s1008 + $0x109] sm:$0xff]
        %v5604 = vld [vmem:[%s1008 + $0x111] sm:$0xff]
        %v5605 = vld [vmem:[%s1008 + $0x129] sm:$0xff]
        %v5606 = vld [vmem:[%s1008 + $0x131] sm:$0xff]
        %v5607 = vld [vmem:[%s1008 + $0x149] sm:$0xff]
        %v5608 = vld [vmem:[%s1008 + $0x151] sm:$0xff]
        %v5609 = vld [vmem:[%s1008 + $0x169] sm:$0xff]
        %v5610 = vld [vmem:[%s1008 + $0x171] sm:$0xff]
        %v5611 = vld [vmem:[%s1008 + $0x189] sm:$0xff]
        %v5612 = vld [vmem:[%s1008 + $0x191] sm:$0xff]
        %v5613 = vld [vmem:[%s1008 + $0x1a9] sm:$0xff]
        %v5614 = vld [vmem:[%s1008 + $0x1b1] sm:$0xff]
        %v5615 = vld [vmem:[%s1008 + $0x1c9] sm:$0xff]
        %v5616 = vld [vmem:[%s1008 + $0x1d1] sm:$0xff]
        %v5617 = vld [vmem:[%s1008 + $0x1e9] sm:$0xff]
        %v5618 = vld [vmem:[%s1008 + $0x1f1] sm:$0xff]
        %v5619 = vpack.c.bf16 %v5588, %v5587
        %v5620 = vpack.c.bf16 %v5590, %v5589
        %v5621 = vpack.c.bf16 %v5592, %v5591
        %v5622 = vpack.c.bf16 %v5594, %v5593
        %v5623 = vpack.c.bf16 %v5596, %v5595
        %v5624 = vpack.c.bf16 %v5598, %v5597
        %v5625 = vpack.c.bf16 %v5600, %v5599
        %v5626 = vpack.c.bf16 %v5602, %v5601
        %v5627 = vpack.c.bf16 %v5604, %v5603
        %v5628 = vpack.c.bf16 %v5606, %v5605
        %v5629 = vpack.c.bf16 %v5608, %v5607
        %v5630 = vpack.c.bf16 %v5610, %v5609
        %v5631 = vpack.c.bf16 %v5612, %v5611
        %v5632 = vpack.c.bf16 %v5614, %v5613
        %v5633 = vpack.c.bf16 %v5616, %v5615
        %v5634 = vpack.c.bf16 %v5618, %v5617
        %s5635 = scalar_lea.vmem %s9, 8
        %v5636 = vld [vmem:[%s5635] sm:$0xf]
        %v5638 = vsel %vm775, %v5619, 0
        %v5641 = vsel %vm775, %v5620, 0
        %v5644 = vsel %vm775, %v5621, 0
        %v5647 = vsel %vm775, %v5622, 0
        %v5650 = vsel %vm775, %v5623, 0
        %v5653 = vsel %vm775, %v5624, 0
        %v5656 = vsel %vm775, %v5625, 0
        %v5659 = vsel %vm775, %v5626, 0
        %v5662 = vsel %vm775, %v5627, 0
        %v5665 = vsel %vm775, %v5628, 0
        %v5668 = vsel %vm775, %v5629, 0
        %v5671 = vsel %vm775, %v5630, 0
        %v5674 = vsel %vm775, %v5631, 0
        %v5677 = vsel %vm775, %v5632, 0
        %v5680 = vsel %vm775, %v5633, 0
        %v5683 = vsel %vm775, %v5634, 0
        %v5686 = vsel %vm5354, %v5636, 0
        %5688 = vmatpush.bf16.msra.mxu0 0
        %5689 = vmatpush.bf16.msra.mxu0 0
        %5690 = vmatpush.bf16.msra.mxu0 0
        %5691 = vmatpush.bf16.msra.mxu0 0
        %5692 = vmatpush.bf16.msra.mxu0 0
        %5693 = vmatpush.bf16.msra.mxu0 0
        %5694 = vmatpush.bf16.msra.mxu0 0
        %5695 = vmatpush.bf16.msra.mxu0 %v5686
        %5696 = vmatmul.bf16.gmra.mxu0 %v5638
        %v5697 = vpop.f32.mrf.mxu0
        %v5698 = vadd.f32 0.0, %v5697
        %v5699 = vpop.f32.mrf.mxu0
        %v5700 = vadd.f32 0.0, %v5699
        %5701 = vmatmul.bf16.gmra.mxu0 %v5641
        %v5702 = vpop.f32.mrf.mxu0
        %v5703 = vadd.f32 0.0, %v5702
        %v5704 = vpop.f32.mrf.mxu0
        %v5705 = vadd.f32 0.0, %v5704
        %5706 = vmatmul.bf16.gmra.mxu0 %v5644
        %v5707 = vpop.f32.mrf.mxu0
        %v5708 = vadd.f32 0.0, %v5707
        %v5709 = vpop.f32.mrf.mxu0
        %v5710 = vadd.f32 0.0, %v5709
        %5711 = vmatmul.bf16.gmra.mxu0 %v5647
        %v5712 = vpop.f32.mrf.mxu0
        %v5713 = vadd.f32 0.0, %v5712
        %v5714 = vpop.f32.mrf.mxu0
        %v5715 = vadd.f32 0.0, %v5714
        %5716 = vmatmul.bf16.gmra.mxu0 %v5650
        %v5717 = vpop.f32.mrf.mxu0
        %v5718 = vadd.f32 0.0, %v5717
        %v5719 = vpop.f32.mrf.mxu0
        %v5720 = vadd.f32 0.0, %v5719
        %5721 = vmatmul.bf16.gmra.mxu0 %v5653
        %v5722 = vpop.f32.mrf.mxu0
        %v5723 = vadd.f32 0.0, %v5722
        %v5724 = vpop.f32.mrf.mxu0
        %v5725 = vadd.f32 0.0, %v5724
        %5726 = vmatmul.bf16.gmra.mxu0 %v5656
        %v5727 = vpop.f32.mrf.mxu0
        %v5728 = vadd.f32 0.0, %v5727
        %v5729 = vpop.f32.mrf.mxu0
        %v5730 = vadd.f32 0.0, %v5729
        %5731 = vmatmul.bf16.gmra.mxu0 %v5659
        %v5732 = vpop.f32.mrf.mxu0
        %v5733 = vadd.f32 0.0, %v5732
        %v5734 = vpop.f32.mrf.mxu0
        %v5735 = vadd.f32 0.0, %v5734
        %5736 = vmatmul.bf16.gmra.mxu0 %v5662
        %v5737 = vpop.f32.mrf.mxu0
        %v5738 = vadd.f32 0.0, %v5737
        %v5739 = vpop.f32.mrf.mxu0
        %v5740 = vadd.f32 0.0, %v5739
        %5741 = vmatmul.bf16.gmra.mxu0 %v5665
        %v5742 = vpop.f32.mrf.mxu0
        %v5743 = vadd.f32 0.0, %v5742
        %v5744 = vpop.f32.mrf.mxu0
        %v5745 = vadd.f32 0.0, %v5744
        %5746 = vmatmul.bf16.gmra.mxu0 %v5668
        %v5747 = vpop.f32.mrf.mxu0
        %v5748 = vadd.f32 0.0, %v5747
        %v5749 = vpop.f32.mrf.mxu0
        %v5750 = vadd.f32 0.0, %v5749
        %5751 = vmatmul.bf16.gmra.mxu0 %v5671
        %v5752 = vpop.f32.mrf.mxu0
        %v5753 = vadd.f32 0.0, %v5752
        %v5754 = vpop.f32.mrf.mxu0
        %v5755 = vadd.f32 0.0, %v5754
        %5756 = vmatmul.bf16.gmra.mxu0 %v5674
        %v5757 = vpop.f32.mrf.mxu0
        %v5758 = vadd.f32 0.0, %v5757
        %v5759 = vpop.f32.mrf.mxu0
        %v5760 = vadd.f32 0.0, %v5759
        %5761 = vmatmul.bf16.gmra.mxu0 %v5677
        %v5762 = vpop.f32.mrf.mxu0
        %v5763 = vadd.f32 0.0, %v5762
        %v5764 = vpop.f32.mrf.mxu0
        %v5765 = vadd.f32 0.0, %v5764
        %5766 = vmatmul.bf16.gmra.mxu0 %v5680
        %v5767 = vpop.f32.mrf.mxu0
        %v5768 = vadd.f32 0.0, %v5767
        %v5769 = vpop.f32.mrf.mxu0
        %v5770 = vadd.f32 0.0, %v5769
        %5771 = vmatmul.bf16.gmra.mxu0 %v5683
        %v5772 = vpop.f32.mrf.mxu0
        %v5773 = vadd.f32 0.0, %v5772
        %v5774 = vpop.f32.mrf.mxu0
        %v5775 = vadd.f32 0.0, %v5774
        %5776 = vdwg.mxu0
        %v5777 = vadd.f32 %v5508, %v5698
        %v5778 = vadd.f32 %v5510, %v5700
        %v5779 = vadd.f32 %v5513, %v5703
        %v5780 = vadd.f32 %v5515, %v5705
        %v5781 = vadd.f32 %v5518, %v5708
        %v5782 = vadd.f32 %v5520, %v5710
        %v5783 = vadd.f32 %v5523, %v5713
        %v5784 = vadd.f32 %v5525, %v5715
        %v5785 = vadd.f32 %v5528, %v5718
        %v5786 = vadd.f32 %v5530, %v5720
        %v5787 = vadd.f32 %v5533, %v5723
        %v5788 = vadd.f32 %v5535, %v5725
        %v5789 = vadd.f32 %v5538, %v5728
        %v5790 = vadd.f32 %v5540, %v5730
        %v5791 = vadd.f32 %v5543, %v5733
        %v5792 = vadd.f32 %v5545, %v5735
        %v5793 = vadd.f32 %v5548, %v5738
        %v5794 = vadd.f32 %v5550, %v5740
        %v5795 = vadd.f32 %v5553, %v5743
        %v5796 = vadd.f32 %v5555, %v5745
        %v5797 = vadd.f32 %v5558, %v5748
        %v5798 = vadd.f32 %v5560, %v5750
        %v5799 = vadd.f32 %v5563, %v5753
        %v5800 = vadd.f32 %v5565, %v5755
        %v5801 = vadd.f32 %v5568, %v5758
        %v5802 = vadd.f32 %v5570, %v5760
        %v5803 = vadd.f32 %v5573, %v5763
        %v5804 = vadd.f32 %v5575, %v5765
        %v5805 = vadd.f32 %v5578, %v5768
        %v5806 = vadd.f32 %v5580, %v5770
        %v5807 = vadd.f32 %v5583, %v5773
        %v5808 = vadd.f32 %v5585, %v5775
        %v5809 = vld [vmem:[%s10] sm:$0x1]
        %v5811 = vperm.slane %v5809, 0
        %v5813 = vadd.f32 %v5777, %v5811
        %v5814 = vadd.f32 %v5778, %v5811
        %v5815 = vadd.f32 %v5779, %v5811
        %v5816 = vadd.f32 %v5780, %v5811
        %v5817 = vadd.f32 %v5781, %v5811
        %v5818 = vadd.f32 %v5782, %v5811
        %v5819 = vadd.f32 %v5783, %v5811
        %v5820 = vadd.f32 %v5784, %v5811
        %v5821 = vadd.f32 %v5785, %v5811
        %v5822 = vadd.f32 %v5786, %v5811
        %v5823 = vadd.f32 %v5787, %v5811
        %v5824 = vadd.f32 %v5788, %v5811
        %v5825 = vadd.f32 %v5789, %v5811
        %v5826 = vadd.f32 %v5790, %v5811
        %v5827 = vadd.f32 %v5791, %v5811
        %v5828 = vadd.f32 %v5792, %v5811
        %v5829 = vadd.f32 %v5793, %v5811
        %v5830 = vadd.f32 %v5794, %v5811
        %v5831 = vadd.f32 %v5795, %v5811
        %v5832 = vadd.f32 %v5796, %v5811
        %v5833 = vadd.f32 %v5797, %v5811
        %v5834 = vadd.f32 %v5798, %v5811
        %v5835 = vadd.f32 %v5799, %v5811
        %v5836 = vadd.f32 %v5800, %v5811
        %v5837 = vadd.f32 %v5801, %v5811
        %v5838 = vadd.f32 %v5802, %v5811
        %v5839 = vadd.f32 %v5803, %v5811
        %v5840 = vadd.f32 %v5804, %v5811
        %v5841 = vadd.f32 %v5805, %v5811
        %v5842 = vadd.f32 %v5806, %v5811
        %v5843 = vadd.f32 %v5807, %v5811
        %v5844 = vadd.f32 %v5808, %v5811
        %v5845 = vmax.f32 %v5813, 0.0
        %v5846 = vmax.f32 %v5814, 0.0
        %v5847 = vmax.f32 %v5815, 0.0
        %v5848 = vmax.f32 %v5816, 0.0
        %v5849 = vmax.f32 %v5817, 0.0
        %v5850 = vmax.f32 %v5818, 0.0
        %v5851 = vmax.f32 %v5819, 0.0
        %v5852 = vmax.f32 %v5820, 0.0
        %v5853 = vmax.f32 %v5821, 0.0
        %v5854 = vmax.f32 %v5822, 0.0
        %v5855 = vmax.f32 %v5823, 0.0
        %v5856 = vmax.f32 %v5824, 0.0
        %v5857 = vmax.f32 %v5825, 0.0
        %v5858 = vmax.f32 %v5826, 0.0
        %v5859 = vmax.f32 %v5827, 0.0
        %v5860 = vmax.f32 %v5828, 0.0
        %v5861 = vmax.f32 %v5829, 0.0
        %v5862 = vmax.f32 %v5830, 0.0
        %v5863 = vmax.f32 %v5831, 0.0
        %v5864 = vmax.f32 %v5832, 0.0
        %v5865 = vmax.f32 %v5833, 0.0
        %v5866 = vmax.f32 %v5834, 0.0
        %v5867 = vmax.f32 %v5835, 0.0
        %v5868 = vmax.f32 %v5836, 0.0
        %v5869 = vmax.f32 %v5837, 0.0
        %v5870 = vmax.f32 %v5838, 0.0
        %v5871 = vmax.f32 %v5839, 0.0
        %v5872 = vmax.f32 %v5840, 0.0
        %v5873 = vmax.f32 %v5841, 0.0
        %v5874 = vmax.f32 %v5842, 0.0
        %v5875 = vmax.f32 %v5843, 0.0
        %v5876 = vmax.f32 %v5844, 0.0
        %5909 = vrot.lane.b32.xlu0 %v5845, 24
        %v5910 = vpop.permute.xlu0 %5909
        %5911 = vrot.lane.b32.xlu0 %v5846, 24
        %v5912 = vpop.permute.xlu0 %5911
        %5913 = vrot.lane.b32.xlu0 %v5847, 24
        %v5914 = vpop.permute.xlu0 %5913
        %5915 = vrot.lane.b32.xlu0 %v5848, 24
        %v5916 = vpop.permute.xlu0 %5915
        %5917 = vrot.lane.b32.xlu0 %v5849, 24
        %v5918 = vpop.permute.xlu0 %5917
        %5919 = vrot.lane.b32.xlu0 %v5850, 24
        %v5920 = vpop.permute.xlu0 %5919
        %5921 = vrot.lane.b32.xlu0 %v5851, 24
        %v5922 = vpop.permute.xlu0 %5921
        %5923 = vrot.lane.b32.xlu0 %v5852, 24
        %v5924 = vpop.permute.xlu0 %5923
        %5925 = vrot.lane.b32.xlu0 %v5853, 24
        %v5926 = vpop.permute.xlu0 %5925
        %5927 = vrot.lane.b32.xlu0 %v5854, 24
        %v5928 = vpop.permute.xlu0 %5927
        %5929 = vrot.lane.b32.xlu0 %v5855, 24
        %v5930 = vpop.permute.xlu0 %5929
        %5931 = vrot.lane.b32.xlu0 %v5856, 24
        %v5932 = vpop.permute.xlu0 %5931
        %5933 = vrot.lane.b32.xlu0 %v5857, 24
        %v5934 = vpop.permute.xlu0 %5933
        %5935 = vrot.lane.b32.xlu0 %v5858, 24
        %v5936 = vpop.permute.xlu0 %5935
        %5937 = vrot.lane.b32.xlu0 %v5859, 24
        %v5938 = vpop.permute.xlu0 %5937
        %5939 = vrot.lane.b32.xlu0 %v5860, 24
        %v5940 = vpop.permute.xlu0 %5939
        %5941 = vrot.lane.b32.xlu0 %v5861, 24
        %v5942 = vpop.permute.xlu0 %5941
        %5943 = vrot.lane.b32.xlu0 %v5862, 24
        %v5944 = vpop.permute.xlu0 %5943
        %5945 = vrot.lane.b32.xlu0 %v5863, 24
        %v5946 = vpop.permute.xlu0 %5945
        %5947 = vrot.lane.b32.xlu0 %v5864, 24
        %v5948 = vpop.permute.xlu0 %5947
        %5949 = vrot.lane.b32.xlu0 %v5865, 24
        %v5950 = vpop.permute.xlu0 %5949
        %5951 = vrot.lane.b32.xlu0 %v5866, 24
        %v5952 = vpop.permute.xlu0 %5951
        %5953 = vrot.lane.b32.xlu0 %v5867, 24
        %v5954 = vpop.permute.xlu0 %5953
        %5955 = vrot.lane.b32.xlu0 %v5868, 24
        %v5956 = vpop.permute.xlu0 %5955
        %5957 = vrot.lane.b32.xlu0 %v5869, 24
        %v5958 = vpop.permute.xlu0 %5957
        %5959 = vrot.lane.b32.xlu0 %v5870, 24
        %v5960 = vpop.permute.xlu0 %5959
        %5961 = vrot.lane.b32.xlu0 %v5871, 24
        %v5962 = vpop.permute.xlu0 %5961
        %5963 = vrot.lane.b32.xlu0 %v5872, 24
        %v5964 = vpop.permute.xlu0 %5963
        %5965 = vrot.lane.b32.xlu0 %v5873, 24
        %v5966 = vpop.permute.xlu0 %5965
        %5967 = vrot.lane.b32.xlu0 %v5874, 24
        %v5968 = vpop.permute.xlu0 %5967
        %5969 = vrot.lane.b32.xlu0 %v5875, 24
        %v5970 = vpop.permute.xlu0 %5969
        %5971 = vrot.lane.b32.xlu0 %v5876, 24
        %v5972 = vpop.permute.xlu0 %5971
        %vm6005 = vcmask 261312
        %6006 = vst.msk [vmem:[%s541] sm:$0xff] %vm6005, %v5910
        %6007 = vst.msk [vmem:[%s541 + $0x8] sm:$0xff] %vm6005, %v5912
        %6008 = vst.msk [vmem:[%s541 + $0x10] sm:$0xff] %vm6005, %v5914
        %6009 = vst.msk [vmem:[%s541 + $0x18] sm:$0xff] %vm6005, %v5916
        %6010 = vst.msk [vmem:[%s541 + $0x20] sm:$0xff] %vm6005, %v5918
        %6011 = vst.msk [vmem:[%s541 + $0x28] sm:$0xff] %vm6005, %v5920
        %6012 = vst.msk [vmem:[%s541 + $0x30] sm:$0xff] %vm6005, %v5922
        %6013 = vst.msk [vmem:[%s541 + $0x38] sm:$0xff] %vm6005, %v5924
        %6014 = vst.msk [vmem:[%s541 + $0x40] sm:$0xff] %vm6005, %v5926
        %6015 = vst.msk [vmem:[%s541 + $0x48] sm:$0xff] %vm6005, %v5928
        %6016 = vst.msk [vmem:[%s541 + $0x50] sm:$0xff] %vm6005, %v5930
        %6017 = vst.msk [vmem:[%s541 + $0x58] sm:$0xff] %vm6005, %v5932
        %6018 = vst.msk [vmem:[%s541 + $0x60] sm:$0xff] %vm6005, %v5934
        %6019 = vst.msk [vmem:[%s541 + $0x68] sm:$0xff] %vm6005, %v5936
        %6020 = vst.msk [vmem:[%s541 + $0x70] sm:$0xff] %vm6005, %v5938
        %6021 = vst.msk [vmem:[%s541 + $0x78] sm:$0xff] %vm6005, %v5940
        %6022 = vst.msk [vmem:[%s541 + $0x80] sm:$0xff] %vm6005, %v5942
        %6023 = vst.msk [vmem:[%s541 + $0x88] sm:$0xff] %vm6005, %v5944
        %6024 = vst.msk [vmem:[%s541 + $0x90] sm:$0xff] %vm6005, %v5946
        %6025 = vst.msk [vmem:[%s541 + $0x98] sm:$0xff] %vm6005, %v5948
        %6026 = vst.msk [vmem:[%s541 + $0xa0] sm:$0xff] %vm6005, %v5950
        %6027 = vst.msk [vmem:[%s541 + $0xa8] sm:$0xff] %vm6005, %v5952
        %6028 = vst.msk [vmem:[%s541 + $0xb0] sm:$0xff] %vm6005, %v5954
        %6029 = vst.msk [vmem:[%s541 + $0xb8] sm:$0xff] %vm6005, %v5956
        %6030 = vst.msk [vmem:[%s541 + $0xc0] sm:$0xff] %vm6005, %v5958
        %6031 = vst.msk [vmem:[%s541 + $0xc8] sm:$0xff] %vm6005, %v5960
        %6032 = vst.msk [vmem:[%s541 + $0xd0] sm:$0xff] %vm6005, %v5962
        %6033 = vst.msk [vmem:[%s541 + $0xd8] sm:$0xff] %vm6005, %v5964
        %6034 = vst.msk [vmem:[%s541 + $0xe0] sm:$0xff] %vm6005, %v5966
        %6035 = vst.msk [vmem:[%s541 + $0xe8] sm:$0xff] %vm6005, %v5968
        %6036 = vst.msk [vmem:[%s541 + $0xf0] sm:$0xff] %vm6005, %v5970
        %6037 = vst.msk [vmem:[%s541 + $0xf8] sm:$0xff] %vm6005, %v5972
        %6038 = vst.msk [vmem:[#allocation2] sm:$0xff] %vm775, 0.0
        %6039 = vst.msk [vmem:[#allocation2 + $0x8] sm:$0xff] %vm775, 0.0
        %6040 = vst.msk [vmem:[#allocation2 + $0x10] sm:$0xff] %vm775, 0.0
        %6041 = vst.msk [vmem:[#allocation2 + $0x18] sm:$0xff] %vm775, 0.0
        %6042 = vst.msk [vmem:[#allocation2 + $0x20] sm:$0xff] %vm775, 0.0
        %6043 = vst.msk [vmem:[#allocation2 + $0x28] sm:$0xff] %vm775, 0.0
        %6044 = vst.msk [vmem:[#allocation2 + $0x30] sm:$0xff] %vm775, 0.0
        %6045 = vst.msk [vmem:[#allocation2 + $0x38] sm:$0xff] %vm775, 0.0
        %6046 = vst.msk [vmem:[#allocation2 + $0x40] sm:$0xff] %vm775, 0.0
        %6047 = vst.msk [vmem:[#allocation2 + $0x48] sm:$0xff] %vm775, 0.0
        %6048 = vst.msk [vmem:[#allocation2 + $0x50] sm:$0xff] %vm775, 0.0
        %6049 = vst.msk [vmem:[#allocation2 + $0x58] sm:$0xff] %vm775, 0.0
        %6050 = vst.msk [vmem:[#allocation2 + $0x60] sm:$0xff] %vm775, 0.0
        %6051 = vst.msk [vmem:[#allocation2 + $0x68] sm:$0xff] %vm775, 0.0
        %6052 = vst.msk [vmem:[#allocation2 + $0x70] sm:$0xff] %vm775, 0.0
        %6053 = vst.msk [vmem:[#allocation2 + $0x78] sm:$0xff] %vm775, 0.0
        %6054 = vst.msk [vmem:[#allocation2 + $0x80] sm:$0xff] %vm775, 0.0
        %6055 = vst.msk [vmem:[#allocation2 + $0x88] sm:$0xff] %vm775, 0.0
        %6056 = vst.msk [vmem:[#allocation2 + $0x90] sm:$0xff] %vm775, 0.0
        %6057 = vst.msk [vmem:[#allocation2 + $0x98] sm:$0xff] %vm775, 0.0
        %6058 = vst.msk [vmem:[#allocation2 + $0xa0] sm:$0xff] %vm775, 0.0
        %6059 = vst.msk [vmem:[#allocation2 + $0xa8] sm:$0xff] %vm775, 0.0
        %6060 = vst.msk [vmem:[#allocation2 + $0xb0] sm:$0xff] %vm775, 0.0
        %6061 = vst.msk [vmem:[#allocation2 + $0xb8] sm:$0xff] %vm775, 0.0
        %6062 = vst.msk [vmem:[#allocation2 + $0xc0] sm:$0xff] %vm775, 0.0
        %6063 = vst.msk [vmem:[#allocation2 + $0xc8] sm:$0xff] %vm775, 0.0
        %6064 = vst.msk [vmem:[#allocation2 + $0xd0] sm:$0xff] %vm775, 0.0
        %6065 = vst.msk [vmem:[#allocation2 + $0xd8] sm:$0xff] %vm775, 0.0
        %6066 = vst.msk [vmem:[#allocation2 + $0xe0] sm:$0xff] %vm775, 0.0
        %6067 = vst.msk [vmem:[#allocation2 + $0xe8] sm:$0xff] %vm775, 0.0
        %6068 = vst.msk [vmem:[#allocation2 + $0xf0] sm:$0xff] %vm775, 0.0
        %6069 = vst.msk [vmem:[#allocation2 + $0xf8] sm:$0xff] %vm775, 0.0
        %6070 = vst.msk [vmem:[#allocation2 + $0x100] sm:$0xff] %vm775, 0.0
        %6071 = vst.msk [vmem:[#allocation2 + $0x108] sm:$0xff] %vm775, 0.0
        %6072 = vst.msk [vmem:[#allocation2 + $0x110] sm:$0xff] %vm775, 0.0
        %6073 = vst.msk [vmem:[#allocation2 + $0x118] sm:$0xff] %vm775, 0.0
        %6074 = vst.msk [vmem:[#allocation2 + $0x120] sm:$0xff] %vm775, 0.0
        %6075 = vst.msk [vmem:[#allocation2 + $0x128] sm:$0xff] %vm775, 0.0
        %6076 = vst.msk [vmem:[#allocation2 + $0x130] sm:$0xff] %vm775, 0.0
        %6077 = vst.msk [vmem:[#allocation2 + $0x138] sm:$0xff] %vm775, 0.0
        %6078 = vst.msk [vmem:[#allocation2 + $0x140] sm:$0xff] %vm775, 0.0
        %6079 = vst.msk [vmem:[#allocation2 + $0x148] sm:$0xff] %vm775, 0.0
        %6080 = vst.msk [vmem:[#allocation2 + $0x150] sm:$0xff] %vm775, 0.0
        %6081 = vst.msk [vmem:[#allocation2 + $0x158] sm:$0xff] %vm775, 0.0
        %6082 = vst.msk [vmem:[#allocation2 + $0x160] sm:$0xff] %vm775, 0.0
        %6083 = vst.msk [vmem:[#allocation2 + $0x168] sm:$0xff] %vm775, 0.0
        %6084 = vst.msk [vmem:[#allocation2 + $0x170] sm:$0xff] %vm775, 0.0
        %6085 = vst.msk [vmem:[#allocation2 + $0x178] sm:$0xff] %vm775, 0.0
        %6086 = vst.msk [vmem:[#allocation2 + $0x180] sm:$0xff] %vm775, 0.0
        %6087 = vst.msk [vmem:[#allocation2 + $0x188] sm:$0xff] %vm775, 0.0
        %6088 = vst.msk [vmem:[#allocation2 + $0x190] sm:$0xff] %vm775, 0.0
        %6089 = vst.msk [vmem:[#allocation2 + $0x198] sm:$0xff] %vm775, 0.0
        %6090 = vst.msk [vmem:[#allocation2 + $0x1a0] sm:$0xff] %vm775, 0.0
        %6091 = vst.msk [vmem:[#allocation2 + $0x1a8] sm:$0xff] %vm775, 0.0
        %6092 = vst.msk [vmem:[#allocation2 + $0x1b0] sm:$0xff] %vm775, 0.0
        %6093 = vst.msk [vmem:[#allocation2 + $0x1b8] sm:$0xff] %vm775, 0.0
        %6094 = vst.msk [vmem:[#allocation2 + $0x1c0] sm:$0xff] %vm775, 0.0
        %6095 = vst.msk [vmem:[#allocation2 + $0x1c8] sm:$0xff] %vm775, 0.0
        %6096 = vst.msk [vmem:[#allocation2 + $0x1d0] sm:$0xff] %vm775, 0.0
        %6097 = vst.msk [vmem:[#allocation2 + $0x1d8] sm:$0xff] %vm775, 0.0
        %6098 = vst.msk [vmem:[#allocation2 + $0x1e0] sm:$0xff] %vm775, 0.0
        %6099 = vst.msk [vmem:[#allocation2 + $0x1e8] sm:$0xff] %vm775, 0.0
        %6100 = vst.msk [vmem:[#allocation2 + $0x1f0] sm:$0xff] %vm775, 0.0
        %6101 = vst.msk [vmem:[#allocation2 + $0x1f8] sm:$0xff] %vm775, 0.0
        %6102 = vst.msk [vmem:[#allocation2 + $0x200] sm:$0xff] %vm775, 0.0
        %6103 = vst.msk [vmem:[#allocation2 + $0x208] sm:$0xff] %vm775, 0.0
        %6104 = vst.msk [vmem:[#allocation2 + $0x210] sm:$0xff] %vm775, 0.0
        %6105 = vst.msk [vmem:[#allocation2 + $0x218] sm:$0xff] %vm775, 0.0
        %6106 = vst.msk [vmem:[#allocation2 + $0x220] sm:$0xff] %vm775, 0.0
        %6107 = vst.msk [vmem:[#allocation2 + $0x228] sm:$0xff] %vm775, 0.0
        %6108 = vst.msk [vmem:[#allocation2 + $0x230] sm:$0xff] %vm775, 0.0
        %6109 = vst.msk [vmem:[#allocation2 + $0x238] sm:$0xff] %vm775, 0.0
        %6110 = vrot.lane.b32.xlu0 %v743, 108
        %v6111 = vpop.permute.xlu0 %6110
        %6112 = vrot.lane.b32.xlu0 %v744, 108
        %v6113 = vpop.permute.xlu0 %6112
        %6114 = vrot.lane.b32.xlu0 %v745, 108
        %v6115 = vpop.permute.xlu0 %6114
        %6116 = vrot.lane.b32.xlu0 %v746, 108
        %v6117 = vpop.permute.xlu0 %6116
        %6118 = vrot.lane.b32.xlu0 %v747, 108
        %v6119 = vpop.permute.xlu0 %6118
        %6120 = vrot.lane.b32.xlu0 %v748, 108
        %v6121 = vpop.permute.xlu0 %6120
        %6122 = vrot.lane.b32.xlu0 %v749, 108
        %v6123 = vpop.permute.xlu0 %6122
        %6124 = vrot.lane.b32.xlu0 %v750, 108
        %v6125 = vpop.permute.xlu0 %6124
        %6126 = vrot.lane.b32.xlu0 %v751, 108
        %v6127 = vpop.permute.xlu0 %6126
        %6128 = vrot.lane.b32.xlu0 %v752, 108
        %v6129 = vpop.permute.xlu0 %6128
        %6130 = vrot.lane.b32.xlu0 %v753, 108
        %v6131 = vpop.permute.xlu0 %6130
        %6132 = vrot.lane.b32.xlu0 %v754, 108
        %v6133 = vpop.permute.xlu0 %6132
        %6134 = vrot.lane.b32.xlu0 %v755, 108
        %v6135 = vpop.permute.xlu0 %6134
        %6136 = vrot.lane.b32.xlu0 %v756, 108
        %v6137 = vpop.permute.xlu0 %6136
        %6138 = vrot.lane.b32.xlu0 %v757, 108
        %v6139 = vpop.permute.xlu0 %6138
        %6140 = vrot.lane.b32.xlu0 %v758, 108
        %v6141 = vpop.permute.xlu0 %6140
        %6142 = vrot.lane.b32.xlu0 %v759, 108
        %v6143 = vpop.permute.xlu0 %6142
        %6144 = vrot.lane.b32.xlu0 %v760, 108
        %v6145 = vpop.permute.xlu0 %6144
        %6146 = vrot.lane.b32.xlu0 %v761, 108
        %v6147 = vpop.permute.xlu0 %6146
        %6148 = vrot.lane.b32.xlu0 %v762, 108
        %v6149 = vpop.permute.xlu0 %6148
        %6150 = vrot.lane.b32.xlu0 %v763, 108
        %v6151 = vpop.permute.xlu0 %6150
        %6152 = vrot.lane.b32.xlu0 %v764, 108
        %v6153 = vpop.permute.xlu0 %6152
        %6154 = vrot.lane.b32.xlu0 %v765, 108
        %v6155 = vpop.permute.xlu0 %6154
        %6156 = vrot.lane.b32.xlu0 %v766, 108
        %v6157 = vpop.permute.xlu0 %6156
        %6158 = vrot.lane.b32.xlu0 %v767, 108
        %v6159 = vpop.permute.xlu0 %6158
        %6160 = vrot.lane.b32.xlu0 %v768, 108
        %v6161 = vpop.permute.xlu0 %6160
        %6162 = vrot.lane.b32.xlu0 %v769, 108
        %v6163 = vpop.permute.xlu0 %6162
        %6164 = vrot.lane.b32.xlu0 %v770, 108
        %v6165 = vpop.permute.xlu0 %6164
        %6166 = vrot.lane.b32.xlu0 %v771, 108
        %v6167 = vpop.permute.xlu0 %6166
        %6168 = vrot.lane.b32.xlu0 %v772, 108
        %v6169 = vpop.permute.xlu0 %6168
        %6170 = vrot.lane.b32.xlu0 %v773, 108
        %v6171 = vpop.permute.xlu0 %6170
        %6172 = vrot.lane.b32.xlu0 %v774, 108
        %v6173 = vpop.permute.xlu0 %6172
        %6206 = vst.msk [vmem:[%s1008 + $0x8] sm:$0xff] %vm601, %v6111
        %6207 = vst.msk [vmem:[%s1008 + $0x10] sm:$0xff] %vm601, %v6113
        %6208 = vst.msk [vmem:[%s1008 + $0x28] sm:$0xff] %vm601, %v6115
        %6209 = vst.msk [vmem:[%s1008 + $0x30] sm:$0xff] %vm601, %v6117
        %6210 = vst.msk [vmem:[%s1008 + $0x48] sm:$0xff] %vm601, %v6119
        %6211 = vst.msk [vmem:[%s1008 + $0x50] sm:$0xff] %vm601, %v6121
        %6212 = vst.msk [vmem:[%s1008 + $0x68] sm:$0xff] %vm601, %v6123
        %6213 = vst.msk [vmem:[%s1008 + $0x70] sm:$0xff] %vm601, %v6125
        %6214 = vst.msk [vmem:[%s1008 + $0x88] sm:$0xff] %vm601, %v6127
        %6215 = vst.msk [vmem:[%s1008 + $0x90] sm:$0xff] %vm601, %v6129
        %6216 = vst.msk [vmem:[%s1008 + $0xa8] sm:$0xff] %vm601, %v6131
        %6217 = vst.msk [vmem:[%s1008 + $0xb0] sm:$0xff] %vm601, %v6133
        %6218 = vst.msk [vmem:[%s1008 + $0xc8] sm:$0xff] %vm601, %v6135
        %6219 = vst.msk [vmem:[%s1008 + $0xd0] sm:$0xff] %vm601, %v6137
        %6220 = vst.msk [vmem:[%s1008 + $0xe8] sm:$0xff] %vm601, %v6139
        %6221 = vst.msk [vmem:[%s1008 + $0xf0] sm:$0xff] %vm601, %v6141
        %6222 = vst.msk [vmem:[%s1008 + $0x108] sm:$0xff] %vm601, %v6143
        %6223 = vst.msk [vmem:[%s1008 + $0x110] sm:$0xff] %vm601, %v6145
        %6224 = vst.msk [vmem:[%s1008 + $0x128] sm:$0xff] %vm601, %v6147
        %6225 = vst.msk [vmem:[%s1008 + $0x130] sm:$0xff] %vm601, %v6149
        %6226 = vst.msk [vmem:[%s1008 + $0x148] sm:$0xff] %vm601, %v6151
        %6227 = vst.msk [vmem:[%s1008 + $0x150] sm:$0xff] %vm601, %v6153
        %6228 = vst.msk [vmem:[%s1008 + $0x168] sm:$0xff] %vm601, %v6155
        %6229 = vst.msk [vmem:[%s1008 + $0x170] sm:$0xff] %vm601, %v6157
        %6230 = vst.msk [vmem:[%s1008 + $0x188] sm:$0xff] %vm601, %v6159
        %6231 = vst.msk [vmem:[%s1008 + $0x190] sm:$0xff] %vm601, %v6161
        %6232 = vst.msk [vmem:[%s1008 + $0x1a8] sm:$0xff] %vm601, %v6163
        %6233 = vst.msk [vmem:[%s1008 + $0x1b0] sm:$0xff] %vm601, %v6165
        %6234 = vst.msk [vmem:[%s1008 + $0x1c8] sm:$0xff] %vm601, %v6167
        %6235 = vst.msk [vmem:[%s1008 + $0x1d0] sm:$0xff] %vm601, %v6169
        %6236 = vst.msk [vmem:[%s1008 + $0x1e8] sm:$0xff] %vm601, %v6171
        %6237 = vst.msk [vmem:[%s1008 + $0x1f0] sm:$0xff] %vm601, %v6173
        %v6238 = vld [vmem:[#allocation2 + $0x7] sm:$0xff]
        %v6239 = vld [vmem:[#allocation2 + $0xf] sm:$0xff]
        %v6240 = vld [vmem:[#allocation2 + $0x27] sm:$0xff]
        %v6241 = vld [vmem:[#allocation2 + $0x2f] sm:$0xff]
        %v6242 = vld [vmem:[#allocation2 + $0x47] sm:$0xff]
        %v6243 = vld [vmem:[#allocation2 + $0x4f] sm:$0xff]
        %v6244 = vld [vmem:[#allocation2 + $0x67] sm:$0xff]
        %v6245 = vld [vmem:[#allocation2 + $0x6f] sm:$0xff]
        %v6246 = vld [vmem:[#allocation2 + $0x87] sm:$0xff]
        %v6247 = vld [vmem:[#allocation2 + $0x8f] sm:$0xff]
        %v6248 = vld [vmem:[#allocation2 + $0xa7] sm:$0xff]
        %v6249 = vld [vmem:[#allocation2 + $0xaf] sm:$0xff]
        %v6250 = vld [vmem:[#allocation2 + $0xc7] sm:$0xff]
        %v6251 = vld [vmem:[#allocation2 + $0xcf] sm:$0xff]
        %v6252 = vld [vmem:[#allocation2 + $0xe7] sm:$0xff]
        %v6253 = vld [vmem:[#allocation2 + $0xef] sm:$0xff]
        %v6254 = vld [vmem:[#allocation2 + $0x107] sm:$0xff]
        %v6255 = vld [vmem:[#allocation2 + $0x10f] sm:$0xff]
        %v6256 = vld [vmem:[#allocation2 + $0x127] sm:$0xff]
        %v6257 = vld [vmem:[#allocation2 + $0x12f] sm:$0xff]
        %v6258 = vld [vmem:[#allocation2 + $0x147] sm:$0xff]
        %v6259 = vld [vmem:[#allocation2 + $0x14f] sm:$0xff]
        %v6260 = vld [vmem:[#allocation2 + $0x167] sm:$0xff]
        %v6261 = vld [vmem:[#allocation2 + $0x16f] sm:$0xff]
        %v6262 = vld [vmem:[#allocation2 + $0x187] sm:$0xff]
        %v6263 = vld [vmem:[#allocation2 + $0x18f] sm:$0xff]
        %v6264 = vld [vmem:[#allocation2 + $0x1a7] sm:$0xff]
        %v6265 = vld [vmem:[#allocation2 + $0x1af] sm:$0xff]
        %v6266 = vld [vmem:[#allocation2 + $0x1c7] sm:$0xff]
        %v6267 = vld [vmem:[#allocation2 + $0x1cf] sm:$0xff]
        %v6268 = vld [vmem:[#allocation2 + $0x1e7] sm:$0xff]
        %v6269 = vld [vmem:[#allocation2 + $0x1ef] sm:$0xff]
        %v6270 = vpack.c.bf16 %v6239, %v6238
        %v6271 = vpack.c.bf16 %v6241, %v6240
        %v6272 = vpack.c.bf16 %v6243, %v6242
        %v6273 = vpack.c.bf16 %v6245, %v6244
        %v6274 = vpack.c.bf16 %v6247, %v6246
        %v6275 = vpack.c.bf16 %v6249, %v6248
        %v6276 = vpack.c.bf16 %v6251, %v6250
        %v6277 = vpack.c.bf16 %v6253, %v6252
        %v6278 = vpack.c.bf16 %v6255, %v6254
        %v6279 = vpack.c.bf16 %v6257, %v6256
        %v6280 = vpack.c.bf16 %v6259, %v6258
        %v6281 = vpack.c.bf16 %v6261, %v6260
        %v6282 = vpack.c.bf16 %v6263, %v6262
        %v6283 = vpack.c.bf16 %v6265, %v6264
        %v6284 = vpack.c.bf16 %v6267, %v6266
        %v6285 = vpack.c.bf16 %v6269, %v6268
        %v6286 = vld [vmem:[%s11] sm:$0x3]
        %v6287 = vld [vmem:[#allocation2 + $0x8] sm:$0xff]
        %v6288 = vld [vmem:[#allocation2 + $0x10] sm:$0xff]
        %v6289 = vld [vmem:[#allocation2 + $0x28] sm:$0xff]
        %v6290 = vld [vmem:[#allocation2 + $0x30] sm:$0xff]
        %v6291 = vld [vmem:[#allocation2 + $0x48] sm:$0xff]
        %v6292 = vld [vmem:[#allocation2 + $0x50] sm:$0xff]
        %v6293 = vld [vmem:[#allocation2 + $0x68] sm:$0xff]
        %v6294 = vld [vmem:[#allocation2 + $0x70] sm:$0xff]
        %v6295 = vld [vmem:[#allocation2 + $0x88] sm:$0xff]
        %v6296 = vld [vmem:[#allocation2 + $0x90] sm:$0xff]
        %v6297 = vld [vmem:[#allocation2 + $0xa8] sm:$0xff]
        %v6298 = vld [vmem:[#allocation2 + $0xb0] sm:$0xff]
        %v6299 = vld [vmem:[#allocation2 + $0xc8] sm:$0xff]
        %v6300 = vld [vmem:[#allocation2 + $0xd0] sm:$0xff]
        %v6301 = vld [vmem:[#allocation2 + $0xe8] sm:$0xff]
        %v6302 = vld [vmem:[#allocation2 + $0xf0] sm:$0xff]
        %v6303 = vld [vmem:[#allocation2 + $0x108] sm:$0xff]
        %v6304 = vld [vmem:[#allocation2 + $0x110] sm:$0xff]
        %v6305 = vld [vmem:[#allocation2 + $0x128] sm:$0xff]
        %v6306 = vld [vmem:[#allocation2 + $0x130] sm:$0xff]
        %v6307 = vld [vmem:[#allocation2 + $0x148] sm:$0xff]
        %v6308 = vld [vmem:[#allocation2 + $0x150] sm:$0xff]
        %v6309 = vld [vmem:[#allocation2 + $0x168] sm:$0xff]
        %v6310 = vld [vmem:[#allocation2 + $0x170] sm:$0xff]
        %v6311 = vld [vmem:[#allocation2 + $0x188] sm:$0xff]
        %v6312 = vld [vmem:[#allocation2 + $0x190] sm:$0xff]
        %v6313 = vld [vmem:[#allocation2 + $0x1a8] sm:$0xff]
        %v6314 = vld [vmem:[#allocation2 + $0x1b0] sm:$0xff]
        %v6315 = vld [vmem:[#allocation2 + $0x1c8] sm:$0xff]
        %v6316 = vld [vmem:[#allocation2 + $0x1d0] sm:$0xff]
        %v6317 = vld [vmem:[#allocation2 + $0x1e8] sm:$0xff]
        %v6318 = vld [vmem:[#allocation2 + $0x1f0] sm:$0xff]
        %v6319 = vpack.c.bf16 %v6288, %v6287
        %v6320 = vpack.c.bf16 %v6290, %v6289
        %v6321 = vpack.c.bf16 %v6292, %v6291
        %v6322 = vpack.c.bf16 %v6294, %v6293
        %v6323 = vpack.c.bf16 %v6296, %v6295
        %v6324 = vpack.c.bf16 %v6298, %v6297
        %v6325 = vpack.c.bf16 %v6300, %v6299
        %v6326 = vpack.c.bf16 %v6302, %v6301
        %v6327 = vpack.c.bf16 %v6304, %v6303
        %v6328 = vpack.c.bf16 %v6306, %v6305
        %v6329 = vpack.c.bf16 %v6308, %v6307
        %v6330 = vpack.c.bf16 %v6310, %v6309
        %v6331 = vpack.c.bf16 %v6312, %v6311
        %v6332 = vpack.c.bf16 %v6314, %v6313
        %v6333 = vpack.c.bf16 %v6316, %v6315
        %v6334 = vpack.c.bf16 %v6318, %v6317
        %s6335 = scalar_lea.vmem %s11, 2
        %v6336 = vld [vmem:[%s6335] sm:$0x3]
        %v6338 = vsel %vm601, %v6319, 0
        %v6341 = vsel %vm601, %v6320, 0
        %v6344 = vsel %vm601, %v6321, 0
        %v6347 = vsel %vm601, %v6322, 0
        %v6350 = vsel %vm601, %v6323, 0
        %v6353 = vsel %vm601, %v6324, 0
        %v6356 = vsel %vm601, %v6325, 0
        %v6359 = vsel %vm601, %v6326, 0
        %v6362 = vsel %vm601, %v6327, 0
        %v6365 = vsel %vm601, %v6328, 0
        %v6368 = vsel %vm601, %v6329, 0
        %v6371 = vsel %vm601, %v6330, 0
        %v6374 = vsel %vm601, %v6331, 0
        %v6377 = vsel %vm601, %v6332, 0
        %v6380 = vsel %vm601, %v6333, 0
        %v6383 = vsel %vm601, %v6334, 0
        %v6386 = vsel %vm650, %v6336, 0
        %6388 = vmatpush.bf16.msra.mxu0 0
        %6389 = vmatpush.bf16.msra.mxu0 0
        %6390 = vmatpush.bf16.msra.mxu0 0
        %6391 = vmatpush.bf16.msra.mxu0 0
        %6392 = vmatpush.bf16.msra.mxu0 0
        %6393 = vmatpush.bf16.msra.mxu0 0
        %6394 = vmatpush.bf16.msra.mxu0 0
        %6395 = vmatpush.bf16.msra.mxu0 %v6386
        %6396 = vmatmul.bf16.gmra.mxu0 %v6338
        %v6397 = vpop.f32.mrf.mxu0
        %v6398 = vadd.f32 0.0, %v6397
        %v6399 = vpop.f32.mrf.mxu0
        %v6400 = vadd.f32 0.0, %v6399
        %6401 = vmatmul.bf16.gmra.mxu0 %v6341
        %v6402 = vpop.f32.mrf.mxu0
        %v6403 = vadd.f32 0.0, %v6402
        %v6404 = vpop.f32.mrf.mxu0
        %v6405 = vadd.f32 0.0, %v6404
        %6406 = vmatmul.bf16.gmra.mxu0 %v6344
        %v6407 = vpop.f32.mrf.mxu0
        %v6408 = vadd.f32 0.0, %v6407
        %v6409 = vpop.f32.mrf.mxu0
        %v6410 = vadd.f32 0.0, %v6409
        %6411 = vmatmul.bf16.gmra.mxu0 %v6347
        %v6412 = vpop.f32.mrf.mxu0
        %v6413 = vadd.f32 0.0, %v6412
        %v6414 = vpop.f32.mrf.mxu0
        %v6415 = vadd.f32 0.0, %v6414
        %6416 = vmatmul.bf16.gmra.mxu0 %v6350
        %v6417 = vpop.f32.mrf.mxu0
        %v6418 = vadd.f32 0.0, %v6417
        %v6419 = vpop.f32.mrf.mxu0
        %v6420 = vadd.f32 0.0, %v6419
        %6421 = vmatmul.bf16.gmra.mxu0 %v6353
        %v6422 = vpop.f32.mrf.mxu0
        %v6423 = vadd.f32 0.0, %v6422
        %v6424 = vpop.f32.mrf.mxu0
        %v6425 = vadd.f32 0.0, %v6424
        %6426 = vmatmul.bf16.gmra.mxu0 %v6356
        %v6427 = vpop.f32.mrf.mxu0
        %v6428 = vadd.f32 0.0, %v6427
        %v6429 = vpop.f32.mrf.mxu0
        %v6430 = vadd.f32 0.0, %v6429
        %6431 = vmatmul.bf16.gmra.mxu0 %v6359
        %v6432 = vpop.f32.mrf.mxu0
        %v6433 = vadd.f32 0.0, %v6432
        %v6434 = vpop.f32.mrf.mxu0
        %v6435 = vadd.f32 0.0, %v6434
        %6436 = vmatmul.bf16.gmra.mxu0 %v6362
        %v6437 = vpop.f32.mrf.mxu0
        %v6438 = vadd.f32 0.0, %v6437
        %v6439 = vpop.f32.mrf.mxu0
        %v6440 = vadd.f32 0.0, %v6439
        %6441 = vmatmul.bf16.gmra.mxu0 %v6365
        %v6442 = vpop.f32.mrf.mxu0
        %v6443 = vadd.f32 0.0, %v6442
        %v6444 = vpop.f32.mrf.mxu0
        %v6445 = vadd.f32 0.0, %v6444
        %6446 = vmatmul.bf16.gmra.mxu0 %v6368
        %v6447 = vpop.f32.mrf.mxu0
        %v6448 = vadd.f32 0.0, %v6447
        %v6449 = vpop.f32.mrf.mxu0
        %v6450 = vadd.f32 0.0, %v6449
        %6451 = vmatmul.bf16.gmra.mxu0 %v6371
        %v6452 = vpop.f32.mrf.mxu0
        %v6453 = vadd.f32 0.0, %v6452
        %v6454 = vpop.f32.mrf.mxu0
        %v6455 = vadd.f32 0.0, %v6454
        %6456 = vmatmul.bf16.gmra.mxu0 %v6374
        %v6457 = vpop.f32.mrf.mxu0
        %v6458 = vadd.f32 0.0, %v6457
        %v6459 = vpop.f32.mrf.mxu0
        %v6460 = vadd.f32 0.0, %v6459
        %6461 = vmatmul.bf16.gmra.mxu0 %v6377
        %v6462 = vpop.f32.mrf.mxu0
        %v6463 = vadd.f32 0.0, %v6462
        %v6464 = vpop.f32.mrf.mxu0
        %v6465 = vadd.f32 0.0, %v6464
        %6466 = vmatmul.bf16.gmra.mxu0 %v6380
        %v6467 = vpop.f32.mrf.mxu0
        %v6468 = vadd.f32 0.0, %v6467
        %v6469 = vpop.f32.mrf.mxu0
        %v6470 = vadd.f32 0.0, %v6469
        %6471 = vmatmul.bf16.gmra.mxu0 %v6383
        %v6472 = vpop.f32.mrf.mxu0
        %v6473 = vadd.f32 0.0, %v6472
        %v6474 = vpop.f32.mrf.mxu0
        %v6475 = vadd.f32 0.0, %v6474
        %6476 = vdwg.mxu0
        %v6478 = vsel %vm601, %v6270, 0
        %v6481 = vsel %vm601, %v6271, 0
        %v6484 = vsel %vm601, %v6272, 0
        %v6487 = vsel %vm601, %v6273, 0
        %v6490 = vsel %vm601, %v6274, 0
        %v6493 = vsel %vm601, %v6275, 0
        %v6496 = vsel %vm601, %v6276, 0
        %v6499 = vsel %vm601, %v6277, 0
        %v6502 = vsel %vm601, %v6278, 0
        %v6505 = vsel %vm601, %v6279, 0
        %v6508 = vsel %vm601, %v6280, 0
        %v6511 = vsel %vm601, %v6281, 0
        %v6514 = vsel %vm601, %v6282, 0
        %v6517 = vsel %vm601, %v6283, 0
        %v6520 = vsel %vm601, %v6284, 0
        %v6523 = vsel %vm601, %v6285, 0
        %v6526 = vsel %vm650, %v6286, 0
        %6528 = vmatpush.bf16.msra.mxu0 0
        %6529 = vmatpush.bf16.msra.mxu0 0
        %6530 = vmatpush.bf16.msra.mxu0 0
        %6531 = vmatpush.bf16.msra.mxu0 0
        %6532 = vmatpush.bf16.msra.mxu0 0
        %6533 = vmatpush.bf16.msra.mxu0 0
        %6534 = vmatpush.bf16.msra.mxu0 0
        %6535 = vmatpush.bf16.msra.mxu0 %v6526
        %6536 = vmatmul.bf16.gmra.mxu0 %v6478
        %v6537 = vpop.f32.mrf.mxu0
        %v6538 = vadd.f32 %v6398, %v6537
        %v6539 = vpop.f32.mrf.mxu0
        %v6540 = vadd.f32 %v6400, %v6539
        %6541 = vmatmul.bf16.gmra.mxu0 %v6481
        %v6542 = vpop.f32.mrf.mxu0
        %v6543 = vadd.f32 %v6403, %v6542
        %v6544 = vpop.f32.mrf.mxu0
        %v6545 = vadd.f32 %v6405, %v6544
        %6546 = vmatmul.bf16.gmra.mxu0 %v6484
        %v6547 = vpop.f32.mrf.mxu0
        %v6548 = vadd.f32 %v6408, %v6547
        %v6549 = vpop.f32.mrf.mxu0
        %v6550 = vadd.f32 %v6410, %v6549
        %6551 = vmatmul.bf16.gmra.mxu0 %v6487
        %v6552 = vpop.f32.mrf.mxu0
        %v6553 = vadd.f32 %v6413, %v6552
        %v6554 = vpop.f32.mrf.mxu0
        %v6555 = vadd.f32 %v6415, %v6554
        %6556 = vmatmul.bf16.gmra.mxu0 %v6490
        %v6557 = vpop.f32.mrf.mxu0
        %v6558 = vadd.f32 %v6418, %v6557
        %v6559 = vpop.f32.mrf.mxu0
        %v6560 = vadd.f32 %v6420, %v6559
        %6561 = vmatmul.bf16.gmra.mxu0 %v6493
        %v6562 = vpop.f32.mrf.mxu0
        %v6563 = vadd.f32 %v6423, %v6562
        %v6564 = vpop.f32.mrf.mxu0
        %v6565 = vadd.f32 %v6425, %v6564
        %6566 = vmatmul.bf16.gmra.mxu0 %v6496
        %v6567 = vpop.f32.mrf.mxu0
        %v6568 = vadd.f32 %v6428, %v6567
        %v6569 = vpop.f32.mrf.mxu0
        %v6570 = vadd.f32 %v6430, %v6569
        %6571 = vmatmul.bf16.gmra.mxu0 %v6499
        %v6572 = vpop.f32.mrf.mxu0
        %v6573 = vadd.f32 %v6433, %v6572
        %v6574 = vpop.f32.mrf.mxu0
        %v6575 = vadd.f32 %v6435, %v6574
        %6576 = vmatmul.bf16.gmra.mxu0 %v6502
        %v6577 = vpop.f32.mrf.mxu0
        %v6578 = vadd.f32 %v6438, %v6577
        %v6579 = vpop.f32.mrf.mxu0
        %v6580 = vadd.f32 %v6440, %v6579
        %6581 = vmatmul.bf16.gmra.mxu0 %v6505
        %v6582 = vpop.f32.mrf.mxu0
        %v6583 = vadd.f32 %v6443, %v6582
        %v6584 = vpop.f32.mrf.mxu0
        %v6585 = vadd.f32 %v6445, %v6584
        %6586 = vmatmul.bf16.gmra.mxu0 %v6508
        %v6587 = vpop.f32.mrf.mxu0
        %v6588 = vadd.f32 %v6448, %v6587
        %v6589 = vpop.f32.mrf.mxu0
        %v6590 = vadd.f32 %v6450, %v6589
        %6591 = vmatmul.bf16.gmra.mxu0 %v6511
        %v6592 = vpop.f32.mrf.mxu0
        %v6593 = vadd.f32 %v6453, %v6592
        %v6594 = vpop.f32.mrf.mxu0
        %v6595 = vadd.f32 %v6455, %v6594
        %6596 = vmatmul.bf16.gmra.mxu0 %v6514
        %v6597 = vpop.f32.mrf.mxu0
        %v6598 = vadd.f32 %v6458, %v6597
        %v6599 = vpop.f32.mrf.mxu0
        %v6600 = vadd.f32 %v6460, %v6599
        %6601 = vmatmul.bf16.gmra.mxu0 %v6517
        %v6602 = vpop.f32.mrf.mxu0
        %v6603 = vadd.f32 %v6463, %v6602
        %v6604 = vpop.f32.mrf.mxu0
        %v6605 = vadd.f32 %v6465, %v6604
        %6606 = vmatmul.bf16.gmra.mxu0 %v6520
        %v6607 = vpop.f32.mrf.mxu0
        %v6608 = vadd.f32 %v6468, %v6607
        %v6609 = vpop.f32.mrf.mxu0
        %v6610 = vadd.f32 %v6470, %v6609
        %6611 = vmatmul.bf16.gmra.mxu0 %v6523
        %v6612 = vpop.f32.mrf.mxu0
        %v6613 = vadd.f32 %v6473, %v6612
        %v6614 = vpop.f32.mrf.mxu0
        %v6615 = vadd.f32 %v6475, %v6614
        %6616 = vdwg.mxu0
        %v6617 = vld [vmem:[#allocation2 + $0x9] sm:$0xff]
        %v6618 = vld [vmem:[#allocation2 + $0x11] sm:$0xff]
        %v6619 = vld [vmem:[#allocation2 + $0x29] sm:$0xff]
        %v6620 = vld [vmem:[#allocation2 + $0x31] sm:$0xff]
        %v6621 = vld [vmem:[#allocation2 + $0x49] sm:$0xff]
        %v6622 = vld [vmem:[#allocation2 + $0x51] sm:$0xff]
        %v6623 = vld [vmem:[#allocation2 + $0x69] sm:$0xff]
        %v6624 = vld [vmem:[#allocation2 + $0x71] sm:$0xff]
        %v6625 = vld [vmem:[#allocation2 + $0x89] sm:$0xff]
        %v6626 = vld [vmem:[#allocation2 + $0x91] sm:$0xff]
        %v6627 = vld [vmem:[#allocation2 + $0xa9] sm:$0xff]
        %v6628 = vld [vmem:[#allocation2 + $0xb1] sm:$0xff]
        %v6629 = vld [vmem:[#allocation2 + $0xc9] sm:$0xff]
        %v6630 = vld [vmem:[#allocation2 + $0xd1] sm:$0xff]
        %v6631 = vld [vmem:[#allocation2 + $0xe9] sm:$0xff]
        %v6632 = vld [vmem:[#allocation2 + $0xf1] sm:$0xff]
        %v6633 = vld [vmem:[#allocation2 + $0x109] sm:$0xff]
        %v6634 = vld [vmem:[#allocation2 + $0x111] sm:$0xff]
        %v6635 = vld [vmem:[#allocation2 + $0x129] sm:$0xff]
        %v6636 = vld [vmem:[#allocation2 + $0x131] sm:$0xff]
        %v6637 = vld [vmem:[#allocation2 + $0x149] sm:$0xff]
        %v6638 = vld [vmem:[#allocation2 + $0x151] sm:$0xff]
        %v6639 = vld [vmem:[#allocation2 + $0x169] sm:$0xff]
        %v6640 = vld [vmem:[#allocation2 + $0x171] sm:$0xff]
        %v6641 = vld [vmem:[#allocation2 + $0x189] sm:$0xff]
        %v6642 = vld [vmem:[#allocation2 + $0x191] sm:$0xff]
        %v6643 = vld [vmem:[#allocation2 + $0x1a9] sm:$0xff]
        %v6644 = vld [vmem:[#allocation2 + $0x1b1] sm:$0xff]
        %v6645 = vld [vmem:[#allocation2 + $0x1c9] sm:$0xff]
        %v6646 = vld [vmem:[#allocation2 + $0x1d1] sm:$0xff]
        %v6647 = vld [vmem:[#allocation2 + $0x1e9] sm:$0xff]
        %v6648 = vld [vmem:[#allocation2 + $0x1f1] sm:$0xff]
        %v6649 = vpack.c.bf16 %v6618, %v6617
        %v6650 = vpack.c.bf16 %v6620, %v6619
        %v6651 = vpack.c.bf16 %v6622, %v6621
        %v6652 = vpack.c.bf16 %v6624, %v6623
        %v6653 = vpack.c.bf16 %v6626, %v6625
        %v6654 = vpack.c.bf16 %v6628, %v6627
        %v6655 = vpack.c.bf16 %v6630, %v6629
        %v6656 = vpack.c.bf16 %v6632, %v6631
        %v6657 = vpack.c.bf16 %v6634, %v6633
        %v6658 = vpack.c.bf16 %v6636, %v6635
        %v6659 = vpack.c.bf16 %v6638, %v6637
        %v6660 = vpack.c.bf16 %v6640, %v6639
        %v6661 = vpack.c.bf16 %v6642, %v6641
        %v6662 = vpack.c.bf16 %v6644, %v6643
        %v6663 = vpack.c.bf16 %v6646, %v6645
        %v6664 = vpack.c.bf16 %v6648, %v6647
        %s6665 = scalar_lea.vmem %s11, 4
        %v6666 = vld [vmem:[%s6665] sm:$0x3]
        %v6668 = vsel %vm601, %v6649, 0
        %v6671 = vsel %vm601, %v6650, 0
        %v6674 = vsel %vm601, %v6651, 0
        %v6677 = vsel %vm601, %v6652, 0
        %v6680 = vsel %vm601, %v6653, 0
        %v6683 = vsel %vm601, %v6654, 0
        %v6686 = vsel %vm601, %v6655, 0
        %v6689 = vsel %vm601, %v6656, 0
        %v6692 = vsel %vm601, %v6657, 0
        %v6695 = vsel %vm601, %v6658, 0
        %v6698 = vsel %vm601, %v6659, 0
        %v6701 = vsel %vm601, %v6660, 0
        %v6704 = vsel %vm601, %v6661, 0
        %v6707 = vsel %vm601, %v6662, 0
        %v6710 = vsel %vm601, %v6663, 0
        %v6713 = vsel %vm601, %v6664, 0
        %v6716 = vsel %vm650, %v6666, 0
        %6718 = vmatpush.bf16.msra.mxu0 0
        %6719 = vmatpush.bf16.msra.mxu0 0
        %6720 = vmatpush.bf16.msra.mxu0 0
        %6721 = vmatpush.bf16.msra.mxu0 0
        %6722 = vmatpush.bf16.msra.mxu0 0
        %6723 = vmatpush.bf16.msra.mxu0 0
        %6724 = vmatpush.bf16.msra.mxu0 0
        %6725 = vmatpush.bf16.msra.mxu0 %v6716
        %6726 = vmatmul.bf16.gmra.mxu0 %v6668
        %v6727 = vpop.f32.mrf.mxu0
        %v6728 = vadd.f32 0.0, %v6727
        %v6729 = vpop.f32.mrf.mxu0
        %v6730 = vadd.f32 0.0, %v6729
        %6731 = vmatmul.bf16.gmra.mxu0 %v6671
        %v6732 = vpop.f32.mrf.mxu0
        %v6733 = vadd.f32 0.0, %v6732
        %v6734 = vpop.f32.mrf.mxu0
        %v6735 = vadd.f32 0.0, %v6734
        %6736 = vmatmul.bf16.gmra.mxu0 %v6674
        %v6737 = vpop.f32.mrf.mxu0
        %v6738 = vadd.f32 0.0, %v6737
        %v6739 = vpop.f32.mrf.mxu0
        %v6740 = vadd.f32 0.0, %v6739
        %6741 = vmatmul.bf16.gmra.mxu0 %v6677
        %v6742 = vpop.f32.mrf.mxu0
        %v6743 = vadd.f32 0.0, %v6742
        %v6744 = vpop.f32.mrf.mxu0
        %v6745 = vadd.f32 0.0, %v6744
        %6746 = vmatmul.bf16.gmra.mxu0 %v6680
        %v6747 = vpop.f32.mrf.mxu0
        %v6748 = vadd.f32 0.0, %v6747
        %v6749 = vpop.f32.mrf.mxu0
        %v6750 = vadd.f32 0.0, %v6749
        %6751 = vmatmul.bf16.gmra.mxu0 %v6683
        %v6752 = vpop.f32.mrf.mxu0
        %v6753 = vadd.f32 0.0, %v6752
        %v6754 = vpop.f32.mrf.mxu0
        %v6755 = vadd.f32 0.0, %v6754
        %6756 = vmatmul.bf16.gmra.mxu0 %v6686
        %v6757 = vpop.f32.mrf.mxu0
        %v6758 = vadd.f32 0.0, %v6757
        %v6759 = vpop.f32.mrf.mxu0
        %v6760 = vadd.f32 0.0, %v6759
        %6761 = vmatmul.bf16.gmra.mxu0 %v6689
        %v6762 = vpop.f32.mrf.mxu0
        %v6763 = vadd.f32 0.0, %v6762
        %v6764 = vpop.f32.mrf.mxu0
        %v6765 = vadd.f32 0.0, %v6764
        %6766 = vmatmul.bf16.gmra.mxu0 %v6692
        %v6767 = vpop.f32.mrf.mxu0
        %v6768 = vadd.f32 0.0, %v6767
        %v6769 = vpop.f32.mrf.mxu0
        %v6770 = vadd.f32 0.0, %v6769
        %6771 = vmatmul.bf16.gmra.mxu0 %v6695
        %v6772 = vpop.f32.mrf.mxu0
        %v6773 = vadd.f32 0.0, %v6772
        %v6774 = vpop.f32.mrf.mxu0
        %v6775 = vadd.f32 0.0, %v6774
        %6776 = vmatmul.bf16.gmra.mxu0 %v6698
        %v6777 = vpop.f32.mrf.mxu0
        %v6778 = vadd.f32 0.0, %v6777
        %v6779 = vpop.f32.mrf.mxu0
        %v6780 = vadd.f32 0.0, %v6779
        %6781 = vmatmul.bf16.gmra.mxu0 %v6701
        %v6782 = vpop.f32.mrf.mxu0
        %v6783 = vadd.f32 0.0, %v6782
        %v6784 = vpop.f32.mrf.mxu0
        %v6785 = vadd.f32 0.0, %v6784
        %6786 = vmatmul.bf16.gmra.mxu0 %v6704
        %v6787 = vpop.f32.mrf.mxu0
        %v6788 = vadd.f32 0.0, %v6787
        %v6789 = vpop.f32.mrf.mxu0
        %v6790 = vadd.f32 0.0, %v6789
        %6791 = vmatmul.bf16.gmra.mxu0 %v6707
        %v6792 = vpop.f32.mrf.mxu0
        %v6793 = vadd.f32 0.0, %v6792
        %v6794 = vpop.f32.mrf.mxu0
        %v6795 = vadd.f32 0.0, %v6794
        %6796 = vmatmul.bf16.gmra.mxu0 %v6710
        %v6797 = vpop.f32.mrf.mxu0
        %v6798 = vadd.f32 0.0, %v6797
        %v6799 = vpop.f32.mrf.mxu0
        %v6800 = vadd.f32 0.0, %v6799
        %6801 = vmatmul.bf16.gmra.mxu0 %v6713
        %v6802 = vpop.f32.mrf.mxu0
        %v6803 = vadd.f32 0.0, %v6802
        %v6804 = vpop.f32.mrf.mxu0
        %v6805 = vadd.f32 0.0, %v6804
        %6806 = vdwg.mxu0
        %v6807 = vadd.f32 %v6538, %v6728
        %v6808 = vadd.f32 %v6540, %v6730
        %v6809 = vadd.f32 %v6543, %v6733
        %v6810 = vadd.f32 %v6545, %v6735
        %v6811 = vadd.f32 %v6548, %v6738
        %v6812 = vadd.f32 %v6550, %v6740
        %v6813 = vadd.f32 %v6553, %v6743
        %v6814 = vadd.f32 %v6555, %v6745
        %v6815 = vadd.f32 %v6558, %v6748
        %v6816 = vadd.f32 %v6560, %v6750
        %v6817 = vadd.f32 %v6563, %v6753
        %v6818 = vadd.f32 %v6565, %v6755
        %v6819 = vadd.f32 %v6568, %v6758
        %v6820 = vadd.f32 %v6570, %v6760
        %v6821 = vadd.f32 %v6573, %v6763
        %v6822 = vadd.f32 %v6575, %v6765
        %v6823 = vadd.f32 %v6578, %v6768
        %v6824 = vadd.f32 %v6580, %v6770
        %v6825 = vadd.f32 %v6583, %v6773
        %v6826 = vadd.f32 %v6585, %v6775
        %v6827 = vadd.f32 %v6588, %v6778
        %v6828 = vadd.f32 %v6590, %v6780
        %v6829 = vadd.f32 %v6593, %v6783
        %v6830 = vadd.f32 %v6595, %v6785
        %v6831 = vadd.f32 %v6598, %v6788
        %v6832 = vadd.f32 %v6600, %v6790
        %v6833 = vadd.f32 %v6603, %v6793
        %v6834 = vadd.f32 %v6605, %v6795
        %v6835 = vadd.f32 %v6608, %v6798
        %v6836 = vadd.f32 %v6610, %v6800
        %v6837 = vadd.f32 %v6613, %v6803
        %v6838 = vadd.f32 %v6615, %v6805
        %v6839 = vld [vmem:[%s1008 + $0x7] sm:$0xff]
        %v6840 = vld [vmem:[%s1008 + $0xf] sm:$0xff]
        %v6841 = vld [vmem:[%s1008 + $0x27] sm:$0xff]
        %v6842 = vld [vmem:[%s1008 + $0x2f] sm:$0xff]
        %v6843 = vld [vmem:[%s1008 + $0x47] sm:$0xff]
        %v6844 = vld [vmem:[%s1008 + $0x4f] sm:$0xff]
        %v6845 = vld [vmem:[%s1008 + $0x67] sm:$0xff]
        %v6846 = vld [vmem:[%s1008 + $0x6f] sm:$0xff]
        %v6847 = vld [vmem:[%s1008 + $0x87] sm:$0xff]
        %v6848 = vld [vmem:[%s1008 + $0x8f] sm:$0xff]
        %v6849 = vld [vmem:[%s1008 + $0xa7] sm:$0xff]
        %v6850 = vld [vmem:[%s1008 + $0xaf] sm:$0xff]
        %v6851 = vld [vmem:[%s1008 + $0xc7] sm:$0xff]
        %v6852 = vld [vmem:[%s1008 + $0xcf] sm:$0xff]
        %v6853 = vld [vmem:[%s1008 + $0xe7] sm:$0xff]
        %v6854 = vld [vmem:[%s1008 + $0xef] sm:$0xff]
        %v6855 = vld [vmem:[%s1008 + $0x107] sm:$0xff]
        %v6856 = vld [vmem:[%s1008 + $0x10f] sm:$0xff]
        %v6857 = vld [vmem:[%s1008 + $0x127] sm:$0xff]
        %v6858 = vld [vmem:[%s1008 + $0x12f] sm:$0xff]
        %v6859 = vld [vmem:[%s1008 + $0x147] sm:$0xff]
        %v6860 = vld [vmem:[%s1008 + $0x14f] sm:$0xff]
        %v6861 = vld [vmem:[%s1008 + $0x167] sm:$0xff]
        %v6862 = vld [vmem:[%s1008 + $0x16f] sm:$0xff]
        %v6863 = vld [vmem:[%s1008 + $0x187] sm:$0xff]
        %v6864 = vld [vmem:[%s1008 + $0x18f] sm:$0xff]
        %v6865 = vld [vmem:[%s1008 + $0x1a7] sm:$0xff]
        %v6866 = vld [vmem:[%s1008 + $0x1af] sm:$0xff]
        %v6867 = vld [vmem:[%s1008 + $0x1c7] sm:$0xff]
        %v6868 = vld [vmem:[%s1008 + $0x1cf] sm:$0xff]
        %v6869 = vld [vmem:[%s1008 + $0x1e7] sm:$0xff]
        %v6870 = vld [vmem:[%s1008 + $0x1ef] sm:$0xff]
        %v6871 = vpack.c.bf16 %v6840, %v6839
        %v6872 = vpack.c.bf16 %v6842, %v6841
        %v6873 = vpack.c.bf16 %v6844, %v6843
        %v6874 = vpack.c.bf16 %v6846, %v6845
        %v6875 = vpack.c.bf16 %v6848, %v6847
        %v6876 = vpack.c.bf16 %v6850, %v6849
        %v6877 = vpack.c.bf16 %v6852, %v6851
        %v6878 = vpack.c.bf16 %v6854, %v6853
        %v6879 = vpack.c.bf16 %v6856, %v6855
        %v6880 = vpack.c.bf16 %v6858, %v6857
        %v6881 = vpack.c.bf16 %v6860, %v6859
        %v6882 = vpack.c.bf16 %v6862, %v6861
        %v6883 = vpack.c.bf16 %v6864, %v6863
        %v6884 = vpack.c.bf16 %v6866, %v6865
        %v6885 = vpack.c.bf16 %v6868, %v6867
        %v6886 = vpack.c.bf16 %v6870, %v6869
        %s6887 = scalar_lea.vmem %s11, 6
        %v6888 = vld [vmem:[%s6887] sm:$0x3]
        %v6890 = vsel %vm601, %v6871, 0
        %v6893 = vsel %vm601, %v6872, 0
        %v6896 = vsel %vm601, %v6873, 0
        %v6899 = vsel %vm601, %v6874, 0
        %v6902 = vsel %vm601, %v6875, 0
        %v6905 = vsel %vm601, %v6876, 0
        %v6908 = vsel %vm601, %v6877, 0
        %v6911 = vsel %vm601, %v6878, 0
        %v6914 = vsel %vm601, %v6879, 0
        %v6917 = vsel %vm601, %v6880, 0
        %v6920 = vsel %vm601, %v6881, 0
        %v6923 = vsel %vm601, %v6882, 0
        %v6926 = vsel %vm601, %v6883, 0
        %v6929 = vsel %vm601, %v6884, 0
        %v6932 = vsel %vm601, %v6885, 0
        %v6935 = vsel %vm601, %v6886, 0
        %v6938 = vsel %vm650, %v6888, 0
        %6940 = vmatpush.bf16.msra.mxu0 0
        %6941 = vmatpush.bf16.msra.mxu0 0
        %6942 = vmatpush.bf16.msra.mxu0 0
        %6943 = vmatpush.bf16.msra.mxu0 0
        %6944 = vmatpush.bf16.msra.mxu0 0
        %6945 = vmatpush.bf16.msra.mxu0 0
        %6946 = vmatpush.bf16.msra.mxu0 0
        %6947 = vmatpush.bf16.msra.mxu0 %v6938
        %6948 = vmatmul.bf16.gmra.mxu0 %v6890
        %v6949 = vpop.f32.mrf.mxu0
        %v6950 = vadd.f32 0.0, %v6949
        %v6951 = vpop.f32.mrf.mxu0
        %v6952 = vadd.f32 0.0, %v6951
        %6953 = vmatmul.bf16.gmra.mxu0 %v6893
        %v6954 = vpop.f32.mrf.mxu0
        %v6955 = vadd.f32 0.0, %v6954
        %v6956 = vpop.f32.mrf.mxu0
        %v6957 = vadd.f32 0.0, %v6956
        %6958 = vmatmul.bf16.gmra.mxu0 %v6896
        %v6959 = vpop.f32.mrf.mxu0
        %v6960 = vadd.f32 0.0, %v6959
        %v6961 = vpop.f32.mrf.mxu0
        %v6962 = vadd.f32 0.0, %v6961
        %6963 = vmatmul.bf16.gmra.mxu0 %v6899
        %v6964 = vpop.f32.mrf.mxu0
        %v6965 = vadd.f32 0.0, %v6964
        %v6966 = vpop.f32.mrf.mxu0
        %v6967 = vadd.f32 0.0, %v6966
        %6968 = vmatmul.bf16.gmra.mxu0 %v6902
        %v6969 = vpop.f32.mrf.mxu0
        %v6970 = vadd.f32 0.0, %v6969
        %v6971 = vpop.f32.mrf.mxu0
        %v6972 = vadd.f32 0.0, %v6971
        %6973 = vmatmul.bf16.gmra.mxu0 %v6905
        %v6974 = vpop.f32.mrf.mxu0
        %v6975 = vadd.f32 0.0, %v6974
        %v6976 = vpop.f32.mrf.mxu0
        %v6977 = vadd.f32 0.0, %v6976
        %6978 = vmatmul.bf16.gmra.mxu0 %v6908
        %v6979 = vpop.f32.mrf.mxu0
        %v6980 = vadd.f32 0.0, %v6979
        %v6981 = vpop.f32.mrf.mxu0
        %v6982 = vadd.f32 0.0, %v6981
        %6983 = vmatmul.bf16.gmra.mxu0 %v6911
        %v6984 = vpop.f32.mrf.mxu0
        %v6985 = vadd.f32 0.0, %v6984
        %v6986 = vpop.f32.mrf.mxu0
        %v6987 = vadd.f32 0.0, %v6986
        %6988 = vmatmul.bf16.gmra.mxu0 %v6914
        %v6989 = vpop.f32.mrf.mxu0
        %v6990 = vadd.f32 0.0, %v6989
        %v6991 = vpop.f32.mrf.mxu0
        %v6992 = vadd.f32 0.0, %v6991
        %6993 = vmatmul.bf16.gmra.mxu0 %v6917
        %v6994 = vpop.f32.mrf.mxu0
        %v6995 = vadd.f32 0.0, %v6994
        %v6996 = vpop.f32.mrf.mxu0
        %v6997 = vadd.f32 0.0, %v6996
        %6998 = vmatmul.bf16.gmra.mxu0 %v6920
        %v6999 = vpop.f32.mrf.mxu0
        %v7000 = vadd.f32 0.0, %v6999
        %v7001 = vpop.f32.mrf.mxu0
        %v7002 = vadd.f32 0.0, %v7001
        %7003 = vmatmul.bf16.gmra.mxu0 %v6923
        %v7004 = vpop.f32.mrf.mxu0
        %v7005 = vadd.f32 0.0, %v7004
        %v7006 = vpop.f32.mrf.mxu0
        %v7007 = vadd.f32 0.0, %v7006
        %7008 = vmatmul.bf16.gmra.mxu0 %v6926
        %v7009 = vpop.f32.mrf.mxu0
        %v7010 = vadd.f32 0.0, %v7009
        %v7011 = vpop.f32.mrf.mxu0
        %v7012 = vadd.f32 0.0, %v7011
        %7013 = vmatmul.bf16.gmra.mxu0 %v6929
        %v7014 = vpop.f32.mrf.mxu0
        %v7015 = vadd.f32 0.0, %v7014
        %v7016 = vpop.f32.mrf.mxu0
        %v7017 = vadd.f32 0.0, %v7016
        %7018 = vmatmul.bf16.gmra.mxu0 %v6932
        %v7019 = vpop.f32.mrf.mxu0
        %v7020 = vadd.f32 0.0, %v7019
        %v7021 = vpop.f32.mrf.mxu0
        %v7022 = vadd.f32 0.0, %v7021
        %7023 = vmatmul.bf16.gmra.mxu0 %v6935
        %v7024 = vpop.f32.mrf.mxu0
        %v7025 = vadd.f32 0.0, %v7024
        %v7026 = vpop.f32.mrf.mxu0
        %v7027 = vadd.f32 0.0, %v7026
        %7028 = vdwg.mxu0
        %v7029 = vadd.f32 %v6807, %v6950
        %v7030 = vadd.f32 %v6808, %v6952
        %v7031 = vadd.f32 %v6809, %v6955
        %v7032 = vadd.f32 %v6810, %v6957
        %v7033 = vadd.f32 %v6811, %v6960
        %v7034 = vadd.f32 %v6812, %v6962
        %v7035 = vadd.f32 %v6813, %v6965
        %v7036 = vadd.f32 %v6814, %v6967
        %v7037 = vadd.f32 %v6815, %v6970
        %v7038 = vadd.f32 %v6816, %v6972
        %v7039 = vadd.f32 %v6817, %v6975
        %v7040 = vadd.f32 %v6818, %v6977
        %v7041 = vadd.f32 %v6819, %v6980
        %v7042 = vadd.f32 %v6820, %v6982
        %v7043 = vadd.f32 %v6821, %v6985
        %v7044 = vadd.f32 %v6822, %v6987
        %v7045 = vadd.f32 %v6823, %v6990
        %v7046 = vadd.f32 %v6824, %v6992
        %v7047 = vadd.f32 %v6825, %v6995
        %v7048 = vadd.f32 %v6826, %v6997
        %v7049 = vadd.f32 %v6827, %v7000
        %v7050 = vadd.f32 %v6828, %v7002
        %v7051 = vadd.f32 %v6829, %v7005
        %v7052 = vadd.f32 %v6830, %v7007
        %v7053 = vadd.f32 %v6831, %v7010
        %v7054 = vadd.f32 %v6832, %v7012
        %v7055 = vadd.f32 %v6833, %v7015
        %v7056 = vadd.f32 %v6834, %v7017
        %v7057 = vadd.f32 %v6835, %v7020
        %v7058 = vadd.f32 %v6836, %v7022
        %v7059 = vadd.f32 %v6837, %v7025
        %v7060 = vadd.f32 %v6838, %v7027
        %v7061 = vld [vmem:[%s1008 + $0x8] sm:$0xff]
        %v7062 = vld [vmem:[%s1008 + $0x10] sm:$0xff]
        %v7063 = vld [vmem:[%s1008 + $0x28] sm:$0xff]
        %v7064 = vld [vmem:[%s1008 + $0x30] sm:$0xff]
        %v7065 = vld [vmem:[%s1008 + $0x48] sm:$0xff]
        %v7066 = vld [vmem:[%s1008 + $0x50] sm:$0xff]
        %v7067 = vld [vmem:[%s1008 + $0x68] sm:$0xff]
        %v7068 = vld [vmem:[%s1008 + $0x70] sm:$0xff]
        %v7069 = vld [vmem:[%s1008 + $0x88] sm:$0xff]
        %v7070 = vld [vmem:[%s1008 + $0x90] sm:$0xff]
        %v7071 = vld [vmem:[%s1008 + $0xa8] sm:$0xff]
        %v7072 = vld [vmem:[%s1008 + $0xb0] sm:$0xff]
        %v7073 = vld [vmem:[%s1008 + $0xc8] sm:$0xff]
        %v7074 = vld [vmem:[%s1008 + $0xd0] sm:$0xff]
        %v7075 = vld [vmem:[%s1008 + $0xe8] sm:$0xff]
        %v7076 = vld [vmem:[%s1008 + $0xf0] sm:$0xff]
        %v7077 = vld [vmem:[%s1008 + $0x108] sm:$0xff]
        %v7078 = vld [vmem:[%s1008 + $0x110] sm:$0xff]
        %v7079 = vld [vmem:[%s1008 + $0x128] sm:$0xff]
        %v7080 = vld [vmem:[%s1008 + $0x130] sm:$0xff]
        %v7081 = vld [vmem:[%s1008 + $0x148] sm:$0xff]
        %v7082 = vld [vmem:[%s1008 + $0x150] sm:$0xff]
        %v7083 = vld [vmem:[%s1008 + $0x168] sm:$0xff]
        %v7084 = vld [vmem:[%s1008 + $0x170] sm:$0xff]
        %v7085 = vld [vmem:[%s1008 + $0x188] sm:$0xff]
        %v7086 = vld [vmem:[%s1008 + $0x190] sm:$0xff]
        %v7087 = vld [vmem:[%s1008 + $0x1a8] sm:$0xff]
        %v7088 = vld [vmem:[%s1008 + $0x1b0] sm:$0xff]
        %v7089 = vld [vmem:[%s1008 + $0x1c8] sm:$0xff]
        %v7090 = vld [vmem:[%s1008 + $0x1d0] sm:$0xff]
        %v7091 = vld [vmem:[%s1008 + $0x1e8] sm:$0xff]
        %v7092 = vld [vmem:[%s1008 + $0x1f0] sm:$0xff]
        %v7093 = vpack.c.bf16 %v7062, %v7061
        %v7094 = vpack.c.bf16 %v7064, %v7063
        %v7095 = vpack.c.bf16 %v7066, %v7065
        %v7096 = vpack.c.bf16 %v7068, %v7067
        %v7097 = vpack.c.bf16 %v7070, %v7069
        %v7098 = vpack.c.bf16 %v7072, %v7071
        %v7099 = vpack.c.bf16 %v7074, %v7073
        %v7100 = vpack.c.bf16 %v7076, %v7075
        %v7101 = vpack.c.bf16 %v7078, %v7077
        %v7102 = vpack.c.bf16 %v7080, %v7079
        %v7103 = vpack.c.bf16 %v7082, %v7081
        %v7104 = vpack.c.bf16 %v7084, %v7083
        %v7105 = vpack.c.bf16 %v7086, %v7085
        %v7106 = vpack.c.bf16 %v7088, %v7087
        %v7107 = vpack.c.bf16 %v7090, %v7089
        %v7108 = vpack.c.bf16 %v7092, %v7091
        %s7109 = scalar_lea.vmem %s11, 8
        %v7110 = vld [vmem:[%s7109] sm:$0x3]
        %v7112 = vsel %vm601, %v7093, 0
        %v7115 = vsel %vm601, %v7094, 0
        %v7118 = vsel %vm601, %v7095, 0
        %v7121 = vsel %vm601, %v7096, 0
        %v7124 = vsel %vm601, %v7097, 0
        %v7127 = vsel %vm601, %v7098, 0
        %v7130 = vsel %vm601, %v7099, 0
        %v7133 = vsel %vm601, %v7100, 0
        %v7136 = vsel %vm601, %v7101, 0
        %v7139 = vsel %vm601, %v7102, 0
        %v7142 = vsel %vm601, %v7103, 0
        %v7145 = vsel %vm601, %v7104, 0
        %v7148 = vsel %vm601, %v7105, 0
        %v7151 = vsel %vm601, %v7106, 0
        %v7154 = vsel %vm601, %v7107, 0
        %v7157 = vsel %vm601, %v7108, 0
        %v7160 = vsel %vm650, %v7110, 0
        %7162 = vmatpush.bf16.msra.mxu0 0
        %7163 = vmatpush.bf16.msra.mxu0 0
        %7164 = vmatpush.bf16.msra.mxu0 0
        %7165 = vmatpush.bf16.msra.mxu0 0
        %7166 = vmatpush.bf16.msra.mxu0 0
        %7167 = vmatpush.bf16.msra.mxu0 0
        %7168 = vmatpush.bf16.msra.mxu0 0
        %7169 = vmatpush.bf16.msra.mxu0 %v7160
        %7170 = vmatmul.bf16.gmra.mxu0 %v7112
        %v7171 = vpop.f32.mrf.mxu0
        %v7172 = vadd.f32 0.0, %v7171
        %v7173 = vpop.f32.mrf.mxu0
        %v7174 = vadd.f32 0.0, %v7173
        %7175 = vmatmul.bf16.gmra.mxu0 %v7115
        %v7176 = vpop.f32.mrf.mxu0
        %v7177 = vadd.f32 0.0, %v7176
        %v7178 = vpop.f32.mrf.mxu0
        %v7179 = vadd.f32 0.0, %v7178
        %7180 = vmatmul.bf16.gmra.mxu0 %v7118
        %v7181 = vpop.f32.mrf.mxu0
        %v7182 = vadd.f32 0.0, %v7181
        %v7183 = vpop.f32.mrf.mxu0
        %v7184 = vadd.f32 0.0, %v7183
        %7185 = vmatmul.bf16.gmra.mxu0 %v7121
        %v7186 = vpop.f32.mrf.mxu0
        %v7187 = vadd.f32 0.0, %v7186
        %v7188 = vpop.f32.mrf.mxu0
        %v7189 = vadd.f32 0.0, %v7188
        %7190 = vmatmul.bf16.gmra.mxu0 %v7124
        %v7191 = vpop.f32.mrf.mxu0
        %v7192 = vadd.f32 0.0, %v7191
        %v7193 = vpop.f32.mrf.mxu0
        %v7194 = vadd.f32 0.0, %v7193
        %7195 = vmatmul.bf16.gmra.mxu0 %v7127
        %v7196 = vpop.f32.mrf.mxu0
        %v7197 = vadd.f32 0.0, %v7196
        %v7198 = vpop.f32.mrf.mxu0
        %v7199 = vadd.f32 0.0, %v7198
        %7200 = vmatmul.bf16.gmra.mxu0 %v7130
        %v7201 = vpop.f32.mrf.mxu0
        %v7202 = vadd.f32 0.0, %v7201
        %v7203 = vpop.f32.mrf.mxu0
        %v7204 = vadd.f32 0.0, %v7203
        %7205 = vmatmul.bf16.gmra.mxu0 %v7133
        %v7206 = vpop.f32.mrf.mxu0
        %v7207 = vadd.f32 0.0, %v7206
        %v7208 = vpop.f32.mrf.mxu0
        %v7209 = vadd.f32 0.0, %v7208
        %7210 = vmatmul.bf16.gmra.mxu0 %v7136
        %v7211 = vpop.f32.mrf.mxu0
        %v7212 = vadd.f32 0.0, %v7211
        %v7213 = vpop.f32.mrf.mxu0
        %v7214 = vadd.f32 0.0, %v7213
        %7215 = vmatmul.bf16.gmra.mxu0 %v7139
        %v7216 = vpop.f32.mrf.mxu0
        %v7217 = vadd.f32 0.0, %v7216
        %v7218 = vpop.f32.mrf.mxu0
        %v7219 = vadd.f32 0.0, %v7218
        %7220 = vmatmul.bf16.gmra.mxu0 %v7142
        %v7221 = vpop.f32.mrf.mxu0
        %v7222 = vadd.f32 0.0, %v7221
        %v7223 = vpop.f32.mrf.mxu0
        %v7224 = vadd.f32 0.0, %v7223
        %7225 = vmatmul.bf16.gmra.mxu0 %v7145
        %v7226 = vpop.f32.mrf.mxu0
        %v7227 = vadd.f32 0.0, %v7226
        %v7228 = vpop.f32.mrf.mxu0
        %v7229 = vadd.f32 0.0, %v7228
        %7230 = vmatmul.bf16.gmra.mxu0 %v7148
        %v7231 = vpop.f32.mrf.mxu0
        %v7232 = vadd.f32 0.0, %v7231
        %v7233 = vpop.f32.mrf.mxu0
        %v7234 = vadd.f32 0.0, %v7233
        %7235 = vmatmul.bf16.gmra.mxu0 %v7151
        %v7236 = vpop.f32.mrf.mxu0
        %v7237 = vadd.f32 0.0, %v7236
        %v7238 = vpop.f32.mrf.mxu0
        %v7239 = vadd.f32 0.0, %v7238
        %7240 = vmatmul.bf16.gmra.mxu0 %v7154
        %v7241 = vpop.f32.mrf.mxu0
        %v7242 = vadd.f32 0.0, %v7241
        %v7243 = vpop.f32.mrf.mxu0
        %v7244 = vadd.f32 0.0, %v7243
        %7245 = vmatmul.bf16.gmra.mxu0 %v7157
        %v7246 = vpop.f32.mrf.mxu0
        %v7247 = vadd.f32 0.0, %v7246
        %v7248 = vpop.f32.mrf.mxu0
        %v7249 = vadd.f32 0.0, %v7248
        %7250 = vdwg.mxu0
        %v7251 = vadd.f32 %v7029, %v7172
        %v7252 = vadd.f32 %v7030, %v7174
        %v7253 = vadd.f32 %v7031, %v7177
        %v7254 = vadd.f32 %v7032, %v7179
        %v7255 = vadd.f32 %v7033, %v7182
        %v7256 = vadd.f32 %v7034, %v7184
        %v7257 = vadd.f32 %v7035, %v7187
        %v7258 = vadd.f32 %v7036, %v7189
        %v7259 = vadd.f32 %v7037, %v7192
        %v7260 = vadd.f32 %v7038, %v7194
        %v7261 = vadd.f32 %v7039, %v7197
        %v7262 = vadd.f32 %v7040, %v7199
        %v7263 = vadd.f32 %v7041, %v7202
        %v7264 = vadd.f32 %v7042, %v7204
        %v7265 = vadd.f32 %v7043, %v7207
        %v7266 = vadd.f32 %v7044, %v7209
        %v7267 = vadd.f32 %v7045, %v7212
        %v7268 = vadd.f32 %v7046, %v7214
        %v7269 = vadd.f32 %v7047, %v7217
        %v7270 = vadd.f32 %v7048, %v7219
        %v7271 = vadd.f32 %v7049, %v7222
        %v7272 = vadd.f32 %v7050, %v7224
        %v7273 = vadd.f32 %v7051, %v7227
        %v7274 = vadd.f32 %v7052, %v7229
        %v7275 = vadd.f32 %v7053, %v7232
        %v7276 = vadd.f32 %v7054, %v7234
        %v7277 = vadd.f32 %v7055, %v7237
        %v7278 = vadd.f32 %v7056, %v7239
        %v7279 = vadd.f32 %v7057, %v7242
        %v7280 = vadd.f32 %v7058, %v7244
        %v7281 = vadd.f32 %v7059, %v7247
        %v7282 = vadd.f32 %v7060, %v7249
        %v7283 = vld [vmem:[%s1008 + $0x9] sm:$0xff]
        %v7284 = vld [vmem:[%s1008 + $0x11] sm:$0xff]
        %v7285 = vld [vmem:[%s1008 + $0x29] sm:$0xff]
        %v7286 = vld [vmem:[%s1008 + $0x31] sm:$0xff]
        %v7287 = vld [vmem:[%s1008 + $0x49] sm:$0xff]
        %v7288 = vld [vmem:[%s1008 + $0x51] sm:$0xff]
        %v7289 = vld [vmem:[%s1008 + $0x69] sm:$0xff]
        %v7290 = vld [vmem:[%s1008 + $0x71] sm:$0xff]
        %v7291 = vld [vmem:[%s1008 + $0x89] sm:$0xff]
        %v7292 = vld [vmem:[%s1008 + $0x91] sm:$0xff]
        %v7293 = vld [vmem:[%s1008 + $0xa9] sm:$0xff]
        %v7294 = vld [vmem:[%s1008 + $0xb1] sm:$0xff]
        %v7295 = vld [vmem:[%s1008 + $0xc9] sm:$0xff]
        %v7296 = vld [vmem:[%s1008 + $0xd1] sm:$0xff]
        %v7297 = vld [vmem:[%s1008 + $0xe9] sm:$0xff]
        %v7298 = vld [vmem:[%s1008 + $0xf1] sm:$0xff]
        %v7299 = vld [vmem:[%s1008 + $0x109] sm:$0xff]
        %v7300 = vld [vmem:[%s1008 + $0x111] sm:$0xff]
        %v7301 = vld [vmem:[%s1008 + $0x129] sm:$0xff]
        %v7302 = vld [vmem:[%s1008 + $0x131] sm:$0xff]
        %v7303 = vld [vmem:[%s1008 + $0x149] sm:$0xff]
        %v7304 = vld [vmem:[%s1008 + $0x151] sm:$0xff]
        %v7305 = vld [vmem:[%s1008 + $0x169] sm:$0xff]
        %v7306 = vld [vmem:[%s1008 + $0x171] sm:$0xff]
        %v7307 = vld [vmem:[%s1008 + $0x189] sm:$0xff]
        %v7308 = vld [vmem:[%s1008 + $0x191] sm:$0xff]
        %v7309 = vld [vmem:[%s1008 + $0x1a9] sm:$0xff]
        %v7310 = vld [vmem:[%s1008 + $0x1b1] sm:$0xff]
        %v7311 = vld [vmem:[%s1008 + $0x1c9] sm:$0xff]
        %v7312 = vld [vmem:[%s1008 + $0x1d1] sm:$0xff]
        %v7313 = vld [vmem:[%s1008 + $0x1e9] sm:$0xff]
        %v7314 = vld [vmem:[%s1008 + $0x1f1] sm:$0xff]
        %v7315 = vpack.c.bf16 %v7284, %v7283
        %v7316 = vpack.c.bf16 %v7286, %v7285
        %v7317 = vpack.c.bf16 %v7288, %v7287
        %v7318 = vpack.c.bf16 %v7290, %v7289
        %v7319 = vpack.c.bf16 %v7292, %v7291
        %v7320 = vpack.c.bf16 %v7294, %v7293
        %v7321 = vpack.c.bf16 %v7296, %v7295
        %v7322 = vpack.c.bf16 %v7298, %v7297
        %v7323 = vpack.c.bf16 %v7300, %v7299
        %v7324 = vpack.c.bf16 %v7302, %v7301
        %v7325 = vpack.c.bf16 %v7304, %v7303
        %v7326 = vpack.c.bf16 %v7306, %v7305
        %v7327 = vpack.c.bf16 %v7308, %v7307
        %v7328 = vpack.c.bf16 %v7310, %v7309
        %v7329 = vpack.c.bf16 %v7312, %v7311
        %v7330 = vpack.c.bf16 %v7314, %v7313
        %s7331 = scalar_lea.vmem %s11, 10
        %v7332 = vld [vmem:[%s7331] sm:$0x3]
        %v7334 = vsel %vm601, %v7315, 0
        %v7337 = vsel %vm601, %v7316, 0
        %v7340 = vsel %vm601, %v7317, 0
        %v7343 = vsel %vm601, %v7318, 0
        %v7346 = vsel %vm601, %v7319, 0
        %v7349 = vsel %vm601, %v7320, 0
        %v7352 = vsel %vm601, %v7321, 0
        %v7355 = vsel %vm601, %v7322, 0
        %v7358 = vsel %vm601, %v7323, 0
        %v7361 = vsel %vm601, %v7324, 0
        %v7364 = vsel %vm601, %v7325, 0
        %v7367 = vsel %vm601, %v7326, 0
        %v7370 = vsel %vm601, %v7327, 0
        %v7373 = vsel %vm601, %v7328, 0
        %v7376 = vsel %vm601, %v7329, 0
        %v7379 = vsel %vm601, %v7330, 0
        %v7382 = vsel %vm650, %v7332, 0
        %7384 = vmatpush.bf16.msra.mxu0 0
        %7385 = vmatpush.bf16.msra.mxu0 0
        %7386 = vmatpush.bf16.msra.mxu0 0
        %7387 = vmatpush.bf16.msra.mxu0 0
        %7388 = vmatpush.bf16.msra.mxu0 0
        %7389 = vmatpush.bf16.msra.mxu0 0
        %7390 = vmatpush.bf16.msra.mxu0 0
        %7391 = vmatpush.bf16.msra.mxu0 %v7382
        %7392 = vmatmul.bf16.gmra.mxu0 %v7334
        %v7393 = vpop.f32.mrf.mxu0
        %v7394 = vadd.f32 0.0, %v7393
        %v7395 = vpop.f32.mrf.mxu0
        %v7396 = vadd.f32 0.0, %v7395
        %7397 = vmatmul.bf16.gmra.mxu0 %v7337
        %v7398 = vpop.f32.mrf.mxu0
        %v7399 = vadd.f32 0.0, %v7398
        %v7400 = vpop.f32.mrf.mxu0
        %v7401 = vadd.f32 0.0, %v7400
        %7402 = vmatmul.bf16.gmra.mxu0 %v7340
        %v7403 = vpop.f32.mrf.mxu0
        %v7404 = vadd.f32 0.0, %v7403
        %v7405 = vpop.f32.mrf.mxu0
        %v7406 = vadd.f32 0.0, %v7405
        %7407 = vmatmul.bf16.gmra.mxu0 %v7343
        %v7408 = vpop.f32.mrf.mxu0
        %v7409 = vadd.f32 0.0, %v7408
        %v7410 = vpop.f32.mrf.mxu0
        %v7411 = vadd.f32 0.0, %v7410
        %7412 = vmatmul.bf16.gmra.mxu0 %v7346
        %v7413 = vpop.f32.mrf.mxu0
        %v7414 = vadd.f32 0.0, %v7413
        %v7415 = vpop.f32.mrf.mxu0
        %v7416 = vadd.f32 0.0, %v7415
        %7417 = vmatmul.bf16.gmra.mxu0 %v7349
        %v7418 = vpop.f32.mrf.mxu0
        %v7419 = vadd.f32 0.0, %v7418
        %v7420 = vpop.f32.mrf.mxu0
        %v7421 = vadd.f32 0.0, %v7420
        %7422 = vmatmul.bf16.gmra.mxu0 %v7352
        %v7423 = vpop.f32.mrf.mxu0
        %v7424 = vadd.f32 0.0, %v7423
        %v7425 = vpop.f32.mrf.mxu0
        %v7426 = vadd.f32 0.0, %v7425
        %7427 = vmatmul.bf16.gmra.mxu0 %v7355
        %v7428 = vpop.f32.mrf.mxu0
        %v7429 = vadd.f32 0.0, %v7428
        %v7430 = vpop.f32.mrf.mxu0
        %v7431 = vadd.f32 0.0, %v7430
        %7432 = vmatmul.bf16.gmra.mxu0 %v7358
        %v7433 = vpop.f32.mrf.mxu0
        %v7434 = vadd.f32 0.0, %v7433
        %v7435 = vpop.f32.mrf.mxu0
        %v7436 = vadd.f32 0.0, %v7435
        %7437 = vmatmul.bf16.gmra.mxu0 %v7361
        %v7438 = vpop.f32.mrf.mxu0
        %v7439 = vadd.f32 0.0, %v7438
        %v7440 = vpop.f32.mrf.mxu0
        %v7441 = vadd.f32 0.0, %v7440
        %7442 = vmatmul.bf16.gmra.mxu0 %v7364
        %v7443 = vpop.f32.mrf.mxu0
        %v7444 = vadd.f32 0.0, %v7443
        %v7445 = vpop.f32.mrf.mxu0
        %v7446 = vadd.f32 0.0, %v7445
        %7447 = vmatmul.bf16.gmra.mxu0 %v7367
        %v7448 = vpop.f32.mrf.mxu0
        %v7449 = vadd.f32 0.0, %v7448
        %v7450 = vpop.f32.mrf.mxu0
        %v7451 = vadd.f32 0.0, %v7450
        %7452 = vmatmul.bf16.gmra.mxu0 %v7370
        %v7453 = vpop.f32.mrf.mxu0
        %v7454 = vadd.f32 0.0, %v7453
        %v7455 = vpop.f32.mrf.mxu0
        %v7456 = vadd.f32 0.0, %v7455
        %7457 = vmatmul.bf16.gmra.mxu0 %v7373
        %v7458 = vpop.f32.mrf.mxu0
        %v7459 = vadd.f32 0.0, %v7458
        %v7460 = vpop.f32.mrf.mxu0
        %v7461 = vadd.f32 0.0, %v7460
        %7462 = vmatmul.bf16.gmra.mxu0 %v7376
        %v7463 = vpop.f32.mrf.mxu0
        %v7464 = vadd.f32 0.0, %v7463
        %v7465 = vpop.f32.mrf.mxu0
        %v7466 = vadd.f32 0.0, %v7465
        %7467 = vmatmul.bf16.gmra.mxu0 %v7379
        %v7468 = vpop.f32.mrf.mxu0
        %v7469 = vadd.f32 0.0, %v7468
        %v7470 = vpop.f32.mrf.mxu0
        %v7471 = vadd.f32 0.0, %v7470
        %7472 = vdwg.mxu0
        %v7473 = vadd.f32 %v7251, %v7394
        %v7474 = vadd.f32 %v7252, %v7396
        %v7475 = vadd.f32 %v7253, %v7399
        %v7476 = vadd.f32 %v7254, %v7401
        %v7477 = vadd.f32 %v7255, %v7404
        %v7478 = vadd.f32 %v7256, %v7406
        %v7479 = vadd.f32 %v7257, %v7409
        %v7480 = vadd.f32 %v7258, %v7411
        %v7481 = vadd.f32 %v7259, %v7414
        %v7482 = vadd.f32 %v7260, %v7416
        %v7483 = vadd.f32 %v7261, %v7419
        %v7484 = vadd.f32 %v7262, %v7421
        %v7485 = vadd.f32 %v7263, %v7424
        %v7486 = vadd.f32 %v7264, %v7426
        %v7487 = vadd.f32 %v7265, %v7429
        %v7488 = vadd.f32 %v7266, %v7431
        %v7489 = vadd.f32 %v7267, %v7434
        %v7490 = vadd.f32 %v7268, %v7436
        %v7491 = vadd.f32 %v7269, %v7439
        %v7492 = vadd.f32 %v7270, %v7441
        %v7493 = vadd.f32 %v7271, %v7444
        %v7494 = vadd.f32 %v7272, %v7446
        %v7495 = vadd.f32 %v7273, %v7449
        %v7496 = vadd.f32 %v7274, %v7451
        %v7497 = vadd.f32 %v7275, %v7454
        %v7498 = vadd.f32 %v7276, %v7456
        %v7499 = vadd.f32 %v7277, %v7459
        %v7500 = vadd.f32 %v7278, %v7461
        %v7501 = vadd.f32 %v7279, %v7464
        %v7502 = vadd.f32 %v7280, %v7466
        %v7503 = vadd.f32 %v7281, %v7469
        %v7504 = vadd.f32 %v7282, %v7471
        %v7505 = vld [vmem:[%s2450 + $0x7] sm:$0xff]
        %v7506 = vld [vmem:[%s2450 + $0xf] sm:$0xff]
        %v7507 = vld [vmem:[%s2450 + $0x27] sm:$0xff]
        %v7508 = vld [vmem:[%s2450 + $0x2f] sm:$0xff]
        %v7509 = vld [vmem:[%s2450 + $0x47] sm:$0xff]
        %v7510 = vld [vmem:[%s2450 + $0x4f] sm:$0xff]
        %v7511 = vld [vmem:[%s2450 + $0x67] sm:$0xff]
        %v7512 = vld [vmem:[%s2450 + $0x6f] sm:$0xff]
        %v7513 = vld [vmem:[%s2450 + $0x87] sm:$0xff]
        %v7514 = vld [vmem:[%s2450 + $0x8f] sm:$0xff]
        %v7515 = vld [vmem:[%s2450 + $0xa7] sm:$0xff]
        %v7516 = vld [vmem:[%s2450 + $0xaf] sm:$0xff]
        %v7517 = vld [vmem:[%s2450 + $0xc7] sm:$0xff]
        %v7518 = vld [vmem:[%s2450 + $0xcf] sm:$0xff]
        %v7519 = vld [vmem:[%s2450 + $0xe7] sm:$0xff]
        %v7520 = vld [vmem:[%s2450 + $0xef] sm:$0xff]
        %v7521 = vld [vmem:[%s2450 + $0x107] sm:$0xff]
        %v7522 = vld [vmem:[%s2450 + $0x10f] sm:$0xff]
        %v7523 = vld [vmem:[%s2450 + $0x127] sm:$0xff]
        %v7524 = vld [vmem:[%s2450 + $0x12f] sm:$0xff]
        %v7525 = vld [vmem:[%s2450 + $0x147] sm:$0xff]
        %v7526 = vld [vmem:[%s2450 + $0x14f] sm:$0xff]
        %v7527 = vld [vmem:[%s2450 + $0x167] sm:$0xff]
        %v7528 = vld [vmem:[%s2450 + $0x16f] sm:$0xff]
        %v7529 = vld [vmem:[%s2450 + $0x187] sm:$0xff]
        %v7530 = vld [vmem:[%s2450 + $0x18f] sm:$0xff]
        %v7531 = vld [vmem:[%s2450 + $0x1a7] sm:$0xff]
        %v7532 = vld [vmem:[%s2450 + $0x1af] sm:$0xff]
        %v7533 = vld [vmem:[%s2450 + $0x1c7] sm:$0xff]
        %v7534 = vld [vmem:[%s2450 + $0x1cf] sm:$0xff]
        %v7535 = vld [vmem:[%s2450 + $0x1e7] sm:$0xff]
        %v7536 = vld [vmem:[%s2450 + $0x1ef] sm:$0xff]
        %v7537 = vpack.c.bf16 %v7506, %v7505
        %v7538 = vpack.c.bf16 %v7508, %v7507
        %v7539 = vpack.c.bf16 %v7510, %v7509
        %v7540 = vpack.c.bf16 %v7512, %v7511
        %v7541 = vpack.c.bf16 %v7514, %v7513
        %v7542 = vpack.c.bf16 %v7516, %v7515
        %v7543 = vpack.c.bf16 %v7518, %v7517
        %v7544 = vpack.c.bf16 %v7520, %v7519
        %v7545 = vpack.c.bf16 %v7522, %v7521
        %v7546 = vpack.c.bf16 %v7524, %v7523
        %v7547 = vpack.c.bf16 %v7526, %v7525
        %v7548 = vpack.c.bf16 %v7528, %v7527
        %v7549 = vpack.c.bf16 %v7530, %v7529
        %v7550 = vpack.c.bf16 %v7532, %v7531
        %v7551 = vpack.c.bf16 %v7534, %v7533
        %v7552 = vpack.c.bf16 %v7536, %v7535
        %s7553 = scalar_lea.vmem %s11, 12
        %v7554 = vld [vmem:[%s7553] sm:$0x3]
        %v7556 = vsel %vm601, %v7537, 0
        %v7559 = vsel %vm601, %v7538, 0
        %v7562 = vsel %vm601, %v7539, 0
        %v7565 = vsel %vm601, %v7540, 0
        %v7568 = vsel %vm601, %v7541, 0
        %v7571 = vsel %vm601, %v7542, 0
        %v7574 = vsel %vm601, %v7543, 0
        %v7577 = vsel %vm601, %v7544, 0
        %v7580 = vsel %vm601, %v7545, 0
        %v7583 = vsel %vm601, %v7546, 0
        %v7586 = vsel %vm601, %v7547, 0
        %v7589 = vsel %vm601, %v7548, 0
        %v7592 = vsel %vm601, %v7549, 0
        %v7595 = vsel %vm601, %v7550, 0
        %v7598 = vsel %vm601, %v7551, 0
        %v7601 = vsel %vm601, %v7552, 0
        %v7604 = vsel %vm650, %v7554, 0
        %7606 = vmatpush.bf16.msra.mxu0 0
        %7607 = vmatpush.bf16.msra.mxu0 0
        %7608 = vmatpush.bf16.msra.mxu0 0
        %7609 = vmatpush.bf16.msra.mxu0 0
        %7610 = vmatpush.bf16.msra.mxu0 0
        %7611 = vmatpush.bf16.msra.mxu0 0
        %7612 = vmatpush.bf16.msra.mxu0 0
        %7613 = vmatpush.bf16.msra.mxu0 %v7604
        %7614 = vmatmul.bf16.gmra.mxu0 %v7556
        %v7615 = vpop.f32.mrf.mxu0
        %v7616 = vadd.f32 0.0, %v7615
        %v7617 = vpop.f32.mrf.mxu0
        %v7618 = vadd.f32 0.0, %v7617
        %7619 = vmatmul.bf16.gmra.mxu0 %v7559
        %v7620 = vpop.f32.mrf.mxu0
        %v7621 = vadd.f32 0.0, %v7620
        %v7622 = vpop.f32.mrf.mxu0
        %v7623 = vadd.f32 0.0, %v7622
        %7624 = vmatmul.bf16.gmra.mxu0 %v7562
        %v7625 = vpop.f32.mrf.mxu0
        %v7626 = vadd.f32 0.0, %v7625
        %v7627 = vpop.f32.mrf.mxu0
        %v7628 = vadd.f32 0.0, %v7627
        %7629 = vmatmul.bf16.gmra.mxu0 %v7565
        %v7630 = vpop.f32.mrf.mxu0
        %v7631 = vadd.f32 0.0, %v7630
        %v7632 = vpop.f32.mrf.mxu0
        %v7633 = vadd.f32 0.0, %v7632
        %7634 = vmatmul.bf16.gmra.mxu0 %v7568
        %v7635 = vpop.f32.mrf.mxu0
        %v7636 = vadd.f32 0.0, %v7635
        %v7637 = vpop.f32.mrf.mxu0
        %v7638 = vadd.f32 0.0, %v7637
        %7639 = vmatmul.bf16.gmra.mxu0 %v7571
        %v7640 = vpop.f32.mrf.mxu0
        %v7641 = vadd.f32 0.0, %v7640
        %v7642 = vpop.f32.mrf.mxu0
        %v7643 = vadd.f32 0.0, %v7642
        %7644 = vmatmul.bf16.gmra.mxu0 %v7574
        %v7645 = vpop.f32.mrf.mxu0
        %v7646 = vadd.f32 0.0, %v7645
        %v7647 = vpop.f32.mrf.mxu0
        %v7648 = vadd.f32 0.0, %v7647
        %7649 = vmatmul.bf16.gmra.mxu0 %v7577
        %v7650 = vpop.f32.mrf.mxu0
        %v7651 = vadd.f32 0.0, %v7650
        %v7652 = vpop.f32.mrf.mxu0
        %v7653 = vadd.f32 0.0, %v7652
        %7654 = vmatmul.bf16.gmra.mxu0 %v7580
        %v7655 = vpop.f32.mrf.mxu0
        %v7656 = vadd.f32 0.0, %v7655
        %v7657 = vpop.f32.mrf.mxu0
        %v7658 = vadd.f32 0.0, %v7657
        %7659 = vmatmul.bf16.gmra.mxu0 %v7583
        %v7660 = vpop.f32.mrf.mxu0
        %v7661 = vadd.f32 0.0, %v7660
        %v7662 = vpop.f32.mrf.mxu0
        %v7663 = vadd.f32 0.0, %v7662
        %7664 = vmatmul.bf16.gmra.mxu0 %v7586
        %v7665 = vpop.f32.mrf.mxu0
        %v7666 = vadd.f32 0.0, %v7665
        %v7667 = vpop.f32.mrf.mxu0
        %v7668 = vadd.f32 0.0, %v7667
        %7669 = vmatmul.bf16.gmra.mxu0 %v7589
        %v7670 = vpop.f32.mrf.mxu0
        %v7671 = vadd.f32 0.0, %v7670
        %v7672 = vpop.f32.mrf.mxu0
        %v7673 = vadd.f32 0.0, %v7672
        %7674 = vmatmul.bf16.gmra.mxu0 %v7592
        %v7675 = vpop.f32.mrf.mxu0
        %v7676 = vadd.f32 0.0, %v7675
        %v7677 = vpop.f32.mrf.mxu0
        %v7678 = vadd.f32 0.0, %v7677
        %7679 = vmatmul.bf16.gmra.mxu0 %v7595
        %v7680 = vpop.f32.mrf.mxu0
        %v7681 = vadd.f32 0.0, %v7680
        %v7682 = vpop.f32.mrf.mxu0
        %v7683 = vadd.f32 0.0, %v7682
        %7684 = vmatmul.bf16.gmra.mxu0 %v7598
        %v7685 = vpop.f32.mrf.mxu0
        %v7686 = vadd.f32 0.0, %v7685
        %v7687 = vpop.f32.mrf.mxu0
        %v7688 = vadd.f32 0.0, %v7687
        %7689 = vmatmul.bf16.gmra.mxu0 %v7601
        %v7690 = vpop.f32.mrf.mxu0
        %v7691 = vadd.f32 0.0, %v7690
        %v7692 = vpop.f32.mrf.mxu0
        %v7693 = vadd.f32 0.0, %v7692
        %7694 = vdwg.mxu0
        %v7695 = vadd.f32 %v7473, %v7616
        %v7696 = vadd.f32 %v7474, %v7618
        %v7697 = vadd.f32 %v7475, %v7621
        %v7698 = vadd.f32 %v7476, %v7623
        %v7699 = vadd.f32 %v7477, %v7626
        %v7700 = vadd.f32 %v7478, %v7628
        %v7701 = vadd.f32 %v7479, %v7631
        %v7702 = vadd.f32 %v7480, %v7633
        %v7703 = vadd.f32 %v7481, %v7636
        %v7704 = vadd.f32 %v7482, %v7638
        %v7705 = vadd.f32 %v7483, %v7641
        %v7706 = vadd.f32 %v7484, %v7643
        %v7707 = vadd.f32 %v7485, %v7646
        %v7708 = vadd.f32 %v7486, %v7648
        %v7709 = vadd.f32 %v7487, %v7651
        %v7710 = vadd.f32 %v7488, %v7653
        %v7711 = vadd.f32 %v7489, %v7656
        %v7712 = vadd.f32 %v7490, %v7658
        %v7713 = vadd.f32 %v7491, %v7661
        %v7714 = vadd.f32 %v7492, %v7663
        %v7715 = vadd.f32 %v7493, %v7666
        %v7716 = vadd.f32 %v7494, %v7668
        %v7717 = vadd.f32 %v7495, %v7671
        %v7718 = vadd.f32 %v7496, %v7673
        %v7719 = vadd.f32 %v7497, %v7676
        %v7720 = vadd.f32 %v7498, %v7678
        %v7721 = vadd.f32 %v7499, %v7681
        %v7722 = vadd.f32 %v7500, %v7683
        %v7723 = vadd.f32 %v7501, %v7686
        %v7724 = vadd.f32 %v7502, %v7688
        %v7725 = vadd.f32 %v7503, %v7691
        %v7726 = vadd.f32 %v7504, %v7693
        %v7727 = vld [vmem:[%s2450 + $0x8] sm:$0xff]
        %v7728 = vld [vmem:[%s2450 + $0x10] sm:$0xff]
        %v7729 = vld [vmem:[%s2450 + $0x28] sm:$0xff]
        %v7730 = vld [vmem:[%s2450 + $0x30] sm:$0xff]
        %v7731 = vld [vmem:[%s2450 + $0x48] sm:$0xff]
        %v7732 = vld [vmem:[%s2450 + $0x50] sm:$0xff]
        %v7733 = vld [vmem:[%s2450 + $0x68] sm:$0xff]
        %v7734 = vld [vmem:[%s2450 + $0x70] sm:$0xff]
        %v7735 = vld [vmem:[%s2450 + $0x88] sm:$0xff]
        %v7736 = vld [vmem:[%s2450 + $0x90] sm:$0xff]
        %v7737 = vld [vmem:[%s2450 + $0xa8] sm:$0xff]
        %v7738 = vld [vmem:[%s2450 + $0xb0] sm:$0xff]
        %v7739 = vld [vmem:[%s2450 + $0xc8] sm:$0xff]
        %v7740 = vld [vmem:[%s2450 + $0xd0] sm:$0xff]
        %v7741 = vld [vmem:[%s2450 + $0xe8] sm:$0xff]
        %v7742 = vld [vmem:[%s2450 + $0xf0] sm:$0xff]
        %v7743 = vld [vmem:[%s2450 + $0x108] sm:$0xff]
        %v7744 = vld [vmem:[%s2450 + $0x110] sm:$0xff]
        %v7745 = vld [vmem:[%s2450 + $0x128] sm:$0xff]
        %v7746 = vld [vmem:[%s2450 + $0x130] sm:$0xff]
        %v7747 = vld [vmem:[%s2450 + $0x148] sm:$0xff]
        %v7748 = vld [vmem:[%s2450 + $0x150] sm:$0xff]
        %v7749 = vld [vmem:[%s2450 + $0x168] sm:$0xff]
        %v7750 = vld [vmem:[%s2450 + $0x170] sm:$0xff]
        %v7751 = vld [vmem:[%s2450 + $0x188] sm:$0xff]
        %v7752 = vld [vmem:[%s2450 + $0x190] sm:$0xff]
        %v7753 = vld [vmem:[%s2450 + $0x1a8] sm:$0xff]
        %v7754 = vld [vmem:[%s2450 + $0x1b0] sm:$0xff]
        %v7755 = vld [vmem:[%s2450 + $0x1c8] sm:$0xff]
        %v7756 = vld [vmem:[%s2450 + $0x1d0] sm:$0xff]
        %v7757 = vld [vmem:[%s2450 + $0x1e8] sm:$0xff]
        %v7758 = vld [vmem:[%s2450 + $0x1f0] sm:$0xff]
        %v7759 = vpack.c.bf16 %v7728, %v7727
        %v7760 = vpack.c.bf16 %v7730, %v7729
        %v7761 = vpack.c.bf16 %v7732, %v7731
        %v7762 = vpack.c.bf16 %v7734, %v7733
        %v7763 = vpack.c.bf16 %v7736, %v7735
        %v7764 = vpack.c.bf16 %v7738, %v7737
        %v7765 = vpack.c.bf16 %v7740, %v7739
        %v7766 = vpack.c.bf16 %v7742, %v7741
        %v7767 = vpack.c.bf16 %v7744, %v7743
        %v7768 = vpack.c.bf16 %v7746, %v7745
        %v7769 = vpack.c.bf16 %v7748, %v7747
        %v7770 = vpack.c.bf16 %v7750, %v7749
        %v7771 = vpack.c.bf16 %v7752, %v7751
        %v7772 = vpack.c.bf16 %v7754, %v7753
        %v7773 = vpack.c.bf16 %v7756, %v7755
        %v7774 = vpack.c.bf16 %v7758, %v7757
        %s7775 = scalar_lea.vmem %s11, 14
        %v7776 = vld [vmem:[%s7775] sm:$0x3]
        %v7778 = vsel %vm601, %v7759, 0
        %v7781 = vsel %vm601, %v7760, 0
        %v7784 = vsel %vm601, %v7761, 0
        %v7787 = vsel %vm601, %v7762, 0
        %v7790 = vsel %vm601, %v7763, 0
        %v7793 = vsel %vm601, %v7764, 0
        %v7796 = vsel %vm601, %v7765, 0
        %v7799 = vsel %vm601, %v7766, 0
        %v7802 = vsel %vm601, %v7767, 0
        %v7805 = vsel %vm601, %v7768, 0
        %v7808 = vsel %vm601, %v7769, 0
        %v7811 = vsel %vm601, %v7770, 0
        %v7814 = vsel %vm601, %v7771, 0
        %v7817 = vsel %vm601, %v7772, 0
        %v7820 = vsel %vm601, %v7773, 0
        %v7823 = vsel %vm601, %v7774, 0
        %v7826 = vsel %vm650, %v7776, 0
        %7828 = vmatpush.bf16.msra.mxu0 0
        %7829 = vmatpush.bf16.msra.mxu0 0
        %7830 = vmatpush.bf16.msra.mxu0 0
        %7831 = vmatpush.bf16.msra.mxu0 0
        %7832 = vmatpush.bf16.msra.mxu0 0
        %7833 = vmatpush.bf16.msra.mxu0 0
        %7834 = vmatpush.bf16.msra.mxu0 0
        %7835 = vmatpush.bf16.msra.mxu0 %v7826
        %7836 = vmatmul.bf16.gmra.mxu0 %v7778
        %v7837 = vpop.f32.mrf.mxu0
        %v7838 = vadd.f32 0.0, %v7837
        %v7839 = vpop.f32.mrf.mxu0
        %v7840 = vadd.f32 0.0, %v7839
        %7841 = vmatmul.bf16.gmra.mxu0 %v7781
        %v7842 = vpop.f32.mrf.mxu0
        %v7843 = vadd.f32 0.0, %v7842
        %v7844 = vpop.f32.mrf.mxu0
        %v7845 = vadd.f32 0.0, %v7844
        %7846 = vmatmul.bf16.gmra.mxu0 %v7784
        %v7847 = vpop.f32.mrf.mxu0
        %v7848 = vadd.f32 0.0, %v7847
        %v7849 = vpop.f32.mrf.mxu0
        %v7850 = vadd.f32 0.0, %v7849
        %7851 = vmatmul.bf16.gmra.mxu0 %v7787
        %v7852 = vpop.f32.mrf.mxu0
        %v7853 = vadd.f32 0.0, %v7852
        %v7854 = vpop.f32.mrf.mxu0
        %v7855 = vadd.f32 0.0, %v7854
        %7856 = vmatmul.bf16.gmra.mxu0 %v7790
        %v7857 = vpop.f32.mrf.mxu0
        %v7858 = vadd.f32 0.0, %v7857
        %v7859 = vpop.f32.mrf.mxu0
        %v7860 = vadd.f32 0.0, %v7859
        %7861 = vmatmul.bf16.gmra.mxu0 %v7793
        %v7862 = vpop.f32.mrf.mxu0
        %v7863 = vadd.f32 0.0, %v7862
        %v7864 = vpop.f32.mrf.mxu0
        %v7865 = vadd.f32 0.0, %v7864
        %7866 = vmatmul.bf16.gmra.mxu0 %v7796
        %v7867 = vpop.f32.mrf.mxu0
        %v7868 = vadd.f32 0.0, %v7867
        %v7869 = vpop.f32.mrf.mxu0
        %v7870 = vadd.f32 0.0, %v7869
        %7871 = vmatmul.bf16.gmra.mxu0 %v7799
        %v7872 = vpop.f32.mrf.mxu0
        %v7873 = vadd.f32 0.0, %v7872
        %v7874 = vpop.f32.mrf.mxu0
        %v7875 = vadd.f32 0.0, %v7874
        %7876 = vmatmul.bf16.gmra.mxu0 %v7802
        %v7877 = vpop.f32.mrf.mxu0
        %v7878 = vadd.f32 0.0, %v7877
        %v7879 = vpop.f32.mrf.mxu0
        %v7880 = vadd.f32 0.0, %v7879
        %7881 = vmatmul.bf16.gmra.mxu0 %v7805
        %v7882 = vpop.f32.mrf.mxu0
        %v7883 = vadd.f32 0.0, %v7882
        %v7884 = vpop.f32.mrf.mxu0
        %v7885 = vadd.f32 0.0, %v7884
        %7886 = vmatmul.bf16.gmra.mxu0 %v7808
        %v7887 = vpop.f32.mrf.mxu0
        %v7888 = vadd.f32 0.0, %v7887
        %v7889 = vpop.f32.mrf.mxu0
        %v7890 = vadd.f32 0.0, %v7889
        %7891 = vmatmul.bf16.gmra.mxu0 %v7811
        %v7892 = vpop.f32.mrf.mxu0
        %v7893 = vadd.f32 0.0, %v7892
        %v7894 = vpop.f32.mrf.mxu0
        %v7895 = vadd.f32 0.0, %v7894
        %7896 = vmatmul.bf16.gmra.mxu0 %v7814
        %v7897 = vpop.f32.mrf.mxu0
        %v7898 = vadd.f32 0.0, %v7897
        %v7899 = vpop.f32.mrf.mxu0
        %v7900 = vadd.f32 0.0, %v7899
        %7901 = vmatmul.bf16.gmra.mxu0 %v7817
        %v7902 = vpop.f32.mrf.mxu0
        %v7903 = vadd.f32 0.0, %v7902
        %v7904 = vpop.f32.mrf.mxu0
        %v7905 = vadd.f32 0.0, %v7904
        %7906 = vmatmul.bf16.gmra.mxu0 %v7820
        %v7907 = vpop.f32.mrf.mxu0
        %v7908 = vadd.f32 0.0, %v7907
        %v7909 = vpop.f32.mrf.mxu0
        %v7910 = vadd.f32 0.0, %v7909
        %7911 = vmatmul.bf16.gmra.mxu0 %v7823
        %v7912 = vpop.f32.mrf.mxu0
        %v7913 = vadd.f32 0.0, %v7912
        %v7914 = vpop.f32.mrf.mxu0
        %v7915 = vadd.f32 0.0, %v7914
        %7916 = vdwg.mxu0
        %v7917 = vadd.f32 %v7695, %v7838
        %v7918 = vadd.f32 %v7696, %v7840
        %v7919 = vadd.f32 %v7697, %v7843
        %v7920 = vadd.f32 %v7698, %v7845
        %v7921 = vadd.f32 %v7699, %v7848
        %v7922 = vadd.f32 %v7700, %v7850
        %v7923 = vadd.f32 %v7701, %v7853
        %v7924 = vadd.f32 %v7702, %v7855
        %v7925 = vadd.f32 %v7703, %v7858
        %v7926 = vadd.f32 %v7704, %v7860
        %v7927 = vadd.f32 %v7705, %v7863
        %v7928 = vadd.f32 %v7706, %v7865
        %v7929 = vadd.f32 %v7707, %v7868
        %v7930 = vadd.f32 %v7708, %v7870
        %v7931 = vadd.f32 %v7709, %v7873
        %v7932 = vadd.f32 %v7710, %v7875
        %v7933 = vadd.f32 %v7711, %v7878
        %v7934 = vadd.f32 %v7712, %v7880
        %v7935 = vadd.f32 %v7713, %v7883
        %v7936 = vadd.f32 %v7714, %v7885
        %v7937 = vadd.f32 %v7715, %v7888
        %v7938 = vadd.f32 %v7716, %v7890
        %v7939 = vadd.f32 %v7717, %v7893
        %v7940 = vadd.f32 %v7718, %v7895
        %v7941 = vadd.f32 %v7719, %v7898
        %v7942 = vadd.f32 %v7720, %v7900
        %v7943 = vadd.f32 %v7721, %v7903
        %v7944 = vadd.f32 %v7722, %v7905
        %v7945 = vadd.f32 %v7723, %v7908
        %v7946 = vadd.f32 %v7724, %v7910
        %v7947 = vadd.f32 %v7725, %v7913
        %v7948 = vadd.f32 %v7726, %v7915
        %v7949 = vld [vmem:[%s2450 + $0x9] sm:$0xff]
        %v7950 = vld [vmem:[%s2450 + $0x11] sm:$0xff]
        %v7951 = vld [vmem:[%s2450 + $0x29] sm:$0xff]
        %v7952 = vld [vmem:[%s2450 + $0x31] sm:$0xff]
        %v7953 = vld [vmem:[%s2450 + $0x49] sm:$0xff]
        %v7954 = vld [vmem:[%s2450 + $0x51] sm:$0xff]
        %v7955 = vld [vmem:[%s2450 + $0x69] sm:$0xff]
        %v7956 = vld [vmem:[%s2450 + $0x71] sm:$0xff]
        %v7957 = vld [vmem:[%s2450 + $0x89] sm:$0xff]
        %v7958 = vld [vmem:[%s2450 + $0x91] sm:$0xff]
        %v7959 = vld [vmem:[%s2450 + $0xa9] sm:$0xff]
        %v7960 = vld [vmem:[%s2450 + $0xb1] sm:$0xff]
        %v7961 = vld [vmem:[%s2450 + $0xc9] sm:$0xff]
        %v7962 = vld [vmem:[%s2450 + $0xd1] sm:$0xff]
        %v7963 = vld [vmem:[%s2450 + $0xe9] sm:$0xff]
        %v7964 = vld [vmem:[%s2450 + $0xf1] sm:$0xff]
        %v7965 = vld [vmem:[%s2450 + $0x109] sm:$0xff]
        %v7966 = vld [vmem:[%s2450 + $0x111] sm:$0xff]
        %v7967 = vld [vmem:[%s2450 + $0x129] sm:$0xff]
        %v7968 = vld [vmem:[%s2450 + $0x131] sm:$0xff]
        %v7969 = vld [vmem:[%s2450 + $0x149] sm:$0xff]
        %v7970 = vld [vmem:[%s2450 + $0x151] sm:$0xff]
        %v7971 = vld [vmem:[%s2450 + $0x169] sm:$0xff]
        %v7972 = vld [vmem:[%s2450 + $0x171] sm:$0xff]
        %v7973 = vld [vmem:[%s2450 + $0x189] sm:$0xff]
        %v7974 = vld [vmem:[%s2450 + $0x191] sm:$0xff]
        %v7975 = vld [vmem:[%s2450 + $0x1a9] sm:$0xff]
        %v7976 = vld [vmem:[%s2450 + $0x1b1] sm:$0xff]
        %v7977 = vld [vmem:[%s2450 + $0x1c9] sm:$0xff]
        %v7978 = vld [vmem:[%s2450 + $0x1d1] sm:$0xff]
        %v7979 = vld [vmem:[%s2450 + $0x1e9] sm:$0xff]
        %v7980 = vld [vmem:[%s2450 + $0x1f1] sm:$0xff]
        %v7981 = vpack.c.bf16 %v7950, %v7949
        %v7982 = vpack.c.bf16 %v7952, %v7951
        %v7983 = vpack.c.bf16 %v7954, %v7953
        %v7984 = vpack.c.bf16 %v7956, %v7955
        %v7985 = vpack.c.bf16 %v7958, %v7957
        %v7986 = vpack.c.bf16 %v7960, %v7959
        %v7987 = vpack.c.bf16 %v7962, %v7961
        %v7988 = vpack.c.bf16 %v7964, %v7963
        %v7989 = vpack.c.bf16 %v7966, %v7965
        %v7990 = vpack.c.bf16 %v7968, %v7967
        %v7991 = vpack.c.bf16 %v7970, %v7969
        %v7992 = vpack.c.bf16 %v7972, %v7971
        %v7993 = vpack.c.bf16 %v7974, %v7973
        %v7994 = vpack.c.bf16 %v7976, %v7975
        %v7995 = vpack.c.bf16 %v7978, %v7977
        %v7996 = vpack.c.bf16 %v7980, %v7979
        %s7997 = scalar_lea.vmem %s11, 16
        %v7998 = vld [vmem:[%s7997] sm:$0x3]
        %v8000 = vsel %vm601, %v7981, 0
        %v8003 = vsel %vm601, %v7982, 0
        %v8006 = vsel %vm601, %v7983, 0
        %v8009 = vsel %vm601, %v7984, 0
        %v8012 = vsel %vm601, %v7985, 0
        %v8015 = vsel %vm601, %v7986, 0
        %v8018 = vsel %vm601, %v7987, 0
        %v8021 = vsel %vm601, %v7988, 0
        %v8024 = vsel %vm601, %v7989, 0
        %v8027 = vsel %vm601, %v7990, 0
        %v8030 = vsel %vm601, %v7991, 0
        %v8033 = vsel %vm601, %v7992, 0
        %v8036 = vsel %vm601, %v7993, 0
        %v8039 = vsel %vm601, %v7994, 0
        %v8042 = vsel %vm601, %v7995, 0
        %v8045 = vsel %vm601, %v7996, 0
        %v8048 = vsel %vm650, %v7998, 0
        %8050 = vmatpush.bf16.msra.mxu0 0
        %8051 = vmatpush.bf16.msra.mxu0 0
        %8052 = vmatpush.bf16.msra.mxu0 0
        %8053 = vmatpush.bf16.msra.mxu0 0
        %8054 = vmatpush.bf16.msra.mxu0 0
        %8055 = vmatpush.bf16.msra.mxu0 0
        %8056 = vmatpush.bf16.msra.mxu0 0
        %8057 = vmatpush.bf16.msra.mxu0 %v8048
        %8058 = vmatmul.bf16.gmra.mxu0 %v8000
        %v8059 = vpop.f32.mrf.mxu0
        %v8060 = vadd.f32 0.0, %v8059
        %v8061 = vpop.f32.mrf.mxu0
        %v8062 = vadd.f32 0.0, %v8061
        %8063 = vmatmul.bf16.gmra.mxu0 %v8003
        %v8064 = vpop.f32.mrf.mxu0
        %v8065 = vadd.f32 0.0, %v8064
        %v8066 = vpop.f32.mrf.mxu0
        %v8067 = vadd.f32 0.0, %v8066
        %8068 = vmatmul.bf16.gmra.mxu0 %v8006
        %v8069 = vpop.f32.mrf.mxu0
        %v8070 = vadd.f32 0.0, %v8069
        %v8071 = vpop.f32.mrf.mxu0
        %v8072 = vadd.f32 0.0, %v8071
        %8073 = vmatmul.bf16.gmra.mxu0 %v8009
        %v8074 = vpop.f32.mrf.mxu0
        %v8075 = vadd.f32 0.0, %v8074
        %v8076 = vpop.f32.mrf.mxu0
        %v8077 = vadd.f32 0.0, %v8076
        %8078 = vmatmul.bf16.gmra.mxu0 %v8012
        %v8079 = vpop.f32.mrf.mxu0
        %v8080 = vadd.f32 0.0, %v8079
        %v8081 = vpop.f32.mrf.mxu0
        %v8082 = vadd.f32 0.0, %v8081
        %8083 = vmatmul.bf16.gmra.mxu0 %v8015
        %v8084 = vpop.f32.mrf.mxu0
        %v8085 = vadd.f32 0.0, %v8084
        %v8086 = vpop.f32.mrf.mxu0
        %v8087 = vadd.f32 0.0, %v8086
        %8088 = vmatmul.bf16.gmra.mxu0 %v8018
        %v8089 = vpop.f32.mrf.mxu0
        %v8090 = vadd.f32 0.0, %v8089
        %v8091 = vpop.f32.mrf.mxu0
        %v8092 = vadd.f32 0.0, %v8091
        %8093 = vmatmul.bf16.gmra.mxu0 %v8021
        %v8094 = vpop.f32.mrf.mxu0
        %v8095 = vadd.f32 0.0, %v8094
        %v8096 = vpop.f32.mrf.mxu0
        %v8097 = vadd.f32 0.0, %v8096
        %8098 = vmatmul.bf16.gmra.mxu0 %v8024
        %v8099 = vpop.f32.mrf.mxu0
        %v8100 = vadd.f32 0.0, %v8099
        %v8101 = vpop.f32.mrf.mxu0
        %v8102 = vadd.f32 0.0, %v8101
        %8103 = vmatmul.bf16.gmra.mxu0 %v8027
        %v8104 = vpop.f32.mrf.mxu0
        %v8105 = vadd.f32 0.0, %v8104
        %v8106 = vpop.f32.mrf.mxu0
        %v8107 = vadd.f32 0.0, %v8106
        %8108 = vmatmul.bf16.gmra.mxu0 %v8030
        %v8109 = vpop.f32.mrf.mxu0
        %v8110 = vadd.f32 0.0, %v8109
        %v8111 = vpop.f32.mrf.mxu0
        %v8112 = vadd.f32 0.0, %v8111
        %8113 = vmatmul.bf16.gmra.mxu0 %v8033
        %v8114 = vpop.f32.mrf.mxu0
        %v8115 = vadd.f32 0.0, %v8114
        %v8116 = vpop.f32.mrf.mxu0
        %v8117 = vadd.f32 0.0, %v8116
        %8118 = vmatmul.bf16.gmra.mxu0 %v8036
        %v8119 = vpop.f32.mrf.mxu0
        %v8120 = vadd.f32 0.0, %v8119
        %v8121 = vpop.f32.mrf.mxu0
        %v8122 = vadd.f32 0.0, %v8121
        %8123 = vmatmul.bf16.gmra.mxu0 %v8039
        %v8124 = vpop.f32.mrf.mxu0
        %v8125 = vadd.f32 0.0, %v8124
        %v8126 = vpop.f32.mrf.mxu0
        %v8127 = vadd.f32 0.0, %v8126
        %8128 = vmatmul.bf16.gmra.mxu0 %v8042
        %v8129 = vpop.f32.mrf.mxu0
        %v8130 = vadd.f32 0.0, %v8129
        %v8131 = vpop.f32.mrf.mxu0
        %v8132 = vadd.f32 0.0, %v8131
        %8133 = vmatmul.bf16.gmra.mxu0 %v8045
        %v8134 = vpop.f32.mrf.mxu0
        %v8135 = vadd.f32 0.0, %v8134
        %v8136 = vpop.f32.mrf.mxu0
        %v8137 = vadd.f32 0.0, %v8136
        %8138 = vdwg.mxu0
        %v8139 = vadd.f32 %v7917, %v8060
        %v8140 = vadd.f32 %v7918, %v8062
        %v8141 = vadd.f32 %v7919, %v8065
        %v8142 = vadd.f32 %v7920, %v8067
        %v8143 = vadd.f32 %v7921, %v8070
        %v8144 = vadd.f32 %v7922, %v8072
        %v8145 = vadd.f32 %v7923, %v8075
        %v8146 = vadd.f32 %v7924, %v8077
        %v8147 = vadd.f32 %v7925, %v8080
        %v8148 = vadd.f32 %v7926, %v8082
        %v8149 = vadd.f32 %v7927, %v8085
        %v8150 = vadd.f32 %v7928, %v8087
        %v8151 = vadd.f32 %v7929, %v8090
        %v8152 = vadd.f32 %v7930, %v8092
        %v8153 = vadd.f32 %v7931, %v8095
        %v8154 = vadd.f32 %v7932, %v8097
        %v8155 = vadd.f32 %v7933, %v8100
        %v8156 = vadd.f32 %v7934, %v8102
        %v8157 = vadd.f32 %v7935, %v8105
        %v8158 = vadd.f32 %v7936, %v8107
        %v8159 = vadd.f32 %v7937, %v8110
        %v8160 = vadd.f32 %v7938, %v8112
        %v8161 = vadd.f32 %v7939, %v8115
        %v8162 = vadd.f32 %v7940, %v8117
        %v8163 = vadd.f32 %v7941, %v8120
        %v8164 = vadd.f32 %v7942, %v8122
        %v8165 = vadd.f32 %v7943, %v8125
        %v8166 = vadd.f32 %v7944, %v8127
        %v8167 = vadd.f32 %v7945, %v8130
        %v8168 = vadd.f32 %v7946, %v8132
        %v8169 = vadd.f32 %v7947, %v8135
        %v8170 = vadd.f32 %v7948, %v8137
        %v8171 = vld [vmem:[%s12] sm:$0x1]
        %v8173 = vperm.slane %v8171, 0
        %v8175 = vadd.f32 %v8139, %v8173
        %v8176 = vadd.f32 %v8140, %v8173
        %v8177 = vadd.f32 %v8141, %v8173
        %v8178 = vadd.f32 %v8142, %v8173
        %v8179 = vadd.f32 %v8143, %v8173
        %v8180 = vadd.f32 %v8144, %v8173
        %v8181 = vadd.f32 %v8145, %v8173
        %v8182 = vadd.f32 %v8146, %v8173
        %v8183 = vadd.f32 %v8147, %v8173
        %v8184 = vadd.f32 %v8148, %v8173
        %v8185 = vadd.f32 %v8149, %v8173
        %v8186 = vadd.f32 %v8150, %v8173
        %v8187 = vadd.f32 %v8151, %v8173
        %v8188 = vadd.f32 %v8152, %v8173
        %v8189 = vadd.f32 %v8153, %v8173
        %v8190 = vadd.f32 %v8154, %v8173
        %v8191 = vadd.f32 %v8155, %v8173
        %v8192 = vadd.f32 %v8156, %v8173
        %v8193 = vadd.f32 %v8157, %v8173
        %v8194 = vadd.f32 %v8158, %v8173
        %v8195 = vadd.f32 %v8159, %v8173
        %v8196 = vadd.f32 %v8160, %v8173
        %v8197 = vadd.f32 %v8161, %v8173
        %v8198 = vadd.f32 %v8162, %v8173
        %v8199 = vadd.f32 %v8163, %v8173
        %v8200 = vadd.f32 %v8164, %v8173
        %v8201 = vadd.f32 %v8165, %v8173
        %v8202 = vadd.f32 %v8166, %v8173
        %v8203 = vadd.f32 %v8167, %v8173
        %v8204 = vadd.f32 %v8168, %v8173
        %v8205 = vadd.f32 %v8169, %v8173
        %v8206 = vadd.f32 %v8170, %v8173
        %v8207 = vmax.f32 %v8175, 0.0
        %v8208 = vmax.f32 %v8176, 0.0
        %v8209 = vmax.f32 %v8177, 0.0
        %v8210 = vmax.f32 %v8178, 0.0
        %v8211 = vmax.f32 %v8179, 0.0
        %v8212 = vmax.f32 %v8180, 0.0
        %v8213 = vmax.f32 %v8181, 0.0
        %v8214 = vmax.f32 %v8182, 0.0
        %v8215 = vmax.f32 %v8183, 0.0
        %v8216 = vmax.f32 %v8184, 0.0
        %v8217 = vmax.f32 %v8185, 0.0
        %v8218 = vmax.f32 %v8186, 0.0
        %v8219 = vmax.f32 %v8187, 0.0
        %v8220 = vmax.f32 %v8188, 0.0
        %v8221 = vmax.f32 %v8189, 0.0
        %v8222 = vmax.f32 %v8190, 0.0
        %v8223 = vmax.f32 %v8191, 0.0
        %v8224 = vmax.f32 %v8192, 0.0
        %v8225 = vmax.f32 %v8193, 0.0
        %v8226 = vmax.f32 %v8194, 0.0
        %v8227 = vmax.f32 %v8195, 0.0
        %v8228 = vmax.f32 %v8196, 0.0
        %v8229 = vmax.f32 %v8197, 0.0
        %v8230 = vmax.f32 %v8198, 0.0
        %v8231 = vmax.f32 %v8199, 0.0
        %v8232 = vmax.f32 %v8200, 0.0
        %v8233 = vmax.f32 %v8201, 0.0
        %v8234 = vmax.f32 %v8202, 0.0
        %v8235 = vmax.f32 %v8203, 0.0
        %v8236 = vmax.f32 %v8204, 0.0
        %v8237 = vmax.f32 %v8205, 0.0
        %v8238 = vmax.f32 %v8206, 0.0
        %8239 = vst.msk [vmem:[#allocation2] sm:$0xff] %vm775, 0.0
        %8240 = vst.msk [vmem:[#allocation2 + $0x8] sm:$0xff] %vm775, 0.0
        %8241 = vst.msk [vmem:[#allocation2 + $0x10] sm:$0xff] %vm775, 0.0
        %8242 = vst.msk [vmem:[#allocation2 + $0x18] sm:$0xff] %vm775, 0.0
        %8243 = vst.msk [vmem:[#allocation2 + $0x20] sm:$0xff] %vm775, 0.0
        %8244 = vst.msk [vmem:[#allocation2 + $0x28] sm:$0xff] %vm775, 0.0
        %8245 = vst.msk [vmem:[#allocation2 + $0x30] sm:$0xff] %vm775, 0.0
        %8246 = vst.msk [vmem:[#allocation2 + $0x38] sm:$0xff] %vm775, 0.0
        %8247 = vst.msk [vmem:[#allocation2 + $0x40] sm:$0xff] %vm775, 0.0
        %8248 = vst.msk [vmem:[#allocation2 + $0x48] sm:$0xff] %vm775, 0.0
        %8249 = vst.msk [vmem:[#allocation2 + $0x50] sm:$0xff] %vm775, 0.0
        %8250 = vst.msk [vmem:[#allocation2 + $0x58] sm:$0xff] %vm775, 0.0
        %8251 = vst.msk [vmem:[#allocation2 + $0x60] sm:$0xff] %vm775, 0.0
        %8252 = vst.msk [vmem:[#allocation2 + $0x68] sm:$0xff] %vm775, 0.0
        %8253 = vst.msk [vmem:[#allocation2 + $0x70] sm:$0xff] %vm775, 0.0
        %8254 = vst.msk [vmem:[#allocation2 + $0x78] sm:$0xff] %vm775, 0.0
        %8255 = vst.msk [vmem:[#allocation2 + $0x80] sm:$0xff] %vm775, 0.0
        %8256 = vst.msk [vmem:[#allocation2 + $0x88] sm:$0xff] %vm775, 0.0
        %8257 = vst.msk [vmem:[#allocation2 + $0x90] sm:$0xff] %vm775, 0.0
        %8258 = vst.msk [vmem:[#allocation2 + $0x98] sm:$0xff] %vm775, 0.0
        %8259 = vst.msk [vmem:[#allocation2 + $0xa0] sm:$0xff] %vm775, 0.0
        %8260 = vst.msk [vmem:[#allocation2 + $0xa8] sm:$0xff] %vm775, 0.0
        %8261 = vst.msk [vmem:[#allocation2 + $0xb0] sm:$0xff] %vm775, 0.0
        %8262 = vst.msk [vmem:[#allocation2 + $0xb8] sm:$0xff] %vm775, 0.0
        %8263 = vst.msk [vmem:[#allocation2 + $0xc0] sm:$0xff] %vm775, 0.0
        %8264 = vst.msk [vmem:[#allocation2 + $0xc8] sm:$0xff] %vm775, 0.0
        %8265 = vst.msk [vmem:[#allocation2 + $0xd0] sm:$0xff] %vm775, 0.0
        %8266 = vst.msk [vmem:[#allocation2 + $0xd8] sm:$0xff] %vm775, 0.0
        %8267 = vst.msk [vmem:[#allocation2 + $0xe0] sm:$0xff] %vm775, 0.0
        %8268 = vst.msk [vmem:[#allocation2 + $0xe8] sm:$0xff] %vm775, 0.0
        %8269 = vst.msk [vmem:[#allocation2 + $0xf0] sm:$0xff] %vm775, 0.0
        %8270 = vst.msk [vmem:[#allocation2 + $0xf8] sm:$0xff] %vm775, 0.0
        %8271 = vst.msk [vmem:[#allocation2 + $0x100] sm:$0xff] %vm775, 0.0
        %8272 = vst.msk [vmem:[#allocation2 + $0x108] sm:$0xff] %vm775, 0.0
        %8273 = vst.msk [vmem:[#allocation2 + $0x110] sm:$0xff] %vm775, 0.0
        %8274 = vst.msk [vmem:[#allocation2 + $0x118] sm:$0xff] %vm775, 0.0
        %8275 = vst.msk [vmem:[#allocation2 + $0x120] sm:$0xff] %vm775, 0.0
        %8276 = vst.msk [vmem:[#allocation2 + $0x128] sm:$0xff] %vm775, 0.0
        %8277 = vst.msk [vmem:[#allocation2 + $0x130] sm:$0xff] %vm775, 0.0
        %8278 = vst.msk [vmem:[#allocation2 + $0x138] sm:$0xff] %vm775, 0.0
        %8279 = vst.msk [vmem:[#allocation2 + $0x140] sm:$0xff] %vm775, 0.0
        %8280 = vst.msk [vmem:[#allocation2 + $0x148] sm:$0xff] %vm775, 0.0
        %8281 = vst.msk [vmem:[#allocation2 + $0x150] sm:$0xff] %vm775, 0.0
        %8282 = vst.msk [vmem:[#allocation2 + $0x158] sm:$0xff] %vm775, 0.0
        %8283 = vst.msk [vmem:[#allocation2 + $0x160] sm:$0xff] %vm775, 0.0
        %8284 = vst.msk [vmem:[#allocation2 + $0x168] sm:$0xff] %vm775, 0.0
        %8285 = vst.msk [vmem:[#allocation2 + $0x170] sm:$0xff] %vm775, 0.0
        %8286 = vst.msk [vmem:[#allocation2 + $0x178] sm:$0xff] %vm775, 0.0
        %8287 = vst.msk [vmem:[#allocation2 + $0x180] sm:$0xff] %vm775, 0.0
        %8288 = vst.msk [vmem:[#allocation2 + $0x188] sm:$0xff] %vm775, 0.0
        %8289 = vst.msk [vmem:[#allocation2 + $0x190] sm:$0xff] %vm775, 0.0
        %8290 = vst.msk [vmem:[#allocation2 + $0x198] sm:$0xff] %vm775, 0.0
        %8291 = vst.msk [vmem:[#allocation2 + $0x1a0] sm:$0xff] %vm775, 0.0
        %8292 = vst.msk [vmem:[#allocation2 + $0x1a8] sm:$0xff] %vm775, 0.0
        %8293 = vst.msk [vmem:[#allocation2 + $0x1b0] sm:$0xff] %vm775, 0.0
        %8294 = vst.msk [vmem:[#allocation2 + $0x1b8] sm:$0xff] %vm775, 0.0
        %8295 = vst.msk [vmem:[#allocation2 + $0x1c0] sm:$0xff] %vm775, 0.0
        %8296 = vst.msk [vmem:[#allocation2 + $0x1c8] sm:$0xff] %vm775, 0.0
        %8297 = vst.msk [vmem:[#allocation2 + $0x1d0] sm:$0xff] %vm775, 0.0
        %8298 = vst.msk [vmem:[#allocation2 + $0x1d8] sm:$0xff] %vm775, 0.0
        %8299 = vst.msk [vmem:[#allocation2 + $0x1e0] sm:$0xff] %vm775, 0.0
        %8300 = vst.msk [vmem:[#allocation2 + $0x1e8] sm:$0xff] %vm775, 0.0
        %8301 = vst.msk [vmem:[#allocation2 + $0x1f0] sm:$0xff] %vm775, 0.0
        %8302 = vst.msk [vmem:[#allocation2 + $0x1f8] sm:$0xff] %vm775, 0.0
        %8303 = vst.msk [vmem:[#allocation2 + $0x200] sm:$0xff] %vm775, 0.0
        %8304 = vst.msk [vmem:[#allocation2 + $0x208] sm:$0xff] %vm775, 0.0
        %8305 = vst.msk [vmem:[#allocation2 + $0x210] sm:$0xff] %vm775, 0.0
        %8306 = vst.msk [vmem:[#allocation2 + $0x218] sm:$0xff] %vm775, 0.0
        %8307 = vst.msk [vmem:[#allocation2 + $0x220] sm:$0xff] %vm775, 0.0
        %8308 = vst.msk [vmem:[#allocation2 + $0x228] sm:$0xff] %vm775, 0.0
        %8309 = vst.msk [vmem:[#allocation2 + $0x230] sm:$0xff] %vm775, 0.0
        %8310 = vst.msk [vmem:[#allocation2 + $0x238] sm:$0xff] %vm775, 0.0
        %8311 = vst.msk [vmem:[%s1008 + $0x8] sm:$0xff] %vm775, %v8207
        %8312 = vst.msk [vmem:[%s1008 + $0x10] sm:$0xff] %vm775, %v8208
        %8313 = vst.msk [vmem:[%s1008 + $0x28] sm:$0xff] %vm775, %v8209
        %8314 = vst.msk [vmem:[%s1008 + $0x30] sm:$0xff] %vm775, %v8210
        %8315 = vst.msk [vmem:[%s1008 + $0x48] sm:$0xff] %vm775, %v8211
        %8316 = vst.msk [vmem:[%s1008 + $0x50] sm:$0xff] %vm775, %v8212
        %8317 = vst.msk [vmem:[%s1008 + $0x68] sm:$0xff] %vm775, %v8213
        %8318 = vst.msk [vmem:[%s1008 + $0x70] sm:$0xff] %vm775, %v8214
        %8319 = vst.msk [vmem:[%s1008 + $0x88] sm:$0xff] %vm775, %v8215
        %8320 = vst.msk [vmem:[%s1008 + $0x90] sm:$0xff] %vm775, %v8216
        %8321 = vst.msk [vmem:[%s1008 + $0xa8] sm:$0xff] %vm775, %v8217
        %8322 = vst.msk [vmem:[%s1008 + $0xb0] sm:$0xff] %vm775, %v8218
        %8323 = vst.msk [vmem:[%s1008 + $0xc8] sm:$0xff] %vm775, %v8219
        %8324 = vst.msk [vmem:[%s1008 + $0xd0] sm:$0xff] %vm775, %v8220
        %8325 = vst.msk [vmem:[%s1008 + $0xe8] sm:$0xff] %vm775, %v8221
        %8326 = vst.msk [vmem:[%s1008 + $0xf0] sm:$0xff] %vm775, %v8222
        %8327 = vst.msk [vmem:[%s1008 + $0x108] sm:$0xff] %vm775, %v8223
        %8328 = vst.msk [vmem:[%s1008 + $0x110] sm:$0xff] %vm775, %v8224
        %8329 = vst.msk [vmem:[%s1008 + $0x128] sm:$0xff] %vm775, %v8225
        %8330 = vst.msk [vmem:[%s1008 + $0x130] sm:$0xff] %vm775, %v8226
        %8331 = vst.msk [vmem:[%s1008 + $0x148] sm:$0xff] %vm775, %v8227
        %8332 = vst.msk [vmem:[%s1008 + $0x150] sm:$0xff] %vm775, %v8228
        %8333 = vst.msk [vmem:[%s1008 + $0x168] sm:$0xff] %vm775, %v8229
        %8334 = vst.msk [vmem:[%s1008 + $0x170] sm:$0xff] %vm775, %v8230
        %8335 = vst.msk [vmem:[%s1008 + $0x188] sm:$0xff] %vm775, %v8231
        %8336 = vst.msk [vmem:[%s1008 + $0x190] sm:$0xff] %vm775, %v8232
        %8337 = vst.msk [vmem:[%s1008 + $0x1a8] sm:$0xff] %vm775, %v8233
        %8338 = vst.msk [vmem:[%s1008 + $0x1b0] sm:$0xff] %vm775, %v8234
        %8339 = vst.msk [vmem:[%s1008 + $0x1c8] sm:$0xff] %vm775, %v8235
        %8340 = vst.msk [vmem:[%s1008 + $0x1d0] sm:$0xff] %vm775, %v8236
        %8341 = vst.msk [vmem:[%s1008 + $0x1e8] sm:$0xff] %vm775, %v8237
        %8342 = vst.msk [vmem:[%s1008 + $0x1f0] sm:$0xff] %vm775, %v8238
        %v8343 = vld [vmem:[#allocation2 + $0x8] sm:$0xff]
        %v8344 = vld [vmem:[#allocation2 + $0x10] sm:$0xff]
        %v8345 = vld [vmem:[#allocation2 + $0x28] sm:$0xff]
        %v8346 = vld [vmem:[#allocation2 + $0x30] sm:$0xff]
        %v8347 = vld [vmem:[#allocation2 + $0x48] sm:$0xff]
        %v8348 = vld [vmem:[#allocation2 + $0x50] sm:$0xff]
        %v8349 = vld [vmem:[#allocation2 + $0x68] sm:$0xff]
        %v8350 = vld [vmem:[#allocation2 + $0x70] sm:$0xff]
        %v8351 = vld [vmem:[#allocation2 + $0x88] sm:$0xff]
        %v8352 = vld [vmem:[#allocation2 + $0x90] sm:$0xff]
        %v8353 = vld [vmem:[#allocation2 + $0xa8] sm:$0xff]
        %v8354 = vld [vmem:[#allocation2 + $0xb0] sm:$0xff]
        %v8355 = vld [vmem:[#allocation2 + $0xc8] sm:$0xff]
        %v8356 = vld [vmem:[#allocation2 + $0xd0] sm:$0xff]
        %v8357 = vld [vmem:[#allocation2 + $0xe8] sm:$0xff]
        %v8358 = vld [vmem:[#allocation2 + $0xf0] sm:$0xff]
        %v8359 = vld [vmem:[#allocation2 + $0x108] sm:$0xff]
        %v8360 = vld [vmem:[#allocation2 + $0x110] sm:$0xff]
        %v8361 = vld [vmem:[#allocation2 + $0x128] sm:$0xff]
        %v8362 = vld [vmem:[#allocation2 + $0x130] sm:$0xff]
        %v8363 = vld [vmem:[#allocation2 + $0x148] sm:$0xff]
        %v8364 = vld [vmem:[#allocation2 + $0x150] sm:$0xff]
        %v8365 = vld [vmem:[#allocation2 + $0x168] sm:$0xff]
        %v8366 = vld [vmem:[#allocation2 + $0x170] sm:$0xff]
        %v8367 = vld [vmem:[#allocation2 + $0x188] sm:$0xff]
        %v8368 = vld [vmem:[#allocation2 + $0x190] sm:$0xff]
        %v8369 = vld [vmem:[#allocation2 + $0x1a8] sm:$0xff]
        %v8370 = vld [vmem:[#allocation2 + $0x1b0] sm:$0xff]
        %v8371 = vld [vmem:[#allocation2 + $0x1c8] sm:$0xff]
        %v8372 = vld [vmem:[#allocation2 + $0x1d0] sm:$0xff]
        %v8373 = vld [vmem:[#allocation2 + $0x1e8] sm:$0xff]
        %v8374 = vld [vmem:[#allocation2 + $0x1f0] sm:$0xff]
        %v8375 = vpack.c.bf16 %v8344, %v8343
        %v8376 = vpack.c.bf16 %v8346, %v8345
        %v8377 = vpack.c.bf16 %v8348, %v8347
        %v8378 = vpack.c.bf16 %v8350, %v8349
        %v8379 = vpack.c.bf16 %v8352, %v8351
        %v8380 = vpack.c.bf16 %v8354, %v8353
        %v8381 = vpack.c.bf16 %v8356, %v8355
        %v8382 = vpack.c.bf16 %v8358, %v8357
        %v8383 = vpack.c.bf16 %v8360, %v8359
        %v8384 = vpack.c.bf16 %v8362, %v8361
        %v8385 = vpack.c.bf16 %v8364, %v8363
        %v8386 = vpack.c.bf16 %v8366, %v8365
        %v8387 = vpack.c.bf16 %v8368, %v8367
        %v8388 = vpack.c.bf16 %v8370, %v8369
        %v8389 = vpack.c.bf16 %v8372, %v8371
        %v8390 = vpack.c.bf16 %v8374, %v8373
        %v8391 = vld [vmem:[%s13] sm:$0xf]
        %v8392 = vld [vmem:[%s1008 + $0x8] sm:$0xff]
        %v8393 = vld [vmem:[%s1008 + $0x10] sm:$0xff]
        %v8394 = vld [vmem:[%s1008 + $0x28] sm:$0xff]
        %v8395 = vld [vmem:[%s1008 + $0x30] sm:$0xff]
        %v8396 = vld [vmem:[%s1008 + $0x48] sm:$0xff]
        %v8397 = vld [vmem:[%s1008 + $0x50] sm:$0xff]
        %v8398 = vld [vmem:[%s1008 + $0x68] sm:$0xff]
        %v8399 = vld [vmem:[%s1008 + $0x70] sm:$0xff]
        %v8400 = vld [vmem:[%s1008 + $0x88] sm:$0xff]
        %v8401 = vld [vmem:[%s1008 + $0x90] sm:$0xff]
        %v8402 = vld [vmem:[%s1008 + $0xa8] sm:$0xff]
        %v8403 = vld [vmem:[%s1008 + $0xb0] sm:$0xff]
        %v8404 = vld [vmem:[%s1008 + $0xc8] sm:$0xff]
        %v8405 = vld [vmem:[%s1008 + $0xd0] sm:$0xff]
        %v8406 = vld [vmem:[%s1008 + $0xe8] sm:$0xff]
        %v8407 = vld [vmem:[%s1008 + $0xf0] sm:$0xff]
        %v8408 = vld [vmem:[%s1008 + $0x108] sm:$0xff]
        %v8409 = vld [vmem:[%s1008 + $0x110] sm:$0xff]
        %v8410 = vld [vmem:[%s1008 + $0x128] sm:$0xff]
        %v8411 = vld [vmem:[%s1008 + $0x130] sm:$0xff]
        %v8412 = vld [vmem:[%s1008 + $0x148] sm:$0xff]
        %v8413 = vld [vmem:[%s1008 + $0x150] sm:$0xff]
        %v8414 = vld [vmem:[%s1008 + $0x168] sm:$0xff]
        %v8415 = vld [vmem:[%s1008 + $0x170] sm:$0xff]
        %v8416 = vld [vmem:[%s1008 + $0x188] sm:$0xff]
        %v8417 = vld [vmem:[%s1008 + $0x190] sm:$0xff]
        %v8418 = vld [vmem:[%s1008 + $0x1a8] sm:$0xff]
        %v8419 = vld [vmem:[%s1008 + $0x1b0] sm:$0xff]
        %v8420 = vld [vmem:[%s1008 + $0x1c8] sm:$0xff]
        %v8421 = vld [vmem:[%s1008 + $0x1d0] sm:$0xff]
        %v8422 = vld [vmem:[%s1008 + $0x1e8] sm:$0xff]
        %v8423 = vld [vmem:[%s1008 + $0x1f0] sm:$0xff]
        %v8424 = vpack.c.bf16 %v8393, %v8392
        %v8425 = vpack.c.bf16 %v8395, %v8394
        %v8426 = vpack.c.bf16 %v8397, %v8396
        %v8427 = vpack.c.bf16 %v8399, %v8398
        %v8428 = vpack.c.bf16 %v8401, %v8400
        %v8429 = vpack.c.bf16 %v8403, %v8402
        %v8430 = vpack.c.bf16 %v8405, %v8404
        %v8431 = vpack.c.bf16 %v8407, %v8406
        %v8432 = vpack.c.bf16 %v8409, %v8408
        %v8433 = vpack.c.bf16 %v8411, %v8410
        %v8434 = vpack.c.bf16 %v8413, %v8412
        %v8435 = vpack.c.bf16 %v8415, %v8414
        %v8436 = vpack.c.bf16 %v8417, %v8416
        %v8437 = vpack.c.bf16 %v8419, %v8418
        %v8438 = vpack.c.bf16 %v8421, %v8420
        %v8439 = vpack.c.bf16 %v8423, %v8422
        %s8440 = scalar_lea.vmem %s13, 4
        %v8441 = vld [vmem:[%s8440] sm:$0xf]
        %v8443 = vsel %vm775, %v8424, 0
        %v8446 = vsel %vm775, %v8425, 0
        %v8449 = vsel %vm775, %v8426, 0
        %v8452 = vsel %vm775, %v8427, 0
        %v8455 = vsel %vm775, %v8428, 0
        %v8458 = vsel %vm775, %v8429, 0
        %v8461 = vsel %vm775, %v8430, 0
        %v8464 = vsel %vm775, %v8431, 0
        %v8467 = vsel %vm775, %v8432, 0
        %v8470 = vsel %vm775, %v8433, 0
        %v8473 = vsel %vm775, %v8434, 0
        %v8476 = vsel %vm775, %v8435, 0
        %v8479 = vsel %vm775, %v8436, 0
        %v8482 = vsel %vm775, %v8437, 0
        %v8485 = vsel %vm775, %v8438, 0
        %v8488 = vsel %vm775, %v8439, 0
        %v8491 = vsel %vm5354, %v8441, 0
        %8493 = vmatpush.bf16.msra.mxu0 0
        %8494 = vmatpush.bf16.msra.mxu0 0
        %8495 = vmatpush.bf16.msra.mxu0 0
        %8496 = vmatpush.bf16.msra.mxu0 0
        %8497 = vmatpush.bf16.msra.mxu0 0
        %8498 = vmatpush.bf16.msra.mxu0 0
        %8499 = vmatpush.bf16.msra.mxu0 0
        %8500 = vmatpush.bf16.msra.mxu0 %v8491
        %8501 = vmatmul.bf16.gmra.mxu0 %v8443
        %v8502 = vpop.f32.mrf.mxu0
        %v8503 = vadd.f32 0.0, %v8502
        %v8504 = vpop.f32.mrf.mxu0
        %v8505 = vadd.f32 0.0, %v8504
        %8506 = vmatmul.bf16.gmra.mxu0 %v8446
        %v8507 = vpop.f32.mrf.mxu0
        %v8508 = vadd.f32 0.0, %v8507
        %v8509 = vpop.f32.mrf.mxu0
        %v8510 = vadd.f32 0.0, %v8509
        %8511 = vmatmul.bf16.gmra.mxu0 %v8449
        %v8512 = vpop.f32.mrf.mxu0
        %v8513 = vadd.f32 0.0, %v8512
        %v8514 = vpop.f32.mrf.mxu0
        %v8515 = vadd.f32 0.0, %v8514
        %8516 = vmatmul.bf16.gmra.mxu0 %v8452
        %v8517 = vpop.f32.mrf.mxu0
        %v8518 = vadd.f32 0.0, %v8517
        %v8519 = vpop.f32.mrf.mxu0
        %v8520 = vadd.f32 0.0, %v8519
        %8521 = vmatmul.bf16.gmra.mxu0 %v8455
        %v8522 = vpop.f32.mrf.mxu0
        %v8523 = vadd.f32 0.0, %v8522
        %v8524 = vpop.f32.mrf.mxu0
        %v8525 = vadd.f32 0.0, %v8524
        %8526 = vmatmul.bf16.gmra.mxu0 %v8458
        %v8527 = vpop.f32.mrf.mxu0
        %v8528 = vadd.f32 0.0, %v8527
        %v8529 = vpop.f32.mrf.mxu0
        %v8530 = vadd.f32 0.0, %v8529
        %8531 = vmatmul.bf16.gmra.mxu0 %v8461
        %v8532 = vpop.f32.mrf.mxu0
        %v8533 = vadd.f32 0.0, %v8532
        %v8534 = vpop.f32.mrf.mxu0
        %v8535 = vadd.f32 0.0, %v8534
        %8536 = vmatmul.bf16.gmra.mxu0 %v8464
        %v8537 = vpop.f32.mrf.mxu0
        %v8538 = vadd.f32 0.0, %v8537
        %v8539 = vpop.f32.mrf.mxu0
        %v8540 = vadd.f32 0.0, %v8539
        %8541 = vmatmul.bf16.gmra.mxu0 %v8467
        %v8542 = vpop.f32.mrf.mxu0
        %v8543 = vadd.f32 0.0, %v8542
        %v8544 = vpop.f32.mrf.mxu0
        %v8545 = vadd.f32 0.0, %v8544
        %8546 = vmatmul.bf16.gmra.mxu0 %v8470
        %v8547 = vpop.f32.mrf.mxu0
        %v8548 = vadd.f32 0.0, %v8547
        %v8549 = vpop.f32.mrf.mxu0
        %v8550 = vadd.f32 0.0, %v8549
        %8551 = vmatmul.bf16.gmra.mxu0 %v8473
        %v8552 = vpop.f32.mrf.mxu0
        %v8553 = vadd.f32 0.0, %v8552
        %v8554 = vpop.f32.mrf.mxu0
        %v8555 = vadd.f32 0.0, %v8554
        %8556 = vmatmul.bf16.gmra.mxu0 %v8476
        %v8557 = vpop.f32.mrf.mxu0
        %v8558 = vadd.f32 0.0, %v8557
        %v8559 = vpop.f32.mrf.mxu0
        %v8560 = vadd.f32 0.0, %v8559
        %8561 = vmatmul.bf16.gmra.mxu0 %v8479
        %v8562 = vpop.f32.mrf.mxu0
        %v8563 = vadd.f32 0.0, %v8562
        %v8564 = vpop.f32.mrf.mxu0
        %v8565 = vadd.f32 0.0, %v8564
        %8566 = vmatmul.bf16.gmra.mxu0 %v8482
        %v8567 = vpop.f32.mrf.mxu0
        %v8568 = vadd.f32 0.0, %v8567
        %v8569 = vpop.f32.mrf.mxu0
        %v8570 = vadd.f32 0.0, %v8569
        %8571 = vmatmul.bf16.gmra.mxu0 %v8485
        %v8572 = vpop.f32.mrf.mxu0
        %v8573 = vadd.f32 0.0, %v8572
        %v8574 = vpop.f32.mrf.mxu0
        %v8575 = vadd.f32 0.0, %v8574
        %8576 = vmatmul.bf16.gmra.mxu0 %v8488
        %v8577 = vpop.f32.mrf.mxu0
        %v8578 = vadd.f32 0.0, %v8577
        %v8579 = vpop.f32.mrf.mxu0
        %v8580 = vadd.f32 0.0, %v8579
        %8581 = vdwg.mxu0
        %v8583 = vsel %vm775, %v8375, 0
        %v8586 = vsel %vm775, %v8376, 0
        %v8589 = vsel %vm775, %v8377, 0
        %v8592 = vsel %vm775, %v8378, 0
        %v8595 = vsel %vm775, %v8379, 0
        %v8598 = vsel %vm775, %v8380, 0
        %v8601 = vsel %vm775, %v8381, 0
        %v8604 = vsel %vm775, %v8382, 0
        %v8607 = vsel %vm775, %v8383, 0
        %v8610 = vsel %vm775, %v8384, 0
        %v8613 = vsel %vm775, %v8385, 0
        %v8616 = vsel %vm775, %v8386, 0
        %v8619 = vsel %vm775, %v8387, 0
        %v8622 = vsel %vm775, %v8388, 0
        %v8625 = vsel %vm775, %v8389, 0
        %v8628 = vsel %vm775, %v8390, 0
        %v8631 = vsel %vm5354, %v8391, 0
        %8633 = vmatpush.bf16.msra.mxu0 0
        %8634 = vmatpush.bf16.msra.mxu0 0
        %8635 = vmatpush.bf16.msra.mxu0 0
        %8636 = vmatpush.bf16.msra.mxu0 0
        %8637 = vmatpush.bf16.msra.mxu0 0
        %8638 = vmatpush.bf16.msra.mxu0 0
        %8639 = vmatpush.bf16.msra.mxu0 0
        %8640 = vmatpush.bf16.msra.mxu0 %v8631
        %8641 = vmatmul.bf16.gmra.mxu0 %v8583
        %v8642 = vpop.f32.mrf.mxu0
        %v8643 = vadd.f32 %v8503, %v8642
        %v8644 = vpop.f32.mrf.mxu0
        %v8645 = vadd.f32 %v8505, %v8644
        %8646 = vmatmul.bf16.gmra.mxu0 %v8586
        %v8647 = vpop.f32.mrf.mxu0
        %v8648 = vadd.f32 %v8508, %v8647
        %v8649 = vpop.f32.mrf.mxu0
        %v8650 = vadd.f32 %v8510, %v8649
        %8651 = vmatmul.bf16.gmra.mxu0 %v8589
        %v8652 = vpop.f32.mrf.mxu0
        %v8653 = vadd.f32 %v8513, %v8652
        %v8654 = vpop.f32.mrf.mxu0
        %v8655 = vadd.f32 %v8515, %v8654
        %8656 = vmatmul.bf16.gmra.mxu0 %v8592
        %v8657 = vpop.f32.mrf.mxu0
        %v8658 = vadd.f32 %v8518, %v8657
        %v8659 = vpop.f32.mrf.mxu0
        %v8660 = vadd.f32 %v8520, %v8659
        %8661 = vmatmul.bf16.gmra.mxu0 %v8595
        %v8662 = vpop.f32.mrf.mxu0
        %v8663 = vadd.f32 %v8523, %v8662
        %v8664 = vpop.f32.mrf.mxu0
        %v8665 = vadd.f32 %v8525, %v8664
        %8666 = vmatmul.bf16.gmra.mxu0 %v8598
        %v8667 = vpop.f32.mrf.mxu0
        %v8668 = vadd.f32 %v8528, %v8667
        %v8669 = vpop.f32.mrf.mxu0
        %v8670 = vadd.f32 %v8530, %v8669
        %8671 = vmatmul.bf16.gmra.mxu0 %v8601
        %v8672 = vpop.f32.mrf.mxu0
        %v8673 = vadd.f32 %v8533, %v8672
        %v8674 = vpop.f32.mrf.mxu0
        %v8675 = vadd.f32 %v8535, %v8674
        %8676 = vmatmul.bf16.gmra.mxu0 %v8604
        %v8677 = vpop.f32.mrf.mxu0
        %v8678 = vadd.f32 %v8538, %v8677
        %v8679 = vpop.f32.mrf.mxu0
        %v8680 = vadd.f32 %v8540, %v8679
        %8681 = vmatmul.bf16.gmra.mxu0 %v8607
        %v8682 = vpop.f32.mrf.mxu0
        %v8683 = vadd.f32 %v8543, %v8682
        %v8684 = vpop.f32.mrf.mxu0
        %v8685 = vadd.f32 %v8545, %v8684
        %8686 = vmatmul.bf16.gmra.mxu0 %v8610
        %v8687 = vpop.f32.mrf.mxu0
        %v8688 = vadd.f32 %v8548, %v8687
        %v8689 = vpop.f32.mrf.mxu0
        %v8690 = vadd.f32 %v8550, %v8689
        %8691 = vmatmul.bf16.gmra.mxu0 %v8613
        %v8692 = vpop.f32.mrf.mxu0
        %v8693 = vadd.f32 %v8553, %v8692
        %v8694 = vpop.f32.mrf.mxu0
        %v8695 = vadd.f32 %v8555, %v8694
        %8696 = vmatmul.bf16.gmra.mxu0 %v8616
        %v8697 = vpop.f32.mrf.mxu0
        %v8698 = vadd.f32 %v8558, %v8697
        %v8699 = vpop.f32.mrf.mxu0
        %v8700 = vadd.f32 %v8560, %v8699
        %8701 = vmatmul.bf16.gmra.mxu0 %v8619
        %v8702 = vpop.f32.mrf.mxu0
        %v8703 = vadd.f32 %v8563, %v8702
        %v8704 = vpop.f32.mrf.mxu0
        %v8705 = vadd.f32 %v8565, %v8704
        %8706 = vmatmul.bf16.gmra.mxu0 %v8622
        %v8707 = vpop.f32.mrf.mxu0
        %v8708 = vadd.f32 %v8568, %v8707
        %v8709 = vpop.f32.mrf.mxu0
        %v8710 = vadd.f32 %v8570, %v8709
        %8711 = vmatmul.bf16.gmra.mxu0 %v8625
        %v8712 = vpop.f32.mrf.mxu0
        %v8713 = vadd.f32 %v8573, %v8712
        %v8714 = vpop.f32.mrf.mxu0
        %v8715 = vadd.f32 %v8575, %v8714
        %8716 = vmatmul.bf16.gmra.mxu0 %v8628
        %v8717 = vpop.f32.mrf.mxu0
        %v8718 = vadd.f32 %v8578, %v8717
        %v8719 = vpop.f32.mrf.mxu0
        %v8720 = vadd.f32 %v8580, %v8719
        %8721 = vdwg.mxu0
        %v8722 = vld [vmem:[%s2450 + $0x8] sm:$0xff]
        %v8723 = vld [vmem:[%s2450 + $0x10] sm:$0xff]
        %v8724 = vld [vmem:[%s2450 + $0x28] sm:$0xff]
        %v8725 = vld [vmem:[%s2450 + $0x30] sm:$0xff]
        %v8726 = vld [vmem:[%s2450 + $0x48] sm:$0xff]
        %v8727 = vld [vmem:[%s2450 + $0x50] sm:$0xff]
        %v8728 = vld [vmem:[%s2450 + $0x68] sm:$0xff]
        %v8729 = vld [vmem:[%s2450 + $0x70] sm:$0xff]
        %v8730 = vld [vmem:[%s2450 + $0x88] sm:$0xff]
        %v8731 = vld [vmem:[%s2450 + $0x90] sm:$0xff]
        %v8732 = vld [vmem:[%s2450 + $0xa8] sm:$0xff]
        %v8733 = vld [vmem:[%s2450 + $0xb0] sm:$0xff]
        %v8734 = vld [vmem:[%s2450 + $0xc8] sm:$0xff]
        %v8735 = vld [vmem:[%s2450 + $0xd0] sm:$0xff]
        %v8736 = vld [vmem:[%s2450 + $0xe8] sm:$0xff]
        %v8737 = vld [vmem:[%s2450 + $0xf0] sm:$0xff]
        %v8738 = vld [vmem:[%s2450 + $0x108] sm:$0xff]
        %v8739 = vld [vmem:[%s2450 + $0x110] sm:$0xff]
        %v8740 = vld [vmem:[%s2450 + $0x128] sm:$0xff]
        %v8741 = vld [vmem:[%s2450 + $0x130] sm:$0xff]
        %v8742 = vld [vmem:[%s2450 + $0x148] sm:$0xff]
        %v8743 = vld [vmem:[%s2450 + $0x150] sm:$0xff]
        %v8744 = vld [vmem:[%s2450 + $0x168] sm:$0xff]
        %v8745 = vld [vmem:[%s2450 + $0x170] sm:$0xff]
        %v8746 = vld [vmem:[%s2450 + $0x188] sm:$0xff]
        %v8747 = vld [vmem:[%s2450 + $0x190] sm:$0xff]
        %v8748 = vld [vmem:[%s2450 + $0x1a8] sm:$0xff]
        %v8749 = vld [vmem:[%s2450 + $0x1b0] sm:$0xff]
        %v8750 = vld [vmem:[%s2450 + $0x1c8] sm:$0xff]
        %v8751 = vld [vmem:[%s2450 + $0x1d0] sm:$0xff]
        %v8752 = vld [vmem:[%s2450 + $0x1e8] sm:$0xff]
        %v8753 = vld [vmem:[%s2450 + $0x1f0] sm:$0xff]
        %v8754 = vpack.c.bf16 %v8723, %v8722
        %v8755 = vpack.c.bf16 %v8725, %v8724
        %v8756 = vpack.c.bf16 %v8727, %v8726
        %v8757 = vpack.c.bf16 %v8729, %v8728
        %v8758 = vpack.c.bf16 %v8731, %v8730
        %v8759 = vpack.c.bf16 %v8733, %v8732
        %v8760 = vpack.c.bf16 %v8735, %v8734
        %v8761 = vpack.c.bf16 %v8737, %v8736
        %v8762 = vpack.c.bf16 %v8739, %v8738
        %v8763 = vpack.c.bf16 %v8741, %v8740
        %v8764 = vpack.c.bf16 %v8743, %v8742
        %v8765 = vpack.c.bf16 %v8745, %v8744
        %v8766 = vpack.c.bf16 %v8747, %v8746
        %v8767 = vpack.c.bf16 %v8749, %v8748
        %v8768 = vpack.c.bf16 %v8751, %v8750
        %v8769 = vpack.c.bf16 %v8753, %v8752
        %s8770 = scalar_lea.vmem %s13, 8
        %v8771 = vld [vmem:[%s8770] sm:$0xf]
        %v8773 = vsel %vm775, %v8754, 0
        %v8776 = vsel %vm775, %v8755, 0
        %v8779 = vsel %vm775, %v8756, 0
        %v8782 = vsel %vm775, %v8757, 0
        %v8785 = vsel %vm775, %v8758, 0
        %v8788 = vsel %vm775, %v8759, 0
        %v8791 = vsel %vm775, %v8760, 0
        %v8794 = vsel %vm775, %v8761, 0
        %v8797 = vsel %vm775, %v8762, 0
        %v8800 = vsel %vm775, %v8763, 0
        %v8803 = vsel %vm775, %v8764, 0
        %v8806 = vsel %vm775, %v8765, 0
        %v8809 = vsel %vm775, %v8766, 0
        %v8812 = vsel %vm775, %v8767, 0
        %v8815 = vsel %vm775, %v8768, 0
        %v8818 = vsel %vm775, %v8769, 0
        %v8821 = vsel %vm5354, %v8771, 0
        %8823 = vmatpush.bf16.msra.mxu0 0
        %8824 = vmatpush.bf16.msra.mxu0 0
        %8825 = vmatpush.bf16.msra.mxu0 0
        %8826 = vmatpush.bf16.msra.mxu0 0
        %8827 = vmatpush.bf16.msra.mxu0 0
        %8828 = vmatpush.bf16.msra.mxu0 0
        %8829 = vmatpush.bf16.msra.mxu0 0
        %8830 = vmatpush.bf16.msra.mxu0 %v8821
        %8831 = vmatmul.bf16.gmra.mxu0 %v8773
        %v8832 = vpop.f32.mrf.mxu0
        %v8833 = vadd.f32 0.0, %v8832
        %v8834 = vpop.f32.mrf.mxu0
        %v8835 = vadd.f32 0.0, %v8834
        %8836 = vmatmul.bf16.gmra.mxu0 %v8776
        %v8837 = vpop.f32.mrf.mxu0
        %v8838 = vadd.f32 0.0, %v8837
        %v8839 = vpop.f32.mrf.mxu0
        %v8840 = vadd.f32 0.0, %v8839
        %8841 = vmatmul.bf16.gmra.mxu0 %v8779
        %v8842 = vpop.f32.mrf.mxu0
        %v8843 = vadd.f32 0.0, %v8842
        %v8844 = vpop.f32.mrf.mxu0
        %v8845 = vadd.f32 0.0, %v8844
        %8846 = vmatmul.bf16.gmra.mxu0 %v8782
        %v8847 = vpop.f32.mrf.mxu0
        %v8848 = vadd.f32 0.0, %v8847
        %v8849 = vpop.f32.mrf.mxu0
        %v8850 = vadd.f32 0.0, %v8849
        %8851 = vmatmul.bf16.gmra.mxu0 %v8785
        %v8852 = vpop.f32.mrf.mxu0
        %v8853 = vadd.f32 0.0, %v8852
        %v8854 = vpop.f32.mrf.mxu0
        %v8855 = vadd.f32 0.0, %v8854
        %8856 = vmatmul.bf16.gmra.mxu0 %v8788
        %v8857 = vpop.f32.mrf.mxu0
        %v8858 = vadd.f32 0.0, %v8857
        %v8859 = vpop.f32.mrf.mxu0
        %v8860 = vadd.f32 0.0, %v8859
        %8861 = vmatmul.bf16.gmra.mxu0 %v8791
        %v8862 = vpop.f32.mrf.mxu0
        %v8863 = vadd.f32 0.0, %v8862
        %v8864 = vpop.f32.mrf.mxu0
        %v8865 = vadd.f32 0.0, %v8864
        %8866 = vmatmul.bf16.gmra.mxu0 %v8794
        %v8867 = vpop.f32.mrf.mxu0
        %v8868 = vadd.f32 0.0, %v8867
        %v8869 = vpop.f32.mrf.mxu0
        %v8870 = vadd.f32 0.0, %v8869
        %8871 = vmatmul.bf16.gmra.mxu0 %v8797
        %v8872 = vpop.f32.mrf.mxu0
        %v8873 = vadd.f32 0.0, %v8872
        %v8874 = vpop.f32.mrf.mxu0
        %v8875 = vadd.f32 0.0, %v8874
        %8876 = vmatmul.bf16.gmra.mxu0 %v8800
        %v8877 = vpop.f32.mrf.mxu0
        %v8878 = vadd.f32 0.0, %v8877
        %v8879 = vpop.f32.mrf.mxu0
        %v8880 = vadd.f32 0.0, %v8879
        %8881 = vmatmul.bf16.gmra.mxu0 %v8803
        %v8882 = vpop.f32.mrf.mxu0
        %v8883 = vadd.f32 0.0, %v8882
        %v8884 = vpop.f32.mrf.mxu0
        %v8885 = vadd.f32 0.0, %v8884
        %8886 = vmatmul.bf16.gmra.mxu0 %v8806
        %v8887 = vpop.f32.mrf.mxu0
        %v8888 = vadd.f32 0.0, %v8887
        %v8889 = vpop.f32.mrf.mxu0
        %v8890 = vadd.f32 0.0, %v8889
        %8891 = vmatmul.bf16.gmra.mxu0 %v8809
        %v8892 = vpop.f32.mrf.mxu0
        %v8893 = vadd.f32 0.0, %v8892
        %v8894 = vpop.f32.mrf.mxu0
        %v8895 = vadd.f32 0.0, %v8894
        %8896 = vmatmul.bf16.gmra.mxu0 %v8812
        %v8897 = vpop.f32.mrf.mxu0
        %v8898 = vadd.f32 0.0, %v8897
        %v8899 = vpop.f32.mrf.mxu0
        %v8900 = vadd.f32 0.0, %v8899
        %8901 = vmatmul.bf16.gmra.mxu0 %v8815
        %v8902 = vpop.f32.mrf.mxu0
        %v8903 = vadd.f32 0.0, %v8902
        %v8904 = vpop.f32.mrf.mxu0
        %v8905 = vadd.f32 0.0, %v8904
        %8906 = vmatmul.bf16.gmra.mxu0 %v8818
        %v8907 = vpop.f32.mrf.mxu0
        %v8908 = vadd.f32 0.0, %v8907
        %v8909 = vpop.f32.mrf.mxu0
        %v8910 = vadd.f32 0.0, %v8909
        %8911 = vdwg.mxu0
        %v8912 = vadd.f32 %v8643, %v8833
        %v8913 = vadd.f32 %v8645, %v8835
        %v8914 = vadd.f32 %v8648, %v8838
        %v8915 = vadd.f32 %v8650, %v8840
        %v8916 = vadd.f32 %v8653, %v8843
        %v8917 = vadd.f32 %v8655, %v8845
        %v8918 = vadd.f32 %v8658, %v8848
        %v8919 = vadd.f32 %v8660, %v8850
        %v8920 = vadd.f32 %v8663, %v8853
        %v8921 = vadd.f32 %v8665, %v8855
        %v8922 = vadd.f32 %v8668, %v8858
        %v8923 = vadd.f32 %v8670, %v8860
        %v8924 = vadd.f32 %v8673, %v8863
        %v8925 = vadd.f32 %v8675, %v8865
        %v8926 = vadd.f32 %v8678, %v8868
        %v8927 = vadd.f32 %v8680, %v8870
        %v8928 = vadd.f32 %v8683, %v8873
        %v8929 = vadd.f32 %v8685, %v8875
        %v8930 = vadd.f32 %v8688, %v8878
        %v8931 = vadd.f32 %v8690, %v8880
        %v8932 = vadd.f32 %v8693, %v8883
        %v8933 = vadd.f32 %v8695, %v8885
        %v8934 = vadd.f32 %v8698, %v8888
        %v8935 = vadd.f32 %v8700, %v8890
        %v8936 = vadd.f32 %v8703, %v8893
        %v8937 = vadd.f32 %v8705, %v8895
        %v8938 = vadd.f32 %v8708, %v8898
        %v8939 = vadd.f32 %v8710, %v8900
        %v8940 = vadd.f32 %v8713, %v8903
        %v8941 = vadd.f32 %v8715, %v8905
        %v8942 = vadd.f32 %v8718, %v8908
        %v8943 = vadd.f32 %v8720, %v8910
        %v8944 = vld [vmem:[%s14] sm:$0x1]
        %v8946 = vperm.slane %v8944, 0
        %v8948 = vadd.f32 %v8912, %v8946
        %v8949 = vadd.f32 %v8913, %v8946
        %v8950 = vadd.f32 %v8914, %v8946
        %v8951 = vadd.f32 %v8915, %v8946
        %v8952 = vadd.f32 %v8916, %v8946
        %v8953 = vadd.f32 %v8917, %v8946
        %v8954 = vadd.f32 %v8918, %v8946
        %v8955 = vadd.f32 %v8919, %v8946
        %v8956 = vadd.f32 %v8920, %v8946
        %v8957 = vadd.f32 %v8921, %v8946
        %v8958 = vadd.f32 %v8922, %v8946
        %v8959 = vadd.f32 %v8923, %v8946
        %v8960 = vadd.f32 %v8924, %v8946
        %v8961 = vadd.f32 %v8925, %v8946
        %v8962 = vadd.f32 %v8926, %v8946
        %v8963 = vadd.f32 %v8927, %v8946
        %v8964 = vadd.f32 %v8928, %v8946
        %v8965 = vadd.f32 %v8929, %v8946
        %v8966 = vadd.f32 %v8930, %v8946
        %v8967 = vadd.f32 %v8931, %v8946
        %v8968 = vadd.f32 %v8932, %v8946
        %v8969 = vadd.f32 %v8933, %v8946
        %v8970 = vadd.f32 %v8934, %v8946
        %v8971 = vadd.f32 %v8935, %v8946
        %v8972 = vadd.f32 %v8936, %v8946
        %v8973 = vadd.f32 %v8937, %v8946
        %v8974 = vadd.f32 %v8938, %v8946
        %v8975 = vadd.f32 %v8939, %v8946
        %v8976 = vadd.f32 %v8940, %v8946
        %v8977 = vadd.f32 %v8941, %v8946
        %v8978 = vadd.f32 %v8942, %v8946
        %v8979 = vadd.f32 %v8943, %v8946
        %v8980 = vmax.f32 %v8948, 0.0
        %v8981 = vmax.f32 %v8949, 0.0
        %v8982 = vmax.f32 %v8950, 0.0
        %v8983 = vmax.f32 %v8951, 0.0
        %v8984 = vmax.f32 %v8952, 0.0
        %v8985 = vmax.f32 %v8953, 0.0
        %v8986 = vmax.f32 %v8954, 0.0
        %v8987 = vmax.f32 %v8955, 0.0
        %v8988 = vmax.f32 %v8956, 0.0
        %v8989 = vmax.f32 %v8957, 0.0
        %v8990 = vmax.f32 %v8958, 0.0
        %v8991 = vmax.f32 %v8959, 0.0
        %v8992 = vmax.f32 %v8960, 0.0
        %v8993 = vmax.f32 %v8961, 0.0
        %v8994 = vmax.f32 %v8962, 0.0
        %v8995 = vmax.f32 %v8963, 0.0
        %v8996 = vmax.f32 %v8964, 0.0
        %v8997 = vmax.f32 %v8965, 0.0
        %v8998 = vmax.f32 %v8966, 0.0
        %v8999 = vmax.f32 %v8967, 0.0
        %v9000 = vmax.f32 %v8968, 0.0
        %v9001 = vmax.f32 %v8969, 0.0
        %v9002 = vmax.f32 %v8970, 0.0
        %v9003 = vmax.f32 %v8971, 0.0
        %v9004 = vmax.f32 %v8972, 0.0
        %v9005 = vmax.f32 %v8973, 0.0
        %v9006 = vmax.f32 %v8974, 0.0
        %v9007 = vmax.f32 %v8975, 0.0
        %v9008 = vmax.f32 %v8976, 0.0
        %v9009 = vmax.f32 %v8977, 0.0
        %v9010 = vmax.f32 %v8978, 0.0
        %v9011 = vmax.f32 %v8979, 0.0
        %9044 = vrot.lane.b32.xlu0 %v8980, 32
        %v9045 = vpop.permute.xlu0 %9044
        %9046 = vrot.lane.b32.xlu0 %v8981, 32
        %v9047 = vpop.permute.xlu0 %9046
        %9048 = vrot.lane.b32.xlu0 %v8982, 32
        %v9049 = vpop.permute.xlu0 %9048
        %9050 = vrot.lane.b32.xlu0 %v8983, 32
        %v9051 = vpop.permute.xlu0 %9050
        %9052 = vrot.lane.b32.xlu0 %v8984, 32
        %v9053 = vpop.permute.xlu0 %9052
        %9054 = vrot.lane.b32.xlu0 %v8985, 32
        %v9055 = vpop.permute.xlu0 %9054
        %9056 = vrot.lane.b32.xlu0 %v8986, 32
        %v9057 = vpop.permute.xlu0 %9056
        %9058 = vrot.lane.b32.xlu0 %v8987, 32
        %v9059 = vpop.permute.xlu0 %9058
        %9060 = vrot.lane.b32.xlu0 %v8988, 32
        %v9061 = vpop.permute.xlu0 %9060
        %9062 = vrot.lane.b32.xlu0 %v8989, 32
        %v9063 = vpop.permute.xlu0 %9062
        %9064 = vrot.lane.b32.xlu0 %v8990, 32
        %v9065 = vpop.permute.xlu0 %9064
        %9066 = vrot.lane.b32.xlu0 %v8991, 32
        %v9067 = vpop.permute.xlu0 %9066
        %9068 = vrot.lane.b32.xlu0 %v8992, 32
        %v9069 = vpop.permute.xlu0 %9068
        %9070 = vrot.lane.b32.xlu0 %v8993, 32
        %v9071 = vpop.permute.xlu0 %9070
        %9072 = vrot.lane.b32.xlu0 %v8994, 32
        %v9073 = vpop.permute.xlu0 %9072
        %9074 = vrot.lane.b32.xlu0 %v8995, 32
        %v9075 = vpop.permute.xlu0 %9074
        %9076 = vrot.lane.b32.xlu0 %v8996, 32
        %v9077 = vpop.permute.xlu0 %9076
        %9078 = vrot.lane.b32.xlu0 %v8997, 32
        %v9079 = vpop.permute.xlu0 %9078
        %9080 = vrot.lane.b32.xlu0 %v8998, 32
        %v9081 = vpop.permute.xlu0 %9080
        %9082 = vrot.lane.b32.xlu0 %v8999, 32
        %v9083 = vpop.permute.xlu0 %9082
        %9084 = vrot.lane.b32.xlu0 %v9000, 32
        %v9085 = vpop.permute.xlu0 %9084
        %9086 = vrot.lane.b32.xlu0 %v9001, 32
        %v9087 = vpop.permute.xlu0 %9086
        %9088 = vrot.lane.b32.xlu0 %v9002, 32
        %v9089 = vpop.permute.xlu0 %9088
        %9090 = vrot.lane.b32.xlu0 %v9003, 32
        %v9091 = vpop.permute.xlu0 %9090
        %9092 = vrot.lane.b32.xlu0 %v9004, 32
        %v9093 = vpop.permute.xlu0 %9092
        %9094 = vrot.lane.b32.xlu0 %v9005, 32
        %v9095 = vpop.permute.xlu0 %9094
        %9096 = vrot.lane.b32.xlu0 %v9006, 32
        %v9097 = vpop.permute.xlu0 %9096
        %9098 = vrot.lane.b32.xlu0 %v9007, 32
        %v9099 = vpop.permute.xlu0 %9098
        %9100 = vrot.lane.b32.xlu0 %v9008, 32
        %v9101 = vpop.permute.xlu0 %9100
        %9102 = vrot.lane.b32.xlu0 %v9009, 32
        %v9103 = vpop.permute.xlu0 %9102
        %9104 = vrot.lane.b32.xlu0 %v9010, 32
        %v9105 = vpop.permute.xlu0 %9104
        %9106 = vrot.lane.b32.xlu0 %v9011, 32
        %v9107 = vpop.permute.xlu0 %9106
        %vm9140 = vcmask 326912
        %9141 = vst.msk [vmem:[%s541] sm:$0xff] %vm9140, %v9045
        %9142 = vst.msk [vmem:[%s541 + $0x8] sm:$0xff] %vm9140, %v9047
        %9143 = vst.msk [vmem:[%s541 + $0x10] sm:$0xff] %vm9140, %v9049
        %9144 = vst.msk [vmem:[%s541 + $0x18] sm:$0xff] %vm9140, %v9051
        %9145 = vst.msk [vmem:[%s541 + $0x20] sm:$0xff] %vm9140, %v9053
        %9146 = vst.msk [vmem:[%s541 + $0x28] sm:$0xff] %vm9140, %v9055
        %9147 = vst.msk [vmem:[%s541 + $0x30] sm:$0xff] %vm9140, %v9057
        %9148 = vst.msk [vmem:[%s541 + $0x38] sm:$0xff] %vm9140, %v9059
        %9149 = vst.msk [vmem:[%s541 + $0x40] sm:$0xff] %vm9140, %v9061
        %9150 = vst.msk [vmem:[%s541 + $0x48] sm:$0xff] %vm9140, %v9063
        %9151 = vst.msk [vmem:[%s541 + $0x50] sm:$0xff] %vm9140, %v9065
        %9152 = vst.msk [vmem:[%s541 + $0x58] sm:$0xff] %vm9140, %v9067
        %9153 = vst.msk [vmem:[%s541 + $0x60] sm:$0xff] %vm9140, %v9069
        %9154 = vst.msk [vmem:[%s541 + $0x68] sm:$0xff] %vm9140, %v9071
        %9155 = vst.msk [vmem:[%s541 + $0x70] sm:$0xff] %vm9140, %v9073
        %9156 = vst.msk [vmem:[%s541 + $0x78] sm:$0xff] %vm9140, %v9075
        %9157 = vst.msk [vmem:[%s541 + $0x80] sm:$0xff] %vm9140, %v9077
        %9158 = vst.msk [vmem:[%s541 + $0x88] sm:$0xff] %vm9140, %v9079
        %9159 = vst.msk [vmem:[%s541 + $0x90] sm:$0xff] %vm9140, %v9081
        %9160 = vst.msk [vmem:[%s541 + $0x98] sm:$0xff] %vm9140, %v9083
        %9161 = vst.msk [vmem:[%s541 + $0xa0] sm:$0xff] %vm9140, %v9085
        %9162 = vst.msk [vmem:[%s541 + $0xa8] sm:$0xff] %vm9140, %v9087
        %9163 = vst.msk [vmem:[%s541 + $0xb0] sm:$0xff] %vm9140, %v9089
        %9164 = vst.msk [vmem:[%s541 + $0xb8] sm:$0xff] %vm9140, %v9091
        %9165 = vst.msk [vmem:[%s541 + $0xc0] sm:$0xff] %vm9140, %v9093
        %9166 = vst.msk [vmem:[%s541 + $0xc8] sm:$0xff] %vm9140, %v9095
        %9167 = vst.msk [vmem:[%s541 + $0xd0] sm:$0xff] %vm9140, %v9097
        %9168 = vst.msk [vmem:[%s541 + $0xd8] sm:$0xff] %vm9140, %v9099
        %9169 = vst.msk [vmem:[%s541 + $0xe0] sm:$0xff] %vm9140, %v9101
        %9170 = vst.msk [vmem:[%s541 + $0xe8] sm:$0xff] %vm9140, %v9103
        %9171 = vst.msk [vmem:[%s541 + $0xf0] sm:$0xff] %vm9140, %v9105
        %9172 = vst.msk [vmem:[%s541 + $0xf8] sm:$0xff] %vm9140, %v9107
        %9173 = vst.msk [vmem:[#allocation2] sm:$0xff] %vm775, -inf
        %9174 = vst.msk [vmem:[#allocation2 + $0x8] sm:$0xff] %vm775, -inf
        %9175 = vst.msk [vmem:[#allocation2 + $0x10] sm:$0xff] %vm775, -inf
        %9176 = vst.msk [vmem:[#allocation2 + $0x18] sm:$0xff] %vm775, -inf
        %9177 = vst.msk [vmem:[#allocation2 + $0x20] sm:$0xff] %vm775, -inf
        %9178 = vst.msk [vmem:[#allocation2 + $0x28] sm:$0xff] %vm775, -inf
        %9179 = vst.msk [vmem:[#allocation2 + $0x30] sm:$0xff] %vm775, -inf
        %9180 = vst.msk [vmem:[#allocation2 + $0x38] sm:$0xff] %vm775, -inf
        %9181 = vst.msk [vmem:[#allocation2 + $0x40] sm:$0xff] %vm775, -inf
        %9182 = vst.msk [vmem:[#allocation2 + $0x48] sm:$0xff] %vm775, -inf
        %9183 = vst.msk [vmem:[#allocation2 + $0x50] sm:$0xff] %vm775, -inf
        %9184 = vst.msk [vmem:[#allocation2 + $0x58] sm:$0xff] %vm775, -inf
        %9185 = vst.msk [vmem:[#allocation2 + $0x60] sm:$0xff] %vm775, -inf
        %9186 = vst.msk [vmem:[#allocation2 + $0x68] sm:$0xff] %vm775, -inf
        %9187 = vst.msk [vmem:[#allocation2 + $0x70] sm:$0xff] %vm775, -inf
        %9188 = vst.msk [vmem:[#allocation2 + $0x78] sm:$0xff] %vm775, -inf
        %9189 = vst.msk [vmem:[#allocation2 + $0x80] sm:$0xff] %vm775, -inf
        %9190 = vst.msk [vmem:[#allocation2 + $0x88] sm:$0xff] %vm775, -inf
        %9191 = vst.msk [vmem:[#allocation2 + $0x90] sm:$0xff] %vm775, -inf
        %9192 = vst.msk [vmem:[#allocation2 + $0x98] sm:$0xff] %vm775, -inf
        %9193 = vst.msk [vmem:[#allocation2 + $0xa0] sm:$0xff] %vm775, -inf
        %9194 = vst.msk [vmem:[#allocation2 + $0xa8] sm:$0xff] %vm775, -inf
        %9195 = vst.msk [vmem:[#allocation2 + $0xb0] sm:$0xff] %vm775, -inf
        %9196 = vst.msk [vmem:[#allocation2 + $0xb8] sm:$0xff] %vm775, -inf
        %9197 = vst.msk [vmem:[#allocation2 + $0xc0] sm:$0xff] %vm775, -inf
        %9198 = vst.msk [vmem:[#allocation2 + $0xc8] sm:$0xff] %vm775, -inf
        %9199 = vst.msk [vmem:[#allocation2 + $0xd0] sm:$0xff] %vm775, -inf
        %9200 = vst.msk [vmem:[#allocation2 + $0xd8] sm:$0xff] %vm775, -inf
        %9201 = vst.msk [vmem:[#allocation2 + $0xe0] sm:$0xff] %vm775, -inf
        %9202 = vst.msk [vmem:[#allocation2 + $0xe8] sm:$0xff] %vm775, -inf
        %9203 = vst.msk [vmem:[#allocation2 + $0xf0] sm:$0xff] %vm775, -inf
        %9204 = vst.msk [vmem:[#allocation2 + $0xf8] sm:$0xff] %vm775, -inf
        %9205 = vst.msk [vmem:[#allocation2 + $0x100] sm:$0xff] %vm775, -inf
        %9206 = vst.msk [vmem:[#allocation2 + $0x108] sm:$0xff] %vm775, -inf
        %9207 = vst.msk [vmem:[#allocation2 + $0x110] sm:$0xff] %vm775, -inf
        %9208 = vst.msk [vmem:[#allocation2 + $0x118] sm:$0xff] %vm775, -inf
        %9209 = vst.msk [vmem:[#allocation2 + $0x120] sm:$0xff] %vm775, -inf
        %9210 = vst.msk [vmem:[#allocation2 + $0x128] sm:$0xff] %vm775, -inf
        %9211 = vst.msk [vmem:[#allocation2 + $0x130] sm:$0xff] %vm775, -inf
        %9212 = vst.msk [vmem:[#allocation2 + $0x138] sm:$0xff] %vm775, -inf
        %9213 = vst.msk [vmem:[#allocation2 + $0x140] sm:$0xff] %vm775, -inf
        %9214 = vst.msk [vmem:[#allocation2 + $0x148] sm:$0xff] %vm775, -inf
        %9215 = vst.msk [vmem:[#allocation2 + $0x150] sm:$0xff] %vm775, -inf
        %9216 = vst.msk [vmem:[#allocation2 + $0x158] sm:$0xff] %vm775, -inf
        %9217 = vst.msk [vmem:[#allocation2 + $0x160] sm:$0xff] %vm775, -inf
        %9218 = vst.msk [vmem:[#allocation2 + $0x168] sm:$0xff] %vm775, -inf
        %9219 = vst.msk [vmem:[#allocation2 + $0x170] sm:$0xff] %vm775, -inf
        %9220 = vst.msk [vmem:[#allocation2 + $0x178] sm:$0xff] %vm775, -inf
        %9221 = vst.msk [vmem:[#allocation2 + $0x180] sm:$0xff] %vm775, -inf
        %9222 = vst.msk [vmem:[#allocation2 + $0x188] sm:$0xff] %vm775, -inf
        %9223 = vst.msk [vmem:[#allocation2 + $0x190] sm:$0xff] %vm775, -inf
        %9224 = vst.msk [vmem:[#allocation2 + $0x198] sm:$0xff] %vm775, -inf
        %9225 = vst.msk [vmem:[#allocation2 + $0x1a0] sm:$0xff] %vm775, -inf
        %9226 = vst.msk [vmem:[#allocation2 + $0x1a8] sm:$0xff] %vm775, -inf
        %9227 = vst.msk [vmem:[#allocation2 + $0x1b0] sm:$0xff] %vm775, -inf
        %9228 = vst.msk [vmem:[#allocation2 + $0x1b8] sm:$0xff] %vm775, -inf
        %9229 = vst.msk [vmem:[#allocation2 + $0x1c0] sm:$0xff] %vm775, -inf
        %9230 = vst.msk [vmem:[#allocation2 + $0x1c8] sm:$0xff] %vm775, -inf
        %9231 = vst.msk [vmem:[#allocation2 + $0x1d0] sm:$0xff] %vm775, -inf
        %9232 = vst.msk [vmem:[#allocation2 + $0x1d8] sm:$0xff] %vm775, -inf
        %9233 = vst.msk [vmem:[#allocation2 + $0x1e0] sm:$0xff] %vm775, -inf
        %9234 = vst.msk [vmem:[#allocation2 + $0x1e8] sm:$0xff] %vm775, -inf
        %9235 = vst.msk [vmem:[#allocation2 + $0x1f0] sm:$0xff] %vm775, -inf
        %9236 = vst.msk [vmem:[#allocation2 + $0x1f8] sm:$0xff] %vm775, -inf
        %9237 = vst.msk [vmem:[#allocation2 + $0x200] sm:$0xff] %vm775, -inf
        %9238 = vst.msk [vmem:[#allocation2 + $0x208] sm:$0xff] %vm775, -inf
        %9239 = vst.msk [vmem:[#allocation2 + $0x210] sm:$0xff] %vm775, -inf
        %9240 = vst.msk [vmem:[#allocation2 + $0x218] sm:$0xff] %vm775, -inf
        %9241 = vst.msk [vmem:[#allocation2 + $0x220] sm:$0xff] %vm775, -inf
        %9242 = vst.msk [vmem:[#allocation2 + $0x228] sm:$0xff] %vm775, -inf
        %9243 = vst.msk [vmem:[#allocation2 + $0x230] sm:$0xff] %vm775, -inf
        %9244 = vst.msk [vmem:[#allocation2 + $0x238] sm:$0xff] %vm775, -inf
        %9245 = vst.msk [vmem:[%s1008 + $0x8] sm:$0xff] %vm601, %v548
        %9246 = vst.msk [vmem:[%s1008 + $0x10] sm:$0xff] %vm601, %v549
        %9247 = vst.msk [vmem:[%s1008 + $0x28] sm:$0xff] %vm601, %v550
        %9248 = vst.msk [vmem:[%s1008 + $0x30] sm:$0xff] %vm601, %v551
        %9249 = vst.msk [vmem:[%s1008 + $0x48] sm:$0xff] %vm601, %v552
        %9250 = vst.msk [vmem:[%s1008 + $0x50] sm:$0xff] %vm601, %v553
        %9251 = vst.msk [vmem:[%s1008 + $0x68] sm:$0xff] %vm601, %v554
        %9252 = vst.msk [vmem:[%s1008 + $0x70] sm:$0xff] %vm601, %v555
        %9253 = vst.msk [vmem:[%s1008 + $0x88] sm:$0xff] %vm601, %v556
        %9254 = vst.msk [vmem:[%s1008 + $0x90] sm:$0xff] %vm601, %v557
        %9255 = vst.msk [vmem:[%s1008 + $0xa8] sm:$0xff] %vm601, %v558
        %9256 = vst.msk [vmem:[%s1008 + $0xb0] sm:$0xff] %vm601, %v559
        %9257 = vst.msk [vmem:[%s1008 + $0xc8] sm:$0xff] %vm601, %v560
        %9258 = vst.msk [vmem:[%s1008 + $0xd0] sm:$0xff] %vm601, %v561
        %9259 = vst.msk [vmem:[%s1008 + $0xe8] sm:$0xff] %vm601, %v562
        %9260 = vst.msk [vmem:[%s1008 + $0xf0] sm:$0xff] %vm601, %v563
        %9261 = vst.msk [vmem:[%s1008 + $0x108] sm:$0xff] %vm601, %v564
        %9262 = vst.msk [vmem:[%s1008 + $0x110] sm:$0xff] %vm601, %v565
        %9263 = vst.msk [vmem:[%s1008 + $0x128] sm:$0xff] %vm601, %v566
        %9264 = vst.msk [vmem:[%s1008 + $0x130] sm:$0xff] %vm601, %v567
        %9265 = vst.msk [vmem:[%s1008 + $0x148] sm:$0xff] %vm601, %v568
        %9266 = vst.msk [vmem:[%s1008 + $0x150] sm:$0xff] %vm601, %v569
        %9267 = vst.msk [vmem:[%s1008 + $0x168] sm:$0xff] %vm601, %v570
        %9268 = vst.msk [vmem:[%s1008 + $0x170] sm:$0xff] %vm601, %v571
        %9269 = vst.msk [vmem:[%s1008 + $0x188] sm:$0xff] %vm601, %v572
        %9270 = vst.msk [vmem:[%s1008 + $0x190] sm:$0xff] %vm601, %v573
        %9271 = vst.msk [vmem:[%s1008 + $0x1a8] sm:$0xff] %vm601, %v574
        %9272 = vst.msk [vmem:[%s1008 + $0x1b0] sm:$0xff] %vm601, %v575
        %9273 = vst.msk [vmem:[%s1008 + $0x1c8] sm:$0xff] %vm601, %v576
        %9274 = vst.msk [vmem:[%s1008 + $0x1d0] sm:$0xff] %vm601, %v577
        %9275 = vst.msk [vmem:[%s1008 + $0x1e8] sm:$0xff] %vm601, %v578
        %9276 = vst.msk [vmem:[%s1008 + $0x1f0] sm:$0xff] %vm601, %v579
        %v9277 = vld [vmem:[%s1008 + $0x8] sm:$0xff]
        %v9278 = vld [vmem:[%s1008 + $0x10] sm:$0xff]
        %v9279 = vld [vmem:[%s1008 + $0x28] sm:$0xff]
        %v9280 = vld [vmem:[%s1008 + $0x30] sm:$0xff]
        %v9281 = vld [vmem:[%s1008 + $0x48] sm:$0xff]
        %v9282 = vld [vmem:[%s1008 + $0x50] sm:$0xff]
        %v9283 = vld [vmem:[%s1008 + $0x68] sm:$0xff]
        %v9284 = vld [vmem:[%s1008 + $0x70] sm:$0xff]
        %v9285 = vld [vmem:[%s1008 + $0x88] sm:$0xff]
        %v9286 = vld [vmem:[%s1008 + $0x90] sm:$0xff]
        %v9287 = vld [vmem:[%s1008 + $0xa8] sm:$0xff]
        %v9288 = vld [vmem:[%s1008 + $0xb0] sm:$0xff]
        %v9289 = vld [vmem:[%s1008 + $0xc8] sm:$0xff]
        %v9290 = vld [vmem:[%s1008 + $0xd0] sm:$0xff]
        %v9291 = vld [vmem:[%s1008 + $0xe8] sm:$0xff]
        %v9292 = vld [vmem:[%s1008 + $0xf0] sm:$0xff]
        %v9293 = vld [vmem:[%s1008 + $0x108] sm:$0xff]
        %v9294 = vld [vmem:[%s1008 + $0x110] sm:$0xff]
        %v9295 = vld [vmem:[%s1008 + $0x128] sm:$0xff]
        %v9296 = vld [vmem:[%s1008 + $0x130] sm:$0xff]
        %v9297 = vld [vmem:[%s1008 + $0x148] sm:$0xff]
        %v9298 = vld [vmem:[%s1008 + $0x150] sm:$0xff]
        %v9299 = vld [vmem:[%s1008 + $0x168] sm:$0xff]
        %v9300 = vld [vmem:[%s1008 + $0x170] sm:$0xff]
        %v9301 = vld [vmem:[%s1008 + $0x188] sm:$0xff]
        %v9302 = vld [vmem:[%s1008 + $0x190] sm:$0xff]
        %v9303 = vld [vmem:[%s1008 + $0x1a8] sm:$0xff]
        %v9304 = vld [vmem:[%s1008 + $0x1b0] sm:$0xff]
        %v9305 = vld [vmem:[%s1008 + $0x1c8] sm:$0xff]
        %v9306 = vld [vmem:[%s1008 + $0x1d0] sm:$0xff]
        %v9307 = vld [vmem:[%s1008 + $0x1e8] sm:$0xff]
        %v9308 = vld [vmem:[%s1008 + $0x1f0] sm:$0xff]
        %v9309 = vld [vmem:[#allocation2 + $0x7] sm:$0xff]
        %v9310 = vld [vmem:[#allocation2 + $0xf] sm:$0xff]
        %v9311 = vld [vmem:[#allocation2 + $0x27] sm:$0xff]
        %v9312 = vld [vmem:[#allocation2 + $0x2f] sm:$0xff]
        %v9313 = vld [vmem:[#allocation2 + $0x47] sm:$0xff]
        %v9314 = vld [vmem:[#allocation2 + $0x4f] sm:$0xff]
        %v9315 = vld [vmem:[#allocation2 + $0x67] sm:$0xff]
        %v9316 = vld [vmem:[#allocation2 + $0x6f] sm:$0xff]
        %v9317 = vld [vmem:[#allocation2 + $0x87] sm:$0xff]
        %v9318 = vld [vmem:[#allocation2 + $0x8f] sm:$0xff]
        %v9319 = vld [vmem:[#allocation2 + $0xa7] sm:$0xff]
        %v9320 = vld [vmem:[#allocation2 + $0xaf] sm:$0xff]
        %v9321 = vld [vmem:[#allocation2 + $0xc7] sm:$0xff]
        %v9322 = vld [vmem:[#allocation2 + $0xcf] sm:$0xff]
        %v9323 = vld [vmem:[#allocation2 + $0xe7] sm:$0xff]
        %v9324 = vld [vmem:[#allocation2 + $0xef] sm:$0xff]
        %v9325 = vld [vmem:[#allocation2 + $0x107] sm:$0xff]
        %v9326 = vld [vmem:[#allocation2 + $0x10f] sm:$0xff]
        %v9327 = vld [vmem:[#allocation2 + $0x127] sm:$0xff]
        %v9328 = vld [vmem:[#allocation2 + $0x12f] sm:$0xff]
        %v9329 = vld [vmem:[#allocation2 + $0x147] sm:$0xff]
        %v9330 = vld [vmem:[#allocation2 + $0x14f] sm:$0xff]
        %v9331 = vld [vmem:[#allocation2 + $0x167] sm:$0xff]
        %v9332 = vld [vmem:[#allocation2 + $0x16f] sm:$0xff]
        %v9333 = vld [vmem:[#allocation2 + $0x187] sm:$0xff]
        %v9334 = vld [vmem:[#allocation2 + $0x18f] sm:$0xff]
        %v9335 = vld [vmem:[#allocation2 + $0x1a7] sm:$0xff]
        %v9336 = vld [vmem:[#allocation2 + $0x1af] sm:$0xff]
        %v9337 = vld [vmem:[#allocation2 + $0x1c7] sm:$0xff]
        %v9338 = vld [vmem:[#allocation2 + $0x1cf] sm:$0xff]
        %v9339 = vld [vmem:[#allocation2 + $0x1e7] sm:$0xff]
        %v9340 = vld [vmem:[#allocation2 + $0x1ef] sm:$0xff]
        %v9341 = vmax.f32 %v9277, %v9309
        %v9342 = vmax.f32 %v9278, %v9310
        %v9343 = vmax.f32 %v9279, %v9311
        %v9344 = vmax.f32 %v9280, %v9312
        %v9345 = vmax.f32 %v9281, %v9313
        %v9346 = vmax.f32 %v9282, %v9314
        %v9347 = vmax.f32 %v9283, %v9315
        %v9348 = vmax.f32 %v9284, %v9316
        %v9349 = vmax.f32 %v9285, %v9317
        %v9350 = vmax.f32 %v9286, %v9318
        %v9351 = vmax.f32 %v9287, %v9319
        %v9352 = vmax.f32 %v9288, %v9320
        %v9353 = vmax.f32 %v9289, %v9321
        %v9354 = vmax.f32 %v9290, %v9322
        %v9355 = vmax.f32 %v9291, %v9323
        %v9356 = vmax.f32 %v9292, %v9324
        %v9357 = vmax.f32 %v9293, %v9325
        %v9358 = vmax.f32 %v9294, %v9326
        %v9359 = vmax.f32 %v9295, %v9327
        %v9360 = vmax.f32 %v9296, %v9328
        %v9361 = vmax.f32 %v9297, %v9329
        %v9362 = vmax.f32 %v9298, %v9330
        %v9363 = vmax.f32 %v9299, %v9331
        %v9364 = vmax.f32 %v9300, %v9332
        %v9365 = vmax.f32 %v9301, %v9333
        %v9366 = vmax.f32 %v9302, %v9334
        %v9367 = vmax.f32 %v9303, %v9335
        %v9368 = vmax.f32 %v9304, %v9336
        %v9369 = vmax.f32 %v9305, %v9337
        %v9370 = vmax.f32 %v9306, %v9338
        %v9371 = vmax.f32 %v9307, %v9339
        %v9372 = vmax.f32 %v9308, %v9340
        %v9373 = vld [vmem:[#allocation2 + $0x8] sm:$0xff]
        %v9374 = vld [vmem:[#allocation2 + $0x10] sm:$0xff]
        %v9375 = vld [vmem:[#allocation2 + $0x28] sm:$0xff]
        %v9376 = vld [vmem:[#allocation2 + $0x30] sm:$0xff]
        %v9377 = vld [vmem:[#allocation2 + $0x48] sm:$0xff]
        %v9378 = vld [vmem:[#allocation2 + $0x50] sm:$0xff]
        %v9379 = vld [vmem:[#allocation2 + $0x68] sm:$0xff]
        %v9380 = vld [vmem:[#allocation2 + $0x70] sm:$0xff]
        %v9381 = vld [vmem:[#allocation2 + $0x88] sm:$0xff]
        %v9382 = vld [vmem:[#allocation2 + $0x90] sm:$0xff]
        %v9383 = vld [vmem:[#allocation2 + $0xa8] sm:$0xff]
        %v9384 = vld [vmem:[#allocation2 + $0xb0] sm:$0xff]
        %v9385 = vld [vmem:[#allocation2 + $0xc8] sm:$0xff]
        %v9386 = vld [vmem:[#allocation2 + $0xd0] sm:$0xff]
        %v9387 = vld [vmem:[#allocation2 + $0xe8] sm:$0xff]
        %v9388 = vld [vmem:[#allocation2 + $0xf0] sm:$0xff]
        %v9389 = vld [vmem:[#allocation2 + $0x108] sm:$0xff]
        %v9390 = vld [vmem:[#allocation2 + $0x110] sm:$0xff]
        %v9391 = vld [vmem:[#allocation2 + $0x128] sm:$0xff]
        %v9392 = vld [vmem:[#allocation2 + $0x130] sm:$0xff]
        %v9393 = vld [vmem:[#allocation2 + $0x148] sm:$0xff]
        %v9394 = vld [vmem:[#allocation2 + $0x150] sm:$0xff]
        %v9395 = vld [vmem:[#allocation2 + $0x168] sm:$0xff]
        %v9396 = vld [vmem:[#allocation2 + $0x170] sm:$0xff]
        %v9397 = vld [vmem:[#allocation2 + $0x188] sm:$0xff]
        %v9398 = vld [vmem:[#allocation2 + $0x190] sm:$0xff]
        %v9399 = vld [vmem:[#allocation2 + $0x1a8] sm:$0xff]
        %v9400 = vld [vmem:[#allocation2 + $0x1b0] sm:$0xff]
        %v9401 = vld [vmem:[#allocation2 + $0x1c8] sm:$0xff]
        %v9402 = vld [vmem:[#allocation2 + $0x1d0] sm:$0xff]
        %v9403 = vld [vmem:[#allocation2 + $0x1e8] sm:$0xff]
        %v9404 = vld [vmem:[#allocation2 + $0x1f0] sm:$0xff]
        %v9405 = vmax.f32 %v9341, %v9373
        %v9406 = vmax.f32 %v9342, %v9374
        %v9407 = vmax.f32 %v9343, %v9375
        %v9408 = vmax.f32 %v9344, %v9376
        %v9409 = vmax.f32 %v9345, %v9377
        %v9410 = vmax.f32 %v9346, %v9378
        %v9411 = vmax.f32 %v9347, %v9379
        %v9412 = vmax.f32 %v9348, %v9380
        %v9413 = vmax.f32 %v9349, %v9381
        %v9414 = vmax.f32 %v9350, %v9382
        %v9415 = vmax.f32 %v9351, %v9383
        %v9416 = vmax.f32 %v9352, %v9384
        %v9417 = vmax.f32 %v9353, %v9385
        %v9418 = vmax.f32 %v9354, %v9386
        %v9419 = vmax.f32 %v9355, %v9387
        %v9420 = vmax.f32 %v9356, %v9388
        %v9421 = vmax.f32 %v9357, %v9389
        %v9422 = vmax.f32 %v9358, %v9390
        %v9423 = vmax.f32 %v9359, %v9391
        %v9424 = vmax.f32 %v9360, %v9392
        %v9425 = vmax.f32 %v9361, %v9393
        %v9426 = vmax.f32 %v9362, %v9394
        %v9427 = vmax.f32 %v9363, %v9395
        %v9428 = vmax.f32 %v9364, %v9396
        %v9429 = vmax.f32 %v9365, %v9397
        %v9430 = vmax.f32 %v9366, %v9398
        %v9431 = vmax.f32 %v9367, %v9399
        %v9432 = vmax.f32 %v9368, %v9400
        %v9433 = vmax.f32 %v9369, %v9401
        %v9434 = vmax.f32 %v9370, %v9402
        %v9435 = vmax.f32 %v9371, %v9403
        %v9436 = vmax.f32 %v9372, %v9404
        %v9437 = vld [vmem:[#allocation2 + $0x9] sm:$0xff]
        %v9438 = vld [vmem:[#allocation2 + $0x11] sm:$0xff]
        %v9439 = vld [vmem:[#allocation2 + $0x29] sm:$0xff]
        %v9440 = vld [vmem:[#allocation2 + $0x31] sm:$0xff]
        %v9441 = vld [vmem:[#allocation2 + $0x49] sm:$0xff]
        %v9442 = vld [vmem:[#allocation2 + $0x51] sm:$0xff]
        %v9443 = vld [vmem:[#allocation2 + $0x69] sm:$0xff]
        %v9444 = vld [vmem:[#allocation2 + $0x71] sm:$0xff]
        %v9445 = vld [vmem:[#allocation2 + $0x89] sm:$0xff]
        %v9446 = vld [vmem:[#allocation2 + $0x91] sm:$0xff]
        %v9447 = vld [vmem:[#allocation2 + $0xa9] sm:$0xff]
        %v9448 = vld [vmem:[#allocation2 + $0xb1] sm:$0xff]
        %v9449 = vld [vmem:[#allocation2 + $0xc9] sm:$0xff]
        %v9450 = vld [vmem:[#allocation2 + $0xd1] sm:$0xff]
        %v9451 = vld [vmem:[#allocation2 + $0xe9] sm:$0xff]
        %v9452 = vld [vmem:[#allocation2 + $0xf1] sm:$0xff]
        %v9453 = vld [vmem:[#allocation2 + $0x109] sm:$0xff]
        %v9454 = vld [vmem:[#allocation2 + $0x111] sm:$0xff]
        %v9455 = vld [vmem:[#allocation2 + $0x129] sm:$0xff]
        %v9456 = vld [vmem:[#allocation2 + $0x131] sm:$0xff]
        %v9457 = vld [vmem:[#allocation2 + $0x149] sm:$0xff]
        %v9458 = vld [vmem:[#allocation2 + $0x151] sm:$0xff]
        %v9459 = vld [vmem:[#allocation2 + $0x169] sm:$0xff]
        %v9460 = vld [vmem:[#allocation2 + $0x171] sm:$0xff]
        %v9461 = vld [vmem:[#allocation2 + $0x189] sm:$0xff]
        %v9462 = vld [vmem:[#allocation2 + $0x191] sm:$0xff]
        %v9463 = vld [vmem:[#allocation2 + $0x1a9] sm:$0xff]
        %v9464 = vld [vmem:[#allocation2 + $0x1b1] sm:$0xff]
        %v9465 = vld [vmem:[#allocation2 + $0x1c9] sm:$0xff]
        %v9466 = vld [vmem:[#allocation2 + $0x1d1] sm:$0xff]
        %v9467 = vld [vmem:[#allocation2 + $0x1e9] sm:$0xff]
        %v9468 = vld [vmem:[#allocation2 + $0x1f1] sm:$0xff]
        %v9469 = vmax.f32 %v9405, %v9437
        %v9470 = vmax.f32 %v9406, %v9438
        %v9471 = vmax.f32 %v9407, %v9439
        %v9472 = vmax.f32 %v9408, %v9440
        %v9473 = vmax.f32 %v9409, %v9441
        %v9474 = vmax.f32 %v9410, %v9442
        %v9475 = vmax.f32 %v9411, %v9443
        %v9476 = vmax.f32 %v9412, %v9444
        %v9477 = vmax.f32 %v9413, %v9445
        %v9478 = vmax.f32 %v9414, %v9446
        %v9479 = vmax.f32 %v9415, %v9447
        %v9480 = vmax.f32 %v9416, %v9448
        %v9481 = vmax.f32 %v9417, %v9449
        %v9482 = vmax.f32 %v9418, %v9450
        %v9483 = vmax.f32 %v9419, %v9451
        %v9484 = vmax.f32 %v9420, %v9452
        %v9485 = vmax.f32 %v9421, %v9453
        %v9486 = vmax.f32 %v9422, %v9454
        %v9487 = vmax.f32 %v9423, %v9455
        %v9488 = vmax.f32 %v9424, %v9456
        %v9489 = vmax.f32 %v9425, %v9457
        %v9490 = vmax.f32 %v9426, %v9458
        %v9491 = vmax.f32 %v9427, %v9459
        %v9492 = vmax.f32 %v9428, %v9460
        %v9493 = vmax.f32 %v9429, %v9461
        %v9494 = vmax.f32 %v9430, %v9462
        %v9495 = vmax.f32 %v9431, %v9463
        %v9496 = vmax.f32 %v9432, %v9464
        %v9497 = vmax.f32 %v9433, %v9465
        %v9498 = vmax.f32 %v9434, %v9466
        %v9499 = vmax.f32 %v9435, %v9467
        %v9500 = vmax.f32 %v9436, %v9468
        %v9501 = vld [vmem:[%s1008 + $0x7] sm:$0xff]
        %v9502 = vld [vmem:[%s1008 + $0xf] sm:$0xff]
        %v9503 = vld [vmem:[%s1008 + $0x27] sm:$0xff]
        %v9504 = vld [vmem:[%s1008 + $0x2f] sm:$0xff]
        %v9505 = vld [vmem:[%s1008 + $0x47] sm:$0xff]
        %v9506 = vld [vmem:[%s1008 + $0x4f] sm:$0xff]
        %v9507 = vld [vmem:[%s1008 + $0x67] sm:$0xff]
        %v9508 = vld [vmem:[%s1008 + $0x6f] sm:$0xff]
        %v9509 = vld [vmem:[%s1008 + $0x87] sm:$0xff]
        %v9510 = vld [vmem:[%s1008 + $0x8f] sm:$0xff]
        %v9511 = vld [vmem:[%s1008 + $0xa7] sm:$0xff]
        %v9512 = vld [vmem:[%s1008 + $0xaf] sm:$0xff]
        %v9513 = vld [vmem:[%s1008 + $0xc7] sm:$0xff]
        %v9514 = vld [vmem:[%s1008 + $0xcf] sm:$0xff]
        %v9515 = vld [vmem:[%s1008 + $0xe7] sm:$0xff]
        %v9516 = vld [vmem:[%s1008 + $0xef] sm:$0xff]
        %v9517 = vld [vmem:[%s1008 + $0x107] sm:$0xff]
        %v9518 = vld [vmem:[%s1008 + $0x10f] sm:$0xff]
        %v9519 = vld [vmem:[%s1008 + $0x127] sm:$0xff]
        %v9520 = vld [vmem:[%s1008 + $0x12f] sm:$0xff]
        %v9521 = vld [vmem:[%s1008 + $0x147] sm:$0xff]
        %v9522 = vld [vmem:[%s1008 + $0x14f] sm:$0xff]
        %v9523 = vld [vmem:[%s1008 + $0x167] sm:$0xff]
        %v9524 = vld [vmem:[%s1008 + $0x16f] sm:$0xff]
        %v9525 = vld [vmem:[%s1008 + $0x187] sm:$0xff]
        %v9526 = vld [vmem:[%s1008 + $0x18f] sm:$0xff]
        %v9527 = vld [vmem:[%s1008 + $0x1a7] sm:$0xff]
        %v9528 = vld [vmem:[%s1008 + $0x1af] sm:$0xff]
        %v9529 = vld [vmem:[%s1008 + $0x1c7] sm:$0xff]
        %v9530 = vld [vmem:[%s1008 + $0x1cf] sm:$0xff]
        %v9531 = vld [vmem:[%s1008 + $0x1e7] sm:$0xff]
        %v9532 = vld [vmem:[%s1008 + $0x1ef] sm:$0xff]
        %v9533 = vmax.f32 %v9469, %v9501
        %v9534 = vmax.f32 %v9470, %v9502
        %v9535 = vmax.f32 %v9471, %v9503
        %v9536 = vmax.f32 %v9472, %v9504
        %v9537 = vmax.f32 %v9473, %v9505
        %v9538 = vmax.f32 %v9474, %v9506
        %v9539 = vmax.f32 %v9475, %v9507
        %v9540 = vmax.f32 %v9476, %v9508
        %v9541 = vmax.f32 %v9477, %v9509
        %v9542 = vmax.f32 %v9478, %v9510
        %v9543 = vmax.f32 %v9479, %v9511
        %v9544 = vmax.f32 %v9480, %v9512
        %v9545 = vmax.f32 %v9481, %v9513
        %v9546 = vmax.f32 %v9482, %v9514
        %v9547 = vmax.f32 %v9483, %v9515
        %v9548 = vmax.f32 %v9484, %v9516
        %v9549 = vmax.f32 %v9485, %v9517
        %v9550 = vmax.f32 %v9486, %v9518
        %v9551 = vmax.f32 %v9487, %v9519
        %v9552 = vmax.f32 %v9488, %v9520
        %v9553 = vmax.f32 %v9489, %v9521
        %v9554 = vmax.f32 %v9490, %v9522
        %v9555 = vmax.f32 %v9491, %v9523
        %v9556 = vmax.f32 %v9492, %v9524
        %v9557 = vmax.f32 %v9493, %v9525
        %v9558 = vmax.f32 %v9494, %v9526
        %v9559 = vmax.f32 %v9495, %v9527
        %v9560 = vmax.f32 %v9496, %v9528
        %v9561 = vmax.f32 %v9497, %v9529
        %v9562 = vmax.f32 %v9498, %v9530
        %v9563 = vmax.f32 %v9499, %v9531
        %v9564 = vmax.f32 %v9500, %v9532
        %v9565 = vld [vmem:[%s1008 + $0x9] sm:$0xff]
        %v9566 = vld [vmem:[%s1008 + $0x11] sm:$0xff]
        %v9567 = vld [vmem:[%s1008 + $0x29] sm:$0xff]
        %v9568 = vld [vmem:[%s1008 + $0x31] sm:$0xff]
        %v9569 = vld [vmem:[%s1008 + $0x49] sm:$0xff]
        %v9570 = vld [vmem:[%s1008 + $0x51] sm:$0xff]
        %v9571 = vld [vmem:[%s1008 + $0x69] sm:$0xff]
        %v9572 = vld [vmem:[%s1008 + $0x71] sm:$0xff]
        %v9573 = vld [vmem:[%s1008 + $0x89] sm:$0xff]
        %v9574 = vld [vmem:[%s1008 + $0x91] sm:$0xff]
        %v9575 = vld [vmem:[%s1008 + $0xa9] sm:$0xff]
        %v9576 = vld [vmem:[%s1008 + $0xb1] sm:$0xff]
        %v9577 = vld [vmem:[%s1008 + $0xc9] sm:$0xff]
        %v9578 = vld [vmem:[%s1008 + $0xd1] sm:$0xff]
        %v9579 = vld [vmem:[%s1008 + $0xe9] sm:$0xff]
        %v9580 = vld [vmem:[%s1008 + $0xf1] sm:$0xff]
        %v9581 = vld [vmem:[%s1008 + $0x109] sm:$0xff]
        %v9582 = vld [vmem:[%s1008 + $0x111] sm:$0xff]
        %v9583 = vld [vmem:[%s1008 + $0x129] sm:$0xff]
        %v9584 = vld [vmem:[%s1008 + $0x131] sm:$0xff]
        %v9585 = vld [vmem:[%s1008 + $0x149] sm:$0xff]
        %v9586 = vld [vmem:[%s1008 + $0x151] sm:$0xff]
        %v9587 = vld [vmem:[%s1008 + $0x169] sm:$0xff]
        %v9588 = vld [vmem:[%s1008 + $0x171] sm:$0xff]
        %v9589 = vld [vmem:[%s1008 + $0x189] sm:$0xff]
        %v9590 = vld [vmem:[%s1008 + $0x191] sm:$0xff]
        %v9591 = vld [vmem:[%s1008 + $0x1a9] sm:$0xff]
        %v9592 = vld [vmem:[%s1008 + $0x1b1] sm:$0xff]
        %v9593 = vld [vmem:[%s1008 + $0x1c9] sm:$0xff]
        %v9594 = vld [vmem:[%s1008 + $0x1d1] sm:$0xff]
        %v9595 = vld [vmem:[%s1008 + $0x1e9] sm:$0xff]
        %v9596 = vld [vmem:[%s1008 + $0x1f1] sm:$0xff]
        %v9597 = vmax.f32 %v9533, %v9565
        %v9598 = vmax.f32 %v9534, %v9566
        %v9599 = vmax.f32 %v9535, %v9567
        %v9600 = vmax.f32 %v9536, %v9568
        %v9601 = vmax.f32 %v9537, %v9569
        %v9602 = vmax.f32 %v9538, %v9570
        %v9603 = vmax.f32 %v9539, %v9571
        %v9604 = vmax.f32 %v9540, %v9572
        %v9605 = vmax.f32 %v9541, %v9573
        %v9606 = vmax.f32 %v9542, %v9574
        %v9607 = vmax.f32 %v9543, %v9575
        %v9608 = vmax.f32 %v9544, %v9576
        %v9609 = vmax.f32 %v9545, %v9577
        %v9610 = vmax.f32 %v9546, %v9578
        %v9611 = vmax.f32 %v9547, %v9579
        %v9612 = vmax.f32 %v9548, %v9580
        %v9613 = vmax.f32 %v9549, %v9581
        %v9614 = vmax.f32 %v9550, %v9582
        %v9615 = vmax.f32 %v9551, %v9583
        %v9616 = vmax.f32 %v9552, %v9584
        %v9617 = vmax.f32 %v9553, %v9585
        %v9618 = vmax.f32 %v9554, %v9586
        %v9619 = vmax.f32 %v9555, %v9587
        %v9620 = vmax.f32 %v9556, %v9588
        %v9621 = vmax.f32 %v9557, %v9589
        %v9622 = vmax.f32 %v9558, %v9590
        %v9623 = vmax.f32 %v9559, %v9591
        %v9624 = vmax.f32 %v9560, %v9592
        %v9625 = vmax.f32 %v9561, %v9593
        %v9626 = vmax.f32 %v9562, %v9594
        %v9627 = vmax.f32 %v9563, %v9595
        %v9628 = vmax.f32 %v9564, %v9596
        %v9629 = vld [vmem:[%s2450 + $0x7] sm:$0xff]
        %v9630 = vld [vmem:[%s2450 + $0xf] sm:$0xff]
        %v9631 = vld [vmem:[%s2450 + $0x27] sm:$0xff]
        %v9632 = vld [vmem:[%s2450 + $0x2f] sm:$0xff]
        %v9633 = vld [vmem:[%s2450 + $0x47] sm:$0xff]
        %v9634 = vld [vmem:[%s2450 + $0x4f] sm:$0xff]
        %v9635 = vld [vmem:[%s2450 + $0x67] sm:$0xff]
        %v9636 = vld [vmem:[%s2450 + $0x6f] sm:$0xff]
        %v9637 = vld [vmem:[%s2450 + $0x87] sm:$0xff]
        %v9638 = vld [vmem:[%s2450 + $0x8f] sm:$0xff]
        %v9639 = vld [vmem:[%s2450 + $0xa7] sm:$0xff]
        %v9640 = vld [vmem:[%s2450 + $0xaf] sm:$0xff]
        %v9641 = vld [vmem:[%s2450 + $0xc7] sm:$0xff]
        %v9642 = vld [vmem:[%s2450 + $0xcf] sm:$0xff]
        %v9643 = vld [vmem:[%s2450 + $0xe7] sm:$0xff]
        %v9644 = vld [vmem:[%s2450 + $0xef] sm:$0xff]
        %v9645 = vld [vmem:[%s2450 + $0x107] sm:$0xff]
        %v9646 = vld [vmem:[%s2450 + $0x10f] sm:$0xff]
        %v9647 = vld [vmem:[%s2450 + $0x127] sm:$0xff]
        %v9648 = vld [vmem:[%s2450 + $0x12f] sm:$0xff]
        %v9649 = vld [vmem:[%s2450 + $0x147] sm:$0xff]
        %v9650 = vld [vmem:[%s2450 + $0x14f] sm:$0xff]
        %v9651 = vld [vmem:[%s2450 + $0x167] sm:$0xff]
        %v9652 = vld [vmem:[%s2450 + $0x16f] sm:$0xff]
        %v9653 = vld [vmem:[%s2450 + $0x187] sm:$0xff]
        %v9654 = vld [vmem:[%s2450 + $0x18f] sm:$0xff]
        %v9655 = vld [vmem:[%s2450 + $0x1a7] sm:$0xff]
        %v9656 = vld [vmem:[%s2450 + $0x1af] sm:$0xff]
        %v9657 = vld [vmem:[%s2450 + $0x1c7] sm:$0xff]
        %v9658 = vld [vmem:[%s2450 + $0x1cf] sm:$0xff]
        %v9659 = vld [vmem:[%s2450 + $0x1e7] sm:$0xff]
        %v9660 = vld [vmem:[%s2450 + $0x1ef] sm:$0xff]
        %v9661 = vmax.f32 %v9597, %v9629
        %v9662 = vmax.f32 %v9598, %v9630
        %v9663 = vmax.f32 %v9599, %v9631
        %v9664 = vmax.f32 %v9600, %v9632
        %v9665 = vmax.f32 %v9601, %v9633
        %v9666 = vmax.f32 %v9602, %v9634
        %v9667 = vmax.f32 %v9603, %v9635
        %v9668 = vmax.f32 %v9604, %v9636
        %v9669 = vmax.f32 %v9605, %v9637
        %v9670 = vmax.f32 %v9606, %v9638
        %v9671 = vmax.f32 %v9607, %v9639
        %v9672 = vmax.f32 %v9608, %v9640
        %v9673 = vmax.f32 %v9609, %v9641
        %v9674 = vmax.f32 %v9610, %v9642
        %v9675 = vmax.f32 %v9611, %v9643
        %v9676 = vmax.f32 %v9612, %v9644
        %v9677 = vmax.f32 %v9613, %v9645
        %v9678 = vmax.f32 %v9614, %v9646
        %v9679 = vmax.f32 %v9615, %v9647
        %v9680 = vmax.f32 %v9616, %v9648
        %v9681 = vmax.f32 %v9617, %v9649
        %v9682 = vmax.f32 %v9618, %v9650
        %v9683 = vmax.f32 %v9619, %v9651
        %v9684 = vmax.f32 %v9620, %v9652
        %v9685 = vmax.f32 %v9621, %v9653
        %v9686 = vmax.f32 %v9622, %v9654
        %v9687 = vmax.f32 %v9623, %v9655
        %v9688 = vmax.f32 %v9624, %v9656
        %v9689 = vmax.f32 %v9625, %v9657
        %v9690 = vmax.f32 %v9626, %v9658
        %v9691 = vmax.f32 %v9627, %v9659
        %v9692 = vmax.f32 %v9628, %v9660
        %v9693 = vld [vmem:[%s2450 + $0x8] sm:$0xff]
        %v9694 = vld [vmem:[%s2450 + $0x10] sm:$0xff]
        %v9695 = vld [vmem:[%s2450 + $0x28] sm:$0xff]
        %v9696 = vld [vmem:[%s2450 + $0x30] sm:$0xff]
        %v9697 = vld [vmem:[%s2450 + $0x48] sm:$0xff]
        %v9698 = vld [vmem:[%s2450 + $0x50] sm:$0xff]
        %v9699 = vld [vmem:[%s2450 + $0x68] sm:$0xff]
        %v9700 = vld [vmem:[%s2450 + $0x70] sm:$0xff]
        %v9701 = vld [vmem:[%s2450 + $0x88] sm:$0xff]
        %v9702 = vld [vmem:[%s2450 + $0x90] sm:$0xff]
        %v9703 = vld [vmem:[%s2450 + $0xa8] sm:$0xff]
        %v9704 = vld [vmem:[%s2450 + $0xb0] sm:$0xff]
        %v9705 = vld [vmem:[%s2450 + $0xc8] sm:$0xff]
        %v9706 = vld [vmem:[%s2450 + $0xd0] sm:$0xff]
        %v9707 = vld [vmem:[%s2450 + $0xe8] sm:$0xff]
        %v9708 = vld [vmem:[%s2450 + $0xf0] sm:$0xff]
        %v9709 = vld [vmem:[%s2450 + $0x108] sm:$0xff]
        %v9710 = vld [vmem:[%s2450 + $0x110] sm:$0xff]
        %v9711 = vld [vmem:[%s2450 + $0x128] sm:$0xff]
        %v9712 = vld [vmem:[%s2450 + $0x130] sm:$0xff]
        %v9713 = vld [vmem:[%s2450 + $0x148] sm:$0xff]
        %v9714 = vld [vmem:[%s2450 + $0x150] sm:$0xff]
        %v9715 = vld [vmem:[%s2450 + $0x168] sm:$0xff]
        %v9716 = vld [vmem:[%s2450 + $0x170] sm:$0xff]
        %v9717 = vld [vmem:[%s2450 + $0x188] sm:$0xff]
        %v9718 = vld [vmem:[%s2450 + $0x190] sm:$0xff]
        %v9719 = vld [vmem:[%s2450 + $0x1a8] sm:$0xff]
        %v9720 = vld [vmem:[%s2450 + $0x1b0] sm:$0xff]
        %v9721 = vld [vmem:[%s2450 + $0x1c8] sm:$0xff]
        %v9722 = vld [vmem:[%s2450 + $0x1d0] sm:$0xff]
        %v9723 = vld [vmem:[%s2450 + $0x1e8] sm:$0xff]
        %v9724 = vld [vmem:[%s2450 + $0x1f0] sm:$0xff]
        %v9725 = vmax.f32 %v9661, %v9693
        %v9726 = vmax.f32 %v9662, %v9694
        %v9727 = vmax.f32 %v9663, %v9695
        %v9728 = vmax.f32 %v9664, %v9696
        %v9729 = vmax.f32 %v9665, %v9697
        %v9730 = vmax.f32 %v9666, %v9698
        %v9731 = vmax.f32 %v9667, %v9699
        %v9732 = vmax.f32 %v9668, %v9700
        %v9733 = vmax.f32 %v9669, %v9701
        %v9734 = vmax.f32 %v9670, %v9702
        %v9735 = vmax.f32 %v9671, %v9703
        %v9736 = vmax.f32 %v9672, %v9704
        %v9737 = vmax.f32 %v9673, %v9705
        %v9738 = vmax.f32 %v9674, %v9706
        %v9739 = vmax.f32 %v9675, %v9707
        %v9740 = vmax.f32 %v9676, %v9708
        %v9741 = vmax.f32 %v9677, %v9709
        %v9742 = vmax.f32 %v9678, %v9710
        %v9743 = vmax.f32 %v9679, %v9711
        %v9744 = vmax.f32 %v9680, %v9712
        %v9745 = vmax.f32 %v9681, %v9713
        %v9746 = vmax.f32 %v9682, %v9714
        %v9747 = vmax.f32 %v9683, %v9715
        %v9748 = vmax.f32 %v9684, %v9716
        %v9749 = vmax.f32 %v9685, %v9717
        %v9750 = vmax.f32 %v9686, %v9718
        %v9751 = vmax.f32 %v9687, %v9719
        %v9752 = vmax.f32 %v9688, %v9720
        %v9753 = vmax.f32 %v9689, %v9721
        %v9754 = vmax.f32 %v9690, %v9722
        %v9755 = vmax.f32 %v9691, %v9723
        %v9756 = vmax.f32 %v9692, %v9724
        %v9757 = vld [vmem:[%s2450 + $0x9] sm:$0xff]
        %v9758 = vld [vmem:[%s2450 + $0x11] sm:$0xff]
        %v9759 = vld [vmem:[%s2450 + $0x29] sm:$0xff]
        %v9760 = vld [vmem:[%s2450 + $0x31] sm:$0xff]
        %v9761 = vld [vmem:[%s2450 + $0x49] sm:$0xff]
        %v9762 = vld [vmem:[%s2450 + $0x51] sm:$0xff]
        %v9763 = vld [vmem:[%s2450 + $0x69] sm:$0xff]
        %v9764 = vld [vmem:[%s2450 + $0x71] sm:$0xff]
        %v9765 = vld [vmem:[%s2450 + $0x89] sm:$0xff]
        %v9766 = vld [vmem:[%s2450 + $0x91] sm:$0xff]
        %v9767 = vld [vmem:[%s2450 + $0xa9] sm:$0xff]
        %v9768 = vld [vmem:[%s2450 + $0xb1] sm:$0xff]
        %v9769 = vld [vmem:[%s2450 + $0xc9] sm:$0xff]
        %v9770 = vld [vmem:[%s2450 + $0xd1] sm:$0xff]
        %v9771 = vld [vmem:[%s2450 + $0xe9] sm:$0xff]
        %v9772 = vld [vmem:[%s2450 + $0xf1] sm:$0xff]
        %v9773 = vld [vmem:[%s2450 + $0x109] sm:$0xff]
        %v9774 = vld [vmem:[%s2450 + $0x111] sm:$0xff]
        %v9775 = vld [vmem:[%s2450 + $0x129] sm:$0xff]
        %v9776 = vld [vmem:[%s2450 + $0x131] sm:$0xff]
        %v9777 = vld [vmem:[%s2450 + $0x149] sm:$0xff]
        %v9778 = vld [vmem:[%s2450 + $0x151] sm:$0xff]
        %v9779 = vld [vmem:[%s2450 + $0x169] sm:$0xff]
        %v9780 = vld [vmem:[%s2450 + $0x171] sm:$0xff]
        %v9781 = vld [vmem:[%s2450 + $0x189] sm:$0xff]
        %v9782 = vld [vmem:[%s2450 + $0x191] sm:$0xff]
        %v9783 = vld [vmem:[%s2450 + $0x1a9] sm:$0xff]
        %v9784 = vld [vmem:[%s2450 + $0x1b1] sm:$0xff]
        %v9785 = vld [vmem:[%s2450 + $0x1c9] sm:$0xff]
        %v9786 = vld [vmem:[%s2450 + $0x1d1] sm:$0xff]
        %v9787 = vld [vmem:[%s2450 + $0x1e9] sm:$0xff]
        %v9788 = vld [vmem:[%s2450 + $0x1f1] sm:$0xff]
        %v9789 = vmax.f32 %v9725, %v9757
        %v9790 = vmax.f32 %v9726, %v9758
        %v9791 = vmax.f32 %v9727, %v9759
        %v9792 = vmax.f32 %v9728, %v9760
        %v9793 = vmax.f32 %v9729, %v9761
        %v9794 = vmax.f32 %v9730, %v9762
        %v9795 = vmax.f32 %v9731, %v9763
        %v9796 = vmax.f32 %v9732, %v9764
        %v9797 = vmax.f32 %v9733, %v9765
        %v9798 = vmax.f32 %v9734, %v9766
        %v9799 = vmax.f32 %v9735, %v9767
        %v9800 = vmax.f32 %v9736, %v9768
        %v9801 = vmax.f32 %v9737, %v9769
        %v9802 = vmax.f32 %v9738, %v9770
        %v9803 = vmax.f32 %v9739, %v9771
        %v9804 = vmax.f32 %v9740, %v9772
        %v9805 = vmax.f32 %v9741, %v9773
        %v9806 = vmax.f32 %v9742, %v9774
        %v9807 = vmax.f32 %v9743, %v9775
        %v9808 = vmax.f32 %v9744, %v9776
        %v9809 = vmax.f32 %v9745, %v9777
        %v9810 = vmax.f32 %v9746, %v9778
        %v9811 = vmax.f32 %v9747, %v9779
        %v9812 = vmax.f32 %v9748, %v9780
        %v9813 = vmax.f32 %v9749, %v9781
        %v9814 = vmax.f32 %v9750, %v9782
        %v9815 = vmax.f32 %v9751, %v9783
        %v9816 = vmax.f32 %v9752, %v9784
        %v9817 = vmax.f32 %v9753, %v9785
        %v9818 = vmax.f32 %v9754, %v9786
        %v9819 = vmax.f32 %v9755, %v9787
        %v9820 = vmax.f32 %v9756, %v9788
        %v9821 = vpack.c.bf16 %v9790, %v9789
        %v9822 = vpack.c.bf16 %v9792, %v9791
        %v9823 = vpack.c.bf16 %v9794, %v9793
        %v9824 = vpack.c.bf16 %v9796, %v9795
        %v9825 = vpack.c.bf16 %v9798, %v9797
        %v9826 = vpack.c.bf16 %v9800, %v9799
        %v9827 = vpack.c.bf16 %v9802, %v9801
        %v9828 = vpack.c.bf16 %v9804, %v9803
        %v9829 = vpack.c.bf16 %v9806, %v9805
        %v9830 = vpack.c.bf16 %v9808, %v9807
        %v9831 = vpack.c.bf16 %v9810, %v9809
        %v9832 = vpack.c.bf16 %v9812, %v9811
        %v9833 = vpack.c.bf16 %v9814, %v9813
        %v9834 = vpack.c.bf16 %v9816, %v9815
        %v9835 = vpack.c.bf16 %v9818, %v9817
        %v9836 = vpack.c.bf16 %v9820, %v9819
        %v9837 = vld [vmem:[%s15] sm:$0x3]
        %v9838 = vld [vmem:[%s16] sm:$0x1]
        %v9840 = vperm.slane %v9838, 0
        %v9843 = vsel %vm601, %v9821, 0
        %v9846 = vsel %vm601, %v9822, 0
        %v9849 = vsel %vm601, %v9823, 0
        %v9852 = vsel %vm601, %v9824, 0
        %v9855 = vsel %vm601, %v9825, 0
        %v9858 = vsel %vm601, %v9826, 0
        %v9861 = vsel %vm601, %v9827, 0
        %v9864 = vsel %vm601, %v9828, 0
        %v9867 = vsel %vm601, %v9829, 0
        %v9870 = vsel %vm601, %v9830, 0
        %v9873 = vsel %vm601, %v9831, 0
        %v9876 = vsel %vm601, %v9832, 0
        %v9879 = vsel %vm601, %v9833, 0
        %v9882 = vsel %vm601, %v9834, 0
        %v9885 = vsel %vm601, %v9835, 0
        %v9888 = vsel %vm601, %v9836, 0
        %v9891 = vsel %vm650, %v9837, 0
        %9893 = vmatpush.bf16.msra.mxu0 0
        %9894 = vmatpush.bf16.msra.mxu0 0
        %9895 = vmatpush.bf16.msra.mxu0 0
        %9896 = vmatpush.bf16.msra.mxu0 0
        %9897 = vmatpush.bf16.msra.mxu0 0
        %9898 = vmatpush.bf16.msra.mxu0 0
        %9899 = vmatpush.bf16.msra.mxu0 0
        %9900 = vmatpush.bf16.msra.mxu0 %v9891
        %9901 = vmatmul.bf16.gmra.mxu0 %v9843
        %v9902 = vpop.f32.mrf.mxu0
        %v9903 = vadd.f32 %v9840, %v9902
        %v9904 = vpop.f32.mrf.mxu0
        %v9905 = vadd.f32 %v9840, %v9904
        %9906 = vmatmul.bf16.gmra.mxu0 %v9846
        %v9907 = vpop.f32.mrf.mxu0
        %v9908 = vadd.f32 %v9840, %v9907
        %v9909 = vpop.f32.mrf.mxu0
        %v9910 = vadd.f32 %v9840, %v9909
        %9911 = vmatmul.bf16.gmra.mxu0 %v9849
        %v9912 = vpop.f32.mrf.mxu0
        %v9913 = vadd.f32 %v9840, %v9912
        %v9914 = vpop.f32.mrf.mxu0
        %v9915 = vadd.f32 %v9840, %v9914
        %9916 = vmatmul.bf16.gmra.mxu0 %v9852
        %v9917 = vpop.f32.mrf.mxu0
        %v9918 = vadd.f32 %v9840, %v9917
        %v9919 = vpop.f32.mrf.mxu0
        %v9920 = vadd.f32 %v9840, %v9919
        %9921 = vmatmul.bf16.gmra.mxu0 %v9855
        %v9922 = vpop.f32.mrf.mxu0
        %v9923 = vadd.f32 %v9840, %v9922
        %v9924 = vpop.f32.mrf.mxu0
        %v9925 = vadd.f32 %v9840, %v9924
        %9926 = vmatmul.bf16.gmra.mxu0 %v9858
        %v9927 = vpop.f32.mrf.mxu0
        %v9928 = vadd.f32 %v9840, %v9927
        %v9929 = vpop.f32.mrf.mxu0
        %v9930 = vadd.f32 %v9840, %v9929
        %9931 = vmatmul.bf16.gmra.mxu0 %v9861
        %v9932 = vpop.f32.mrf.mxu0
        %v9933 = vadd.f32 %v9840, %v9932
        %v9934 = vpop.f32.mrf.mxu0
        %v9935 = vadd.f32 %v9840, %v9934
        %9936 = vmatmul.bf16.gmra.mxu0 %v9864
        %v9937 = vpop.f32.mrf.mxu0
        %v9938 = vadd.f32 %v9840, %v9937
        %v9939 = vpop.f32.mrf.mxu0
        %v9940 = vadd.f32 %v9840, %v9939
        %9941 = vmatmul.bf16.gmra.mxu0 %v9867
        %v9942 = vpop.f32.mrf.mxu0
        %v9943 = vadd.f32 %v9840, %v9942
        %v9944 = vpop.f32.mrf.mxu0
        %v9945 = vadd.f32 %v9840, %v9944
        %9946 = vmatmul.bf16.gmra.mxu0 %v9870
        %v9947 = vpop.f32.mrf.mxu0
        %v9948 = vadd.f32 %v9840, %v9947
        %v9949 = vpop.f32.mrf.mxu0
        %v9950 = vadd.f32 %v9840, %v9949
        %9951 = vmatmul.bf16.gmra.mxu0 %v9873
        %v9952 = vpop.f32.mrf.mxu0
        %v9953 = vadd.f32 %v9840, %v9952
        %v9954 = vpop.f32.mrf.mxu0
        %v9955 = vadd.f32 %v9840, %v9954
        %9956 = vmatmul.bf16.gmra.mxu0 %v9876
        %v9957 = vpop.f32.mrf.mxu0
        %v9958 = vadd.f32 %v9840, %v9957
        %v9959 = vpop.f32.mrf.mxu0
        %v9960 = vadd.f32 %v9840, %v9959
        %9961 = vmatmul.bf16.gmra.mxu0 %v9879
        %v9962 = vpop.f32.mrf.mxu0
        %v9963 = vadd.f32 %v9840, %v9962
        %v9964 = vpop.f32.mrf.mxu0
        %v9965 = vadd.f32 %v9840, %v9964
        %9966 = vmatmul.bf16.gmra.mxu0 %v9882
        %v9967 = vpop.f32.mrf.mxu0
        %v9968 = vadd.f32 %v9840, %v9967
        %v9969 = vpop.f32.mrf.mxu0
        %v9970 = vadd.f32 %v9840, %v9969
        %9971 = vmatmul.bf16.gmra.mxu0 %v9885
        %v9972 = vpop.f32.mrf.mxu0
        %v9973 = vadd.f32 %v9840, %v9972
        %v9974 = vpop.f32.mrf.mxu0
        %v9975 = vadd.f32 %v9840, %v9974
        %9976 = vmatmul.bf16.gmra.mxu0 %v9888
        %v9977 = vpop.f32.mrf.mxu0
        %v9978 = vadd.f32 %v9840, %v9977
        %v9979 = vpop.f32.mrf.mxu0
        %v9980 = vadd.f32 %v9840, %v9979
        %9981 = vdwg.mxu0
        %v9982 = vmax.f32 %v9903, 0.0
        %v9983 = vmax.f32 %v9905, 0.0
        %v9984 = vmax.f32 %v9908, 0.0
        %v9985 = vmax.f32 %v9910, 0.0
        %v9986 = vmax.f32 %v9913, 0.0
        %v9987 = vmax.f32 %v9915, 0.0
        %v9988 = vmax.f32 %v9918, 0.0
        %v9989 = vmax.f32 %v9920, 0.0
        %v9990 = vmax.f32 %v9923, 0.0
        %v9991 = vmax.f32 %v9925, 0.0
        %v9992 = vmax.f32 %v9928, 0.0
        %v9993 = vmax.f32 %v9930, 0.0
        %v9994 = vmax.f32 %v9933, 0.0
        %v9995 = vmax.f32 %v9935, 0.0
        %v9996 = vmax.f32 %v9938, 0.0
        %v9997 = vmax.f32 %v9940, 0.0
        %v9998 = vmax.f32 %v9943, 0.0
        %v9999 = vmax.f32 %v9945, 0.0
        %v10000 = vmax.f32 %v9948, 0.0
        %v10001 = vmax.f32 %v9950, 0.0
        %v10002 = vmax.f32 %v9953, 0.0
        %v10003 = vmax.f32 %v9955, 0.0
        %v10004 = vmax.f32 %v9958, 0.0
        %v10005 = vmax.f32 %v9960, 0.0
        %v10006 = vmax.f32 %v9963, 0.0
        %v10007 = vmax.f32 %v9965, 0.0
        %v10008 = vmax.f32 %v9968, 0.0
        %v10009 = vmax.f32 %v9970, 0.0
        %v10010 = vmax.f32 %v9973, 0.0
        %v10011 = vmax.f32 %v9975, 0.0
        %v10012 = vmax.f32 %v9978, 0.0
        %v10013 = vmax.f32 %v9980, 0.0
        %10046 = vrot.lane.b32.xlu0 %v9982, 40
        %v10047 = vpop.permute.xlu0 %10046
        %10048 = vrot.lane.b32.xlu0 %v9983, 40
        %v10049 = vpop.permute.xlu0 %10048
        %10050 = vrot.lane.b32.xlu0 %v9984, 40
        %v10051 = vpop.permute.xlu0 %10050
        %10052 = vrot.lane.b32.xlu0 %v9985, 40
        %v10053 = vpop.permute.xlu0 %10052
        %10054 = vrot.lane.b32.xlu0 %v9986, 40
        %v10055 = vpop.permute.xlu0 %10054
        %10056 = vrot.lane.b32.xlu0 %v9987, 40
        %v10057 = vpop.permute.xlu0 %10056
        %10058 = vrot.lane.b32.xlu0 %v9988, 40
        %v10059 = vpop.permute.xlu0 %10058
        %10060 = vrot.lane.b32.xlu0 %v9989, 40
        %v10061 = vpop.permute.xlu0 %10060
        %10062 = vrot.lane.b32.xlu0 %v9990, 40
        %v10063 = vpop.permute.xlu0 %10062
        %10064 = vrot.lane.b32.xlu0 %v9991, 40
        %v10065 = vpop.permute.xlu0 %10064
        %10066 = vrot.lane.b32.xlu0 %v9992, 40
        %v10067 = vpop.permute.xlu0 %10066
        %10068 = vrot.lane.b32.xlu0 %v9993, 40
        %v10069 = vpop.permute.xlu0 %10068
        %10070 = vrot.lane.b32.xlu0 %v9994, 40
        %v10071 = vpop.permute.xlu0 %10070
        %10072 = vrot.lane.b32.xlu0 %v9995, 40
        %v10073 = vpop.permute.xlu0 %10072
        %10074 = vrot.lane.b32.xlu0 %v9996, 40
        %v10075 = vpop.permute.xlu0 %10074
        %10076 = vrot.lane.b32.xlu0 %v9997, 40
        %v10077 = vpop.permute.xlu0 %10076
        %10078 = vrot.lane.b32.xlu0 %v9998, 40
        %v10079 = vpop.permute.xlu0 %10078
        %10080 = vrot.lane.b32.xlu0 %v9999, 40
        %v10081 = vpop.permute.xlu0 %10080
        %10082 = vrot.lane.b32.xlu0 %v10000, 40
        %v10083 = vpop.permute.xlu0 %10082
        %10084 = vrot.lane.b32.xlu0 %v10001, 40
        %v10085 = vpop.permute.xlu0 %10084
        %10086 = vrot.lane.b32.xlu0 %v10002, 40
        %v10087 = vpop.permute.xlu0 %10086
        %10088 = vrot.lane.b32.xlu0 %v10003, 40
        %v10089 = vpop.permute.xlu0 %10088
        %10090 = vrot.lane.b32.xlu0 %v10004, 40
        %v10091 = vpop.permute.xlu0 %10090
        %10092 = vrot.lane.b32.xlu0 %v10005, 40
        %v10093 = vpop.permute.xlu0 %10092
        %10094 = vrot.lane.b32.xlu0 %v10006, 40
        %v10095 = vpop.permute.xlu0 %10094
        %10096 = vrot.lane.b32.xlu0 %v10007, 40
        %v10097 = vpop.permute.xlu0 %10096
        %10098 = vrot.lane.b32.xlu0 %v10008, 40
        %v10099 = vpop.permute.xlu0 %10098
        %10100 = vrot.lane.b32.xlu0 %v10009, 40
        %v10101 = vpop.permute.xlu0 %10100
        %10102 = vrot.lane.b32.xlu0 %v10010, 40
        %v10103 = vpop.permute.xlu0 %10102
        %10104 = vrot.lane.b32.xlu0 %v10011, 40
        %v10105 = vpop.permute.xlu0 %10104
        %10106 = vrot.lane.b32.xlu0 %v10012, 40
        %v10107 = vpop.permute.xlu0 %10106
        %10108 = vrot.lane.b32.xlu0 %v10013, 40
        %v10109 = vpop.permute.xlu0 %10108
        %vm10142 = vcmask 392512
        %10143 = vst.msk [vmem:[%s541] sm:$0xff] %vm10142, %v10047
        %10144 = vst.msk [vmem:[%s541 + $0x8] sm:$0xff] %vm10142, %v10049
        %10145 = vst.msk [vmem:[%s541 + $0x10] sm:$0xff] %vm10142, %v10051
        %10146 = vst.msk [vmem:[%s541 + $0x18] sm:$0xff] %vm10142, %v10053
        %10147 = vst.msk [vmem:[%s541 + $0x20] sm:$0xff] %vm10142, %v10055
        %10148 = vst.msk [vmem:[%s541 + $0x28] sm:$0xff] %vm10142, %v10057
        %10149 = vst.msk [vmem:[%s541 + $0x30] sm:$0xff] %vm10142, %v10059
        %10150 = vst.msk [vmem:[%s541 + $0x38] sm:$0xff] %vm10142, %v10061
        %10151 = vst.msk [vmem:[%s541 + $0x40] sm:$0xff] %vm10142, %v10063
        %10152 = vst.msk [vmem:[%s541 + $0x48] sm:$0xff] %vm10142, %v10065
        %10153 = vst.msk [vmem:[%s541 + $0x50] sm:$0xff] %vm10142, %v10067
        %10154 = vst.msk [vmem:[%s541 + $0x58] sm:$0xff] %vm10142, %v10069
        %10155 = vst.msk [vmem:[%s541 + $0x60] sm:$0xff] %vm10142, %v10071
        %10156 = vst.msk [vmem:[%s541 + $0x68] sm:$0xff] %vm10142, %v10073
        %10157 = vst.msk [vmem:[%s541 + $0x70] sm:$0xff] %vm10142, %v10075
        %10158 = vst.msk [vmem:[%s541 + $0x78] sm:$0xff] %vm10142, %v10077
        %10159 = vst.msk [vmem:[%s541 + $0x80] sm:$0xff] %vm10142, %v10079
        %10160 = vst.msk [vmem:[%s541 + $0x88] sm:$0xff] %vm10142, %v10081
        %10161 = vst.msk [vmem:[%s541 + $0x90] sm:$0xff] %vm10142, %v10083
        %10162 = vst.msk [vmem:[%s541 + $0x98] sm:$0xff] %vm10142, %v10085
        %10163 = vst.msk [vmem:[%s541 + $0xa0] sm:$0xff] %vm10142, %v10087
        %10164 = vst.msk [vmem:[%s541 + $0xa8] sm:$0xff] %vm10142, %v10089
        %10165 = vst.msk [vmem:[%s541 + $0xb0] sm:$0xff] %vm10142, %v10091
        %10166 = vst.msk [vmem:[%s541 + $0xb8] sm:$0xff] %vm10142, %v10093
        %10167 = vst.msk [vmem:[%s541 + $0xc0] sm:$0xff] %vm10142, %v10095
        %10168 = vst.msk [vmem:[%s541 + $0xc8] sm:$0xff] %vm10142, %v10097
        %10169 = vst.msk [vmem:[%s541 + $0xd0] sm:$0xff] %vm10142, %v10099
        %10170 = vst.msk [vmem:[%s541 + $0xd8] sm:$0xff] %vm10142, %v10101
        %10171 = vst.msk [vmem:[%s541 + $0xe0] sm:$0xff] %vm10142, %v10103
        %10172 = vst.msk [vmem:[%s541 + $0xe8] sm:$0xff] %vm10142, %v10105
        %10173 = vst.msk [vmem:[%s541 + $0xf0] sm:$0xff] %vm10142, %v10107
        %10174 = vst.msk [vmem:[%s541 + $0xf8] sm:$0xff] %vm10142, %v10109
        %s10175 = sand.u32 %s401, 1
        %s10176 = scalar_lea.sflag [#allocation4], %s10175
        %s10177 = sand.u32 %s401, 1
        %s10178 = smul.addr %s10177, 256
        %s10179 = scalar_lea.vmem [#allocation3], %s10178
        // Predicated region
        $region89: #{inception_c_forward.1} parent=87 // pred_check
          %p10180 = pneg %p411
        $region90: #{inception_c_forward.1} parent=87 // pred_check_branch
          %10182 = sbr.rel (%p10180) target = $region92
        $region91: #{inception_c_forward.1} parent=87 // pred_region
          %10184 = vsyncadd %s10176, 0
          %s10185 = smul.addr %s31, 32
          %s10186 = smul.addr %s10185, 8
          %s10187 = scalar_lea.hbm %s17, %s10186
          %s10188 = sshll.u32 %s10179, 4
          %s10189 = int_to_ptr.vmem [resolvable:$true] %s10188
          %s10190 = sshll.u32 %s10187, 4
          %s10191 = int_to_ptr.hbm [resolvable:$true] %s10190
          %10196 = dma.vmem_to_hbm [thread:$0]  %s10189, 4096, %s10191, %s10176, 128, 128, 8
        $region92: #{inception_c_forward.1} parent=87 // pred_fallthru
          _
      $region88: #{inception_c_forward.1} parent=5 // pred_fallthru
        _
      %p10197 = scmp.le.s32.totalorder 2, %s26
      // Predicated region
      $region93: #{inception_c_forward.1} parent=5 // pred_check
        %p10198 = pneg %p10197
      $region94: #{inception_c_forward.1} parent=5 // pred_check_branch
        %10200 = sbr.rel (%p10198) target = $region96
      $region95: #{inception_c_forward.1} parent=5 // pred_region
        %s10201 = ssub.s32 %s26, 2
        // Predicated region
        $region97: #{inception_c_forward.1} parent=95 // pred_check
          %p10202 = pneg %p417
        $region98: #{inception_c_forward.1} parent=95 // pred_check_branch
          %10204 = sbr.rel (%p10202) target = $region100
        $region99: #{inception_c_forward.1} parent=95 // pred_region
          %s10205 = sand.u32 %s402, 1
          %s10206 = scalar_lea.sflag [#allocation4], %s10205
          %s10207 = sand.u32 %s402, 1
          %s10208 = smul.addr %s10207, 256
          %s10209 = scalar_lea.vmem [#allocation3], %s10208
          %10211 = dma.done %s10206, 4096
        $region100: #{inception_c_forward.1} parent=95 // pred_fallthru
          _
      $region96: #{inception_c_forward.1} parent=5 // pred_fallthru
        _
    $region6: #{inception_c_forward.1} parent=1 // loop_footer
      %s30 = sadd.s32 1, %s26
    $region7: #{inception_c_forward.1} parent=1 // loop_footer_branch
      %25 = sbr.rel target = $region3
    $region8: #{inception_c_forward.1} parent=1 // loop_exit
      _
    %10212 = vsyncpa [#allocation4], 1
    %s10213 = scalar_lea.sflag [#allocation4], 1
    %10214 = vsyncpa %s10213, 1

</llo_original>
